<compile_context>
chip_gen: v6e
topology: v6e:2x2x1
jax: 0.10.0
libtpu: 0.0.40
codegen_flags: <defaults>
</compile_context>

<pallas_src>
import functools

import jax
import jax.numpy as jnp
from jax import lax
from jax.experimental import pallas as pl
from jax.experimental.pallas import tpu as pltpu

_SQRT1_2 = 0.7071067811865476


# ----------------------------- in-kernel math ------------------------------ #
def _sigmoid(t):
    # 1 / (1 + exp(-t)); divide goes to EUP via approx reciprocal.
    return pl.reciprocal(1.0 + jnp.exp(-t), approx=True)


def _erf(t):
    # Abramowitz & Stegun 7.1.26 polynomial (max abs err ~1.5e-7); avoids
    # relying on an erf primitive lowering inside Mosaic.
    a1, a2, a3, a4, a5 = 0.254829592, -0.284496736, 1.421413741, -1.453152027, 1.061405429
    p = 0.3275911
    ax = jnp.abs(t)
    u = pl.reciprocal(1.0 + p * ax, approx=True)
    poly = ((((a5 * u + a4) * u + a3) * u + a2) * u + a1) * u
    y = 1.0 - poly * jnp.exp(-ax * ax)
    return jnp.where(t >= 0, y, -y)


def _gelu(t):
    # exact (erf-based) GELU, matching torch.nn.GELU() default
    return 0.5 * t * (1.0 + _erf(t * _SQRT1_2))


def _conv1d(inp_bf16, w_ref, bias_ref, lpos, *, L, K, Cout):
    """'same' 1-D conv over row-stacked length-L sequences.

    inp_bf16: [M, Cin] bf16 activations (rows are conv positions; blocks never
              split a sequence, so row index % L is the in-sequence position).
    w_ref   : [Cin, K*Cout] bf16 weights, tap-major columns
              (cols t*Cout:(t+1)*Cout == W_t ;  y[l] = sum_t x[l+t-pad] @ W_t + b).
    bias_ref: [1, Cout] f32.   lpos: [M, 1] int32 in-sequence position per row.
    """
    M = inp_bf16.shape[0]
    pad = K // 2
    # ONE wide MXU matmul (bf16 x bf16, f32 accumulation) covering all K taps.
    c_all = jnp.dot(inp_bf16, w_ref[...], preferred_element_type=jnp.float32)
    # centre tap needs no shift/mask; fold the bias add into its extraction
    acc = c_all[:, pad * Cout:(pad + 1) * Cout] + bias_ref[...]
    for t in range(K):                                  # static unroll, K in {5, 15}
        off = t - pad
        if off == 0:
            continue
        # out[m] = c[(m + off) mod M]  (XLU roll; wrapped rows are masked below)
        c_t = pltpu.roll(c_all[:, t * Cout:(t + 1) * Cout], (-off) % M, axis=0)
        # zero rows whose source crosses a sequence boundary; block boundaries
        # coincide with sequence boundaries, so roll wrap-around is masked too.
        if off > 0:
            mask = (lpos < (L - off)).astype(jnp.float32)
        else:
            mask = (lpos >= (-off)).astype(jnp.float32)
        acc = acc + c_t * mask
    return acc


# ------------------------------- kernels ----------------------------------- #
def _gru_stage1_kernel(h_ref, x_ref,
                       wzr_ref, bzr_ref, wzrb_ref, bzrb_ref, wq_ref, bq_ref,
                       o_ref, *, L, C, K_big, K_small):
    blk = h_ref.shape[0]
    lpos = lax.broadcasted_iota(jnp.int32, (blk, 1), 0) % L
    h = h_ref[...].astype(jnp.float32)                           # [blk, C]
    x_bf = x_ref[...].astype(jnp.bfloat16)                       # [blk, D]
    hx = jnp.concatenate([h.astype(jnp.bfloat16), x_bf], axis=1)  # [blk, C+D]

    # fused z/r first conv (k=15): one 2C-wide matmul
    zr_mid = _gelu(_conv1d(hx, wzr_ref, bzr_ref, lpos, L=L, K=K_big, Cout=2 * C))
    # fused z/r second conv (k=5): one matmul over the full [blk, 2C] slab with a
    # block-diagonal [2C, K*2C] weight (fills the 256-deep MXU on v6e/v7x)
    zr = _conv1d(zr_mid.astype(jnp.bfloat16), wzrb_ref, bzrb_ref, lpos,
                 L=L, K=K_small, Cout=2 * C)
    z = _sigmoid(zr[:, :C])
    r = _sigmoid(zr[:, C:])
    rhx = jnp.concatenate([(r * h).astype(jnp.bfloat16), x_bf], axis=1)
    q = jnp.tanh(_conv1d(rhx, wq_ref, bq_ref, lpos, L=L, K=K_small, Cout=C))
    o_ref[...] = ((1.0 - z) * h + z * q).astype(o_ref.dtype)


def _gru_stage_kernel(h_ref, x_ref, wzr_ref, bzr_ref, wq_ref, bq_ref,
                      o_ref, *, L, C, K):
    blk = h_ref.shape[0]
    lpos = lax.broadcasted_iota(jnp.int32, (blk, 1), 0) % L
    h = h_ref[...].astype(jnp.float32)
    x_bf = x_ref[...].astype(jnp.bfloat16)
    hx = jnp.concatenate([h.astype(jnp.bfloat16), x_bf], axis=1)

    zr = _conv1d(hx, wzr_ref, bzr_ref, lpos, L=L, K=K, Cout=2 * C)
    z = _sigmoid(zr[:, :C])
    r = _sigmoid(zr[:, C:])
    rhx = jnp.concatenate([(r * h).astype(jnp.bfloat16), x_bf], axis=1)
    q = jnp.tanh(_conv1d(rhx, wq_ref, bq_ref, lpos, L=L, K=K, Cout=C))
    o_ref[...] = ((1.0 - z) * h + z * q).astype(o_ref.dtype)


# ------------------------------- wrappers ----------------------------------- #
_PERM = {4: (0, 2, 3, 4, 1),   # conv along W
         3: (0, 2, 4, 3, 1),   # conv along H
         2: (0, 3, 4, 2, 1)}   # conv along T


def _to2d(u, axis):
    perm = _PERM[axis]
    up = jnp.transpose(u, perm)              # [..., L, C] channels-last
    return up.reshape(-1, up.shape[-1]), up.shape


def _from2d(u2, shape5, axis):
    perm = _PERM[axis]
    inv = [0] * 5
    for i, p in enumerate(perm):
        inv[p] = i
    return u2.reshape(shape5).transpose(inv)


def _pick_block_rows(n_seq, L, target_rows):
    """Largest block (multiple of L, divides M, sublane-aligned) that fits the
    target while keeping >=2 grid steps for megacore sharding / pipelining."""
    multi = [d for d in range(1, n_seq) if n_seq % d == 0 and (d * L) % 8 == 0]
    good = [d for d in multi if d * L <= target_rows]
    if good:
        return max(good) * L
    if multi:                       # nothing fits the target: smallest multi-step block
        return min(multi) * L
    return n_seq * L                # degenerate: single full-array block (always legal)


def _vmem_limit_bytes():
    # Leave headroom below physical VMEM (64 MiB/TC on v7x, 128 MiB on v5e/v6e)
    # for pipeline double-buffers and Mosaic internal scratch.
    try:
        cap = int(pltpu.get_tpu_info().vmem_capacity_bytes)
    except Exception:
        cap = 64 * 1024 * 1024
    return max(32 * 1024 * 1024, min((cap * 3) // 4, 100 * 1024 * 1024))


def _compiler_params():
    return pltpu.CompilerParams(
        dimension_semantics=("parallel",),   # row blocks are fully independent
        vmem_limit_bytes=_vmem_limit_bytes(),
    )


def _full_spec(arr):
    # TODO(synk): pipeline_mode=pl.Buffered(1) here (constant index_map) to
    # single-buffer the weights once supported on this pallas_call path.
    return pl.BlockSpec(arr.shape, lambda i: (0,) * arr.ndim)


def _run_stage1(h5, x5, kp, *, block_rows):
    C = h5.shape[1]
    h2, shp = _to2d(h5, 4)
    x2, _ = _to2d(x5, 4)
    M, L, D = h2.shape[0], shp[-2], x2.shape[1]
    blk = _pick_block_rows(M // L, L, block_rows)
    weights = [kp["s1_wzr"], kp["s1_bzr"], kp["s1_wzrb"], kp["s1_bzrb"],
               kp["s1_wq"], kp["s1_bq"]]
    kern = functools.partial(_gru_stage1_kernel, L=L, C=C, K_big=15, K_small=5)
    out2 = pl.pallas_call(
        kern,
        out_shape=jax.ShapeDtypeStruct((M, C), h2.dtype),
        grid_spec=pltpu.PrefetchScalarGridSpec(
            num_scalar_prefetch=0,
            grid=(M // blk,),
            in_specs=[pl.BlockSpec((blk, C), lambda i: (i, 0)),
                      pl.BlockSpec((blk, D), lambda i: (i, 0))]
                     + [_full_spec(w) for w in weights],
            out_specs=pl.BlockSpec((blk, C), lambda i: (i, 0)),
        ),
        compiler_params=_compiler_params(),
    )(h2, x2, *weights)
    return _from2d(out2, shp, 4)


def _run_stage_simple(h5, x5, kp, *, stage, axis, block_rows):
    C = h5.shape[1]
    h2, shp = _to2d(h5, axis)
    x2, _ = _to2d(x5, axis)
    M, L, D = h2.shape[0], shp[-2], x2.shape[1]
    blk = _pick_block_rows(M // L, L, block_rows)
    weights = [kp[f"s{stage}_wzr"], kp[f"s{stage}_bzr"],
               kp[f"s{stage}_wq"], kp[f"s{stage}_bq"]]
    kern = functools.partial(_gru_stage_kernel, L=L, C=C, K=5)
    out2 = pl.pallas_call(
        kern,
        out_shape=jax.ShapeDtypeStruct((M, C), h2.dtype),
        grid_spec=pltpu.PrefetchScalarGridSpec(
            num_scalar_prefetch=0,
            grid=(M // blk,),
            in_specs=[pl.BlockSpec((blk, C), lambda i: (i, 0)),
                      pl.BlockSpec((blk, D), lambda i: (i, 0))]
                     + [_full_spec(w) for w in weights],
            out_specs=pl.BlockSpec((blk, C), lambda i: (i, 0)),
        ),
        compiler_params=_compiler_params(),
    )(h2, x2, *weights)
    return _from2d(out2, shp, axis)


def sk_sep_conv_gru3d(h, x, kernel_params, *, block_rows=512):
    """h: [B, C, T, H, W], x: [B, D, T, H, W] -> updated h, same shape as h."""
    h = _run_stage1(h, x, kernel_params, block_rows=block_rows)                          # along W
    h = _run_stage_simple(h, x, kernel_params, stage=2, axis=3, block_rows=block_rows)   # along H
    h = _run_stage_simple(h, x, kernel_params, stage=3, axis=2, block_rows=block_rows)   # along T
    return h


# ------------------------- parameters & reference --------------------------- #
def make_params(key, C, D):
    """Raw per-conv weights [K, Cin, Cout] (y[l] = sum_t in[l+t-pad] @ W[t] + b)."""
    Cin = C + D
    specs = {"z1a": (15, Cin, C), "r1a": (15, Cin, C),
             "z1b": (5, C, C), "r1b": (5, C, C), "q1": (5, Cin, C),
             "z2": (5, Cin, C), "r2": (5, Cin, C), "q2": (5, Cin, C),
             "z3": (5, Cin, C), "r3": (5, Cin, C), "q3": (5, Cin, C)}
    P = {}
    keys = jax.random.split(key, 2 * len(specs))
    for i, (name, (K, ci, co)) in enumerate(specs.items()):
        scale = 1.0 / float(K * ci) ** 0.5
        P["w" + name] = scale * jax.random.normal(keys[2 * i], (K, ci, co), jnp.float32)
        P["b" + name] = 0.1 * jax.random.normal(keys[2 * i + 1], (co,), jnp.float32)
    return P


def _flatten_taps(w):
    K, Cin, Cout = w.shape
    return jnp.transpose(w, (1, 0, 2)).reshape(Cin, K * Cout)   # tap-major columns


def prep_kernel_params(P, C):
    """Flatten, fuse and cast weights for the kernels (matmul operands in bf16,
    biases kept f32 so the accumulate / gate math stays f32)."""
    fl = lambda w: _flatten_taps(w).astype(jnp.bfloat16)
    kp = {}
    # stage 1: fused z/r first conv (k=15)
    w_zr1 = jnp.concatenate([P["wz1a"], P["wr1a"]], axis=2)            # (15, Cin, 2C)
    kp["s1_wzr"] = fl(w_zr1)
    kp["s1_bzr"] = jnp.concatenate([P["bz1a"], P["br1a"]]).reshape(1, -1)
    # stage 1: fused z/r second conv (k=5) as a block-diagonal [2C, 5*2C] weight
    wb = jnp.zeros((5, 2 * C, 2 * C), jnp.float32)
    wb = wb.at[:, :C, :C].set(P["wz1b"]).at[:, C:, C:].set(P["wr1b"])
    kp["s1_wzrb"] = fl(wb)
    kp["s1_bzrb"] = jnp.concatenate([P["bz1b"], P["br1b"]]).reshape(1, -1)
    kp["s1_wq"] = fl(P["wq1"])
    kp["s1_bq"] = P["bq1"].reshape(1, -1)
    for s in (2, 3):
        w_zr = jnp.concatenate([P[f"wz{s}"], P[f"wr{s}"]], axis=2)
        kp[f"s{s}_wzr"] = fl(w_zr)
        kp[f"s{s}_bzr"] = jnp.concatenate([P[f"bz{s}"], P[f"br{s}"]]).reshape(1, -1)
        kp[f"s{s}_wq"] = fl(P[f"wq{s}"])
        kp[f"s{s}_bq"] = P[f"bq{s}"].reshape(1, -1)
    return kp


def _ref_conv(u, w, b, axis):
    """'same' 1-D conv of [B, Cin, T, H, W] along `axis` (pure-JAX f32 reference)."""
    K = w.shape[0]
    pad = K // 2
    L = u.shape[axis]
    pads = [(0, 0)] * 5
    pads[axis] = (pad, pad)
    up = jnp.pad(u, pads)
    out = None
    for t in range(K):
        sl = [slice(None)] * 5
        sl[axis] = slice(t, t + L)
        contrib = jnp.einsum("bcthw,co->bothw", up[tuple(sl)], w[t])
        out = contrib if out is None else out + contrib
    return out + b.reshape(1, -1, 1, 1, 1)


def reference(h, x, P):
    """Pure-JAX f32 reference mirroring the PyTorch module exactly (exact GELU)."""
    h = h.astype(jnp.float32)
    x = x.astype(jnp.float32)
    gelu = lambda t: 0.5 * t * (1.0 + lax.erf(t * _SQRT1_2))
    sig = lambda t: 1.0 / (1.0 + jnp.exp(-t))

    hx = jnp.concatenate([h, x], axis=1)     # stage 1: convs along W (axis 4)
    z = sig(_ref_conv(gelu(_ref_conv(hx, P["wz1a"], P["bz1a"], 4)), P["wz1b"], P["bz1b"], 4))
    r = sig(_ref_conv(gelu(_ref_conv(hx, P["wr1a"], P["br1a"], 4)), P["wr1b"], P["br1b"], 4))
    q = jnp.tanh(_ref_conv(jnp.concatenate([r * h, x], axis=1), P["wq1"], P["bq1"], 4))
    h = (1.0 - z) * h + z * q

    for s, axis in ((2, 3), (3, 2)):         # stage 2: along H, stage 3: along T
        hx = jnp.concatenate([h, x], axis=1)
        z = sig(_ref_conv(hx, P[f"wz{s}"], P[f"bz{s}"], axis))
        r = sig(_ref_conv(hx, P[f"wr{s}"], P[f"br{s}"], axis))
        q = jnp.tanh(_ref_conv(jnp.concatenate([r * h, x], axis=1), P[f"wq{s}"], P[f"bq{s}"], axis))
        h = (1.0 - z) * h + z * q
    return h


if __name__ == "__main__":
    # Small but structure-consistent config (real model: C=128, D=320).
    B, C, D, T, H, W = 2, 16, 24, 4, 8, 8

    key = jax.random.PRNGKey(0)
    kh, kx, kparam = jax.random.split(key, 3)
    h0 = jax.random.normal(kh, (B, C, T, H, W), jnp.float32)
    x0 = jax.random.normal(kx, (B, D, T, H, W), jnp.float32)
    P = make_params(kparam, C, D)
    KP = prep_kernel_params(P, C)

    out = sk_sep_conv_gru3d(h0, x0, KP, block_rows=512)
    out = jax.block_until_ready(out)

    ref = jax.block_until_ready(reference(h0, x0, P))
    assert out.shape == h0.shape and out.dtype == h0.dtype
    # bf16 matmul operands + approx reciprocals => loosened tolerance vs the
    # exact f32 reference; real bugs (wrong taps/shifts/weights) are O(1).
    err_max = float(jnp.max(jnp.abs(out - ref)))
    err_mean = float(jnp.mean(jnp.abs(out - ref)))
    assert err_max < 1e-1 and err_mean < 1e-2, (err_max, err_mean)

    print("KERNEL_OK")
</pallas_src>

<mosaic_0001>
module attributes {stable_mosaic.version = 11 : i64} {
  func.func @_gru_stage1_kernel(%arg0: i32, %arg1: memref<256x16xf32, #tpu.memory_space<vmem>>, %arg2: memref<256x24xf32, #tpu.memory_space<vmem>>, %arg3: memref<40x480xbf16, #tpu.memory_space<vmem>>, %arg4: memref<1x32xf32, #tpu.memory_space<vmem>>, %arg5: memref<32x160xbf16, #tpu.memory_space<vmem>>, %arg6: memref<1x32xf32, #tpu.memory_space<vmem>>, %arg7: memref<40x80xbf16, #tpu.memory_space<vmem>>, %arg8: memref<1x16xf32, #tpu.memory_space<vmem>>, %arg9: memref<256x16xf32, #tpu.memory_space<vmem>>) attributes {dimension_semantics = [#tpu.dimension_semantics<parallel>], iteration_bounds = array<i64: 2>, scalar_prefetch = 0 : i64, scratch_operands = 0 : i64, tpu.core_type = #tpu.core_type<tc>, window_params = [{transform_indices = @transform_0, window_bounds = array<i64: 256, 16>}, {transform_indices = @transform_1, window_bounds = array<i64: 256, 24>}, {pipeline_mode = #tpu.pipeline_mode<synchronous>, transform_indices = @transform_2, window_bounds = array<i64: 40, 480>}, {pipeline_mode = #tpu.pipeline_mode<synchronous>, transform_indices = @transform_3, window_bounds = array<i64: 1, 32>}, {pipeline_mode = #tpu.pipeline_mode<synchronous>, transform_indices = @transform_4, window_bounds = array<i64: 32, 160>}, {pipeline_mode = #tpu.pipeline_mode<synchronous>, transform_indices = @transform_5, window_bounds = array<i64: 1, 32>}, {pipeline_mode = #tpu.pipeline_mode<synchronous>, transform_indices = @transform_6, window_bounds = array<i64: 40, 80>}, {pipeline_mode = #tpu.pipeline_mode<synchronous>, transform_indices = @transform_7, window_bounds = array<i64: 1, 16>}, {transform_indices = @transform_8, window_bounds = array<i64: 256, 16>}]} {
    %0 = tpu.iota {dimensions = array<i32: 0>} : vector<256x1xi32>
    %c8_i32 = arith.constant 8 : i32
    %c0_i32 = arith.constant 0 : i32
    %1 = arith.cmpi eq, %c8_i32, %c0_i32 : i32
    %c1_i32 = arith.constant 1 : i32
    %2 = arith.select %1, %c1_i32, %c8_i32 : i32
    %3 = vector.broadcast %2 : i32 to vector<256x1xi32>
    %4 = arith.remsi %0, %3 : vector<256x1xi32>
    %c0_i32_0 = arith.constant 0 : i32
    %5 = vector.broadcast %c0_i32_0 : i32 to vector<256x1xi32>
    %6 = arith.cmpi ne, %4, %5 : vector<256x1xi32>
    %c0_i32_1 = arith.constant 0 : i32
    %7 = vector.broadcast %c0_i32_1 : i32 to vector<256x1xi32>
    %8 = arith.cmpi slt, %4, %7 : vector<256x1xi32>
    %c0_i32_2 = arith.constant 0 : i32
    %9 = arith.cmpi slt, %2, %c0_i32_2 : i32
    %10 = vector.broadcast %9 : i1 to vector<256x1xi1>
    %11 = vector.broadcast %10 : vector<256x1xi1> to vector<256x1xi1>
    %12 = arith.xori %8, %11 : vector<256x1xi1>
    %13 = arith.andi %12, %6 : vector<256x1xi1>
    %14 = vector.broadcast %2 : i32 to vector<256x1xi32>
    %15 = arith.addi %4, %14 : vector<256x1xi32>
    %16 = arith.select %13, %15, %4 : vector<256x1xi1>, vector<256x1xi32>
    %c0 = arith.constant 0 : index
    %c0_3 = arith.constant 0 : index
    %17 = vector.load %arg1[%c0, %c0_3] : memref<256x16xf32, #tpu.memory_space<vmem>>, vector<256x16xf32>
    %c0_4 = arith.constant 0 : index
    %c0_5 = arith.constant 0 : index
    %18 = vector.load %arg2[%c0_4, %c0_5] : memref<256x24xf32, #tpu.memory_space<vmem>>, vector<256x24xf32>
    %19 = arith.truncf %18 : vector<256x24xf32> to vector<256x24xbf16>
    %20 = arith.truncf %17 : vector<256x16xf32> to vector<256x16xbf16>
    %21 = tpu.concatenate %20, %19 in 1 : vector<256x16xbf16>, vector<256x24xbf16> -> vector<256x40xbf16>
    %c0_6 = arith.constant 0 : index
    %c0_7 = arith.constant 0 : index
    %22 = vector.load %arg3[%c0_6, %c0_7] : memref<40x480xbf16, #tpu.memory_space<vmem>>, vector<40x480xbf16>
    %cst = arith.constant dense<0.000000e+00> : vector<256x480xf32>
    %23 = tpu.matmul %21, %22, %cst {dimension_numbers = #tpu.dot_dimension_numbers<[1], [0], [0], [1], [0, 0, 1, 1], [], []>} : vector<256x40xbf16>, vector<40x480xbf16>, vector<256x480xf32> -> vector<256x480xf32>
    %24 = vector.extract_strided_slice %23 {offsets = [0, 224], sizes = [256, 32], strides = [1, 1]} : vector<256x480xf32> to vector<256x32xf32>
    %c0_8 = arith.constant 0 : index
    %c0_9 = arith.constant 0 : index
    %25 = vector.load %arg4[%c0_8, %c0_9] : memref<1x32xf32, #tpu.memory_space<vmem>>, vector<1x32xf32>
    %26 = vector.broadcast %25 : vector<1x32xf32> to vector<256x32xf32>
    %27 = arith.addf %24, %26 : vector<256x32xf32>
    %28 = vector.extract_strided_slice %23 {offsets = [0, 0], sizes = [256, 32], strides = [1, 1]} : vector<256x480xf32> to vector<256x32xf32>
    %c7_i32 = arith.constant 7 : i32
    %29 = tpu.dynamic_rotate %28 by %c7_i32 dim 0 : vector<256x32xf32>, i32 -> vector<256x32xf32>
    %c7_i32_10 = arith.constant 7 : i32
    %30 = vector.broadcast %c7_i32_10 : i32 to vector<256x1xi32>
    %31 = arith.cmpi sge, %16, %30 : vector<256x1xi32>
    %32 = arith.extui %31 : vector<256x1xi1> to vector<256x1xi32>
    %33 = arith.sitofp %32 : vector<256x1xi32> to vector<256x1xf32>
    %34 = vector.broadcast %33 : vector<256x1xf32> to vector<256x32xf32>
    %35 = arith.mulf %29, %34 : vector<256x32xf32>
    %36 = arith.addf %27, %35 : vector<256x32xf32>
    %37 = vector.extract_strided_slice %23 {offsets = [0, 32], sizes = [256, 32], strides = [1, 1]} : vector<256x480xf32> to vector<256x32xf32>
    %c6_i32 = arith.constant 6 : i32
    %38 = tpu.dynamic_rotate %37 by %c6_i32 dim 0 : vector<256x32xf32>, i32 -> vector<256x32xf32>
    %c6_i32_11 = arith.constant 6 : i32
    %39 = vector.broadcast %c6_i32_11 : i32 to vector<256x1xi32>
    %40 = arith.cmpi sge, %16, %39 : vector<256x1xi32>
    %41 = arith.extui %40 : vector<256x1xi1> to vector<256x1xi32>
    %42 = arith.sitofp %41 : vector<256x1xi32> to vector<256x1xf32>
    %43 = vector.broadcast %42 : vector<256x1xf32> to vector<256x32xf32>
    %44 = arith.mulf %38, %43 : vector<256x32xf32>
    %45 = arith.addf %36, %44 : vector<256x32xf32>
    %46 = vector.extract_strided_slice %23 {offsets = [0, 64], sizes = [256, 32], strides = [1, 1]} : vector<256x480xf32> to vector<256x32xf32>
    %c5_i32 = arith.constant 5 : i32
    %47 = tpu.dynamic_rotate %46 by %c5_i32 dim 0 : vector<256x32xf32>, i32 -> vector<256x32xf32>
    %c5_i32_12 = arith.constant 5 : i32
    %48 = vector.broadcast %c5_i32_12 : i32 to vector<256x1xi32>
    %49 = arith.cmpi sge, %16, %48 : vector<256x1xi32>
    %50 = arith.extui %49 : vector<256x1xi1> to vector<256x1xi32>
    %51 = arith.sitofp %50 : vector<256x1xi32> to vector<256x1xf32>
    %52 = vector.broadcast %51 : vector<256x1xf32> to vector<256x32xf32>
    %53 = arith.mulf %47, %52 : vector<256x32xf32>
    %54 = arith.addf %45, %53 : vector<256x32xf32>
    %55 = vector.extract_strided_slice %23 {offsets = [0, 96], sizes = [256, 32], strides = [1, 1]} : vector<256x480xf32> to vector<256x32xf32>
    %c4_i32 = arith.constant 4 : i32
    %56 = tpu.dynamic_rotate %55 by %c4_i32 dim 0 : vector<256x32xf32>, i32 -> vector<256x32xf32>
    %c4_i32_13 = arith.constant 4 : i32
    %57 = vector.broadcast %c4_i32_13 : i32 to vector<256x1xi32>
    %58 = arith.cmpi sge, %16, %57 : vector<256x1xi32>
    %59 = arith.extui %58 : vector<256x1xi1> to vector<256x1xi32>
    %60 = arith.sitofp %59 : vector<256x1xi32> to vector<256x1xf32>
    %61 = vector.broadcast %60 : vector<256x1xf32> to vector<256x32xf32>
    %62 = arith.mulf %56, %61 : vector<256x32xf32>
    %63 = arith.addf %54, %62 : vector<256x32xf32>
    %64 = vector.extract_strided_slice %23 {offsets = [0, 128], sizes = [256, 32], strides = [1, 1]} : vector<256x480xf32> to vector<256x32xf32>
    %c3_i32 = arith.constant 3 : i32
    %65 = tpu.dynamic_rotate %64 by %c3_i32 dim 0 : vector<256x32xf32>, i32 -> vector<256x32xf32>
    %c3_i32_14 = arith.constant 3 : i32
    %66 = vector.broadcast %c3_i32_14 : i32 to vector<256x1xi32>
    %67 = arith.cmpi sge, %16, %66 : vector<256x1xi32>
    %68 = arith.extui %67 : vector<256x1xi1> to vector<256x1xi32>
    %69 = arith.sitofp %68 : vector<256x1xi32> to vector<256x1xf32>
    %70 = vector.broadcast %69 : vector<256x1xf32> to vector<256x32xf32>
    %71 = arith.mulf %65, %70 : vector<256x32xf32>
    %72 = arith.addf %63, %71 : vector<256x32xf32>
    %73 = vector.extract_strided_slice %23 {offsets = [0, 160], sizes = [256, 32], strides = [1, 1]} : vector<256x480xf32> to vector<256x32xf32>
    %c2_i32 = arith.constant 2 : i32
    %74 = tpu.dynamic_rotate %73 by %c2_i32 dim 0 : vector<256x32xf32>, i32 -> vector<256x32xf32>
    %c2_i32_15 = arith.constant 2 : i32
    %75 = vector.broadcast %c2_i32_15 : i32 to vector<256x1xi32>
    %76 = arith.cmpi sge, %16, %75 : vector<256x1xi32>
    %77 = arith.extui %76 : vector<256x1xi1> to vector<256x1xi32>
    %78 = arith.sitofp %77 : vector<256x1xi32> to vector<256x1xf32>
    %79 = vector.broadcast %78 : vector<256x1xf32> to vector<256x32xf32>
    %80 = arith.mulf %74, %79 : vector<256x32xf32>
    %81 = arith.addf %72, %80 : vector<256x32xf32>
    %82 = vector.extract_strided_slice %23 {offsets = [0, 192], sizes = [256, 32], strides = [1, 1]} : vector<256x480xf32> to vector<256x32xf32>
    %c1_i32_16 = arith.constant 1 : i32
    %83 = tpu.dynamic_rotate %82 by %c1_i32_16 dim 0 : vector<256x32xf32>, i32 -> vector<256x32xf32>
    %c1_i32_17 = arith.constant 1 : i32
    %84 = vector.broadcast %c1_i32_17 : i32 to vector<256x1xi32>
    %85 = arith.cmpi sge, %16, %84 : vector<256x1xi32>
    %86 = arith.extui %85 : vector<256x1xi1> to vector<256x1xi32>
    %87 = arith.sitofp %86 : vector<256x1xi32> to vector<256x1xf32>
    %88 = vector.broadcast %87 : vector<256x1xf32> to vector<256x32xf32>
    %89 = arith.mulf %83, %88 : vector<256x32xf32>
    %90 = arith.addf %81, %89 : vector<256x32xf32>
    %91 = vector.extract_strided_slice %23 {offsets = [0, 256], sizes = [256, 32], strides = [1, 1]} : vector<256x480xf32> to vector<256x32xf32>
    %c255_i32 = arith.constant 255 : i32
    %92 = tpu.dynamic_rotate %91 by %c255_i32 dim 0 : vector<256x32xf32>, i32 -> vector<256x32xf32>
    %c7_i32_18 = arith.constant 7 : i32
    %93 = vector.broadcast %c7_i32_18 : i32 to vector<256x1xi32>
    %94 = arith.cmpi slt, %16, %93 : vector<256x1xi32>
    %95 = arith.extui %94 : vector<256x1xi1> to vector<256x1xi32>
    %96 = arith.sitofp %95 : vector<256x1xi32> to vector<256x1xf32>
    %97 = vector.broadcast %96 : vector<256x1xf32> to vector<256x32xf32>
    %98 = arith.mulf %92, %97 : vector<256x32xf32>
    %99 = arith.addf %90, %98 : vector<256x32xf32>
    %100 = vector.extract_strided_slice %23 {offsets = [0, 288], sizes = [256, 32], strides = [1, 1]} : vector<256x480xf32> to vector<256x32xf32>
    %c254_i32 = arith.constant 254 : i32
    %101 = tpu.dynamic_rotate %100 by %c254_i32 dim 0 : vector<256x32xf32>, i32 -> vector<256x32xf32>
    %c6_i32_19 = arith.constant 6 : i32
    %102 = vector.broadcast %c6_i32_19 : i32 to vector<256x1xi32>
    %103 = arith.cmpi slt, %16, %102 : vector<256x1xi32>
    %104 = arith.extui %103 : vector<256x1xi1> to vector<256x1xi32>
    %105 = arith.sitofp %104 : vector<256x1xi32> to vector<256x1xf32>
    %106 = vector.broadcast %105 : vector<256x1xf32> to vector<256x32xf32>
    %107 = arith.mulf %101, %106 : vector<256x32xf32>
    %108 = arith.addf %99, %107 : vector<256x32xf32>
    %109 = vector.extract_strided_slice %23 {offsets = [0, 320], sizes = [256, 32], strides = [1, 1]} : vector<256x480xf32> to vector<256x32xf32>
    %c253_i32 = arith.constant 253 : i32
    %110 = tpu.dynamic_rotate %109 by %c253_i32 dim 0 : vector<256x32xf32>, i32 -> vector<256x32xf32>
    %c5_i32_20 = arith.constant 5 : i32
    %111 = vector.broadcast %c5_i32_20 : i32 to vector<256x1xi32>
    %112 = arith.cmpi slt, %16, %111 : vector<256x1xi32>
    %113 = arith.extui %112 : vector<256x1xi1> to vector<256x1xi32>
    %114 = arith.sitofp %113 : vector<256x1xi32> to vector<256x1xf32>
    %115 = vector.broadcast %114 : vector<256x1xf32> to vector<256x32xf32>
    %116 = arith.mulf %110, %115 : vector<256x32xf32>
    %117 = arith.addf %108, %116 : vector<256x32xf32>
    %118 = vector.extract_strided_slice %23 {offsets = [0, 352], sizes = [256, 32], strides = [1, 1]} : vector<256x480xf32> to vector<256x32xf32>
    %c252_i32 = arith.constant 252 : i32
    %119 = tpu.dynamic_rotate %118 by %c252_i32 dim 0 : vector<256x32xf32>, i32 -> vector<256x32xf32>
    %c4_i32_21 = arith.constant 4 : i32
    %120 = vector.broadcast %c4_i32_21 : i32 to vector<256x1xi32>
    %121 = arith.cmpi slt, %16, %120 : vector<256x1xi32>
    %122 = arith.extui %121 : vector<256x1xi1> to vector<256x1xi32>
    %123 = arith.sitofp %122 : vector<256x1xi32> to vector<256x1xf32>
    %124 = vector.broadcast %123 : vector<256x1xf32> to vector<256x32xf32>
    %125 = arith.mulf %119, %124 : vector<256x32xf32>
    %126 = arith.addf %117, %125 : vector<256x32xf32>
    %127 = vector.extract_strided_slice %23 {offsets = [0, 384], sizes = [256, 32], strides = [1, 1]} : vector<256x480xf32> to vector<256x32xf32>
    %c251_i32 = arith.constant 251 : i32
    %128 = tpu.dynamic_rotate %127 by %c251_i32 dim 0 : vector<256x32xf32>, i32 -> vector<256x32xf32>
    %c3_i32_22 = arith.constant 3 : i32
    %129 = vector.broadcast %c3_i32_22 : i32 to vector<256x1xi32>
    %130 = arith.cmpi slt, %16, %129 : vector<256x1xi32>
    %131 = arith.extui %130 : vector<256x1xi1> to vector<256x1xi32>
    %132 = arith.sitofp %131 : vector<256x1xi32> to vector<256x1xf32>
    %133 = vector.broadcast %132 : vector<256x1xf32> to vector<256x32xf32>
    %134 = arith.mulf %128, %133 : vector<256x32xf32>
    %135 = arith.addf %126, %134 : vector<256x32xf32>
    %136 = vector.extract_strided_slice %23 {offsets = [0, 416], sizes = [256, 32], strides = [1, 1]} : vector<256x480xf32> to vector<256x32xf32>
    %c250_i32 = arith.constant 250 : i32
    %137 = tpu.dynamic_rotate %136 by %c250_i32 dim 0 : vector<256x32xf32>, i32 -> vector<256x32xf32>
    %c2_i32_23 = arith.constant 2 : i32
    %138 = vector.broadcast %c2_i32_23 : i32 to vector<256x1xi32>
    %139 = arith.cmpi slt, %16, %138 : vector<256x1xi32>
    %140 = arith.extui %139 : vector<256x1xi1> to vector<256x1xi32>
    %141 = arith.sitofp %140 : vector<256x1xi32> to vector<256x1xf32>
    %142 = vector.broadcast %141 : vector<256x1xf32> to vector<256x32xf32>
    %143 = arith.mulf %137, %142 : vector<256x32xf32>
    %144 = arith.addf %135, %143 : vector<256x32xf32>
    %145 = vector.extract_strided_slice %23 {offsets = [0, 448], sizes = [256, 32], strides = [1, 1]} : vector<256x480xf32> to vector<256x32xf32>
    %c249_i32 = arith.constant 249 : i32
    %146 = tpu.dynamic_rotate %145 by %c249_i32 dim 0 : vector<256x32xf32>, i32 -> vector<256x32xf32>
    %c1_i32_24 = arith.constant 1 : i32
    %147 = vector.broadcast %c1_i32_24 : i32 to vector<256x1xi32>
    %148 = arith.cmpi slt, %16, %147 : vector<256x1xi32>
    %149 = arith.extui %148 : vector<256x1xi1> to vector<256x1xi32>
    %150 = arith.sitofp %149 : vector<256x1xi32> to vector<256x1xf32>
    %151 = vector.broadcast %150 : vector<256x1xf32> to vector<256x32xf32>
    %152 = arith.mulf %146, %151 : vector<256x32xf32>
    %153 = arith.addf %144, %152 : vector<256x32xf32>
    %cst_25 = arith.constant 5.000000e-01 : f32
    %154 = vector.broadcast %cst_25 : f32 to vector<256x32xf32>
    %155 = arith.mulf %154, %153 : vector<256x32xf32>
    %cst_26 = arith.constant 0.707106769 : f32
    %156 = vector.broadcast %cst_26 : f32 to vector<256x32xf32>
    %157 = arith.mulf %153, %156 : vector<256x32xf32>
    %158 = math.absf %157 : vector<256x32xf32>
    %cst_27 = arith.constant 0.327591091 : f32
    %159 = vector.broadcast %cst_27 : f32 to vector<256x32xf32>
    %160 = arith.mulf %159, %158 : vector<256x32xf32>
    %cst_28 = arith.constant 1.000000e+00 : f32
    %161 = vector.broadcast %cst_28 : f32 to vector<256x32xf32>
    %162 = arith.addf %161, %160 : vector<256x32xf32>
    %163 = tpu.reciprocal %162 {approx = true} : vector<256x32xf32> -> vector<256x32xf32>
    %cst_29 = arith.constant 1.06140542 : f32
    %164 = vector.broadcast %cst_29 : f32 to vector<256x32xf32>
    %165 = arith.mulf %164, %163 : vector<256x32xf32>
    %cst_30 = arith.constant -1.45315206 : f32
    %166 = vector.broadcast %cst_30 : f32 to vector<256x32xf32>
    %167 = arith.addf %165, %166 : vector<256x32xf32>
    %168 = arith.mulf %167, %163 : vector<256x32xf32>
    %cst_31 = arith.constant 1.42141378 : f32
    %169 = vector.broadcast %cst_31 : f32 to vector<256x32xf32>
    %170 = arith.addf %168, %169 : vector<256x32xf32>
    %171 = arith.mulf %170, %163 : vector<256x32xf32>
    %cst_32 = arith.constant -0.284496725 : f32
    %172 = vector.broadcast %cst_32 : f32 to vector<256x32xf32>
    %173 = arith.addf %171, %172 : vector<256x32xf32>
    %174 = arith.mulf %173, %163 : vector<256x32xf32>
    %cst_33 = arith.constant 0.254829586 : f32
    %175 = vector.broadcast %cst_33 : f32 to vector<256x32xf32>
    %176 = arith.addf %174, %175 : vector<256x32xf32>
    %177 = arith.mulf %176, %163 : vector<256x32xf32>
    %cst_34 = arith.constant 0.000000e+00 : f32
    %178 = vector.broadcast %cst_34 : f32 to vector<256x32xf32>
    %179 = arith.subf %178, %158 : vector<256x32xf32>
    %180 = arith.mulf %179, %158 : vector<256x32xf32>
    %181 = math.exp %180 : vector<256x32xf32>
    %182 = arith.mulf %177, %181 : vector<256x32xf32>
    %cst_35 = arith.constant 1.000000e+00 : f32
    %183 = vector.broadcast %cst_35 : f32 to vector<256x32xf32>
    %184 = arith.subf %183, %182 : vector<256x32xf32>
    %cst_36 = arith.constant 0.000000e+00 : f32
    %185 = vector.broadcast %cst_36 : f32 to vector<256x32xf32>
    %186 = arith.cmpf oge, %157, %185 : vector<256x32xf32>
    %cst_37 = arith.constant 0.000000e+00 : f32
    %187 = vector.broadcast %cst_37 : f32 to vector<256x32xf32>
    %188 = arith.subf %187, %184 : vector<256x32xf32>
    %189 = arith.select %186, %184, %188 : vector<256x32xi1>, vector<256x32xf32>
    %cst_38 = arith.constant 1.000000e+00 : f32
    %190 = vector.broadcast %cst_38 : f32 to vector<256x32xf32>
    %191 = arith.addf %190, %189 : vector<256x32xf32>
    %192 = arith.mulf %155, %191 : vector<256x32xf32>
    %193 = arith.truncf %192 : vector<256x32xf32> to vector<256x32xbf16>
    %c0_39 = arith.constant 0 : index
    %c0_40 = arith.constant 0 : index
    %194 = vector.load %arg5[%c0_39, %c0_40] : memref<32x160xbf16, #tpu.memory_space<vmem>>, vector<32x160xbf16>
    %cst_41 = arith.constant dense<0.000000e+00> : vector<256x160xf32>
    %195 = tpu.matmul %193, %194, %cst_41 {dimension_numbers = #tpu.dot_dimension_numbers<[1], [0], [0], [1], [0, 0, 1, 1], [], []>} : vector<256x32xbf16>, vector<32x160xbf16>, vector<256x160xf32> -> vector<256x160xf32>
    %196 = vector.extract_strided_slice %195 {offsets = [0, 64], sizes = [256, 32], strides = [1, 1]} : vector<256x160xf32> to vector<256x32xf32>
    %c0_42 = arith.constant 0 : index
    %c0_43 = arith.constant 0 : index
    %197 = vector.load %arg6[%c0_42, %c0_43] : memref<1x32xf32, #tpu.memory_space<vmem>>, vector<1x32xf32>
    %198 = vector.broadcast %197 : vector<1x32xf32> to vector<256x32xf32>
    %199 = arith.addf %196, %198 : vector<256x32xf32>
    %200 = vector.extract_strided_slice %195 {offsets = [0, 0], sizes = [256, 32], strides = [1, 1]} : vector<256x160xf32> to vector<256x32xf32>
    %c2_i32_44 = arith.constant 2 : i32
    %201 = tpu.dynamic_rotate %200 by %c2_i32_44 dim 0 : vector<256x32xf32>, i32 -> vector<256x32xf32>
    %c2_i32_45 = arith.constant 2 : i32
    %202 = vector.broadcast %c2_i32_45 : i32 to vector<256x1xi32>
    %203 = arith.cmpi sge, %16, %202 : vector<256x1xi32>
    %204 = arith.extui %203 : vector<256x1xi1> to vector<256x1xi32>
    %205 = arith.sitofp %204 : vector<256x1xi32> to vector<256x1xf32>
    %206 = vector.broadcast %205 : vector<256x1xf32> to vector<256x32xf32>
    %207 = arith.mulf %201, %206 : vector<256x32xf32>
    %208 = arith.addf %199, %207 : vector<256x32xf32>
    %209 = vector.extract_strided_slice %195 {offsets = [0, 32], sizes = [256, 32], strides = [1, 1]} : vector<256x160xf32> to vector<256x32xf32>
    %c1_i32_46 = arith.constant 1 : i32
    %210 = tpu.dynamic_rotate %209 by %c1_i32_46 dim 0 : vector<256x32xf32>, i32 -> vector<256x32xf32>
    %c1_i32_47 = arith.constant 1 : i32
    %211 = vector.broadcast %c1_i32_47 : i32 to vector<256x1xi32>
    %212 = arith.cmpi sge, %16, %211 : vector<256x1xi32>
    %213 = arith.extui %212 : vector<256x1xi1> to vector<256x1xi32>
    %214 = arith.sitofp %213 : vector<256x1xi32> to vector<256x1xf32>
    %215 = vector.broadcast %214 : vector<256x1xf32> to vector<256x32xf32>
    %216 = arith.mulf %210, %215 : vector<256x32xf32>
    %217 = arith.addf %208, %216 : vector<256x32xf32>
    %218 = vector.extract_strided_slice %195 {offsets = [0, 96], sizes = [256, 32], strides = [1, 1]} : vector<256x160xf32> to vector<256x32xf32>
    %c255_i32_48 = arith.constant 255 : i32
    %219 = tpu.dynamic_rotate %218 by %c255_i32_48 dim 0 : vector<256x32xf32>, i32 -> vector<256x32xf32>
    %c7_i32_49 = arith.constant 7 : i32
    %220 = vector.broadcast %c7_i32_49 : i32 to vector<256x1xi32>
    %221 = arith.cmpi slt, %16, %220 : vector<256x1xi32>
    %222 = arith.extui %221 : vector<256x1xi1> to vector<256x1xi32>
    %223 = arith.sitofp %222 : vector<256x1xi32> to vector<256x1xf32>
    %224 = vector.broadcast %223 : vector<256x1xf32> to vector<256x32xf32>
    %225 = arith.mulf %219, %224 : vector<256x32xf32>
    %226 = arith.addf %217, %225 : vector<256x32xf32>
    %227 = vector.extract_strided_slice %195 {offsets = [0, 128], sizes = [256, 32], strides = [1, 1]} : vector<256x160xf32> to vector<256x32xf32>
    %c254_i32_50 = arith.constant 254 : i32
    %228 = tpu.dynamic_rotate %227 by %c254_i32_50 dim 0 : vector<256x32xf32>, i32 -> vector<256x32xf32>
    %c6_i32_51 = arith.constant 6 : i32
    %229 = vector.broadcast %c6_i32_51 : i32 to vector<256x1xi32>
    %230 = arith.cmpi slt, %16, %229 : vector<256x1xi32>
    %231 = arith.extui %230 : vector<256x1xi1> to vector<256x1xi32>
    %232 = arith.sitofp %231 : vector<256x1xi32> to vector<256x1xf32>
    %233 = vector.broadcast %232 : vector<256x1xf32> to vector<256x32xf32>
    %234 = arith.mulf %228, %233 : vector<256x32xf32>
    %235 = arith.addf %226, %234 : vector<256x32xf32>
    %236 = vector.extract_strided_slice %235 {offsets = [0, 0], sizes = [256, 16], strides = [1, 1]} : vector<256x32xf32> to vector<256x16xf32>
    %cst_52 = arith.constant 0.000000e+00 : f32
    %237 = vector.broadcast %cst_52 : f32 to vector<256x16xf32>
    %238 = arith.subf %237, %236 : vector<256x16xf32>
    %239 = math.exp %238 : vector<256x16xf32>
    %cst_53 = arith.constant 1.000000e+00 : f32
    %240 = vector.broadcast %cst_53 : f32 to vector<256x16xf32>
    %241 = arith.addf %240, %239 : vector<256x16xf32>
    %242 = tpu.reciprocal %241 {approx = true} : vector<256x16xf32> -> vector<256x16xf32>
    %243 = vector.extract_strided_slice %235 {offsets = [0, 16], sizes = [256, 16], strides = [1, 1]} : vector<256x32xf32> to vector<256x16xf32>
    %cst_54 = arith.constant 0.000000e+00 : f32
    %244 = vector.broadcast %cst_54 : f32 to vector<256x16xf32>
    %245 = arith.subf %244, %243 : vector<256x16xf32>
    %246 = math.exp %245 : vector<256x16xf32>
    %cst_55 = arith.constant 1.000000e+00 : f32
    %247 = vector.broadcast %cst_55 : f32 to vector<256x16xf32>
    %248 = arith.addf %247, %246 : vector<256x16xf32>
    %249 = tpu.reciprocal %248 {approx = true} : vector<256x16xf32> -> vector<256x16xf32>
    %250 = arith.mulf %249, %17 : vector<256x16xf32>
    %251 = arith.truncf %250 : vector<256x16xf32> to vector<256x16xbf16>
    %252 = tpu.concatenate %251, %19 in 1 : vector<256x16xbf16>, vector<256x24xbf16> -> vector<256x40xbf16>
    %c0_56 = arith.constant 0 : index
    %c0_57 = arith.constant 0 : index
    %253 = vector.load %arg7[%c0_56, %c0_57] : memref<40x80xbf16, #tpu.memory_space<vmem>>, vector<40x80xbf16>
    %cst_58 = arith.constant dense<0.000000e+00> : vector<256x80xf32>
    %254 = tpu.matmul %252, %253, %cst_58 {dimension_numbers = #tpu.dot_dimension_numbers<[1], [0], [0], [1], [0, 0, 1, 1], [], []>} : vector<256x40xbf16>, vector<40x80xbf16>, vector<256x80xf32> -> vector<256x80xf32>
    %255 = vector.extract_strided_slice %254 {offsets = [0, 32], sizes = [256, 16], strides = [1, 1]} : vector<256x80xf32> to vector<256x16xf32>
    %c0_59 = arith.constant 0 : index
    %c0_60 = arith.constant 0 : index
    %256 = vector.load %arg8[%c0_59, %c0_60] : memref<1x16xf32, #tpu.memory_space<vmem>>, vector<1x16xf32>
    %257 = vector.broadcast %256 : vector<1x16xf32> to vector<256x16xf32>
    %258 = arith.addf %255, %257 : vector<256x16xf32>
    %259 = vector.extract_strided_slice %254 {offsets = [0, 0], sizes = [256, 16], strides = [1, 1]} : vector<256x80xf32> to vector<256x16xf32>
    %c2_i32_61 = arith.constant 2 : i32
    %260 = tpu.dynamic_rotate %259 by %c2_i32_61 dim 0 : vector<256x16xf32>, i32 -> vector<256x16xf32>
    %c2_i32_62 = arith.constant 2 : i32
    %261 = vector.broadcast %c2_i32_62 : i32 to vector<256x1xi32>
    %262 = arith.cmpi sge, %16, %261 : vector<256x1xi32>
    %263 = arith.extui %262 : vector<256x1xi1> to vector<256x1xi32>
    %264 = arith.sitofp %263 : vector<256x1xi32> to vector<256x1xf32>
    %265 = vector.broadcast %264 : vector<256x1xf32> to vector<256x16xf32>
    %266 = arith.mulf %260, %265 : vector<256x16xf32>
    %267 = arith.addf %258, %266 : vector<256x16xf32>
    %268 = vector.extract_strided_slice %254 {offsets = [0, 16], sizes = [256, 16], strides = [1, 1]} : vector<256x80xf32> to vector<256x16xf32>
    %c1_i32_63 = arith.constant 1 : i32
    %269 = tpu.dynamic_rotate %268 by %c1_i32_63 dim 0 : vector<256x16xf32>, i32 -> vector<256x16xf32>
    %c1_i32_64 = arith.constant 1 : i32
    %270 = vector.broadcast %c1_i32_64 : i32 to vector<256x1xi32>
    %271 = arith.cmpi sge, %16, %270 : vector<256x1xi32>
    %272 = arith.extui %271 : vector<256x1xi1> to vector<256x1xi32>
    %273 = arith.sitofp %272 : vector<256x1xi32> to vector<256x1xf32>
    %274 = vector.broadcast %273 : vector<256x1xf32> to vector<256x16xf32>
    %275 = arith.mulf %269, %274 : vector<256x16xf32>
    %276 = arith.addf %267, %275 : vector<256x16xf32>
    %277 = vector.extract_strided_slice %254 {offsets = [0, 48], sizes = [256, 16], strides = [1, 1]} : vector<256x80xf32> to vector<256x16xf32>
    %c255_i32_65 = arith.constant 255 : i32
    %278 = tpu.dynamic_rotate %277 by %c255_i32_65 dim 0 : vector<256x16xf32>, i32 -> vector<256x16xf32>
    %c7_i32_66 = arith.constant 7 : i32
    %279 = vector.broadcast %c7_i32_66 : i32 to vector<256x1xi32>
    %280 = arith.cmpi slt, %16, %279 : vector<256x1xi32>
    %281 = arith.extui %280 : vector<256x1xi1> to vector<256x1xi32>
    %282 = arith.sitofp %281 : vector<256x1xi32> to vector<256x1xf32>
    %283 = vector.broadcast %282 : vector<256x1xf32> to vector<256x16xf32>
    %284 = arith.mulf %278, %283 : vector<256x16xf32>
    %285 = arith.addf %276, %284 : vector<256x16xf32>
    %286 = vector.extract_strided_slice %254 {offsets = [0, 64], sizes = [256, 16], strides = [1, 1]} : vector<256x80xf32> to vector<256x16xf32>
    %c254_i32_67 = arith.constant 254 : i32
    %287 = tpu.dynamic_rotate %286 by %c254_i32_67 dim 0 : vector<256x16xf32>, i32 -> vector<256x16xf32>
    %c6_i32_68 = arith.constant 6 : i32
    %288 = vector.broadcast %c6_i32_68 : i32 to vector<256x1xi32>
    %289 = arith.cmpi slt, %16, %288 : vector<256x1xi32>
    %290 = arith.extui %289 : vector<256x1xi1> to vector<256x1xi32>
    %291 = arith.sitofp %290 : vector<256x1xi32> to vector<256x1xf32>
    %292 = vector.broadcast %291 : vector<256x1xf32> to vector<256x16xf32>
    %293 = arith.mulf %287, %292 : vector<256x16xf32>
    %294 = arith.addf %285, %293 : vector<256x16xf32>
    %295 = math.tanh %294 : vector<256x16xf32>
    %cst_69 = arith.constant 1.000000e+00 : f32
    %296 = vector.broadcast %cst_69 : f32 to vector<256x16xf32>
    %297 = arith.subf %296, %242 : vector<256x16xf32>
    %298 = arith.mulf %297, %17 : vector<256x16xf32>
    %299 = arith.mulf %242, %295 : vector<256x16xf32>
    %300 = arith.addf %298, %299 : vector<256x16xf32>
    %c0_70 = arith.constant 0 : index
    %c0_71 = arith.constant 0 : index
    %301 = vector.load %arg9[%c0_70, %c0_71] : memref<256x16xf32, #tpu.memory_space<vmem>>, vector<256x16xf32>
    tpu.vector_store %arg9[%c0_70, %c0_71], %300 {strides = array<i32>} : memref<256x16xf32, #tpu.memory_space<vmem>>, vector<256x16xf32>,
    return
  }
  func.func @transform_0(%arg0: i32) -> (i32, i32) {
    %c0_i32 = arith.constant 0 : i32
    %c0_i32_0 = arith.constant 0 : i32
    return %arg0, %c0_i32 : i32, i32
  }
  func.func @transform_1(%arg0: i32) -> (i32, i32) {
    %c0_i32 = arith.constant 0 : i32
    %c0_i32_0 = arith.constant 0 : i32
    return %arg0, %c0_i32 : i32, i32
  }
  func.func @transform_2(%arg0: i32) -> (i32, i32) {
    %c0_i32 = arith.constant 0 : i32
    %c0_i32_0 = arith.constant 0 : i32
    %c0_i32_1 = arith.constant 0 : i32
    return %c0_i32, %c0_i32_0 : i32, i32
  }
  func.func @transform_3(%arg0: i32) -> (i32, i32) {
    %c0_i32 = arith.constant 0 : i32
    %c0_i32_0 = arith.constant 0 : i32
    %c0_i32_1 = arith.constant 0 : i32
    return %c0_i32, %c0_i32_0 : i32, i32
  }
  func.func @transform_4(%arg0: i32) -> (i32, i32) {
    %c0_i32 = arith.constant 0 : i32
    %c0_i32_0 = arith.constant 0 : i32
    %c0_i32_1 = arith.constant 0 : i32
    return %c0_i32, %c0_i32_0 : i32, i32
  }
  func.func @transform_5(%arg0: i32) -> (i32, i32) {
    %c0_i32 = arith.constant 0 : i32
    %c0_i32_0 = arith.constant 0 : i32
    %c0_i32_1 = arith.constant 0 : i32
    return %c0_i32, %c0_i32_0 : i32, i32
  }
  func.func @transform_6(%arg0: i32) -> (i32, i32) {
    %c0_i32 = arith.constant 0 : i32
    %c0_i32_0 = arith.constant 0 : i32
    %c0_i32_1 = arith.constant 0 : i32
    return %c0_i32, %c0_i32_0 : i32, i32
  }
  func.func @transform_7(%arg0: i32) -> (i32, i32) {
    %c0_i32 = arith.constant 0 : i32
    %c0_i32_0 = arith.constant 0 : i32
    %c0_i32_1 = arith.constant 0 : i32
    return %c0_i32, %c0_i32_0 : i32, i32
  }
  func.func @transform_8(%arg0: i32) -> (i32, i32) {
    %c0_i32 = arith.constant 0 : i32
    %c0_i32_0 = arith.constant 0 : i32
    return %arg0, %c0_i32 : i32, i32
  }
}

</mosaic_0001>

<llo_original>
// kernel: tpu_custom_call.1
$region0: #{tpu_custom_call.1}
  #allocation0 [shape = 'u32[]', space=smem, size = 0x4, offset = 0x4, fixed_abs, tag = 'smem constant byte address 0x4 - core index']
  #allocation1 [shape = 'u32[144,128]{1,0:T(1,128)}', space=vmem, size = 0x12000, scoped, tag = 'internal scratch']
  %s0 = inlined_call_operand.vmem [shape: f32[512,16], index: 0, kind: input, shape index: {}]
  %s1 = inlined_call_operand.vmem [shape: f32[512,24], index: 1, kind: input, shape index: {}]
  %s2 = inlined_call_operand.vmem [shape: bf16[40,480], index: 2, kind: input, shape index: {}]
  %s3 = inlined_call_operand.vmem [shape: f32[1,32], index: 3, kind: input, shape index: {}]
  %s4 = inlined_call_operand.vmem [shape: bf16[32,160], index: 4, kind: input, shape index: {}]
  %s5 = inlined_call_operand.vmem [shape: f32[1,32], index: 5, kind: input, shape index: {}]
  %s6 = inlined_call_operand.vmem [shape: bf16[40,80], index: 6, kind: input, shape index: {}]
  %s7 = inlined_call_operand.vmem [shape: f32[1,16], index: 7, kind: input, shape index: {}]
  %s8 = inlined_call_operand.vmem [shape: f32[512,16], index: 8, kind: output, shape index: {}]
  %s9 = sld [smem:[#allocation0]]
  $region65: #{tpu_custom_call.1} parent=0
    _
  %s11 = ssub.s32 1, %s9
  %s12 = scalar_select 0, %s11, %s9
  loop: start=0, step=1, limit=4
  $region2: #{tpu_custom_call.1} parent=0 // loop_pre_header
    _
  $region3: #{tpu_custom_call.1} parent=0 // loop_header
    %s14 = sphi 0, %s18
    %p15 = scmp.ge.s32.totalorder %s14, 4
    %s24 = sphi 0, %s26
    %s27 = sphi 0, %s24
    %s28 = sphi 0, %s27
    %s44 = sphi 0, %s28
    %s50 = sphi 0, %s52
    %s53 = sphi 0, %s50
    %s54 = sphi 0, %s53
    %s70 = sphi 0, %s54
    %s74 = sphi 0, %s74
    %s76 = sphi 0, %s74
    %s77 = sphi 0, %s76
    %s91 = sphi 0, %s77
    %s95 = sphi 0, %s95
    %s97 = sphi 0, %s95
    %s98 = sphi 0, %s97
    %s112 = sphi 0, %s98
    %s116 = sphi 0, %s116
    %s118 = sphi 0, %s116
    %s119 = sphi 0, %s118
    %s133 = sphi 0, %s119
    %s137 = sphi 0, %s137
    %s139 = sphi 0, %s137
    %s140 = sphi 0, %s139
    %s154 = sphi 0, %s140
    %s158 = sphi 0, %s158
    %s160 = sphi 0, %s158
    %s161 = sphi 0, %s160
    %s175 = sphi 0, %s161
    %s179 = sphi 0, %s179
    %s181 = sphi 0, %s179
    %s182 = sphi 0, %s181
    %s196 = sphi 0, %s182
    %s202 = sphi 0, %s204
    %s205 = sphi 0, %s202
    %s206 = sphi 0, %s205
    %s222 = sphi 0, %s206
  $region4: #{tpu_custom_call.1} parent=0 // loop_header_branch
    %17 = sbr.rel (%p15) target = $region8
  $region5: #{tpu_custom_call.1} parent=0 // loop_body
    %s19 = ssub.s32 %s14, 1
    %s20 = ssub.s32 %s14, 2
    %s21 = sadd.s32 %s14, 1
    %s22 = ssub.s32 %s14, %s21
    %p23 = scmp.eq.s32.totalorder %s22, 0
    %s25 = sadd.s32 %s24, 1
    %s26 = scalar_select %p23, %s24, %s25
    %p29 = pneg %p23
    %p30 = scmp.eq.s32.totalorder %s14, 1
    %p31 = por %p29, %p30
    %p32 = scmp.ne.s32.totalorder %s24, %s27
    %p33 = scmp.eq.s32.totalorder %s14, 0
    %p34 = por %p32, %p33
    %p35 = scmp.ne.s32.totalorder %s24, %s27
    %p36 = scmp.eq.s32.totalorder %s19, 1
    %p37 = por %p35, %p36
    %p38 = scmp.ne.s32.totalorder %s27, %s28
    %p39 = scmp.eq.s32.totalorder %s19, 0
    %p40 = por %p38, %p39
    %p41 = scmp.ne.s32.totalorder %s27, %s28
    %p42 = scmp.eq.s32.totalorder %s20, 1
    %p43 = por %p41, %p42
    %p45 = scmp.ne.s32.totalorder %s28, %s44
    %p46 = scmp.eq.s32.totalorder %s20, 0
    %p47 = por %p45, %p46
    %s48 = ssub.s32 %s14, %s21
    %p49 = scmp.eq.s32.totalorder %s48, 0
    %s51 = sadd.s32 %s50, 1
    %s52 = scalar_select %p49, %s50, %s51
    %p55 = pneg %p49
    %p56 = scmp.eq.s32.totalorder %s14, 1
    %p57 = por %p55, %p56
    %p58 = scmp.ne.s32.totalorder %s50, %s53
    %p59 = scmp.eq.s32.totalorder %s14, 0
    %p60 = por %p58, %p59
    %p61 = scmp.ne.s32.totalorder %s50, %s53
    %p62 = scmp.eq.s32.totalorder %s19, 1
    %p63 = por %p61, %p62
    %p64 = scmp.ne.s32.totalorder %s53, %s54
    %p65 = scmp.eq.s32.totalorder %s19, 0
    %p66 = por %p64, %p65
    %p67 = scmp.ne.s32.totalorder %s53, %s54
    %p68 = scmp.eq.s32.totalorder %s20, 1
    %p69 = por %p67, %p68
    %p71 = scmp.ne.s32.totalorder %s54, %s70
    %p72 = scmp.eq.s32.totalorder %s20, 0
    %p73 = por %p71, %p72
    %s75 = sadd.s32 %s74, 1
    %p78 = scmp.eq.s32.totalorder %s14, 1
    %p79 = scmp.ne.s32.totalorder %s74, %s76
    %p80 = scmp.eq.s32.totalorder %s14, 0
    %p81 = por %p79, %p80
    %p82 = scmp.ne.s32.totalorder %s74, %s76
    %p83 = scmp.eq.s32.totalorder %s19, 1
    %p84 = por %p82, %p83
    %p85 = scmp.ne.s32.totalorder %s76, %s77
    %p86 = scmp.eq.s32.totalorder %s19, 0
    %p87 = por %p85, %p86
    %p88 = scmp.ne.s32.totalorder %s76, %s77
    %p89 = scmp.eq.s32.totalorder %s20, 1
    %p90 = por %p88, %p89
    %p92 = scmp.ne.s32.totalorder %s77, %s91
    %p93 = scmp.eq.s32.totalorder %s20, 0
    %p94 = por %p92, %p93
    %s96 = sadd.s32 %s95, 1
    %p99 = scmp.eq.s32.totalorder %s14, 1
    %p100 = scmp.ne.s32.totalorder %s95, %s97
    %p101 = scmp.eq.s32.totalorder %s14, 0
    %p102 = por %p100, %p101
    %p103 = scmp.ne.s32.totalorder %s95, %s97
    %p104 = scmp.eq.s32.totalorder %s19, 1
    %p105 = por %p103, %p104
    %p106 = scmp.ne.s32.totalorder %s97, %s98
    %p107 = scmp.eq.s32.totalorder %s19, 0
    %p108 = por %p106, %p107
    %p109 = scmp.ne.s32.totalorder %s97, %s98
    %p110 = scmp.eq.s32.totalorder %s20, 1
    %p111 = por %p109, %p110
    %p113 = scmp.ne.s32.totalorder %s98, %s112
    %p114 = scmp.eq.s32.totalorder %s20, 0
    %p115 = por %p113, %p114
    %s117 = sadd.s32 %s116, 1
    %p120 = scmp.eq.s32.totalorder %s14, 1
    %p121 = scmp.ne.s32.totalorder %s116, %s118
    %p122 = scmp.eq.s32.totalorder %s14, 0
    %p123 = por %p121, %p122
    %p124 = scmp.ne.s32.totalorder %s116, %s118
    %p125 = scmp.eq.s32.totalorder %s19, 1
    %p126 = por %p124, %p125
    %p127 = scmp.ne.s32.totalorder %s118, %s119
    %p128 = scmp.eq.s32.totalorder %s19, 0
    %p129 = por %p127, %p128
    %p130 = scmp.ne.s32.totalorder %s118, %s119
    %p131 = scmp.eq.s32.totalorder %s20, 1
    %p132 = por %p130, %p131
    %p134 = scmp.ne.s32.totalorder %s119, %s133
    %p135 = scmp.eq.s32.totalorder %s20, 0
    %p136 = por %p134, %p135
    %s138 = sadd.s32 %s137, 1
    %p141 = scmp.eq.s32.totalorder %s14, 1
    %p142 = scmp.ne.s32.totalorder %s137, %s139
    %p143 = scmp.eq.s32.totalorder %s14, 0
    %p144 = por %p142, %p143
    %p145 = scmp.ne.s32.totalorder %s137, %s139
    %p146 = scmp.eq.s32.totalorder %s19, 1
    %p147 = por %p145, %p146
    %p148 = scmp.ne.s32.totalorder %s139, %s140
    %p149 = scmp.eq.s32.totalorder %s19, 0
    %p150 = por %p148, %p149
    %p151 = scmp.ne.s32.totalorder %s139, %s140
    %p152 = scmp.eq.s32.totalorder %s20, 1
    %p153 = por %p151, %p152
    %p155 = scmp.ne.s32.totalorder %s140, %s154
    %p156 = scmp.eq.s32.totalorder %s20, 0
    %p157 = por %p155, %p156
    %s159 = sadd.s32 %s158, 1
    %p162 = scmp.eq.s32.totalorder %s14, 1
    %p163 = scmp.ne.s32.totalorder %s158, %s160
    %p164 = scmp.eq.s32.totalorder %s14, 0
    %p165 = por %p163, %p164
    %p166 = scmp.ne.s32.totalorder %s158, %s160
    %p167 = scmp.eq.s32.totalorder %s19, 1
    %p168 = por %p166, %p167
    %p169 = scmp.ne.s32.totalorder %s160, %s161
    %p170 = scmp.eq.s32.totalorder %s19, 0
    %p171 = por %p169, %p170
    %p172 = scmp.ne.s32.totalorder %s160, %s161
    %p173 = scmp.eq.s32.totalorder %s20, 1
    %p174 = por %p172, %p173
    %p176 = scmp.ne.s32.totalorder %s161, %s175
    %p177 = scmp.eq.s32.totalorder %s20, 0
    %p178 = por %p176, %p177
    %s180 = sadd.s32 %s179, 1
    %p183 = scmp.eq.s32.totalorder %s14, 1
    %p184 = scmp.ne.s32.totalorder %s179, %s181
    %p185 = scmp.eq.s32.totalorder %s14, 0
    %p186 = por %p184, %p185
    %p187 = scmp.ne.s32.totalorder %s179, %s181
    %p188 = scmp.eq.s32.totalorder %s19, 1
    %p189 = por %p187, %p188
    %p190 = scmp.ne.s32.totalorder %s181, %s182
    %p191 = scmp.eq.s32.totalorder %s19, 0
    %p192 = por %p190, %p191
    %p193 = scmp.ne.s32.totalorder %s181, %s182
    %p194 = scmp.eq.s32.totalorder %s20, 1
    %p195 = por %p193, %p194
    %p197 = scmp.ne.s32.totalorder %s182, %s196
    %p198 = scmp.eq.s32.totalorder %s20, 0
    %p199 = por %p197, %p198
    %s200 = ssub.s32 %s14, %s21
    %p201 = scmp.eq.s32.totalorder %s200, 0
    %s203 = sadd.s32 %s202, 1
    %s204 = scalar_select %p201, %s202, %s203
    %p207 = pneg %p201
    %p208 = scmp.eq.s32.totalorder %s14, 1
    %p209 = por %p207, %p208
    %p210 = scmp.ne.s32.totalorder %s202, %s205
    %p211 = scmp.eq.s32.totalorder %s14, 0
    %p212 = por %p210, %p211
    %p213 = scmp.ne.s32.totalorder %s202, %s205
    %p214 = scmp.eq.s32.totalorder %s19, 1
    %p215 = por %p213, %p214
    %p216 = scmp.ne.s32.totalorder %s205, %s206
    %p217 = scmp.eq.s32.totalorder %s19, 0
    %p218 = por %p216, %p217
    %p219 = scmp.ne.s32.totalorder %s205, %s206
    %p220 = scmp.eq.s32.totalorder %s20, 1
    %p221 = por %p219, %p220
    %p223 = scmp.ne.s32.totalorder %s206, %s222
    %p224 = scmp.eq.s32.totalorder %s20, 0
    %p225 = por %p223, %p224
    %p226 = scmp.le.s32.totalorder 1, %s14
    %p227 = scmp.lt.s32.totalorder %s14, 3
    %p228 = pnand %p226, %p227
    %p229 = pneg %p228
    // Predicated region
    $region9: #{tpu_custom_call.1} parent=5 // pred_check
      _
    $region10: #{tpu_custom_call.1} parent=5 // pred_check_branch
      %231 = sbr.rel (%p228) target = $region12
    $region11: #{tpu_custom_call.1} parent=5 // pred_region
      %s232 = ssub.s32 %s14, 1
      // Predicated region
      $region13: #{tpu_custom_call.1} parent=11 // pred_check
        %p233 = pneg %p87
      $region14: #{tpu_custom_call.1} parent=11 // pred_check_branch
        %235 = sbr.rel (%p233) target = $region16
      $region15: #{tpu_custom_call.1} parent=11 // pred_region
        _
      $region16: #{tpu_custom_call.1} parent=11 // pred_fallthru
        _
      // Predicated region
      $region17: #{tpu_custom_call.1} parent=11 // pred_check
        %p236 = pneg %p108
      $region18: #{tpu_custom_call.1} parent=11 // pred_check_branch
        %238 = sbr.rel (%p236) target = $region20
      $region19: #{tpu_custom_call.1} parent=11 // pred_region
        _
      $region20: #{tpu_custom_call.1} parent=11 // pred_fallthru
        _
      // Predicated region
      $region21: #{tpu_custom_call.1} parent=11 // pred_check
        %p239 = pneg %p129
      $region22: #{tpu_custom_call.1} parent=11 // pred_check_branch
        %241 = sbr.rel (%p239) target = $region24
      $region23: #{tpu_custom_call.1} parent=11 // pred_region
        _
      $region24: #{tpu_custom_call.1} parent=11 // pred_fallthru
        _
      // Predicated region
      $region25: #{tpu_custom_call.1} parent=11 // pred_check
        %p242 = pneg %p150
      $region26: #{tpu_custom_call.1} parent=11 // pred_check_branch
        %244 = sbr.rel (%p242) target = $region28
      $region27: #{tpu_custom_call.1} parent=11 // pred_region
        _
      $region28: #{tpu_custom_call.1} parent=11 // pred_fallthru
        _
      // Predicated region
      $region29: #{tpu_custom_call.1} parent=11 // pred_check
        %p245 = pneg %p171
      $region30: #{tpu_custom_call.1} parent=11 // pred_check_branch
        %247 = sbr.rel (%p245) target = $region32
      $region31: #{tpu_custom_call.1} parent=11 // pred_region
        _
      $region32: #{tpu_custom_call.1} parent=11 // pred_fallthru
        _
      // Predicated region
      $region33: #{tpu_custom_call.1} parent=11 // pred_check
        %p248 = pneg %p192
      $region34: #{tpu_custom_call.1} parent=11 // pred_check_branch
        %250 = sbr.rel (%p248) target = $region36
      $region35: #{tpu_custom_call.1} parent=11 // pred_region
        _
      $region36: #{tpu_custom_call.1} parent=11 // pred_fallthru
        _
    $region12: #{tpu_custom_call.1} parent=5 // pred_fallthru
      _
    %p251 = scmp.lt.s32.totalorder %s14, 2
    // Predicated region
    $region37: #{tpu_custom_call.1} parent=5 // pred_check
      %p252 = pneg %p251
    $region38: #{tpu_custom_call.1} parent=5 // pred_check_branch
      %254 = sbr.rel (%p252) target = $region40
    $region39: #{tpu_custom_call.1} parent=5 // pred_region
      // Predicated region
      $region41: #{tpu_custom_call.1} parent=39 // pred_check
        %p255 = pneg %p34
      $region42: #{tpu_custom_call.1} parent=39 // pred_check_branch
        %257 = sbr.rel (%p255) target = $region44
      $region43: #{tpu_custom_call.1} parent=39 // pred_region
        %s258 = smul.u32 32, %s14
        %p259 = scmp.lt.s32.totalorder %s258, 63
        %s260 = scalar_select %p259, %s258, 63
        %s261 = smul.addr %s260, 8
        %s262 = scalar_lea.vmem %s0, %s261
        %s263 = smul.u32 32, %s14
      $region44: #{tpu_custom_call.1} parent=39 // pred_fallthru
        _
      // Predicated region
      $region45: #{tpu_custom_call.1} parent=39 // pred_check
        %p264 = pneg %p60
      $region46: #{tpu_custom_call.1} parent=39 // pred_check_branch
        %266 = sbr.rel (%p264) target = $region48
      $region47: #{tpu_custom_call.1} parent=39 // pred_region
        %s267 = smul.u32 32, %s14
        %p268 = scmp.lt.s32.totalorder %s267, 63
        %s269 = scalar_select %p268, %s267, 63
        %s270 = smul.addr %s269, 8
        %s271 = scalar_lea.vmem %s1, %s270
        %s272 = smul.u32 32, %s14
      $region48: #{tpu_custom_call.1} parent=39 // pred_fallthru
        _
    $region40: #{tpu_custom_call.1} parent=5 // pred_fallthru
      _
    %p273 = scmp.le.s32.totalorder 1, %s14
    %p274 = scmp.lt.s32.totalorder %s14, 3
    %p275 = pnand %p273, %p274
    %p276 = pneg %p275
    // Predicated region
    $region49: #{tpu_custom_call.1} parent=5 // pred_check
      _
    $region50: #{tpu_custom_call.1} parent=5 // pred_check_branch
      %278 = sbr.rel (%p275) target = $region52
    $region51: #{tpu_custom_call.1} parent=5 // pred_region
      %s279 = ssub.s32 %s14, 1
      %s280 = smul.u32 32, %s19
      %p281 = scmp.lt.s32.totalorder %s280, 63
      %s282 = scalar_select %p281, %s280, 63
      %s283 = smul.addr %s282, 8
      %s284 = scalar_lea.vmem %s0, %s283
      %p285 = pneg %p40
      %p286 = pneg %p37
      %s287 = smul.u32 32, %s19
      %p288 = scmp.lt.s32.totalorder %s287, 63
      %s289 = scalar_select %p288, %s287, 63
      %s290 = smul.addr %s289, 8
      %s291 = scalar_lea.vmem %s1, %s290
      %p292 = pneg %p66
      %p293 = pneg %p63
      %p294 = pneg %p87
      %p295 = pneg %p84
      %p296 = pneg %p108
      %p297 = pneg %p105
      %p298 = pneg %p129
      %p299 = pneg %p126
      %p300 = pneg %p150
      %p301 = pneg %p147
      %p302 = pneg %p171
      %p303 = pneg %p168
      %p304 = pneg %p192
      %p305 = pneg %p189
      %p306 = pneg %p218
      %p307 = pneg %p215
      %s308 = smul.u32 32, %s19
      %p309 = scmp.lt.s32.totalorder %s308, 63
      %s310 = scalar_select %p309, %s308, 63
      %s311 = smul.addr %s310, 8
      %s312 = scalar_lea.vmem %s8, %s311
      %s313 = smul.u32 32, %s19
      %p314 = scmp.lt.s32.totalorder %s313, 63
      %s315 = scalar_select %p314, %s313, 63
      %s316 = smul.addr %s315, 8
      %s317 = scalar_lea.vmem %s0, %s316
      %s318 = smul.u32 32, %s19
      %s319 = smul.u32 32, %s19
      %p320 = scmp.lt.s32.totalorder %s319, 63
      %s321 = scalar_select %p320, %s319, 63
      %s322 = smul.addr %s321, 8
      %s323 = scalar_lea.vmem %s1, %s322
      %s324 = smul.u32 32, %s19
      %s325 = smul.u32 32, %s19
      %p326 = scmp.lt.s32.totalorder %s325, 63
      %s327 = scalar_select %p326, %s325, 63
      %s328 = smul.addr %s327, 8
      %s329 = scalar_lea.vmem %s8, %s328
      %s330 = smul.u32 32, %s19
      %v332 = vlaneseq
      %v333 = vshrl.u32 %v332, 7
      %v334 = vadd.s32 %v333, 8
      %v335 = vadd.s32 %v333, 16
      %v336 = vadd.s32 %v333, 24
      %v337 = vadd.s32 %v333, 32
      %v338 = vadd.s32 %v333, 40
      %v339 = vadd.s32 %v333, 48
      %v340 = vadd.s32 %v333, 56
      %v341 = vadd.s32 %v333, 64
      %v342 = vadd.s32 %v333, 72
      %v343 = vadd.s32 %v333, 80
      %v344 = vadd.s32 %v333, 88
      %v345 = vadd.s32 %v333, 96
      %v346 = vadd.s32 %v333, 104
      %v347 = vadd.s32 %v333, 112
      %v348 = vadd.s32 %v333, 120
      %v349 = vadd.s32 %v333, 128
      %v350 = vadd.s32 %v333, 136
      %v351 = vadd.s32 %v333, 144
      %v352 = vadd.s32 %v333, 152
      %v353 = vadd.s32 %v333, 160
      %v354 = vadd.s32 %v333, 168
      %v355 = vadd.s32 %v333, 176
      %v356 = vadd.s32 %v333, 184
      %v357 = vadd.s32 %v333, 192
      %v358 = vadd.s32 %v333, 200
      %v359 = vadd.s32 %v333, 208
      %v360 = vadd.s32 %v333, 216
      %v361 = vadd.s32 %v333, 224
      %v362 = vadd.s32 %v333, 232
      %v363 = vadd.s32 %v333, 240
      %v364 = vadd.s32 %v333, 248
      %vm365 = vcmp.lt.s32.totalorder %v333, 0
      %v366 = vsub.s32 0, %v333
      %v367 = vsel %vm365, %v366, %v333
      %v368 = vshrl.u32 %v367, 3
      %v369 = vand.u32 %v367, 7
      %v370 = vsub.s32 0, %v369
      %v371 = vsel %vm365, %v370, %v369
      %vm372 = vcmp.lt.s32.totalorder %v334, 0
      %v373 = vsub.s32 0, %v334
      %v374 = vsel %vm372, %v373, %v334
      %v375 = vshrl.u32 %v374, 3
      %v376 = vand.u32 %v374, 7
      %v377 = vsub.s32 0, %v376
      %v378 = vsel %vm372, %v377, %v376
      %vm379 = vcmp.lt.s32.totalorder %v335, 0
      %v380 = vsub.s32 0, %v335
      %v381 = vsel %vm379, %v380, %v335
      %v382 = vshrl.u32 %v381, 3
      %v383 = vand.u32 %v381, 7
      %v384 = vsub.s32 0, %v383
      %v385 = vsel %vm379, %v384, %v383
      %vm386 = vcmp.lt.s32.totalorder %v336, 0
      %v387 = vsub.s32 0, %v336
      %v388 = vsel %vm386, %v387, %v336
      %v389 = vshrl.u32 %v388, 3
      %v390 = vand.u32 %v388, 7
      %v391 = vsub.s32 0, %v390
      %v392 = vsel %vm386, %v391, %v390
      %vm393 = vcmp.lt.s32.totalorder %v337, 0
      %v394 = vsub.s32 0, %v337
      %v395 = vsel %vm393, %v394, %v337
      %v396 = vshrl.u32 %v395, 3
      %v397 = vand.u32 %v395, 7
      %v398 = vsub.s32 0, %v397
      %v399 = vsel %vm393, %v398, %v397
      %vm400 = vcmp.lt.s32.totalorder %v338, 0
      %v401 = vsub.s32 0, %v338
      %v402 = vsel %vm400, %v401, %v338
      %v403 = vshrl.u32 %v402, 3
      %v404 = vand.u32 %v402, 7
      %v405 = vsub.s32 0, %v404
      %v406 = vsel %vm400, %v405, %v404
      %vm407 = vcmp.lt.s32.totalorder %v339, 0
      %v408 = vsub.s32 0, %v339
      %v409 = vsel %vm407, %v408, %v339
      %v410 = vshrl.u32 %v409, 3
      %v411 = vand.u32 %v409, 7
      %v412 = vsub.s32 0, %v411
      %v413 = vsel %vm407, %v412, %v411
      %vm414 = vcmp.lt.s32.totalorder %v340, 0
      %v415 = vsub.s32 0, %v340
      %v416 = vsel %vm414, %v415, %v340
      %v417 = vshrl.u32 %v416, 3
      %v418 = vand.u32 %v416, 7
      %v419 = vsub.s32 0, %v418
      %v420 = vsel %vm414, %v419, %v418
      %vm421 = vcmp.lt.s32.totalorder %v341, 0
      %v422 = vsub.s32 0, %v341
      %v423 = vsel %vm421, %v422, %v341
      %v424 = vshrl.u32 %v423, 3
      %v425 = vand.u32 %v423, 7
      %v426 = vsub.s32 0, %v425
      %v427 = vsel %vm421, %v426, %v425
      %vm428 = vcmp.lt.s32.totalorder %v342, 0
      %v429 = vsub.s32 0, %v342
      %v430 = vsel %vm428, %v429, %v342
      %v431 = vshrl.u32 %v430, 3
      %v432 = vand.u32 %v430, 7
      %v433 = vsub.s32 0, %v432
      %v434 = vsel %vm428, %v433, %v432
      %vm435 = vcmp.lt.s32.totalorder %v343, 0
      %v436 = vsub.s32 0, %v343
      %v437 = vsel %vm435, %v436, %v343
      %v438 = vshrl.u32 %v437, 3
      %v439 = vand.u32 %v437, 7
      %v440 = vsub.s32 0, %v439
      %v441 = vsel %vm435, %v440, %v439
      %vm442 = vcmp.lt.s32.totalorder %v344, 0
      %v443 = vsub.s32 0, %v344
      %v444 = vsel %vm442, %v443, %v344
      %v445 = vshrl.u32 %v444, 3
      %v446 = vand.u32 %v444, 7
      %v447 = vsub.s32 0, %v446
      %v448 = vsel %vm442, %v447, %v446
      %vm449 = vcmp.lt.s32.totalorder %v345, 0
      %v450 = vsub.s32 0, %v345
      %v451 = vsel %vm449, %v450, %v345
      %v452 = vshrl.u32 %v451, 3
      %v453 = vand.u32 %v451, 7
      %v454 = vsub.s32 0, %v453
      %v455 = vsel %vm449, %v454, %v453
      %vm456 = vcmp.lt.s32.totalorder %v346, 0
      %v457 = vsub.s32 0, %v346
      %v458 = vsel %vm456, %v457, %v346
      %v459 = vshrl.u32 %v458, 3
      %v460 = vand.u32 %v458, 7
      %v461 = vsub.s32 0, %v460
      %v462 = vsel %vm456, %v461, %v460
      %vm463 = vcmp.lt.s32.totalorder %v347, 0
      %v464 = vsub.s32 0, %v347
      %v465 = vsel %vm463, %v464, %v347
      %v466 = vshrl.u32 %v465, 3
      %v467 = vand.u32 %v465, 7
      %v468 = vsub.s32 0, %v467
      %v469 = vsel %vm463, %v468, %v467
      %vm470 = vcmp.lt.s32.totalorder %v348, 0
      %v471 = vsub.s32 0, %v348
      %v472 = vsel %vm470, %v471, %v348
      %v473 = vshrl.u32 %v472, 3
      %v474 = vand.u32 %v472, 7
      %v475 = vsub.s32 0, %v474
      %v476 = vsel %vm470, %v475, %v474
      %vm477 = vcmp.lt.s32.totalorder %v349, 0
      %v478 = vsub.s32 0, %v349
      %v479 = vsel %vm477, %v478, %v349
      %v480 = vshrl.u32 %v479, 3
      %v481 = vand.u32 %v479, 7
      %v482 = vsub.s32 0, %v481
      %v483 = vsel %vm477, %v482, %v481
      %vm484 = vcmp.lt.s32.totalorder %v350, 0
      %v485 = vsub.s32 0, %v350
      %v486 = vsel %vm484, %v485, %v350
      %v487 = vshrl.u32 %v486, 3
      %v488 = vand.u32 %v486, 7
      %v489 = vsub.s32 0, %v488
      %v490 = vsel %vm484, %v489, %v488
      %vm491 = vcmp.lt.s32.totalorder %v351, 0
      %v492 = vsub.s32 0, %v351
      %v493 = vsel %vm491, %v492, %v351
      %v494 = vshrl.u32 %v493, 3
      %v495 = vand.u32 %v493, 7
      %v496 = vsub.s32 0, %v495
      %v497 = vsel %vm491, %v496, %v495
      %vm498 = vcmp.lt.s32.totalorder %v352, 0
      %v499 = vsub.s32 0, %v352
      %v500 = vsel %vm498, %v499, %v352
      %v501 = vshrl.u32 %v500, 3
      %v502 = vand.u32 %v500, 7
      %v503 = vsub.s32 0, %v502
      %v504 = vsel %vm498, %v503, %v502
      %vm505 = vcmp.lt.s32.totalorder %v353, 0
      %v506 = vsub.s32 0, %v353
      %v507 = vsel %vm505, %v506, %v353
      %v508 = vshrl.u32 %v507, 3
      %v509 = vand.u32 %v507, 7
      %v510 = vsub.s32 0, %v509
      %v511 = vsel %vm505, %v510, %v509
      %vm512 = vcmp.lt.s32.totalorder %v354, 0
      %v513 = vsub.s32 0, %v354
      %v514 = vsel %vm512, %v513, %v354
      %v515 = vshrl.u32 %v514, 3
      %v516 = vand.u32 %v514, 7
      %v517 = vsub.s32 0, %v516
      %v518 = vsel %vm512, %v517, %v516
      %vm519 = vcmp.lt.s32.totalorder %v355, 0
      %v520 = vsub.s32 0, %v355
      %v521 = vsel %vm519, %v520, %v355
      %v522 = vshrl.u32 %v521, 3
      %v523 = vand.u32 %v521, 7
      %v524 = vsub.s32 0, %v523
      %v525 = vsel %vm519, %v524, %v523
      %vm526 = vcmp.lt.s32.totalorder %v356, 0
      %v527 = vsub.s32 0, %v356
      %v528 = vsel %vm526, %v527, %v356
      %v529 = vshrl.u32 %v528, 3
      %v530 = vand.u32 %v528, 7
      %v531 = vsub.s32 0, %v530
      %v532 = vsel %vm526, %v531, %v530
      %vm533 = vcmp.lt.s32.totalorder %v357, 0
      %v534 = vsub.s32 0, %v357
      %v535 = vsel %vm533, %v534, %v357
      %v536 = vshrl.u32 %v535, 3
      %v537 = vand.u32 %v535, 7
      %v538 = vsub.s32 0, %v537
      %v539 = vsel %vm533, %v538, %v537
      %vm540 = vcmp.lt.s32.totalorder %v358, 0
      %v541 = vsub.s32 0, %v358
      %v542 = vsel %vm540, %v541, %v358
      %v543 = vshrl.u32 %v542, 3
      %v544 = vand.u32 %v542, 7
      %v545 = vsub.s32 0, %v544
      %v546 = vsel %vm540, %v545, %v544
      %vm547 = vcmp.lt.s32.totalorder %v359, 0
      %v548 = vsub.s32 0, %v359
      %v549 = vsel %vm547, %v548, %v359
      %v550 = vshrl.u32 %v549, 3
      %v551 = vand.u32 %v549, 7
      %v552 = vsub.s32 0, %v551
      %v553 = vsel %vm547, %v552, %v551
      %vm554 = vcmp.lt.s32.totalorder %v360, 0
      %v555 = vsub.s32 0, %v360
      %v556 = vsel %vm554, %v555, %v360
      %v557 = vshrl.u32 %v556, 3
      %v558 = vand.u32 %v556, 7
      %v559 = vsub.s32 0, %v558
      %v560 = vsel %vm554, %v559, %v558
      %vm561 = vcmp.lt.s32.totalorder %v361, 0
      %v562 = vsub.s32 0, %v361
      %v563 = vsel %vm561, %v562, %v361
      %v564 = vshrl.u32 %v563, 3
      %v565 = vand.u32 %v563, 7
      %v566 = vsub.s32 0, %v565
      %v567 = vsel %vm561, %v566, %v565
      %vm568 = vcmp.lt.s32.totalorder %v362, 0
      %v569 = vsub.s32 0, %v362
      %v570 = vsel %vm568, %v569, %v362
      %v571 = vshrl.u32 %v570, 3
      %v572 = vand.u32 %v570, 7
      %v573 = vsub.s32 0, %v572
      %v574 = vsel %vm568, %v573, %v572
      %vm575 = vcmp.lt.s32.totalorder %v363, 0
      %v576 = vsub.s32 0, %v363
      %v577 = vsel %vm575, %v576, %v363
      %v578 = vshrl.u32 %v577, 3
      %v579 = vand.u32 %v577, 7
      %v580 = vsub.s32 0, %v579
      %v581 = vsel %vm575, %v580, %v579
      %vm582 = vcmp.lt.s32.totalorder %v364, 0
      %v583 = vsub.s32 0, %v364
      %v584 = vsel %vm582, %v583, %v364
      %v585 = vshrl.u32 %v584, 3
      %v586 = vand.u32 %v584, 7
      %v587 = vsub.s32 0, %v586
      %v588 = vsel %vm582, %v587, %v586
      %vm589 = vcmp.ne.s32.totalorder %v371, 0
      %vm590 = vcmp.ne.s32.totalorder %v378, 0
      %vm591 = vcmp.ne.s32.totalorder %v385, 0
      %vm592 = vcmp.ne.s32.totalorder %v392, 0
      %vm593 = vcmp.ne.s32.totalorder %v399, 0
      %vm594 = vcmp.ne.s32.totalorder %v406, 0
      %vm595 = vcmp.ne.s32.totalorder %v413, 0
      %vm596 = vcmp.ne.s32.totalorder %v420, 0
      %vm597 = vcmp.ne.s32.totalorder %v427, 0
      %vm598 = vcmp.ne.s32.totalorder %v434, 0
      %vm599 = vcmp.ne.s32.totalorder %v441, 0
      %vm600 = vcmp.ne.s32.totalorder %v448, 0
      %vm601 = vcmp.ne.s32.totalorder %v455, 0
      %vm602 = vcmp.ne.s32.totalorder %v462, 0
      %vm603 = vcmp.ne.s32.totalorder %v469, 0
      %vm604 = vcmp.ne.s32.totalorder %v476, 0
      %vm605 = vcmp.ne.s32.totalorder %v483, 0
      %vm606 = vcmp.ne.s32.totalorder %v490, 0
      %vm607 = vcmp.ne.s32.totalorder %v497, 0
      %vm608 = vcmp.ne.s32.totalorder %v504, 0
      %vm609 = vcmp.ne.s32.totalorder %v511, 0
      %vm610 = vcmp.ne.s32.totalorder %v518, 0
      %vm611 = vcmp.ne.s32.totalorder %v525, 0
      %vm612 = vcmp.ne.s32.totalorder %v532, 0
      %vm613 = vcmp.ne.s32.totalorder %v539, 0
      %vm614 = vcmp.ne.s32.totalorder %v546, 0
      %vm615 = vcmp.ne.s32.totalorder %v553, 0
      %vm616 = vcmp.ne.s32.totalorder %v560, 0
      %vm617 = vcmp.ne.s32.totalorder %v567, 0
      %vm618 = vcmp.ne.s32.totalorder %v574, 0
      %vm619 = vcmp.ne.s32.totalorder %v581, 0
      %vm620 = vcmp.ne.s32.totalorder %v588, 0
      %vm621 = vcmp.lt.s32.totalorder %v371, 0
      %vm622 = vcmp.lt.s32.totalorder %v378, 0
      %vm623 = vcmp.lt.s32.totalorder %v385, 0
      %vm624 = vcmp.lt.s32.totalorder %v392, 0
      %vm625 = vcmp.lt.s32.totalorder %v399, 0
      %vm626 = vcmp.lt.s32.totalorder %v406, 0
      %vm627 = vcmp.lt.s32.totalorder %v413, 0
      %vm628 = vcmp.lt.s32.totalorder %v420, 0
      %vm629 = vcmp.lt.s32.totalorder %v427, 0
      %vm630 = vcmp.lt.s32.totalorder %v434, 0
      %vm631 = vcmp.lt.s32.totalorder %v441, 0
      %vm632 = vcmp.lt.s32.totalorder %v448, 0
      %vm633 = vcmp.lt.s32.totalorder %v455, 0
      %vm634 = vcmp.lt.s32.totalorder %v462, 0
      %vm635 = vcmp.lt.s32.totalorder %v469, 0
      %vm636 = vcmp.lt.s32.totalorder %v476, 0
      %vm637 = vcmp.lt.s32.totalorder %v483, 0
      %vm638 = vcmp.lt.s32.totalorder %v490, 0
      %vm639 = vcmp.lt.s32.totalorder %v497, 0
      %vm640 = vcmp.lt.s32.totalorder %v504, 0
      %vm641 = vcmp.lt.s32.totalorder %v511, 0
      %vm642 = vcmp.lt.s32.totalorder %v518, 0
      %vm643 = vcmp.lt.s32.totalorder %v525, 0
      %vm644 = vcmp.lt.s32.totalorder %v532, 0
      %vm645 = vcmp.lt.s32.totalorder %v539, 0
      %vm646 = vcmp.lt.s32.totalorder %v546, 0
      %vm647 = vcmp.lt.s32.totalorder %v553, 0
      %vm648 = vcmp.lt.s32.totalorder %v560, 0
      %vm649 = vcmp.lt.s32.totalorder %v567, 0
      %vm650 = vcmp.lt.s32.totalorder %v574, 0
      %vm651 = vcmp.lt.s32.totalorder %v581, 0
      %vm652 = vcmp.lt.s32.totalorder %v588, 0
      %vm653 = vmand %vm621, %vm589
      %vm654 = vmand %vm622, %vm590
      %vm655 = vmand %vm623, %vm591
      %vm656 = vmand %vm624, %vm592
      %vm657 = vmand %vm625, %vm593
      %vm658 = vmand %vm626, %vm594
      %vm659 = vmand %vm627, %vm595
      %vm660 = vmand %vm628, %vm596
      %vm661 = vmand %vm629, %vm597
      %vm662 = vmand %vm630, %vm598
      %vm663 = vmand %vm631, %vm599
      %vm664 = vmand %vm632, %vm600
      %vm665 = vmand %vm633, %vm601
      %vm666 = vmand %vm634, %vm602
      %vm667 = vmand %vm635, %vm603
      %vm668 = vmand %vm636, %vm604
      %vm669 = vmand %vm637, %vm605
      %vm670 = vmand %vm638, %vm606
      %vm671 = vmand %vm639, %vm607
      %vm672 = vmand %vm640, %vm608
      %vm673 = vmand %vm641, %vm609
      %vm674 = vmand %vm642, %vm610
      %vm675 = vmand %vm643, %vm611
      %vm676 = vmand %vm644, %vm612
      %vm677 = vmand %vm645, %vm613
      %vm678 = vmand %vm646, %vm614
      %vm679 = vmand %vm647, %vm615
      %vm680 = vmand %vm648, %vm616
      %vm681 = vmand %vm649, %vm617
      %vm682 = vmand %vm650, %vm618
      %vm683 = vmand %vm651, %vm619
      %vm684 = vmand %vm652, %vm620
      %v685 = vadd.s32 %v371, 8
      %v686 = vadd.s32 %v378, 8
      %v687 = vadd.s32 %v385, 8
      %v688 = vadd.s32 %v392, 8
      %v689 = vadd.s32 %v399, 8
      %v690 = vadd.s32 %v406, 8
      %v691 = vadd.s32 %v413, 8
      %v692 = vadd.s32 %v420, 8
      %v693 = vadd.s32 %v427, 8
      %v694 = vadd.s32 %v434, 8
      %v695 = vadd.s32 %v441, 8
      %v696 = vadd.s32 %v448, 8
      %v697 = vadd.s32 %v455, 8
      %v698 = vadd.s32 %v462, 8
      %v699 = vadd.s32 %v469, 8
      %v700 = vadd.s32 %v476, 8
      %v701 = vadd.s32 %v483, 8
      %v702 = vadd.s32 %v490, 8
      %v703 = vadd.s32 %v497, 8
      %v704 = vadd.s32 %v504, 8
      %v705 = vadd.s32 %v511, 8
      %v706 = vadd.s32 %v518, 8
      %v707 = vadd.s32 %v525, 8
      %v708 = vadd.s32 %v532, 8
      %v709 = vadd.s32 %v539, 8
      %v710 = vadd.s32 %v546, 8
      %v711 = vadd.s32 %v553, 8
      %v712 = vadd.s32 %v560, 8
      %v713 = vadd.s32 %v567, 8
      %v714 = vadd.s32 %v574, 8
      %v715 = vadd.s32 %v581, 8
      %v716 = vadd.s32 %v588, 8
      %v717 = vsel %vm653, %v685, %v371
      %v718 = vsel %vm654, %v686, %v378
      %v719 = vsel %vm655, %v687, %v385
      %v720 = vsel %vm656, %v688, %v392
      %v721 = vsel %vm657, %v689, %v399
      %v722 = vsel %vm658, %v690, %v406
      %v723 = vsel %vm659, %v691, %v413
      %v724 = vsel %vm660, %v692, %v420
      %v725 = vsel %vm661, %v693, %v427
      %v726 = vsel %vm662, %v694, %v434
      %v727 = vsel %vm663, %v695, %v441
      %v728 = vsel %vm664, %v696, %v448
      %v729 = vsel %vm665, %v697, %v455
      %v730 = vsel %vm666, %v698, %v462
      %v731 = vsel %vm667, %v699, %v469
      %v732 = vsel %vm668, %v700, %v476
      %v733 = vsel %vm669, %v701, %v483
      %v734 = vsel %vm670, %v702, %v490
      %v735 = vsel %vm671, %v703, %v497
      %v736 = vsel %vm672, %v704, %v504
      %v737 = vsel %vm673, %v705, %v511
      %v738 = vsel %vm674, %v706, %v518
      %v739 = vsel %vm675, %v707, %v525
      %v740 = vsel %vm676, %v708, %v532
      %v741 = vsel %vm677, %v709, %v539
      %v742 = vsel %vm678, %v710, %v546
      %v743 = vsel %vm679, %v711, %v553
      %v744 = vsel %vm680, %v712, %v560
      %v745 = vsel %vm681, %v713, %v567
      %v746 = vsel %vm682, %v714, %v574
      %v747 = vsel %vm683, %v715, %v581
      %v748 = vsel %vm684, %v716, %v588
      %v749 = vld [vmem:[%s317] sm:$0xff]
      %v750 = vld [vmem:[%s317 + $0x8] sm:$0xff]
      %v751 = vld [vmem:[%s317 + $0x10] sm:$0xff]
      %v752 = vld [vmem:[%s317 + $0x18] sm:$0xff]
      %v753 = vld [vmem:[%s317 + $0x20] sm:$0xff]
      %v754 = vld [vmem:[%s317 + $0x28] sm:$0xff]
      %v755 = vld [vmem:[%s317 + $0x30] sm:$0xff]
      %v756 = vld [vmem:[%s317 + $0x38] sm:$0xff]
      %v757 = vld [vmem:[%s317 + $0x40] sm:$0xff]
      %v758 = vld [vmem:[%s317 + $0x48] sm:$0xff]
      %v759 = vld [vmem:[%s317 + $0x50] sm:$0xff]
      %v760 = vld [vmem:[%s317 + $0x58] sm:$0xff]
      %v761 = vld [vmem:[%s317 + $0x60] sm:$0xff]
      %v762 = vld [vmem:[%s317 + $0x68] sm:$0xff]
      %v763 = vld [vmem:[%s317 + $0x70] sm:$0xff]
      %v764 = vld [vmem:[%s317 + $0x78] sm:$0xff]
      %v765 = vld [vmem:[%s317 + $0x80] sm:$0xff]
      %v766 = vld [vmem:[%s317 + $0x88] sm:$0xff]
      %v767 = vld [vmem:[%s317 + $0x90] sm:$0xff]
      %v768 = vld [vmem:[%s317 + $0x98] sm:$0xff]
      %v769 = vld [vmem:[%s317 + $0xa0] sm:$0xff]
      %v770 = vld [vmem:[%s317 + $0xa8] sm:$0xff]
      %v771 = vld [vmem:[%s317 + $0xb0] sm:$0xff]
      %v772 = vld [vmem:[%s317 + $0xb8] sm:$0xff]
      %v773 = vld [vmem:[%s317 + $0xc0] sm:$0xff]
      %v774 = vld [vmem:[%s317 + $0xc8] sm:$0xff]
      %v775 = vld [vmem:[%s317 + $0xd0] sm:$0xff]
      %v776 = vld [vmem:[%s317 + $0xd8] sm:$0xff]
      %v777 = vld [vmem:[%s317 + $0xe0] sm:$0xff]
      %v778 = vld [vmem:[%s317 + $0xe8] sm:$0xff]
      %v779 = vld [vmem:[%s317 + $0xf0] sm:$0xff]
      %v780 = vld [vmem:[%s317 + $0xf8] sm:$0xff]
      %v781 = vld [vmem:[%s323] sm:$0xff]
      %v782 = vld [vmem:[%s323 + $0x8] sm:$0xff]
      %v783 = vld [vmem:[%s323 + $0x10] sm:$0xff]
      %v784 = vld [vmem:[%s323 + $0x18] sm:$0xff]
      %v785 = vld [vmem:[%s323 + $0x20] sm:$0xff]
      %v786 = vld [vmem:[%s323 + $0x28] sm:$0xff]
      %v787 = vld [vmem:[%s323 + $0x30] sm:$0xff]
      %v788 = vld [vmem:[%s323 + $0x38] sm:$0xff]
      %v789 = vld [vmem:[%s323 + $0x40] sm:$0xff]
      %v790 = vld [vmem:[%s323 + $0x48] sm:$0xff]
      %v791 = vld [vmem:[%s323 + $0x50] sm:$0xff]
      %v792 = vld [vmem:[%s323 + $0x58] sm:$0xff]
      %v793 = vld [vmem:[%s323 + $0x60] sm:$0xff]
      %v794 = vld [vmem:[%s323 + $0x68] sm:$0xff]
      %v795 = vld [vmem:[%s323 + $0x70] sm:$0xff]
      %v796 = vld [vmem:[%s323 + $0x78] sm:$0xff]
      %v797 = vld [vmem:[%s323 + $0x80] sm:$0xff]
      %v798 = vld [vmem:[%s323 + $0x88] sm:$0xff]
      %v799 = vld [vmem:[%s323 + $0x90] sm:$0xff]
      %v800 = vld [vmem:[%s323 + $0x98] sm:$0xff]
      %v801 = vld [vmem:[%s323 + $0xa0] sm:$0xff]
      %v802 = vld [vmem:[%s323 + $0xa8] sm:$0xff]
      %v803 = vld [vmem:[%s323 + $0xb0] sm:$0xff]
      %v804 = vld [vmem:[%s323 + $0xb8] sm:$0xff]
      %v805 = vld [vmem:[%s323 + $0xc0] sm:$0xff]
      %v806 = vld [vmem:[%s323 + $0xc8] sm:$0xff]
      %v807 = vld [vmem:[%s323 + $0xd0] sm:$0xff]
      %v808 = vld [vmem:[%s323 + $0xd8] sm:$0xff]
      %v809 = vld [vmem:[%s323 + $0xe0] sm:$0xff]
      %v810 = vld [vmem:[%s323 + $0xe8] sm:$0xff]
      %v811 = vld [vmem:[%s323 + $0xf0] sm:$0xff]
      %v812 = vld [vmem:[%s323 + $0xf8] sm:$0xff]
      %v813 = vpack.c.bf16 %v782, %v781
      %v814 = vpack.c.bf16 %v784, %v783
      %v815 = vpack.c.bf16 %v786, %v785
      %v816 = vpack.c.bf16 %v788, %v787
      %v817 = vpack.c.bf16 %v790, %v789
      %v818 = vpack.c.bf16 %v792, %v791
      %v819 = vpack.c.bf16 %v794, %v793
      %v820 = vpack.c.bf16 %v796, %v795
      %v821 = vpack.c.bf16 %v798, %v797
      %v822 = vpack.c.bf16 %v800, %v799
      %v823 = vpack.c.bf16 %v802, %v801
      %v824 = vpack.c.bf16 %v804, %v803
      %v825 = vpack.c.bf16 %v806, %v805
      %v826 = vpack.c.bf16 %v808, %v807
      %v827 = vpack.c.bf16 %v810, %v809
      %v828 = vpack.c.bf16 %v812, %v811
      %v829 = vpack.c.bf16 %v750, %v749
      %v830 = vpack.c.bf16 %v752, %v751
      %v831 = vpack.c.bf16 %v754, %v753
      %v832 = vpack.c.bf16 %v756, %v755
      %v833 = vpack.c.bf16 %v758, %v757
      %v834 = vpack.c.bf16 %v760, %v759
      %v835 = vpack.c.bf16 %v762, %v761
      %v836 = vpack.c.bf16 %v764, %v763
      %v837 = vpack.c.bf16 %v766, %v765
      %v838 = vpack.c.bf16 %v768, %v767
      %v839 = vpack.c.bf16 %v770, %v769
      %v840 = vpack.c.bf16 %v772, %v771
      %v841 = vpack.c.bf16 %v774, %v773
      %v842 = vpack.c.bf16 %v776, %v775
      %v843 = vpack.c.bf16 %v778, %v777
      %v844 = vpack.c.bf16 %v780, %v779
      %861 = vrot.lane.b32.xlu0 %v813, 16
      %v862 = vpop.permute.xlu0 %861
      %863 = vrot.lane.b32.xlu0 %v814, 16
      %v864 = vpop.permute.xlu0 %863
      %865 = vrot.lane.b32.xlu0 %v815, 16
      %v866 = vpop.permute.xlu0 %865
      %867 = vrot.lane.b32.xlu0 %v816, 16
      %v868 = vpop.permute.xlu0 %867
      %869 = vrot.lane.b32.xlu0 %v817, 16
      %v870 = vpop.permute.xlu0 %869
      %871 = vrot.lane.b32.xlu0 %v818, 16
      %v872 = vpop.permute.xlu0 %871
      %873 = vrot.lane.b32.xlu0 %v819, 16
      %v874 = vpop.permute.xlu0 %873
      %875 = vrot.lane.b32.xlu0 %v820, 16
      %v876 = vpop.permute.xlu0 %875
      %877 = vrot.lane.b32.xlu0 %v821, 16
      %v878 = vpop.permute.xlu0 %877
      %879 = vrot.lane.b32.xlu0 %v822, 16
      %v880 = vpop.permute.xlu0 %879
      %881 = vrot.lane.b32.xlu0 %v823, 16
      %v882 = vpop.permute.xlu0 %881
      %883 = vrot.lane.b32.xlu0 %v824, 16
      %v884 = vpop.permute.xlu0 %883
      %885 = vrot.lane.b32.xlu0 %v825, 16
      %v886 = vpop.permute.xlu0 %885
      %887 = vrot.lane.b32.xlu0 %v826, 16
      %v888 = vpop.permute.xlu0 %887
      %889 = vrot.lane.b32.xlu0 %v827, 16
      %v890 = vpop.permute.xlu0 %889
      %891 = vrot.lane.b32.xlu0 %v828, 16
      %v892 = vpop.permute.xlu0 %891
      %vm893 = vcmask 130048
      %v896 = vsel %vm893, %v829, %v862
      %v899 = vsel %vm893, %v830, %v864
      %v902 = vsel %vm893, %v831, %v866
      %v905 = vsel %vm893, %v832, %v868
      %v908 = vsel %vm893, %v833, %v870
      %v911 = vsel %vm893, %v834, %v872
      %v914 = vsel %vm893, %v835, %v874
      %v917 = vsel %vm893, %v836, %v876
      %v920 = vsel %vm893, %v837, %v878
      %v923 = vsel %vm893, %v838, %v880
      %v926 = vsel %vm893, %v839, %v882
      %v929 = vsel %vm893, %v840, %v884
      %v932 = vsel %vm893, %v841, %v886
      %v935 = vsel %vm893, %v842, %v888
      %v938 = vsel %vm893, %v843, %v890
      %v941 = vsel %vm893, %v844, %v892
      %v942 = vld [vmem:[%s2] sm:$0xff]
      %v943 = vld [vmem:[%s2 + $0x8] sm:$0xff]
      %v944 = vld [vmem:[%s2 + $0x10] sm:$0xff]
      %v945 = vld [vmem:[%s2 + $0x18] sm:$0xff]
      %v946 = vld [vmem:[%s2 + $0x20] sm:$0xff]
      %v947 = vld [vmem:[%s2 + $0x28] sm:$0xff]
      %v948 = vld [vmem:[%s2 + $0x30] sm:$0xff]
      %v949 = vld [vmem:[%s2 + $0x38] sm:$0xff]
      %v950 = vld [vmem:[%s2 + $0x40] sm:$0xff]
      %v951 = vld [vmem:[%s2 + $0x48] sm:$0xff]
      %v962 = vunpack.c.l.b16 %v942
      %v963 = vunpack.c.h.b16 %v942
      %v964 = vunpack.c.l.b16 %v943
      %v965 = vunpack.c.h.b16 %v943
      %v966 = vunpack.c.l.b16 %v944
      %v967 = vunpack.c.h.b16 %v944
      %v968 = vunpack.c.l.b16 %v945
      %v969 = vunpack.c.h.b16 %v945
      %v970 = vunpack.c.l.b16 %v946
      %v971 = vunpack.c.h.b16 %v946
      %v972 = vunpack.c.l.b16 %v947
      %v973 = vunpack.c.h.b16 %v947
      %v974 = vunpack.c.l.b16 %v948
      %v975 = vunpack.c.h.b16 %v948
      %v976 = vunpack.c.l.b16 %v949
      %v977 = vunpack.c.h.b16 %v949
      %v978 = vunpack.c.l.b16 %v950
      %v979 = vunpack.c.h.b16 %v950
      %v980 = vunpack.c.l.b16 %v951
      %v981 = vunpack.c.h.b16 %v951
      %v982 = vpack.c.b16 %v966, %v962
      %v983 = vpack.c.b16 %v967, %v963
      %v984 = vpack.c.b16 %v968, %v964
      %v985 = vpack.c.b16 %v969, %v965
      %v986 = vpack.c.b16 %v974, %v970
      %v987 = vpack.c.b16 %v975, %v971
      %v988 = vpack.c.b16 %v976, %v972
      %v989 = vpack.c.b16 %v977, %v973
      %v990 = vpack.c.b16 %v978, %v978
      %v991 = vpack.c.b16 %v979, %v979
      %v992 = vpack.c.b16 %v980, %v980
      %v993 = vpack.c.b16 %v981, %v981
      %vm1002 = vcmask 326656
      %v1003 = vsel %vm1002, %v896, 0
      %v1005 = vsel %vm1002, %v899, 0
      %v1007 = vsel %vm1002, %v902, 0
      %v1009 = vsel %vm1002, %v905, 0
      %v1011 = vsel %vm1002, %v908, 0
      %v1013 = vsel %vm1002, %v911, 0
      %v1015 = vsel %vm1002, %v914, 0
      %v1017 = vsel %vm1002, %v917, 0
      %v1019 = vsel %vm1002, %v920, 0
      %v1021 = vsel %vm1002, %v923, 0
      %v1023 = vsel %vm1002, %v926, 0
      %v1025 = vsel %vm1002, %v929, 0
      %v1027 = vsel %vm1002, %v932, 0
      %v1029 = vsel %vm1002, %v935, 0
      %v1031 = vsel %vm1002, %v938, 0
      %v1033 = vsel %vm1002, %v941, 0
      %vm1035 = vcmask 1043456
      %v1037 = vsel %vm1035, %v990, 0
      %v1040 = vsel %vm1035, %v991, 0
      %v1043 = vsel %vm1035, %v992, 0
      %v1046 = vsel %vm1035, %v993, 0
      %1048 = vmatprep.subr.bf16.mxu0 0
      %1049 = vmatpush1.bf16.msra.mxu0 0
      %1050 = vmatprep.subr.bf16.mxu0 0
      %1051 = vmatpush1.bf16.msra.mxu0 0
      %1052 = vmatprep.subr.bf16.mxu0 0
      %1053 = vmatpush1.bf16.msra.mxu0 0
      %1054 = vmatprep.subr.bf16.mxu0 0
      %1055 = vmatpush1.bf16.msra.mxu0 0
      %1056 = vmatprep.subr.bf16.mxu0 0
      %1057 = vmatpush1.bf16.msra.mxu0 0
      %1058 = vmatprep.subr.bf16.mxu0 %v1040
      %1059 = vmatpush1.bf16.msra.mxu0 %v1037
      %1060 = vmatprep.subr.bf16.mxu0 %v987
      %1061 = vmatpush1.bf16.msra.mxu0 %v986
      %1062 = vmatprep.subr.bf16.mxu0 %v983
      %1063 = vmatpush1.bf16.msra.mxu0 %v982
      %1064 = vmatprep.subr.bf16.mxu0 0
      %1065 = vmatpush2.bf16.msra.mxu0 0
      %1066 = vmatprep.subr.bf16.mxu0 0
      %1067 = vmatpush2.bf16.msra.mxu0 0
      %1068 = vmatprep.subr.bf16.mxu0 0
      %1069 = vmatpush2.bf16.msra.mxu0 0
      %1070 = vmatprep.subr.bf16.mxu0 0
      %1071 = vmatpush2.bf16.msra.mxu0 0
      %1072 = vmatprep.subr.bf16.mxu0 0
      %1073 = vmatpush2.bf16.msra.mxu0 0
      %1074 = vmatprep.subr.bf16.mxu0 0
      %1075 = vmatpush2.bf16.msra.mxu0 0
      %1076 = vmatprep.subr.bf16.mxu0 0
      %1077 = vmatpush2.bf16.msra.mxu0 0
      %1078 = vmatprep.subr.bf16.mxu0 0
      %1079 = vmatpush2.bf16.msra.mxu0 0
      %1080 = vmatprep.mubr.bf16.mxu0 0
      %1081 = vmatmul.mubr.bf16.gmra.mxu0 %v1003
      %v1082 = vpop.f32.mrf.mxu0
      %v1083 = vadd.f32 0.0, %v1082
      %v1084 = vpop.f32.mrf.mxu0
      %v1085 = vadd.f32 0.0, %v1084
      %v1086 = vpop.f32.mrf.mxu0
      %v1087 = vadd.f32 0.0, %v1086
      %v1088 = vpop.f32.mrf.mxu0
      %v1089 = vadd.f32 0.0, %v1088
      %1090 = vmatprep.mubr.bf16.mxu0 0
      %1091 = vmatmul.mubr.bf16.gmra.mxu0 %v1005
      %v1092 = vpop.f32.mrf.mxu0
      %v1093 = vadd.f32 0.0, %v1092
      %v1094 = vpop.f32.mrf.mxu0
      %v1095 = vadd.f32 0.0, %v1094
      %v1096 = vpop.f32.mrf.mxu0
      %v1097 = vadd.f32 0.0, %v1096
      %v1098 = vpop.f32.mrf.mxu0
      %v1099 = vadd.f32 0.0, %v1098
      %1100 = vmatprep.mubr.bf16.mxu0 0
      %1101 = vmatmul.mubr.bf16.gmra.mxu0 %v1007
      %v1102 = vpop.f32.mrf.mxu0
      %v1103 = vadd.f32 0.0, %v1102
      %v1104 = vpop.f32.mrf.mxu0
      %v1105 = vadd.f32 0.0, %v1104
      %v1106 = vpop.f32.mrf.mxu0
      %v1107 = vadd.f32 0.0, %v1106
      %v1108 = vpop.f32.mrf.mxu0
      %v1109 = vadd.f32 0.0, %v1108
      %1110 = vmatprep.mubr.bf16.mxu0 0
      %1111 = vmatmul.mubr.bf16.gmra.mxu0 %v1009
      %v1112 = vpop.f32.mrf.mxu0
      %v1113 = vadd.f32 0.0, %v1112
      %v1114 = vpop.f32.mrf.mxu0
      %v1115 = vadd.f32 0.0, %v1114
      %v1116 = vpop.f32.mrf.mxu0
      %v1117 = vadd.f32 0.0, %v1116
      %v1118 = vpop.f32.mrf.mxu0
      %v1119 = vadd.f32 0.0, %v1118
      %1120 = vmatprep.mubr.bf16.mxu0 0
      %1121 = vmatmul.mubr.bf16.gmra.mxu0 %v1011
      %v1122 = vpop.f32.mrf.mxu0
      %v1123 = vadd.f32 0.0, %v1122
      %v1124 = vpop.f32.mrf.mxu0
      %v1125 = vadd.f32 0.0, %v1124
      %v1126 = vpop.f32.mrf.mxu0
      %v1127 = vadd.f32 0.0, %v1126
      %v1128 = vpop.f32.mrf.mxu0
      %v1129 = vadd.f32 0.0, %v1128
      %1130 = vmatprep.mubr.bf16.mxu0 0
      %1131 = vmatmul.mubr.bf16.gmra.mxu0 %v1013
      %v1132 = vpop.f32.mrf.mxu0
      %v1133 = vadd.f32 0.0, %v1132
      %v1134 = vpop.f32.mrf.mxu0
      %v1135 = vadd.f32 0.0, %v1134
      %v1136 = vpop.f32.mrf.mxu0
      %v1137 = vadd.f32 0.0, %v1136
      %v1138 = vpop.f32.mrf.mxu0
      %v1139 = vadd.f32 0.0, %v1138
      %1140 = vmatprep.mubr.bf16.mxu0 0
      %1141 = vmatmul.mubr.bf16.gmra.mxu0 %v1015
      %v1142 = vpop.f32.mrf.mxu0
      %v1143 = vadd.f32 0.0, %v1142
      %v1144 = vpop.f32.mrf.mxu0
      %v1145 = vadd.f32 0.0, %v1144
      %v1146 = vpop.f32.mrf.mxu0
      %v1147 = vadd.f32 0.0, %v1146
      %v1148 = vpop.f32.mrf.mxu0
      %v1149 = vadd.f32 0.0, %v1148
      %1150 = vmatprep.mubr.bf16.mxu0 0
      %1151 = vmatmul.mubr.bf16.gmra.mxu0 %v1017
      %v1152 = vpop.f32.mrf.mxu0
      %v1153 = vadd.f32 0.0, %v1152
      %v1154 = vpop.f32.mrf.mxu0
      %v1155 = vadd.f32 0.0, %v1154
      %v1156 = vpop.f32.mrf.mxu0
      %v1157 = vadd.f32 0.0, %v1156
      %v1158 = vpop.f32.mrf.mxu0
      %v1159 = vadd.f32 0.0, %v1158
      %1160 = vmatprep.mubr.bf16.mxu0 0
      %1161 = vmatmul.mubr.bf16.gmra.mxu0 %v1019
      %v1162 = vpop.f32.mrf.mxu0
      %v1163 = vadd.f32 0.0, %v1162
      %v1164 = vpop.f32.mrf.mxu0
      %v1165 = vadd.f32 0.0, %v1164
      %v1166 = vpop.f32.mrf.mxu0
      %v1167 = vadd.f32 0.0, %v1166
      %v1168 = vpop.f32.mrf.mxu0
      %v1169 = vadd.f32 0.0, %v1168
      %1170 = vmatprep.mubr.bf16.mxu0 0
      %1171 = vmatmul.mubr.bf16.gmra.mxu0 %v1021
      %v1172 = vpop.f32.mrf.mxu0
      %v1173 = vadd.f32 0.0, %v1172
      %v1174 = vpop.f32.mrf.mxu0
      %v1175 = vadd.f32 0.0, %v1174
      %v1176 = vpop.f32.mrf.mxu0
      %v1177 = vadd.f32 0.0, %v1176
      %v1178 = vpop.f32.mrf.mxu0
      %v1179 = vadd.f32 0.0, %v1178
      %1180 = vmatprep.mubr.bf16.mxu0 0
      %1181 = vmatmul.mubr.bf16.gmra.mxu0 %v1023
      %v1182 = vpop.f32.mrf.mxu0
      %v1183 = vadd.f32 0.0, %v1182
      %v1184 = vpop.f32.mrf.mxu0
      %v1185 = vadd.f32 0.0, %v1184
      %v1186 = vpop.f32.mrf.mxu0
      %v1187 = vadd.f32 0.0, %v1186
      %v1188 = vpop.f32.mrf.mxu0
      %v1189 = vadd.f32 0.0, %v1188
      %1190 = vmatprep.mubr.bf16.mxu0 0
      %1191 = vmatmul.mubr.bf16.gmra.mxu0 %v1025
      %v1192 = vpop.f32.mrf.mxu0
      %v1193 = vadd.f32 0.0, %v1192
      %v1194 = vpop.f32.mrf.mxu0
      %v1195 = vadd.f32 0.0, %v1194
      %v1196 = vpop.f32.mrf.mxu0
      %v1197 = vadd.f32 0.0, %v1196
      %v1198 = vpop.f32.mrf.mxu0
      %v1199 = vadd.f32 0.0, %v1198
      %1200 = vmatprep.mubr.bf16.mxu0 0
      %1201 = vmatmul.mubr.bf16.gmra.mxu0 %v1027
      %v1202 = vpop.f32.mrf.mxu0
      %v1203 = vadd.f32 0.0, %v1202
      %v1204 = vpop.f32.mrf.mxu0
      %v1205 = vadd.f32 0.0, %v1204
      %v1206 = vpop.f32.mrf.mxu0
      %v1207 = vadd.f32 0.0, %v1206
      %v1208 = vpop.f32.mrf.mxu0
      %v1209 = vadd.f32 0.0, %v1208
      %1210 = vmatprep.mubr.bf16.mxu0 0
      %1211 = vmatmul.mubr.bf16.gmra.mxu0 %v1029
      %v1212 = vpop.f32.mrf.mxu0
      %v1213 = vadd.f32 0.0, %v1212
      %v1214 = vpop.f32.mrf.mxu0
      %v1215 = vadd.f32 0.0, %v1214
      %v1216 = vpop.f32.mrf.mxu0
      %v1217 = vadd.f32 0.0, %v1216
      %v1218 = vpop.f32.mrf.mxu0
      %v1219 = vadd.f32 0.0, %v1218
      %1220 = vmatprep.mubr.bf16.mxu0 0
      %1221 = vmatmul.mubr.bf16.gmra.mxu0 %v1031
      %v1222 = vpop.f32.mrf.mxu0
      %v1223 = vadd.f32 0.0, %v1222
      %v1224 = vpop.f32.mrf.mxu0
      %v1225 = vadd.f32 0.0, %v1224
      %v1226 = vpop.f32.mrf.mxu0
      %v1227 = vadd.f32 0.0, %v1226
      %v1228 = vpop.f32.mrf.mxu0
      %v1229 = vadd.f32 0.0, %v1228
      %1230 = vmatprep.mubr.bf16.mxu0 0
      %1231 = vmatmul.mubr.bf16.gmra.mxu0 %v1033
      %v1232 = vpop.f32.mrf.mxu0
      %v1233 = vadd.f32 0.0, %v1232
      %v1234 = vpop.f32.mrf.mxu0
      %v1235 = vadd.f32 0.0, %v1234
      %v1236 = vpop.f32.mrf.mxu0
      %v1237 = vadd.f32 0.0, %v1236
      %v1238 = vpop.f32.mrf.mxu0
      %v1239 = vadd.f32 0.0, %v1238
      %1240 = vdwg.mxu0
      %1241 = vmatprep.subr.bf16.mxu0 0
      %1242 = vmatpush1.bf16.msra.mxu0 0
      %1243 = vmatprep.subr.bf16.mxu0 0
      %1244 = vmatpush1.bf16.msra.mxu0 0
      %1245 = vmatprep.subr.bf16.mxu0 0
      %1246 = vmatpush1.bf16.msra.mxu0 0
      %1247 = vmatprep.subr.bf16.mxu0 0
      %1248 = vmatpush1.bf16.msra.mxu0 0
      %1249 = vmatprep.subr.bf16.mxu0 0
      %1250 = vmatpush1.bf16.msra.mxu0 0
      %1251 = vmatprep.subr.bf16.mxu0 %v1046
      %1252 = vmatpush1.bf16.msra.mxu0 %v1043
      %1253 = vmatprep.subr.bf16.mxu0 %v989
      %1254 = vmatpush1.bf16.msra.mxu0 %v988
      %1255 = vmatprep.subr.bf16.mxu0 %v985
      %1256 = vmatpush1.bf16.msra.mxu0 %v984
      %1257 = vmatprep.subr.bf16.mxu0 0
      %1258 = vmatpush2.bf16.msra.mxu0 0
      %1259 = vmatprep.subr.bf16.mxu0 0
      %1260 = vmatpush2.bf16.msra.mxu0 0
      %1261 = vmatprep.subr.bf16.mxu0 0
      %1262 = vmatpush2.bf16.msra.mxu0 0
      %1263 = vmatprep.subr.bf16.mxu0 0
      %1264 = vmatpush2.bf16.msra.mxu0 0
      %1265 = vmatprep.subr.bf16.mxu0 0
      %1266 = vmatpush2.bf16.msra.mxu0 0
      %1267 = vmatprep.subr.bf16.mxu0 0
      %1268 = vmatpush2.bf16.msra.mxu0 0
      %1269 = vmatprep.subr.bf16.mxu0 0
      %1270 = vmatpush2.bf16.msra.mxu0 0
      %1271 = vmatprep.subr.bf16.mxu0 0
      %1272 = vmatpush2.bf16.msra.mxu0 0
      %1273 = vmatprep.mubr.bf16.mxu0 0
      %1274 = vmatmul.mubr.bf16.gmra.mxu0 %v1003
      %v1275 = vpop.f32.mrf.mxu0
      %v1276 = vadd.f32 0.0, %v1275
      %v1277 = vpop.f32.mrf.mxu0
      %v1278 = vadd.f32 0.0, %v1277
      %v1279 = vpop.f32.mrf.mxu0
      %v1280 = vadd.f32 0.0, %v1279
      %v1281 = vpop.f32.mrf.mxu0
      %v1282 = vadd.f32 0.0, %v1281
      %1283 = vmatprep.mubr.bf16.mxu0 0
      %1284 = vmatmul.mubr.bf16.gmra.mxu0 %v1005
      %v1285 = vpop.f32.mrf.mxu0
      %v1286 = vadd.f32 0.0, %v1285
      %v1287 = vpop.f32.mrf.mxu0
      %v1288 = vadd.f32 0.0, %v1287
      %v1289 = vpop.f32.mrf.mxu0
      %v1290 = vadd.f32 0.0, %v1289
      %v1291 = vpop.f32.mrf.mxu0
      %v1292 = vadd.f32 0.0, %v1291
      %1293 = vmatprep.mubr.bf16.mxu0 0
      %1294 = vmatmul.mubr.bf16.gmra.mxu0 %v1007
      %v1295 = vpop.f32.mrf.mxu0
      %v1296 = vadd.f32 0.0, %v1295
      %v1297 = vpop.f32.mrf.mxu0
      %v1298 = vadd.f32 0.0, %v1297
      %v1299 = vpop.f32.mrf.mxu0
      %v1300 = vadd.f32 0.0, %v1299
      %v1301 = vpop.f32.mrf.mxu0
      %v1302 = vadd.f32 0.0, %v1301
      %1303 = vmatprep.mubr.bf16.mxu0 0
      %1304 = vmatmul.mubr.bf16.gmra.mxu0 %v1009
      %v1305 = vpop.f32.mrf.mxu0
      %v1306 = vadd.f32 0.0, %v1305
      %v1307 = vpop.f32.mrf.mxu0
      %v1308 = vadd.f32 0.0, %v1307
      %v1309 = vpop.f32.mrf.mxu0
      %v1310 = vadd.f32 0.0, %v1309
      %v1311 = vpop.f32.mrf.mxu0
      %v1312 = vadd.f32 0.0, %v1311
      %1313 = vmatprep.mubr.bf16.mxu0 0
      %1314 = vmatmul.mubr.bf16.gmra.mxu0 %v1011
      %v1315 = vpop.f32.mrf.mxu0
      %v1316 = vadd.f32 0.0, %v1315
      %v1317 = vpop.f32.mrf.mxu0
      %v1318 = vadd.f32 0.0, %v1317
      %v1319 = vpop.f32.mrf.mxu0
      %v1320 = vadd.f32 0.0, %v1319
      %v1321 = vpop.f32.mrf.mxu0
      %v1322 = vadd.f32 0.0, %v1321
      %1323 = vmatprep.mubr.bf16.mxu0 0
      %1324 = vmatmul.mubr.bf16.gmra.mxu0 %v1013
      %v1325 = vpop.f32.mrf.mxu0
      %v1326 = vadd.f32 0.0, %v1325
      %v1327 = vpop.f32.mrf.mxu0
      %v1328 = vadd.f32 0.0, %v1327
      %v1329 = vpop.f32.mrf.mxu0
      %v1330 = vadd.f32 0.0, %v1329
      %v1331 = vpop.f32.mrf.mxu0
      %v1332 = vadd.f32 0.0, %v1331
      %1333 = vmatprep.mubr.bf16.mxu0 0
      %1334 = vmatmul.mubr.bf16.gmra.mxu0 %v1015
      %v1335 = vpop.f32.mrf.mxu0
      %v1336 = vadd.f32 0.0, %v1335
      %v1337 = vpop.f32.mrf.mxu0
      %v1338 = vadd.f32 0.0, %v1337
      %v1339 = vpop.f32.mrf.mxu0
      %v1340 = vadd.f32 0.0, %v1339
      %v1341 = vpop.f32.mrf.mxu0
      %v1342 = vadd.f32 0.0, %v1341
      %1343 = vmatprep.mubr.bf16.mxu0 0
      %1344 = vmatmul.mubr.bf16.gmra.mxu0 %v1017
      %v1345 = vpop.f32.mrf.mxu0
      %v1346 = vadd.f32 0.0, %v1345
      %v1347 = vpop.f32.mrf.mxu0
      %v1348 = vadd.f32 0.0, %v1347
      %v1349 = vpop.f32.mrf.mxu0
      %v1350 = vadd.f32 0.0, %v1349
      %v1351 = vpop.f32.mrf.mxu0
      %v1352 = vadd.f32 0.0, %v1351
      %1353 = vmatprep.mubr.bf16.mxu0 0
      %1354 = vmatmul.mubr.bf16.gmra.mxu0 %v1019
      %v1355 = vpop.f32.mrf.mxu0
      %v1356 = vadd.f32 0.0, %v1355
      %v1357 = vpop.f32.mrf.mxu0
      %v1358 = vadd.f32 0.0, %v1357
      %v1359 = vpop.f32.mrf.mxu0
      %v1360 = vadd.f32 0.0, %v1359
      %v1361 = vpop.f32.mrf.mxu0
      %v1362 = vadd.f32 0.0, %v1361
      %1363 = vmatprep.mubr.bf16.mxu0 0
      %1364 = vmatmul.mubr.bf16.gmra.mxu0 %v1021
      %v1365 = vpop.f32.mrf.mxu0
      %v1366 = vadd.f32 0.0, %v1365
      %v1367 = vpop.f32.mrf.mxu0
      %v1368 = vadd.f32 0.0, %v1367
      %v1369 = vpop.f32.mrf.mxu0
      %v1370 = vadd.f32 0.0, %v1369
      %v1371 = vpop.f32.mrf.mxu0
      %v1372 = vadd.f32 0.0, %v1371
      %1373 = vmatprep.mubr.bf16.mxu0 0
      %1374 = vmatmul.mubr.bf16.gmra.mxu0 %v1023
      %v1375 = vpop.f32.mrf.mxu0
      %v1376 = vadd.f32 0.0, %v1375
      %v1377 = vpop.f32.mrf.mxu0
      %v1378 = vadd.f32 0.0, %v1377
      %v1379 = vpop.f32.mrf.mxu0
      %v1380 = vadd.f32 0.0, %v1379
      %v1381 = vpop.f32.mrf.mxu0
      %v1382 = vadd.f32 0.0, %v1381
      %1383 = vmatprep.mubr.bf16.mxu0 0
      %1384 = vmatmul.mubr.bf16.gmra.mxu0 %v1025
      %v1385 = vpop.f32.mrf.mxu0
      %v1386 = vadd.f32 0.0, %v1385
      %v1387 = vpop.f32.mrf.mxu0
      %v1388 = vadd.f32 0.0, %v1387
      %v1389 = vpop.f32.mrf.mxu0
      %v1390 = vadd.f32 0.0, %v1389
      %v1391 = vpop.f32.mrf.mxu0
      %v1392 = vadd.f32 0.0, %v1391
      %1393 = vmatprep.mubr.bf16.mxu0 0
      %1394 = vmatmul.mubr.bf16.gmra.mxu0 %v1027
      %v1395 = vpop.f32.mrf.mxu0
      %v1396 = vadd.f32 0.0, %v1395
      %v1397 = vpop.f32.mrf.mxu0
      %v1398 = vadd.f32 0.0, %v1397
      %v1399 = vpop.f32.mrf.mxu0
      %v1400 = vadd.f32 0.0, %v1399
      %v1401 = vpop.f32.mrf.mxu0
      %v1402 = vadd.f32 0.0, %v1401
      %1403 = vmatprep.mubr.bf16.mxu0 0
      %1404 = vmatmul.mubr.bf16.gmra.mxu0 %v1029
      %v1405 = vpop.f32.mrf.mxu0
      %v1406 = vadd.f32 0.0, %v1405
      %v1407 = vpop.f32.mrf.mxu0
      %v1408 = vadd.f32 0.0, %v1407
      %v1409 = vpop.f32.mrf.mxu0
      %v1410 = vadd.f32 0.0, %v1409
      %v1411 = vpop.f32.mrf.mxu0
      %v1412 = vadd.f32 0.0, %v1411
      %1413 = vmatprep.mubr.bf16.mxu0 0
      %1414 = vmatmul.mubr.bf16.gmra.mxu0 %v1031
      %v1415 = vpop.f32.mrf.mxu0
      %v1416 = vadd.f32 0.0, %v1415
      %v1417 = vpop.f32.mrf.mxu0
      %v1418 = vadd.f32 0.0, %v1417
      %v1419 = vpop.f32.mrf.mxu0
      %v1420 = vadd.f32 0.0, %v1419
      %v1421 = vpop.f32.mrf.mxu0
      %v1422 = vadd.f32 0.0, %v1421
      %1423 = vmatprep.mubr.bf16.mxu0 0
      %1424 = vmatmul.mubr.bf16.gmra.mxu0 %v1033
      %v1425 = vpop.f32.mrf.mxu0
      %v1426 = vadd.f32 0.0, %v1425
      %v1427 = vpop.f32.mrf.mxu0
      %v1428 = vadd.f32 0.0, %v1427
      %v1429 = vpop.f32.mrf.mxu0
      %v1430 = vadd.f32 0.0, %v1429
      %v1431 = vpop.f32.mrf.mxu0
      %v1432 = vadd.f32 0.0, %v1431
      %1433 = vdwg.mxu0
      %v1434 = vld [vmem:[%s3] sm:$0x1]
      %v1436 = vlaneseq
      %v1437 = vshrl.u32 %v1436, 7
      %v1438 = vsub.s32 0, %v1437
      %v1439 = vrot.slane %v1434, %v1438
      %1440 = vrot.lane.b32.xlu0 %v1439, 96
      %v1441 = vpop.permute.xlu0 %1440
      %v1443 = vadd.f32 %v1085, %v1441
      %v1444 = vadd.f32 %v1089, %v1441
      %v1445 = vadd.f32 %v1095, %v1441
      %v1446 = vadd.f32 %v1099, %v1441
      %v1447 = vadd.f32 %v1105, %v1441
      %v1448 = vadd.f32 %v1109, %v1441
      %v1449 = vadd.f32 %v1115, %v1441
      %v1450 = vadd.f32 %v1119, %v1441
      %v1451 = vadd.f32 %v1125, %v1441
      %v1452 = vadd.f32 %v1129, %v1441
      %v1453 = vadd.f32 %v1135, %v1441
      %v1454 = vadd.f32 %v1139, %v1441
      %v1455 = vadd.f32 %v1145, %v1441
      %v1456 = vadd.f32 %v1149, %v1441
      %v1457 = vadd.f32 %v1155, %v1441
      %v1458 = vadd.f32 %v1159, %v1441
      %v1459 = vadd.f32 %v1165, %v1441
      %v1460 = vadd.f32 %v1169, %v1441
      %v1461 = vadd.f32 %v1175, %v1441
      %v1462 = vadd.f32 %v1179, %v1441
      %v1463 = vadd.f32 %v1185, %v1441
      %v1464 = vadd.f32 %v1189, %v1441
      %v1465 = vadd.f32 %v1195, %v1441
      %v1466 = vadd.f32 %v1199, %v1441
      %v1467 = vadd.f32 %v1205, %v1441
      %v1468 = vadd.f32 %v1209, %v1441
      %v1469 = vadd.f32 %v1215, %v1441
      %v1470 = vadd.f32 %v1219, %v1441
      %v1471 = vadd.f32 %v1225, %v1441
      %v1472 = vadd.f32 %v1229, %v1441
      %v1473 = vadd.f32 %v1235, %v1441
      %v1474 = vadd.f32 %v1239, %v1441
      %v1475 = vrot.slane %v1083, 1
      %v1476 = vrot.slane %v1087, 1
      %v1477 = vrot.slane %v1093, 1
      %v1478 = vrot.slane %v1097, 1
      %v1479 = vrot.slane %v1103, 1
      %v1480 = vrot.slane %v1107, 1
      %v1481 = vrot.slane %v1113, 1
      %v1482 = vrot.slane %v1117, 1
      %v1483 = vrot.slane %v1123, 1
      %v1484 = vrot.slane %v1127, 1
      %v1485 = vrot.slane %v1133, 1
      %v1486 = vrot.slane %v1137, 1
      %v1487 = vrot.slane %v1143, 1
      %v1488 = vrot.slane %v1147, 1
      %v1489 = vrot.slane %v1153, 1
      %v1490 = vrot.slane %v1157, 1
      %v1491 = vrot.slane %v1163, 1
      %v1492 = vrot.slane %v1167, 1
      %v1493 = vrot.slane %v1173, 1
      %v1494 = vrot.slane %v1177, 1
      %v1495 = vrot.slane %v1183, 1
      %v1496 = vrot.slane %v1187, 1
      %v1497 = vrot.slane %v1193, 1
      %v1498 = vrot.slane %v1197, 1
      %v1499 = vrot.slane %v1203, 1
      %v1500 = vrot.slane %v1207, 1
      %v1501 = vrot.slane %v1213, 1
      %v1502 = vrot.slane %v1217, 1
      %v1503 = vrot.slane %v1223, 1
      %v1504 = vrot.slane %v1227, 1
      %v1505 = vrot.slane %v1233, 1
      %v1506 = vrot.slane %v1237, 1
      %vm1507 = vcmp.lt.s32.totalorder %v333, 7
      %v1508 = vsel %vm1507, %v1505, %v1506
      %v1509 = vsel %vm1507, %v1504, %v1505
      %v1510 = vsel %vm1507, %v1503, %v1504
      %v1511 = vsel %vm1507, %v1502, %v1503
      %v1512 = vsel %vm1507, %v1501, %v1502
      %v1513 = vsel %vm1507, %v1500, %v1501
      %v1514 = vsel %vm1507, %v1499, %v1500
      %v1515 = vsel %vm1507, %v1498, %v1499
      %v1516 = vsel %vm1507, %v1497, %v1498
      %v1517 = vsel %vm1507, %v1496, %v1497
      %v1518 = vsel %vm1507, %v1495, %v1496
      %v1519 = vsel %vm1507, %v1494, %v1495
      %v1520 = vsel %vm1507, %v1493, %v1494
      %v1521 = vsel %vm1507, %v1492, %v1493
      %v1522 = vsel %vm1507, %v1491, %v1492
      %v1523 = vsel %vm1507, %v1490, %v1491
      %v1524 = vsel %vm1507, %v1489, %v1490
      %v1525 = vsel %vm1507, %v1488, %v1489
      %v1526 = vsel %vm1507, %v1487, %v1488
      %v1527 = vsel %vm1507, %v1486, %v1487
      %v1528 = vsel %vm1507, %v1485, %v1486
      %v1529 = vsel %vm1507, %v1484, %v1485
      %v1530 = vsel %vm1507, %v1483, %v1484
      %v1531 = vsel %vm1507, %v1482, %v1483
      %v1532 = vsel %vm1507, %v1481, %v1482
      %v1533 = vsel %vm1507, %v1480, %v1481
      %v1534 = vsel %vm1507, %v1479, %v1480
      %v1535 = vsel %vm1507, %v1478, %v1479
      %v1536 = vsel %vm1507, %v1477, %v1478
      %v1537 = vsel %vm1507, %v1476, %v1477
      %v1538 = vsel %vm1507, %v1475, %v1476
      %v1539 = vsel %vm1507, %v1506, %v1475
      %vm1540 = vcmp.ge.s32.totalorder %v717, 7
      %vm1541 = vcmp.ge.s32.totalorder %v718, 7
      %vm1542 = vcmp.ge.s32.totalorder %v719, 7
      %vm1543 = vcmp.ge.s32.totalorder %v720, 7
      %vm1544 = vcmp.ge.s32.totalorder %v721, 7
      %vm1545 = vcmp.ge.s32.totalorder %v722, 7
      %vm1546 = vcmp.ge.s32.totalorder %v723, 7
      %vm1547 = vcmp.ge.s32.totalorder %v724, 7
      %vm1548 = vcmp.ge.s32.totalorder %v725, 7
      %vm1549 = vcmp.ge.s32.totalorder %v726, 7
      %vm1550 = vcmp.ge.s32.totalorder %v727, 7
      %vm1551 = vcmp.ge.s32.totalorder %v728, 7
      %vm1552 = vcmp.ge.s32.totalorder %v729, 7
      %vm1553 = vcmp.ge.s32.totalorder %v730, 7
      %vm1554 = vcmp.ge.s32.totalorder %v731, 7
      %vm1555 = vcmp.ge.s32.totalorder %v732, 7
      %vm1556 = vcmp.ge.s32.totalorder %v733, 7
      %vm1557 = vcmp.ge.s32.totalorder %v734, 7
      %vm1558 = vcmp.ge.s32.totalorder %v735, 7
      %vm1559 = vcmp.ge.s32.totalorder %v736, 7
      %vm1560 = vcmp.ge.s32.totalorder %v737, 7
      %vm1561 = vcmp.ge.s32.totalorder %v738, 7
      %vm1562 = vcmp.ge.s32.totalorder %v739, 7
      %vm1563 = vcmp.ge.s32.totalorder %v740, 7
      %vm1564 = vcmp.ge.s32.totalorder %v741, 7
      %vm1565 = vcmp.ge.s32.totalorder %v742, 7
      %vm1566 = vcmp.ge.s32.totalorder %v743, 7
      %vm1567 = vcmp.ge.s32.totalorder %v744, 7
      %vm1568 = vcmp.ge.s32.totalorder %v745, 7
      %vm1569 = vcmp.ge.s32.totalorder %v746, 7
      %vm1570 = vcmp.ge.s32.totalorder %v747, 7
      %vm1571 = vcmp.ge.s32.totalorder %v748, 7
      %v1572 = vsel %vm1540, 1, 0
      %v1573 = vsel %vm1541, 1, 0
      %v1574 = vsel %vm1542, 1, 0
      %v1575 = vsel %vm1543, 1, 0
      %v1576 = vsel %vm1544, 1, 0
      %v1577 = vsel %vm1545, 1, 0
      %v1578 = vsel %vm1546, 1, 0
      %v1579 = vsel %vm1547, 1, 0
      %v1580 = vsel %vm1548, 1, 0
      %v1581 = vsel %vm1549, 1, 0
      %v1582 = vsel %vm1550, 1, 0
      %v1583 = vsel %vm1551, 1, 0
      %v1584 = vsel %vm1552, 1, 0
      %v1585 = vsel %vm1553, 1, 0
      %v1586 = vsel %vm1554, 1, 0
      %v1587 = vsel %vm1555, 1, 0
      %v1588 = vsel %vm1556, 1, 0
      %v1589 = vsel %vm1557, 1, 0
      %v1590 = vsel %vm1558, 1, 0
      %v1591 = vsel %vm1559, 1, 0
      %v1592 = vsel %vm1560, 1, 0
      %v1593 = vsel %vm1561, 1, 0
      %v1594 = vsel %vm1562, 1, 0
      %v1595 = vsel %vm1563, 1, 0
      %v1596 = vsel %vm1564, 1, 0
      %v1597 = vsel %vm1565, 1, 0
      %v1598 = vsel %vm1566, 1, 0
      %v1599 = vsel %vm1567, 1, 0
      %v1600 = vsel %vm1568, 1, 0
      %v1601 = vsel %vm1569, 1, 0
      %v1602 = vsel %vm1570, 1, 0
      %v1603 = vsel %vm1571, 1, 0
      %v1604 = vcvt.s32.f32 %v1572
      %v1605 = vcvt.s32.f32 %v1573
      %v1606 = vcvt.s32.f32 %v1574
      %v1607 = vcvt.s32.f32 %v1575
      %v1608 = vcvt.s32.f32 %v1576
      %v1609 = vcvt.s32.f32 %v1577
      %v1610 = vcvt.s32.f32 %v1578
      %v1611 = vcvt.s32.f32 %v1579
      %v1612 = vcvt.s32.f32 %v1580
      %v1613 = vcvt.s32.f32 %v1581
      %v1614 = vcvt.s32.f32 %v1582
      %v1615 = vcvt.s32.f32 %v1583
      %v1616 = vcvt.s32.f32 %v1584
      %v1617 = vcvt.s32.f32 %v1585
      %v1618 = vcvt.s32.f32 %v1586
      %v1619 = vcvt.s32.f32 %v1587
      %v1620 = vcvt.s32.f32 %v1588
      %v1621 = vcvt.s32.f32 %v1589
      %v1622 = vcvt.s32.f32 %v1590
      %v1623 = vcvt.s32.f32 %v1591
      %v1624 = vcvt.s32.f32 %v1592
      %v1625 = vcvt.s32.f32 %v1593
      %v1626 = vcvt.s32.f32 %v1594
      %v1627 = vcvt.s32.f32 %v1595
      %v1628 = vcvt.s32.f32 %v1596
      %v1629 = vcvt.s32.f32 %v1597
      %v1630 = vcvt.s32.f32 %v1598
      %v1631 = vcvt.s32.f32 %v1599
      %v1632 = vcvt.s32.f32 %v1600
      %v1633 = vcvt.s32.f32 %v1601
      %v1634 = vcvt.s32.f32 %v1602
      %v1635 = vcvt.s32.f32 %v1603
      %v1636 = vmul.f32 %v1539, %v1604
      %v1637 = vmul.f32 %v1538, %v1605
      %v1638 = vmul.f32 %v1537, %v1606
      %v1639 = vmul.f32 %v1536, %v1607
      %v1640 = vmul.f32 %v1535, %v1608
      %v1641 = vmul.f32 %v1534, %v1609
      %v1642 = vmul.f32 %v1533, %v1610
      %v1643 = vmul.f32 %v1532, %v1611
      %v1644 = vmul.f32 %v1531, %v1612
      %v1645 = vmul.f32 %v1530, %v1613
      %v1646 = vmul.f32 %v1529, %v1614
      %v1647 = vmul.f32 %v1528, %v1615
      %v1648 = vmul.f32 %v1527, %v1616
      %v1649 = vmul.f32 %v1526, %v1617
      %v1650 = vmul.f32 %v1525, %v1618
      %v1651 = vmul.f32 %v1524, %v1619
      %v1652 = vmul.f32 %v1523, %v1620
      %v1653 = vmul.f32 %v1522, %v1621
      %v1654 = vmul.f32 %v1521, %v1622
      %v1655 = vmul.f32 %v1520, %v1623
      %v1656 = vmul.f32 %v1519, %v1624
      %v1657 = vmul.f32 %v1518, %v1625
      %v1658 = vmul.f32 %v1517, %v1626
      %v1659 = vmul.f32 %v1516, %v1627
      %v1660 = vmul.f32 %v1515, %v1628
      %v1661 = vmul.f32 %v1514, %v1629
      %v1662 = vmul.f32 %v1513, %v1630
      %v1663 = vmul.f32 %v1512, %v1631
      %v1664 = vmul.f32 %v1511, %v1632
      %v1665 = vmul.f32 %v1510, %v1633
      %v1666 = vmul.f32 %v1509, %v1634
      %v1667 = vmul.f32 %v1508, %v1635
      %1700 = vrot.lane.b32.xlu0 %v1636, 96
      %v1701 = vpop.permute.xlu0 %1700
      %1702 = vrot.lane.b32.xlu0 %v1637, 96
      %v1703 = vpop.permute.xlu0 %1702
      %1704 = vrot.lane.b32.xlu0 %v1638, 96
      %v1705 = vpop.permute.xlu0 %1704
      %1706 = vrot.lane.b32.xlu0 %v1639, 96
      %v1707 = vpop.permute.xlu0 %1706
      %1708 = vrot.lane.b32.xlu0 %v1640, 96
      %v1709 = vpop.permute.xlu0 %1708
      %1710 = vrot.lane.b32.xlu0 %v1641, 96
      %v1711 = vpop.permute.xlu0 %1710
      %1712 = vrot.lane.b32.xlu0 %v1642, 96
      %v1713 = vpop.permute.xlu0 %1712
      %1714 = vrot.lane.b32.xlu0 %v1643, 96
      %v1715 = vpop.permute.xlu0 %1714
      %1716 = vrot.lane.b32.xlu0 %v1644, 96
      %v1717 = vpop.permute.xlu0 %1716
      %1718 = vrot.lane.b32.xlu0 %v1645, 96
      %v1719 = vpop.permute.xlu0 %1718
      %1720 = vrot.lane.b32.xlu0 %v1646, 96
      %v1721 = vpop.permute.xlu0 %1720
      %1722 = vrot.lane.b32.xlu0 %v1647, 96
      %v1723 = vpop.permute.xlu0 %1722
      %1724 = vrot.lane.b32.xlu0 %v1648, 96
      %v1725 = vpop.permute.xlu0 %1724
      %1726 = vrot.lane.b32.xlu0 %v1649, 96
      %v1727 = vpop.permute.xlu0 %1726
      %1728 = vrot.lane.b32.xlu0 %v1650, 96
      %v1729 = vpop.permute.xlu0 %1728
      %1730 = vrot.lane.b32.xlu0 %v1651, 96
      %v1731 = vpop.permute.xlu0 %1730
      %1732 = vrot.lane.b32.xlu0 %v1652, 96
      %v1733 = vpop.permute.xlu0 %1732
      %1734 = vrot.lane.b32.xlu0 %v1653, 96
      %v1735 = vpop.permute.xlu0 %1734
      %1736 = vrot.lane.b32.xlu0 %v1654, 96
      %v1737 = vpop.permute.xlu0 %1736
      %1738 = vrot.lane.b32.xlu0 %v1655, 96
      %v1739 = vpop.permute.xlu0 %1738
      %1740 = vrot.lane.b32.xlu0 %v1656, 96
      %v1741 = vpop.permute.xlu0 %1740
      %1742 = vrot.lane.b32.xlu0 %v1657, 96
      %v1743 = vpop.permute.xlu0 %1742
      %1744 = vrot.lane.b32.xlu0 %v1658, 96
      %v1745 = vpop.permute.xlu0 %1744
      %1746 = vrot.lane.b32.xlu0 %v1659, 96
      %v1747 = vpop.permute.xlu0 %1746
      %1748 = vrot.lane.b32.xlu0 %v1660, 96
      %v1749 = vpop.permute.xlu0 %1748
      %1750 = vrot.lane.b32.xlu0 %v1661, 96
      %v1751 = vpop.permute.xlu0 %1750
      %1752 = vrot.lane.b32.xlu0 %v1662, 96
      %v1753 = vpop.permute.xlu0 %1752
      %1754 = vrot.lane.b32.xlu0 %v1663, 96
      %v1755 = vpop.permute.xlu0 %1754
      %1756 = vrot.lane.b32.xlu0 %v1664, 96
      %v1757 = vpop.permute.xlu0 %1756
      %1758 = vrot.lane.b32.xlu0 %v1665, 96
      %v1759 = vpop.permute.xlu0 %1758
      %1760 = vrot.lane.b32.xlu0 %v1666, 96
      %v1761 = vpop.permute.xlu0 %1760
      %1762 = vrot.lane.b32.xlu0 %v1667, 96
      %v1763 = vpop.permute.xlu0 %1762
      %v1796 = vadd.f32 %v1443, %v1701
      %v1797 = vadd.f32 %v1444, %v1703
      %v1798 = vadd.f32 %v1445, %v1705
      %v1799 = vadd.f32 %v1446, %v1707
      %v1800 = vadd.f32 %v1447, %v1709
      %v1801 = vadd.f32 %v1448, %v1711
      %v1802 = vadd.f32 %v1449, %v1713
      %v1803 = vadd.f32 %v1450, %v1715
      %v1804 = vadd.f32 %v1451, %v1717
      %v1805 = vadd.f32 %v1452, %v1719
      %v1806 = vadd.f32 %v1453, %v1721
      %v1807 = vadd.f32 %v1454, %v1723
      %v1808 = vadd.f32 %v1455, %v1725
      %v1809 = vadd.f32 %v1456, %v1727
      %v1810 = vadd.f32 %v1457, %v1729
      %v1811 = vadd.f32 %v1458, %v1731
      %v1812 = vadd.f32 %v1459, %v1733
      %v1813 = vadd.f32 %v1460, %v1735
      %v1814 = vadd.f32 %v1461, %v1737
      %v1815 = vadd.f32 %v1462, %v1739
      %v1816 = vadd.f32 %v1463, %v1741
      %v1817 = vadd.f32 %v1464, %v1743
      %v1818 = vadd.f32 %v1465, %v1745
      %v1819 = vadd.f32 %v1466, %v1747
      %v1820 = vadd.f32 %v1467, %v1749
      %v1821 = vadd.f32 %v1468, %v1751
      %v1822 = vadd.f32 %v1469, %v1753
      %v1823 = vadd.f32 %v1470, %v1755
      %v1824 = vadd.f32 %v1471, %v1757
      %v1825 = vadd.f32 %v1472, %v1759
      %v1826 = vadd.f32 %v1473, %v1761
      %v1827 = vadd.f32 %v1474, %v1763
      %1860 = vrot.lane.b32.xlu0 %v1083, 96
      %v1861 = vpop.permute.xlu0 %1860
      %1862 = vrot.lane.b32.xlu0 %v1087, 96
      %v1863 = vpop.permute.xlu0 %1862
      %1864 = vrot.lane.b32.xlu0 %v1093, 96
      %v1865 = vpop.permute.xlu0 %1864
      %1866 = vrot.lane.b32.xlu0 %v1097, 96
      %v1867 = vpop.permute.xlu0 %1866
      %1868 = vrot.lane.b32.xlu0 %v1103, 96
      %v1869 = vpop.permute.xlu0 %1868
      %1870 = vrot.lane.b32.xlu0 %v1107, 96
      %v1871 = vpop.permute.xlu0 %1870
      %1872 = vrot.lane.b32.xlu0 %v1113, 96
      %v1873 = vpop.permute.xlu0 %1872
      %1874 = vrot.lane.b32.xlu0 %v1117, 96
      %v1875 = vpop.permute.xlu0 %1874
      %1876 = vrot.lane.b32.xlu0 %v1123, 96
      %v1877 = vpop.permute.xlu0 %1876
      %1878 = vrot.lane.b32.xlu0 %v1127, 96
      %v1879 = vpop.permute.xlu0 %1878
      %1880 = vrot.lane.b32.xlu0 %v1133, 96
      %v1881 = vpop.permute.xlu0 %1880
      %1882 = vrot.lane.b32.xlu0 %v1137, 96
      %v1883 = vpop.permute.xlu0 %1882
      %1884 = vrot.lane.b32.xlu0 %v1143, 96
      %v1885 = vpop.permute.xlu0 %1884
      %1886 = vrot.lane.b32.xlu0 %v1147, 96
      %v1887 = vpop.permute.xlu0 %1886
      %1888 = vrot.lane.b32.xlu0 %v1153, 96
      %v1889 = vpop.permute.xlu0 %1888
      %1890 = vrot.lane.b32.xlu0 %v1157, 96
      %v1891 = vpop.permute.xlu0 %1890
      %1892 = vrot.lane.b32.xlu0 %v1163, 96
      %v1893 = vpop.permute.xlu0 %1892
      %1894 = vrot.lane.b32.xlu0 %v1167, 96
      %v1895 = vpop.permute.xlu0 %1894
      %1896 = vrot.lane.b32.xlu0 %v1173, 96
      %v1897 = vpop.permute.xlu0 %1896
      %1898 = vrot.lane.b32.xlu0 %v1177, 96
      %v1899 = vpop.permute.xlu0 %1898
      %1900 = vrot.lane.b32.xlu0 %v1183, 96
      %v1901 = vpop.permute.xlu0 %1900
      %1902 = vrot.lane.b32.xlu0 %v1187, 96
      %v1903 = vpop.permute.xlu0 %1902
      %1904 = vrot.lane.b32.xlu0 %v1193, 96
      %v1905 = vpop.permute.xlu0 %1904
      %1906 = vrot.lane.b32.xlu0 %v1197, 96
      %v1907 = vpop.permute.xlu0 %1906
      %1908 = vrot.lane.b32.xlu0 %v1203, 96
      %v1909 = vpop.permute.xlu0 %1908
      %1910 = vrot.lane.b32.xlu0 %v1207, 96
      %v1911 = vpop.permute.xlu0 %1910
      %1912 = vrot.lane.b32.xlu0 %v1213, 96
      %v1913 = vpop.permute.xlu0 %1912
      %1914 = vrot.lane.b32.xlu0 %v1217, 96
      %v1915 = vpop.permute.xlu0 %1914
      %1916 = vrot.lane.b32.xlu0 %v1223, 96
      %v1917 = vpop.permute.xlu0 %1916
      %1918 = vrot.lane.b32.xlu0 %v1227, 96
      %v1919 = vpop.permute.xlu0 %1918
      %1920 = vrot.lane.b32.xlu0 %v1233, 96
      %v1921 = vpop.permute.xlu0 %1920
      %1922 = vrot.lane.b32.xlu0 %v1237, 96
      %v1923 = vpop.permute.xlu0 %1922
      %v1956 = vrot.slane %v1861, 2
      %v1957 = vrot.slane %v1863, 2
      %v1958 = vrot.slane %v1865, 2
      %v1959 = vrot.slane %v1867, 2
      %v1960 = vrot.slane %v1869, 2
      %v1961 = vrot.slane %v1871, 2
      %v1962 = vrot.slane %v1873, 2
      %v1963 = vrot.slane %v1875, 2
      %v1964 = vrot.slane %v1877, 2
      %v1965 = vrot.slane %v1879, 2
      %v1966 = vrot.slane %v1881, 2
      %v1967 = vrot.slane %v1883, 2
      %v1968 = vrot.slane %v1885, 2
      %v1969 = vrot.slane %v1887, 2
      %v1970 = vrot.slane %v1889, 2
      %v1971 = vrot.slane %v1891, 2
      %v1972 = vrot.slane %v1893, 2
      %v1973 = vrot.slane %v1895, 2
      %v1974 = vrot.slane %v1897, 2
      %v1975 = vrot.slane %v1899, 2
      %v1976 = vrot.slane %v1901, 2
      %v1977 = vrot.slane %v1903, 2
      %v1978 = vrot.slane %v1905, 2
      %v1979 = vrot.slane %v1907, 2
      %v1980 = vrot.slane %v1909, 2
      %v1981 = vrot.slane %v1911, 2
      %v1982 = vrot.slane %v1913, 2
      %v1983 = vrot.slane %v1915, 2
      %v1984 = vrot.slane %v1917, 2
      %v1985 = vrot.slane %v1919, 2
      %v1986 = vrot.slane %v1921, 2
      %v1987 = vrot.slane %v1923, 2
      %vm1988 = vcmp.lt.s32.totalorder %v333, 6
      %v1989 = vsel %vm1988, %v1986, %v1987
      %v1990 = vsel %vm1988, %v1985, %v1986
      %v1991 = vsel %vm1988, %v1984, %v1985
      %v1992 = vsel %vm1988, %v1983, %v1984
      %v1993 = vsel %vm1988, %v1982, %v1983
      %v1994 = vsel %vm1988, %v1981, %v1982
      %v1995 = vsel %vm1988, %v1980, %v1981
      %v1996 = vsel %vm1988, %v1979, %v1980
      %v1997 = vsel %vm1988, %v1978, %v1979
      %v1998 = vsel %vm1988, %v1977, %v1978
      %v1999 = vsel %vm1988, %v1976, %v1977
      %v2000 = vsel %vm1988, %v1975, %v1976
      %v2001 = vsel %vm1988, %v1974, %v1975
      %v2002 = vsel %vm1988, %v1973, %v1974
      %v2003 = vsel %vm1988, %v1972, %v1973
      %v2004 = vsel %vm1988, %v1971, %v1972
      %v2005 = vsel %vm1988, %v1970, %v1971
      %v2006 = vsel %vm1988, %v1969, %v1970
      %v2007 = vsel %vm1988, %v1968, %v1969
      %v2008 = vsel %vm1988, %v1967, %v1968
      %v2009 = vsel %vm1988, %v1966, %v1967
      %v2010 = vsel %vm1988, %v1965, %v1966
      %v2011 = vsel %vm1988, %v1964, %v1965
      %v2012 = vsel %vm1988, %v1963, %v1964
      %v2013 = vsel %vm1988, %v1962, %v1963
      %v2014 = vsel %vm1988, %v1961, %v1962
      %v2015 = vsel %vm1988, %v1960, %v1961
      %v2016 = vsel %vm1988, %v1959, %v1960
      %v2017 = vsel %vm1988, %v1958, %v1959
      %v2018 = vsel %vm1988, %v1957, %v1958
      %v2019 = vsel %vm1988, %v1956, %v1957
      %v2020 = vsel %vm1988, %v1987, %v1956
      %vm2021 = vcmp.ge.s32.totalorder %v717, 6
      %vm2022 = vcmp.ge.s32.totalorder %v718, 6
      %vm2023 = vcmp.ge.s32.totalorder %v719, 6
      %vm2024 = vcmp.ge.s32.totalorder %v720, 6
      %vm2025 = vcmp.ge.s32.totalorder %v721, 6
      %vm2026 = vcmp.ge.s32.totalorder %v722, 6
      %vm2027 = vcmp.ge.s32.totalorder %v723, 6
      %vm2028 = vcmp.ge.s32.totalorder %v724, 6
      %vm2029 = vcmp.ge.s32.totalorder %v725, 6
      %vm2030 = vcmp.ge.s32.totalorder %v726, 6
      %vm2031 = vcmp.ge.s32.totalorder %v727, 6
      %vm2032 = vcmp.ge.s32.totalorder %v728, 6
      %vm2033 = vcmp.ge.s32.totalorder %v729, 6
      %vm2034 = vcmp.ge.s32.totalorder %v730, 6
      %vm2035 = vcmp.ge.s32.totalorder %v731, 6
      %vm2036 = vcmp.ge.s32.totalorder %v732, 6
      %vm2037 = vcmp.ge.s32.totalorder %v733, 6
      %vm2038 = vcmp.ge.s32.totalorder %v734, 6
      %vm2039 = vcmp.ge.s32.totalorder %v735, 6
      %vm2040 = vcmp.ge.s32.totalorder %v736, 6
      %vm2041 = vcmp.ge.s32.totalorder %v737, 6
      %vm2042 = vcmp.ge.s32.totalorder %v738, 6
      %vm2043 = vcmp.ge.s32.totalorder %v739, 6
      %vm2044 = vcmp.ge.s32.totalorder %v740, 6
      %vm2045 = vcmp.ge.s32.totalorder %v741, 6
      %vm2046 = vcmp.ge.s32.totalorder %v742, 6
      %vm2047 = vcmp.ge.s32.totalorder %v743, 6
      %vm2048 = vcmp.ge.s32.totalorder %v744, 6
      %vm2049 = vcmp.ge.s32.totalorder %v745, 6
      %vm2050 = vcmp.ge.s32.totalorder %v746, 6
      %vm2051 = vcmp.ge.s32.totalorder %v747, 6
      %vm2052 = vcmp.ge.s32.totalorder %v748, 6
      %v2053 = vsel %vm2021, 1, 0
      %v2054 = vsel %vm2022, 1, 0
      %v2055 = vsel %vm2023, 1, 0
      %v2056 = vsel %vm2024, 1, 0
      %v2057 = vsel %vm2025, 1, 0
      %v2058 = vsel %vm2026, 1, 0
      %v2059 = vsel %vm2027, 1, 0
      %v2060 = vsel %vm2028, 1, 0
      %v2061 = vsel %vm2029, 1, 0
      %v2062 = vsel %vm2030, 1, 0
      %v2063 = vsel %vm2031, 1, 0
      %v2064 = vsel %vm2032, 1, 0
      %v2065 = vsel %vm2033, 1, 0
      %v2066 = vsel %vm2034, 1, 0
      %v2067 = vsel %vm2035, 1, 0
      %v2068 = vsel %vm2036, 1, 0
      %v2069 = vsel %vm2037, 1, 0
      %v2070 = vsel %vm2038, 1, 0
      %v2071 = vsel %vm2039, 1, 0
      %v2072 = vsel %vm2040, 1, 0
      %v2073 = vsel %vm2041, 1, 0
      %v2074 = vsel %vm2042, 1, 0
      %v2075 = vsel %vm2043, 1, 0
      %v2076 = vsel %vm2044, 1, 0
      %v2077 = vsel %vm2045, 1, 0
      %v2078 = vsel %vm2046, 1, 0
      %v2079 = vsel %vm2047, 1, 0
      %v2080 = vsel %vm2048, 1, 0
      %v2081 = vsel %vm2049, 1, 0
      %v2082 = vsel %vm2050, 1, 0
      %v2083 = vsel %vm2051, 1, 0
      %v2084 = vsel %vm2052, 1, 0
      %v2085 = vcvt.s32.f32 %v2053
      %v2086 = vcvt.s32.f32 %v2054
      %v2087 = vcvt.s32.f32 %v2055
      %v2088 = vcvt.s32.f32 %v2056
      %v2089 = vcvt.s32.f32 %v2057
      %v2090 = vcvt.s32.f32 %v2058
      %v2091 = vcvt.s32.f32 %v2059
      %v2092 = vcvt.s32.f32 %v2060
      %v2093 = vcvt.s32.f32 %v2061
      %v2094 = vcvt.s32.f32 %v2062
      %v2095 = vcvt.s32.f32 %v2063
      %v2096 = vcvt.s32.f32 %v2064
      %v2097 = vcvt.s32.f32 %v2065
      %v2098 = vcvt.s32.f32 %v2066
      %v2099 = vcvt.s32.f32 %v2067
      %v2100 = vcvt.s32.f32 %v2068
      %v2101 = vcvt.s32.f32 %v2069
      %v2102 = vcvt.s32.f32 %v2070
      %v2103 = vcvt.s32.f32 %v2071
      %v2104 = vcvt.s32.f32 %v2072
      %v2105 = vcvt.s32.f32 %v2073
      %v2106 = vcvt.s32.f32 %v2074
      %v2107 = vcvt.s32.f32 %v2075
      %v2108 = vcvt.s32.f32 %v2076
      %v2109 = vcvt.s32.f32 %v2077
      %v2110 = vcvt.s32.f32 %v2078
      %v2111 = vcvt.s32.f32 %v2079
      %v2112 = vcvt.s32.f32 %v2080
      %v2113 = vcvt.s32.f32 %v2081
      %v2114 = vcvt.s32.f32 %v2082
      %v2115 = vcvt.s32.f32 %v2083
      %v2116 = vcvt.s32.f32 %v2084
      %v2117 = vmul.f32 %v2020, %v2085
      %v2118 = vmul.f32 %v2019, %v2086
      %v2119 = vmul.f32 %v2018, %v2087
      %v2120 = vmul.f32 %v2017, %v2088
      %v2121 = vmul.f32 %v2016, %v2089
      %v2122 = vmul.f32 %v2015, %v2090
      %v2123 = vmul.f32 %v2014, %v2091
      %v2124 = vmul.f32 %v2013, %v2092
      %v2125 = vmul.f32 %v2012, %v2093
      %v2126 = vmul.f32 %v2011, %v2094
      %v2127 = vmul.f32 %v2010, %v2095
      %v2128 = vmul.f32 %v2009, %v2096
      %v2129 = vmul.f32 %v2008, %v2097
      %v2130 = vmul.f32 %v2007, %v2098
      %v2131 = vmul.f32 %v2006, %v2099
      %v2132 = vmul.f32 %v2005, %v2100
      %v2133 = vmul.f32 %v2004, %v2101
      %v2134 = vmul.f32 %v2003, %v2102
      %v2135 = vmul.f32 %v2002, %v2103
      %v2136 = vmul.f32 %v2001, %v2104
      %v2137 = vmul.f32 %v2000, %v2105
      %v2138 = vmul.f32 %v1999, %v2106
      %v2139 = vmul.f32 %v1998, %v2107
      %v2140 = vmul.f32 %v1997, %v2108
      %v2141 = vmul.f32 %v1996, %v2109
      %v2142 = vmul.f32 %v1995, %v2110
      %v2143 = vmul.f32 %v1994, %v2111
      %v2144 = vmul.f32 %v1993, %v2112
      %v2145 = vmul.f32 %v1992, %v2113
      %v2146 = vmul.f32 %v1991, %v2114
      %v2147 = vmul.f32 %v1990, %v2115
      %v2148 = vmul.f32 %v1989, %v2116
      %2181 = vrot.lane.b32.xlu0 %v2117, 96
      %v2182 = vpop.permute.xlu0 %2181
      %2183 = vrot.lane.b32.xlu0 %v2118, 96
      %v2184 = vpop.permute.xlu0 %2183
      %2185 = vrot.lane.b32.xlu0 %v2119, 96
      %v2186 = vpop.permute.xlu0 %2185
      %2187 = vrot.lane.b32.xlu0 %v2120, 96
      %v2188 = vpop.permute.xlu0 %2187
      %2189 = vrot.lane.b32.xlu0 %v2121, 96
      %v2190 = vpop.permute.xlu0 %2189
      %2191 = vrot.lane.b32.xlu0 %v2122, 96
      %v2192 = vpop.permute.xlu0 %2191
      %2193 = vrot.lane.b32.xlu0 %v2123, 96
      %v2194 = vpop.permute.xlu0 %2193
      %2195 = vrot.lane.b32.xlu0 %v2124, 96
      %v2196 = vpop.permute.xlu0 %2195
      %2197 = vrot.lane.b32.xlu0 %v2125, 96
      %v2198 = vpop.permute.xlu0 %2197
      %2199 = vrot.lane.b32.xlu0 %v2126, 96
      %v2200 = vpop.permute.xlu0 %2199
      %2201 = vrot.lane.b32.xlu0 %v2127, 96
      %v2202 = vpop.permute.xlu0 %2201
      %2203 = vrot.lane.b32.xlu0 %v2128, 96
      %v2204 = vpop.permute.xlu0 %2203
      %2205 = vrot.lane.b32.xlu0 %v2129, 96
      %v2206 = vpop.permute.xlu0 %2205
      %2207 = vrot.lane.b32.xlu0 %v2130, 96
      %v2208 = vpop.permute.xlu0 %2207
      %2209 = vrot.lane.b32.xlu0 %v2131, 96
      %v2210 = vpop.permute.xlu0 %2209
      %2211 = vrot.lane.b32.xlu0 %v2132, 96
      %v2212 = vpop.permute.xlu0 %2211
      %2213 = vrot.lane.b32.xlu0 %v2133, 96
      %v2214 = vpop.permute.xlu0 %2213
      %2215 = vrot.lane.b32.xlu0 %v2134, 96
      %v2216 = vpop.permute.xlu0 %2215
      %2217 = vrot.lane.b32.xlu0 %v2135, 96
      %v2218 = vpop.permute.xlu0 %2217
      %2219 = vrot.lane.b32.xlu0 %v2136, 96
      %v2220 = vpop.permute.xlu0 %2219
      %2221 = vrot.lane.b32.xlu0 %v2137, 96
      %v2222 = vpop.permute.xlu0 %2221
      %2223 = vrot.lane.b32.xlu0 %v2138, 96
      %v2224 = vpop.permute.xlu0 %2223
      %2225 = vrot.lane.b32.xlu0 %v2139, 96
      %v2226 = vpop.permute.xlu0 %2225
      %2227 = vrot.lane.b32.xlu0 %v2140, 96
      %v2228 = vpop.permute.xlu0 %2227
      %2229 = vrot.lane.b32.xlu0 %v2141, 96
      %v2230 = vpop.permute.xlu0 %2229
      %2231 = vrot.lane.b32.xlu0 %v2142, 96
      %v2232 = vpop.permute.xlu0 %2231
      %2233 = vrot.lane.b32.xlu0 %v2143, 96
      %v2234 = vpop.permute.xlu0 %2233
      %2235 = vrot.lane.b32.xlu0 %v2144, 96
      %v2236 = vpop.permute.xlu0 %2235
      %2237 = vrot.lane.b32.xlu0 %v2145, 96
      %v2238 = vpop.permute.xlu0 %2237
      %2239 = vrot.lane.b32.xlu0 %v2146, 96
      %v2240 = vpop.permute.xlu0 %2239
      %2241 = vrot.lane.b32.xlu0 %v2147, 96
      %v2242 = vpop.permute.xlu0 %2241
      %2243 = vrot.lane.b32.xlu0 %v2148, 96
      %v2244 = vpop.permute.xlu0 %2243
      %v2277 = vadd.f32 %v1796, %v2182
      %v2278 = vadd.f32 %v1797, %v2184
      %v2279 = vadd.f32 %v1798, %v2186
      %v2280 = vadd.f32 %v1799, %v2188
      %v2281 = vadd.f32 %v1800, %v2190
      %v2282 = vadd.f32 %v1801, %v2192
      %v2283 = vadd.f32 %v1802, %v2194
      %v2284 = vadd.f32 %v1803, %v2196
      %v2285 = vadd.f32 %v1804, %v2198
      %v2286 = vadd.f32 %v1805, %v2200
      %v2287 = vadd.f32 %v1806, %v2202
      %v2288 = vadd.f32 %v1807, %v2204
      %v2289 = vadd.f32 %v1808, %v2206
      %v2290 = vadd.f32 %v1809, %v2208
      %v2291 = vadd.f32 %v1810, %v2210
      %v2292 = vadd.f32 %v1811, %v2212
      %v2293 = vadd.f32 %v1812, %v2214
      %v2294 = vadd.f32 %v1813, %v2216
      %v2295 = vadd.f32 %v1814, %v2218
      %v2296 = vadd.f32 %v1815, %v2220
      %v2297 = vadd.f32 %v1816, %v2222
      %v2298 = vadd.f32 %v1817, %v2224
      %v2299 = vadd.f32 %v1818, %v2226
      %v2300 = vadd.f32 %v1819, %v2228
      %v2301 = vadd.f32 %v1820, %v2230
      %v2302 = vadd.f32 %v1821, %v2232
      %v2303 = vadd.f32 %v1822, %v2234
      %v2304 = vadd.f32 %v1823, %v2236
      %v2305 = vadd.f32 %v1824, %v2238
      %v2306 = vadd.f32 %v1825, %v2240
      %v2307 = vadd.f32 %v1826, %v2242
      %v2308 = vadd.f32 %v1827, %v2244
      %2309 = vrot.lane.b32.xlu0 %v1083, 64
      %v2310 = vpop.permute.xlu0 %2309
      %2311 = vrot.lane.b32.xlu0 %v1087, 64
      %v2312 = vpop.permute.xlu0 %2311
      %2313 = vrot.lane.b32.xlu0 %v1093, 64
      %v2314 = vpop.permute.xlu0 %2313
      %2315 = vrot.lane.b32.xlu0 %v1097, 64
      %v2316 = vpop.permute.xlu0 %2315
      %2317 = vrot.lane.b32.xlu0 %v1103, 64
      %v2318 = vpop.permute.xlu0 %2317
      %2319 = vrot.lane.b32.xlu0 %v1107, 64
      %v2320 = vpop.permute.xlu0 %2319
      %2321 = vrot.lane.b32.xlu0 %v1113, 64
      %v2322 = vpop.permute.xlu0 %2321
      %2323 = vrot.lane.b32.xlu0 %v1117, 64
      %v2324 = vpop.permute.xlu0 %2323
      %2325 = vrot.lane.b32.xlu0 %v1123, 64
      %v2326 = vpop.permute.xlu0 %2325
      %2327 = vrot.lane.b32.xlu0 %v1127, 64
      %v2328 = vpop.permute.xlu0 %2327
      %2329 = vrot.lane.b32.xlu0 %v1133, 64
      %v2330 = vpop.permute.xlu0 %2329
      %2331 = vrot.lane.b32.xlu0 %v1137, 64
      %v2332 = vpop.permute.xlu0 %2331
      %2333 = vrot.lane.b32.xlu0 %v1143, 64
      %v2334 = vpop.permute.xlu0 %2333
      %2335 = vrot.lane.b32.xlu0 %v1147, 64
      %v2336 = vpop.permute.xlu0 %2335
      %2337 = vrot.lane.b32.xlu0 %v1153, 64
      %v2338 = vpop.permute.xlu0 %2337
      %2339 = vrot.lane.b32.xlu0 %v1157, 64
      %v2340 = vpop.permute.xlu0 %2339
      %2341 = vrot.lane.b32.xlu0 %v1163, 64
      %v2342 = vpop.permute.xlu0 %2341
      %2343 = vrot.lane.b32.xlu0 %v1167, 64
      %v2344 = vpop.permute.xlu0 %2343
      %2345 = vrot.lane.b32.xlu0 %v1173, 64
      %v2346 = vpop.permute.xlu0 %2345
      %2347 = vrot.lane.b32.xlu0 %v1177, 64
      %v2348 = vpop.permute.xlu0 %2347
      %2349 = vrot.lane.b32.xlu0 %v1183, 64
      %v2350 = vpop.permute.xlu0 %2349
      %2351 = vrot.lane.b32.xlu0 %v1187, 64
      %v2352 = vpop.permute.xlu0 %2351
      %2353 = vrot.lane.b32.xlu0 %v1193, 64
      %v2354 = vpop.permute.xlu0 %2353
      %2355 = vrot.lane.b32.xlu0 %v1197, 64
      %v2356 = vpop.permute.xlu0 %2355
      %2357 = vrot.lane.b32.xlu0 %v1203, 64
      %v2358 = vpop.permute.xlu0 %2357
      %2359 = vrot.lane.b32.xlu0 %v1207, 64
      %v2360 = vpop.permute.xlu0 %2359
      %2361 = vrot.lane.b32.xlu0 %v1213, 64
      %v2362 = vpop.permute.xlu0 %2361
      %2363 = vrot.lane.b32.xlu0 %v1217, 64
      %v2364 = vpop.permute.xlu0 %2363
      %2365 = vrot.lane.b32.xlu0 %v1223, 64
      %v2366 = vpop.permute.xlu0 %2365
      %2367 = vrot.lane.b32.xlu0 %v1227, 64
      %v2368 = vpop.permute.xlu0 %2367
      %2369 = vrot.lane.b32.xlu0 %v1233, 64
      %v2370 = vpop.permute.xlu0 %2369
      %2371 = vrot.lane.b32.xlu0 %v1237, 64
      %v2372 = vpop.permute.xlu0 %2371
      %v2405 = vrot.slane %v2310, 3
      %v2406 = vrot.slane %v2312, 3
      %v2407 = vrot.slane %v2314, 3
      %v2408 = vrot.slane %v2316, 3
      %v2409 = vrot.slane %v2318, 3
      %v2410 = vrot.slane %v2320, 3
      %v2411 = vrot.slane %v2322, 3
      %v2412 = vrot.slane %v2324, 3
      %v2413 = vrot.slane %v2326, 3
      %v2414 = vrot.slane %v2328, 3
      %v2415 = vrot.slane %v2330, 3
      %v2416 = vrot.slane %v2332, 3
      %v2417 = vrot.slane %v2334, 3
      %v2418 = vrot.slane %v2336, 3
      %v2419 = vrot.slane %v2338, 3
      %v2420 = vrot.slane %v2340, 3
      %v2421 = vrot.slane %v2342, 3
      %v2422 = vrot.slane %v2344, 3
      %v2423 = vrot.slane %v2346, 3
      %v2424 = vrot.slane %v2348, 3
      %v2425 = vrot.slane %v2350, 3
      %v2426 = vrot.slane %v2352, 3
      %v2427 = vrot.slane %v2354, 3
      %v2428 = vrot.slane %v2356, 3
      %v2429 = vrot.slane %v2358, 3
      %v2430 = vrot.slane %v2360, 3
      %v2431 = vrot.slane %v2362, 3
      %v2432 = vrot.slane %v2364, 3
      %v2433 = vrot.slane %v2366, 3
      %v2434 = vrot.slane %v2368, 3
      %v2435 = vrot.slane %v2370, 3
      %v2436 = vrot.slane %v2372, 3
      %vm2437 = vcmp.lt.s32.totalorder %v333, 5
      %v2438 = vsel %vm2437, %v2435, %v2436
      %v2439 = vsel %vm2437, %v2434, %v2435
      %v2440 = vsel %vm2437, %v2433, %v2434
      %v2441 = vsel %vm2437, %v2432, %v2433
      %v2442 = vsel %vm2437, %v2431, %v2432
      %v2443 = vsel %vm2437, %v2430, %v2431
      %v2444 = vsel %vm2437, %v2429, %v2430
      %v2445 = vsel %vm2437, %v2428, %v2429
      %v2446 = vsel %vm2437, %v2427, %v2428
      %v2447 = vsel %vm2437, %v2426, %v2427
      %v2448 = vsel %vm2437, %v2425, %v2426
      %v2449 = vsel %vm2437, %v2424, %v2425
      %v2450 = vsel %vm2437, %v2423, %v2424
      %v2451 = vsel %vm2437, %v2422, %v2423
      %v2452 = vsel %vm2437, %v2421, %v2422
      %v2453 = vsel %vm2437, %v2420, %v2421
      %v2454 = vsel %vm2437, %v2419, %v2420
      %v2455 = vsel %vm2437, %v2418, %v2419
      %v2456 = vsel %vm2437, %v2417, %v2418
      %v2457 = vsel %vm2437, %v2416, %v2417
      %v2458 = vsel %vm2437, %v2415, %v2416
      %v2459 = vsel %vm2437, %v2414, %v2415
      %v2460 = vsel %vm2437, %v2413, %v2414
      %v2461 = vsel %vm2437, %v2412, %v2413
      %v2462 = vsel %vm2437, %v2411, %v2412
      %v2463 = vsel %vm2437, %v2410, %v2411
      %v2464 = vsel %vm2437, %v2409, %v2410
      %v2465 = vsel %vm2437, %v2408, %v2409
      %v2466 = vsel %vm2437, %v2407, %v2408
      %v2467 = vsel %vm2437, %v2406, %v2407
      %v2468 = vsel %vm2437, %v2405, %v2406
      %v2469 = vsel %vm2437, %v2436, %v2405
      %vm2470 = vcmp.ge.s32.totalorder %v717, 5
      %vm2471 = vcmp.ge.s32.totalorder %v718, 5
      %vm2472 = vcmp.ge.s32.totalorder %v719, 5
      %vm2473 = vcmp.ge.s32.totalorder %v720, 5
      %vm2474 = vcmp.ge.s32.totalorder %v721, 5
      %vm2475 = vcmp.ge.s32.totalorder %v722, 5
      %vm2476 = vcmp.ge.s32.totalorder %v723, 5
      %vm2477 = vcmp.ge.s32.totalorder %v724, 5
      %vm2478 = vcmp.ge.s32.totalorder %v725, 5
      %vm2479 = vcmp.ge.s32.totalorder %v726, 5
      %vm2480 = vcmp.ge.s32.totalorder %v727, 5
      %vm2481 = vcmp.ge.s32.totalorder %v728, 5
      %vm2482 = vcmp.ge.s32.totalorder %v729, 5
      %vm2483 = vcmp.ge.s32.totalorder %v730, 5
      %vm2484 = vcmp.ge.s32.totalorder %v731, 5
      %vm2485 = vcmp.ge.s32.totalorder %v732, 5
      %vm2486 = vcmp.ge.s32.totalorder %v733, 5
      %vm2487 = vcmp.ge.s32.totalorder %v734, 5
      %vm2488 = vcmp.ge.s32.totalorder %v735, 5
      %vm2489 = vcmp.ge.s32.totalorder %v736, 5
      %vm2490 = vcmp.ge.s32.totalorder %v737, 5
      %vm2491 = vcmp.ge.s32.totalorder %v738, 5
      %vm2492 = vcmp.ge.s32.totalorder %v739, 5
      %vm2493 = vcmp.ge.s32.totalorder %v740, 5
      %vm2494 = vcmp.ge.s32.totalorder %v741, 5
      %vm2495 = vcmp.ge.s32.totalorder %v742, 5
      %vm2496 = vcmp.ge.s32.totalorder %v743, 5
      %vm2497 = vcmp.ge.s32.totalorder %v744, 5
      %vm2498 = vcmp.ge.s32.totalorder %v745, 5
      %vm2499 = vcmp.ge.s32.totalorder %v746, 5
      %vm2500 = vcmp.ge.s32.totalorder %v747, 5
      %vm2501 = vcmp.ge.s32.totalorder %v748, 5
      %v2502 = vsel %vm2470, 1, 0
      %v2503 = vsel %vm2471, 1, 0
      %v2504 = vsel %vm2472, 1, 0
      %v2505 = vsel %vm2473, 1, 0
      %v2506 = vsel %vm2474, 1, 0
      %v2507 = vsel %vm2475, 1, 0
      %v2508 = vsel %vm2476, 1, 0
      %v2509 = vsel %vm2477, 1, 0
      %v2510 = vsel %vm2478, 1, 0
      %v2511 = vsel %vm2479, 1, 0
      %v2512 = vsel %vm2480, 1, 0
      %v2513 = vsel %vm2481, 1, 0
      %v2514 = vsel %vm2482, 1, 0
      %v2515 = vsel %vm2483, 1, 0
      %v2516 = vsel %vm2484, 1, 0
      %v2517 = vsel %vm2485, 1, 0
      %v2518 = vsel %vm2486, 1, 0
      %v2519 = vsel %vm2487, 1, 0
      %v2520 = vsel %vm2488, 1, 0
      %v2521 = vsel %vm2489, 1, 0
      %v2522 = vsel %vm2490, 1, 0
      %v2523 = vsel %vm2491, 1, 0
      %v2524 = vsel %vm2492, 1, 0
      %v2525 = vsel %vm2493, 1, 0
      %v2526 = vsel %vm2494, 1, 0
      %v2527 = vsel %vm2495, 1, 0
      %v2528 = vsel %vm2496, 1, 0
      %v2529 = vsel %vm2497, 1, 0
      %v2530 = vsel %vm2498, 1, 0
      %v2531 = vsel %vm2499, 1, 0
      %v2532 = vsel %vm2500, 1, 0
      %v2533 = vsel %vm2501, 1, 0
      %v2534 = vcvt.s32.f32 %v2502
      %v2535 = vcvt.s32.f32 %v2503
      %v2536 = vcvt.s32.f32 %v2504
      %v2537 = vcvt.s32.f32 %v2505
      %v2538 = vcvt.s32.f32 %v2506
      %v2539 = vcvt.s32.f32 %v2507
      %v2540 = vcvt.s32.f32 %v2508
      %v2541 = vcvt.s32.f32 %v2509
      %v2542 = vcvt.s32.f32 %v2510
      %v2543 = vcvt.s32.f32 %v2511
      %v2544 = vcvt.s32.f32 %v2512
      %v2545 = vcvt.s32.f32 %v2513
      %v2546 = vcvt.s32.f32 %v2514
      %v2547 = vcvt.s32.f32 %v2515
      %v2548 = vcvt.s32.f32 %v2516
      %v2549 = vcvt.s32.f32 %v2517
      %v2550 = vcvt.s32.f32 %v2518
      %v2551 = vcvt.s32.f32 %v2519
      %v2552 = vcvt.s32.f32 %v2520
      %v2553 = vcvt.s32.f32 %v2521
      %v2554 = vcvt.s32.f32 %v2522
      %v2555 = vcvt.s32.f32 %v2523
      %v2556 = vcvt.s32.f32 %v2524
      %v2557 = vcvt.s32.f32 %v2525
      %v2558 = vcvt.s32.f32 %v2526
      %v2559 = vcvt.s32.f32 %v2527
      %v2560 = vcvt.s32.f32 %v2528
      %v2561 = vcvt.s32.f32 %v2529
      %v2562 = vcvt.s32.f32 %v2530
      %v2563 = vcvt.s32.f32 %v2531
      %v2564 = vcvt.s32.f32 %v2532
      %v2565 = vcvt.s32.f32 %v2533
      %v2566 = vmul.f32 %v2469, %v2534
      %v2567 = vmul.f32 %v2468, %v2535
      %v2568 = vmul.f32 %v2467, %v2536
      %v2569 = vmul.f32 %v2466, %v2537
      %v2570 = vmul.f32 %v2465, %v2538
      %v2571 = vmul.f32 %v2464, %v2539
      %v2572 = vmul.f32 %v2463, %v2540
      %v2573 = vmul.f32 %v2462, %v2541
      %v2574 = vmul.f32 %v2461, %v2542
      %v2575 = vmul.f32 %v2460, %v2543
      %v2576 = vmul.f32 %v2459, %v2544
      %v2577 = vmul.f32 %v2458, %v2545
      %v2578 = vmul.f32 %v2457, %v2546
      %v2579 = vmul.f32 %v2456, %v2547
      %v2580 = vmul.f32 %v2455, %v2548
      %v2581 = vmul.f32 %v2454, %v2549
      %v2582 = vmul.f32 %v2453, %v2550
      %v2583 = vmul.f32 %v2452, %v2551
      %v2584 = vmul.f32 %v2451, %v2552
      %v2585 = vmul.f32 %v2450, %v2553
      %v2586 = vmul.f32 %v2449, %v2554
      %v2587 = vmul.f32 %v2448, %v2555
      %v2588 = vmul.f32 %v2447, %v2556
      %v2589 = vmul.f32 %v2446, %v2557
      %v2590 = vmul.f32 %v2445, %v2558
      %v2591 = vmul.f32 %v2444, %v2559
      %v2592 = vmul.f32 %v2443, %v2560
      %v2593 = vmul.f32 %v2442, %v2561
      %v2594 = vmul.f32 %v2441, %v2562
      %v2595 = vmul.f32 %v2440, %v2563
      %v2596 = vmul.f32 %v2439, %v2564
      %v2597 = vmul.f32 %v2438, %v2565
      %2630 = vrot.lane.b32.xlu0 %v2566, 96
      %v2631 = vpop.permute.xlu0 %2630
      %2632 = vrot.lane.b32.xlu0 %v2567, 96
      %v2633 = vpop.permute.xlu0 %2632
      %2634 = vrot.lane.b32.xlu0 %v2568, 96
      %v2635 = vpop.permute.xlu0 %2634
      %2636 = vrot.lane.b32.xlu0 %v2569, 96
      %v2637 = vpop.permute.xlu0 %2636
      %2638 = vrot.lane.b32.xlu0 %v2570, 96
      %v2639 = vpop.permute.xlu0 %2638
      %2640 = vrot.lane.b32.xlu0 %v2571, 96
      %v2641 = vpop.permute.xlu0 %2640
      %2642 = vrot.lane.b32.xlu0 %v2572, 96
      %v2643 = vpop.permute.xlu0 %2642
      %2644 = vrot.lane.b32.xlu0 %v2573, 96
      %v2645 = vpop.permute.xlu0 %2644
      %2646 = vrot.lane.b32.xlu0 %v2574, 96
      %v2647 = vpop.permute.xlu0 %2646
      %2648 = vrot.lane.b32.xlu0 %v2575, 96
      %v2649 = vpop.permute.xlu0 %2648
      %2650 = vrot.lane.b32.xlu0 %v2576, 96
      %v2651 = vpop.permute.xlu0 %2650
      %2652 = vrot.lane.b32.xlu0 %v2577, 96
      %v2653 = vpop.permute.xlu0 %2652
      %2654 = vrot.lane.b32.xlu0 %v2578, 96
      %v2655 = vpop.permute.xlu0 %2654
      %2656 = vrot.lane.b32.xlu0 %v2579, 96
      %v2657 = vpop.permute.xlu0 %2656
      %2658 = vrot.lane.b32.xlu0 %v2580, 96
      %v2659 = vpop.permute.xlu0 %2658
      %2660 = vrot.lane.b32.xlu0 %v2581, 96
      %v2661 = vpop.permute.xlu0 %2660
      %2662 = vrot.lane.b32.xlu0 %v2582, 96
      %v2663 = vpop.permute.xlu0 %2662
      %2664 = vrot.lane.b32.xlu0 %v2583, 96
      %v2665 = vpop.permute.xlu0 %2664
      %2666 = vrot.lane.b32.xlu0 %v2584, 96
      %v2667 = vpop.permute.xlu0 %2666
      %2668 = vrot.lane.b32.xlu0 %v2585, 96
      %v2669 = vpop.permute.xlu0 %2668
      %2670 = vrot.lane.b32.xlu0 %v2586, 96
      %v2671 = vpop.permute.xlu0 %2670
      %2672 = vrot.lane.b32.xlu0 %v2587, 96
      %v2673 = vpop.permute.xlu0 %2672
      %2674 = vrot.lane.b32.xlu0 %v2588, 96
      %v2675 = vpop.permute.xlu0 %2674
      %2676 = vrot.lane.b32.xlu0 %v2589, 96
      %v2677 = vpop.permute.xlu0 %2676
      %2678 = vrot.lane.b32.xlu0 %v2590, 96
      %v2679 = vpop.permute.xlu0 %2678
      %2680 = vrot.lane.b32.xlu0 %v2591, 96
      %v2681 = vpop.permute.xlu0 %2680
      %2682 = vrot.lane.b32.xlu0 %v2592, 96
      %v2683 = vpop.permute.xlu0 %2682
      %2684 = vrot.lane.b32.xlu0 %v2593, 96
      %v2685 = vpop.permute.xlu0 %2684
      %2686 = vrot.lane.b32.xlu0 %v2594, 96
      %v2687 = vpop.permute.xlu0 %2686
      %2688 = vrot.lane.b32.xlu0 %v2595, 96
      %v2689 = vpop.permute.xlu0 %2688
      %2690 = vrot.lane.b32.xlu0 %v2596, 96
      %v2691 = vpop.permute.xlu0 %2690
      %2692 = vrot.lane.b32.xlu0 %v2597, 96
      %v2693 = vpop.permute.xlu0 %2692
      %v2726 = vadd.f32 %v2277, %v2631
      %v2727 = vadd.f32 %v2278, %v2633
      %v2728 = vadd.f32 %v2279, %v2635
      %v2729 = vadd.f32 %v2280, %v2637
      %v2730 = vadd.f32 %v2281, %v2639
      %v2731 = vadd.f32 %v2282, %v2641
      %v2732 = vadd.f32 %v2283, %v2643
      %v2733 = vadd.f32 %v2284, %v2645
      %v2734 = vadd.f32 %v2285, %v2647
      %v2735 = vadd.f32 %v2286, %v2649
      %v2736 = vadd.f32 %v2287, %v2651
      %v2737 = vadd.f32 %v2288, %v2653
      %v2738 = vadd.f32 %v2289, %v2655
      %v2739 = vadd.f32 %v2290, %v2657
      %v2740 = vadd.f32 %v2291, %v2659
      %v2741 = vadd.f32 %v2292, %v2661
      %v2742 = vadd.f32 %v2293, %v2663
      %v2743 = vadd.f32 %v2294, %v2665
      %v2744 = vadd.f32 %v2295, %v2667
      %v2745 = vadd.f32 %v2296, %v2669
      %v2746 = vadd.f32 %v2297, %v2671
      %v2747 = vadd.f32 %v2298, %v2673
      %v2748 = vadd.f32 %v2299, %v2675
      %v2749 = vadd.f32 %v2300, %v2677
      %v2750 = vadd.f32 %v2301, %v2679
      %v2751 = vadd.f32 %v2302, %v2681
      %v2752 = vadd.f32 %v2303, %v2683
      %v2753 = vadd.f32 %v2304, %v2685
      %v2754 = vadd.f32 %v2305, %v2687
      %v2755 = vadd.f32 %v2306, %v2689
      %v2756 = vadd.f32 %v2307, %v2691
      %v2757 = vadd.f32 %v2308, %v2693
      %2758 = vrot.lane.b32.xlu0 %v1083, 32
      %v2759 = vpop.permute.xlu0 %2758
      %2760 = vrot.lane.b32.xlu0 %v1087, 32
      %v2761 = vpop.permute.xlu0 %2760
      %2762 = vrot.lane.b32.xlu0 %v1093, 32
      %v2763 = vpop.permute.xlu0 %2762
      %2764 = vrot.lane.b32.xlu0 %v1097, 32
      %v2765 = vpop.permute.xlu0 %2764
      %2766 = vrot.lane.b32.xlu0 %v1103, 32
      %v2767 = vpop.permute.xlu0 %2766
      %2768 = vrot.lane.b32.xlu0 %v1107, 32
      %v2769 = vpop.permute.xlu0 %2768
      %2770 = vrot.lane.b32.xlu0 %v1113, 32
      %v2771 = vpop.permute.xlu0 %2770
      %2772 = vrot.lane.b32.xlu0 %v1117, 32
      %v2773 = vpop.permute.xlu0 %2772
      %2774 = vrot.lane.b32.xlu0 %v1123, 32
      %v2775 = vpop.permute.xlu0 %2774
      %2776 = vrot.lane.b32.xlu0 %v1127, 32
      %v2777 = vpop.permute.xlu0 %2776
      %2778 = vrot.lane.b32.xlu0 %v1133, 32
      %v2779 = vpop.permute.xlu0 %2778
      %2780 = vrot.lane.b32.xlu0 %v1137, 32
      %v2781 = vpop.permute.xlu0 %2780
      %2782 = vrot.lane.b32.xlu0 %v1143, 32
      %v2783 = vpop.permute.xlu0 %2782
      %2784 = vrot.lane.b32.xlu0 %v1147, 32
      %v2785 = vpop.permute.xlu0 %2784
      %2786 = vrot.lane.b32.xlu0 %v1153, 32
      %v2787 = vpop.permute.xlu0 %2786
      %2788 = vrot.lane.b32.xlu0 %v1157, 32
      %v2789 = vpop.permute.xlu0 %2788
      %2790 = vrot.lane.b32.xlu0 %v1163, 32
      %v2791 = vpop.permute.xlu0 %2790
      %2792 = vrot.lane.b32.xlu0 %v1167, 32
      %v2793 = vpop.permute.xlu0 %2792
      %2794 = vrot.lane.b32.xlu0 %v1173, 32
      %v2795 = vpop.permute.xlu0 %2794
      %2796 = vrot.lane.b32.xlu0 %v1177, 32
      %v2797 = vpop.permute.xlu0 %2796
      %2798 = vrot.lane.b32.xlu0 %v1183, 32
      %v2799 = vpop.permute.xlu0 %2798
      %2800 = vrot.lane.b32.xlu0 %v1187, 32
      %v2801 = vpop.permute.xlu0 %2800
      %2802 = vrot.lane.b32.xlu0 %v1193, 32
      %v2803 = vpop.permute.xlu0 %2802
      %2804 = vrot.lane.b32.xlu0 %v1197, 32
      %v2805 = vpop.permute.xlu0 %2804
      %2806 = vrot.lane.b32.xlu0 %v1203, 32
      %v2807 = vpop.permute.xlu0 %2806
      %2808 = vrot.lane.b32.xlu0 %v1207, 32
      %v2809 = vpop.permute.xlu0 %2808
      %2810 = vrot.lane.b32.xlu0 %v1213, 32
      %v2811 = vpop.permute.xlu0 %2810
      %2812 = vrot.lane.b32.xlu0 %v1217, 32
      %v2813 = vpop.permute.xlu0 %2812
      %2814 = vrot.lane.b32.xlu0 %v1223, 32
      %v2815 = vpop.permute.xlu0 %2814
      %2816 = vrot.lane.b32.xlu0 %v1227, 32
      %v2817 = vpop.permute.xlu0 %2816
      %2818 = vrot.lane.b32.xlu0 %v1233, 32
      %v2819 = vpop.permute.xlu0 %2818
      %2820 = vrot.lane.b32.xlu0 %v1237, 32
      %v2821 = vpop.permute.xlu0 %2820
      %v2854 = vrot.slane %v2759, 4
      %v2855 = vrot.slane %v2761, 4
      %v2856 = vrot.slane %v2763, 4
      %v2857 = vrot.slane %v2765, 4
      %v2858 = vrot.slane %v2767, 4
      %v2859 = vrot.slane %v2769, 4
      %v2860 = vrot.slane %v2771, 4
      %v2861 = vrot.slane %v2773, 4
      %v2862 = vrot.slane %v2775, 4
      %v2863 = vrot.slane %v2777, 4
      %v2864 = vrot.slane %v2779, 4
      %v2865 = vrot.slane %v2781, 4
      %v2866 = vrot.slane %v2783, 4
      %v2867 = vrot.slane %v2785, 4
      %v2868 = vrot.slane %v2787, 4
      %v2869 = vrot.slane %v2789, 4
      %v2870 = vrot.slane %v2791, 4
      %v2871 = vrot.slane %v2793, 4
      %v2872 = vrot.slane %v2795, 4
      %v2873 = vrot.slane %v2797, 4
      %v2874 = vrot.slane %v2799, 4
      %v2875 = vrot.slane %v2801, 4
      %v2876 = vrot.slane %v2803, 4
      %v2877 = vrot.slane %v2805, 4
      %v2878 = vrot.slane %v2807, 4
      %v2879 = vrot.slane %v2809, 4
      %v2880 = vrot.slane %v2811, 4
      %v2881 = vrot.slane %v2813, 4
      %v2882 = vrot.slane %v2815, 4
      %v2883 = vrot.slane %v2817, 4
      %v2884 = vrot.slane %v2819, 4
      %v2885 = vrot.slane %v2821, 4
      %vm2886 = vcmp.lt.s32.totalorder %v333, 4
      %v2887 = vsel %vm2886, %v2884, %v2885
      %v2888 = vsel %vm2886, %v2883, %v2884
      %v2889 = vsel %vm2886, %v2882, %v2883
      %v2890 = vsel %vm2886, %v2881, %v2882
      %v2891 = vsel %vm2886, %v2880, %v2881
      %v2892 = vsel %vm2886, %v2879, %v2880
      %v2893 = vsel %vm2886, %v2878, %v2879
      %v2894 = vsel %vm2886, %v2877, %v2878
      %v2895 = vsel %vm2886, %v2876, %v2877
      %v2896 = vsel %vm2886, %v2875, %v2876
      %v2897 = vsel %vm2886, %v2874, %v2875
      %v2898 = vsel %vm2886, %v2873, %v2874
      %v2899 = vsel %vm2886, %v2872, %v2873
      %v2900 = vsel %vm2886, %v2871, %v2872
      %v2901 = vsel %vm2886, %v2870, %v2871
      %v2902 = vsel %vm2886, %v2869, %v2870
      %v2903 = vsel %vm2886, %v2868, %v2869
      %v2904 = vsel %vm2886, %v2867, %v2868
      %v2905 = vsel %vm2886, %v2866, %v2867
      %v2906 = vsel %vm2886, %v2865, %v2866
      %v2907 = vsel %vm2886, %v2864, %v2865
      %v2908 = vsel %vm2886, %v2863, %v2864
      %v2909 = vsel %vm2886, %v2862, %v2863
      %v2910 = vsel %vm2886, %v2861, %v2862
      %v2911 = vsel %vm2886, %v2860, %v2861
      %v2912 = vsel %vm2886, %v2859, %v2860
      %v2913 = vsel %vm2886, %v2858, %v2859
      %v2914 = vsel %vm2886, %v2857, %v2858
      %v2915 = vsel %vm2886, %v2856, %v2857
      %v2916 = vsel %vm2886, %v2855, %v2856
      %v2917 = vsel %vm2886, %v2854, %v2855
      %v2918 = vsel %vm2886, %v2885, %v2854
      %vm2919 = vcmp.ge.s32.totalorder %v717, 4
      %vm2920 = vcmp.ge.s32.totalorder %v718, 4
      %vm2921 = vcmp.ge.s32.totalorder %v719, 4
      %vm2922 = vcmp.ge.s32.totalorder %v720, 4
      %vm2923 = vcmp.ge.s32.totalorder %v721, 4
      %vm2924 = vcmp.ge.s32.totalorder %v722, 4
      %vm2925 = vcmp.ge.s32.totalorder %v723, 4
      %vm2926 = vcmp.ge.s32.totalorder %v724, 4
      %vm2927 = vcmp.ge.s32.totalorder %v725, 4
      %vm2928 = vcmp.ge.s32.totalorder %v726, 4
      %vm2929 = vcmp.ge.s32.totalorder %v727, 4
      %vm2930 = vcmp.ge.s32.totalorder %v728, 4
      %vm2931 = vcmp.ge.s32.totalorder %v729, 4
      %vm2932 = vcmp.ge.s32.totalorder %v730, 4
      %vm2933 = vcmp.ge.s32.totalorder %v731, 4
      %vm2934 = vcmp.ge.s32.totalorder %v732, 4
      %vm2935 = vcmp.ge.s32.totalorder %v733, 4
      %vm2936 = vcmp.ge.s32.totalorder %v734, 4
      %vm2937 = vcmp.ge.s32.totalorder %v735, 4
      %vm2938 = vcmp.ge.s32.totalorder %v736, 4
      %vm2939 = vcmp.ge.s32.totalorder %v737, 4
      %vm2940 = vcmp.ge.s32.totalorder %v738, 4
      %vm2941 = vcmp.ge.s32.totalorder %v739, 4
      %vm2942 = vcmp.ge.s32.totalorder %v740, 4
      %vm2943 = vcmp.ge.s32.totalorder %v741, 4
      %vm2944 = vcmp.ge.s32.totalorder %v742, 4
      %vm2945 = vcmp.ge.s32.totalorder %v743, 4
      %vm2946 = vcmp.ge.s32.totalorder %v744, 4
      %vm2947 = vcmp.ge.s32.totalorder %v745, 4
      %vm2948 = vcmp.ge.s32.totalorder %v746, 4
      %vm2949 = vcmp.ge.s32.totalorder %v747, 4
      %vm2950 = vcmp.ge.s32.totalorder %v748, 4
      %v2951 = vsel %vm2919, 1, 0
      %v2952 = vsel %vm2920, 1, 0
      %v2953 = vsel %vm2921, 1, 0
      %v2954 = vsel %vm2922, 1, 0
      %v2955 = vsel %vm2923, 1, 0
      %v2956 = vsel %vm2924, 1, 0
      %v2957 = vsel %vm2925, 1, 0
      %v2958 = vsel %vm2926, 1, 0
      %v2959 = vsel %vm2927, 1, 0
      %v2960 = vsel %vm2928, 1, 0
      %v2961 = vsel %vm2929, 1, 0
      %v2962 = vsel %vm2930, 1, 0
      %v2963 = vsel %vm2931, 1, 0
      %v2964 = vsel %vm2932, 1, 0
      %v2965 = vsel %vm2933, 1, 0
      %v2966 = vsel %vm2934, 1, 0
      %v2967 = vsel %vm2935, 1, 0
      %v2968 = vsel %vm2936, 1, 0
      %v2969 = vsel %vm2937, 1, 0
      %v2970 = vsel %vm2938, 1, 0
      %v2971 = vsel %vm2939, 1, 0
      %v2972 = vsel %vm2940, 1, 0
      %v2973 = vsel %vm2941, 1, 0
      %v2974 = vsel %vm2942, 1, 0
      %v2975 = vsel %vm2943, 1, 0
      %v2976 = vsel %vm2944, 1, 0
      %v2977 = vsel %vm2945, 1, 0
      %v2978 = vsel %vm2946, 1, 0
      %v2979 = vsel %vm2947, 1, 0
      %v2980 = vsel %vm2948, 1, 0
      %v2981 = vsel %vm2949, 1, 0
      %v2982 = vsel %vm2950, 1, 0
      %v2983 = vcvt.s32.f32 %v2951
      %v2984 = vcvt.s32.f32 %v2952
      %v2985 = vcvt.s32.f32 %v2953
      %v2986 = vcvt.s32.f32 %v2954
      %v2987 = vcvt.s32.f32 %v2955
      %v2988 = vcvt.s32.f32 %v2956
      %v2989 = vcvt.s32.f32 %v2957
      %v2990 = vcvt.s32.f32 %v2958
      %v2991 = vcvt.s32.f32 %v2959
      %v2992 = vcvt.s32.f32 %v2960
      %v2993 = vcvt.s32.f32 %v2961
      %v2994 = vcvt.s32.f32 %v2962
      %v2995 = vcvt.s32.f32 %v2963
      %v2996 = vcvt.s32.f32 %v2964
      %v2997 = vcvt.s32.f32 %v2965
      %v2998 = vcvt.s32.f32 %v2966
      %v2999 = vcvt.s32.f32 %v2967
      %v3000 = vcvt.s32.f32 %v2968
      %v3001 = vcvt.s32.f32 %v2969
      %v3002 = vcvt.s32.f32 %v2970
      %v3003 = vcvt.s32.f32 %v2971
      %v3004 = vcvt.s32.f32 %v2972
      %v3005 = vcvt.s32.f32 %v2973
      %v3006 = vcvt.s32.f32 %v2974
      %v3007 = vcvt.s32.f32 %v2975
      %v3008 = vcvt.s32.f32 %v2976
      %v3009 = vcvt.s32.f32 %v2977
      %v3010 = vcvt.s32.f32 %v2978
      %v3011 = vcvt.s32.f32 %v2979
      %v3012 = vcvt.s32.f32 %v2980
      %v3013 = vcvt.s32.f32 %v2981
      %v3014 = vcvt.s32.f32 %v2982
      %v3015 = vmul.f32 %v2918, %v2983
      %v3016 = vmul.f32 %v2917, %v2984
      %v3017 = vmul.f32 %v2916, %v2985
      %v3018 = vmul.f32 %v2915, %v2986
      %v3019 = vmul.f32 %v2914, %v2987
      %v3020 = vmul.f32 %v2913, %v2988
      %v3021 = vmul.f32 %v2912, %v2989
      %v3022 = vmul.f32 %v2911, %v2990
      %v3023 = vmul.f32 %v2910, %v2991
      %v3024 = vmul.f32 %v2909, %v2992
      %v3025 = vmul.f32 %v2908, %v2993
      %v3026 = vmul.f32 %v2907, %v2994
      %v3027 = vmul.f32 %v2906, %v2995
      %v3028 = vmul.f32 %v2905, %v2996
      %v3029 = vmul.f32 %v2904, %v2997
      %v3030 = vmul.f32 %v2903, %v2998
      %v3031 = vmul.f32 %v2902, %v2999
      %v3032 = vmul.f32 %v2901, %v3000
      %v3033 = vmul.f32 %v2900, %v3001
      %v3034 = vmul.f32 %v2899, %v3002
      %v3035 = vmul.f32 %v2898, %v3003
      %v3036 = vmul.f32 %v2897, %v3004
      %v3037 = vmul.f32 %v2896, %v3005
      %v3038 = vmul.f32 %v2895, %v3006
      %v3039 = vmul.f32 %v2894, %v3007
      %v3040 = vmul.f32 %v2893, %v3008
      %v3041 = vmul.f32 %v2892, %v3009
      %v3042 = vmul.f32 %v2891, %v3010
      %v3043 = vmul.f32 %v2890, %v3011
      %v3044 = vmul.f32 %v2889, %v3012
      %v3045 = vmul.f32 %v2888, %v3013
      %v3046 = vmul.f32 %v2887, %v3014
      %3079 = vrot.lane.b32.xlu0 %v3015, 96
      %v3080 = vpop.permute.xlu0 %3079
      %3081 = vrot.lane.b32.xlu0 %v3016, 96
      %v3082 = vpop.permute.xlu0 %3081
      %3083 = vrot.lane.b32.xlu0 %v3017, 96
      %v3084 = vpop.permute.xlu0 %3083
      %3085 = vrot.lane.b32.xlu0 %v3018, 96
      %v3086 = vpop.permute.xlu0 %3085
      %3087 = vrot.lane.b32.xlu0 %v3019, 96
      %v3088 = vpop.permute.xlu0 %3087
      %3089 = vrot.lane.b32.xlu0 %v3020, 96
      %v3090 = vpop.permute.xlu0 %3089
      %3091 = vrot.lane.b32.xlu0 %v3021, 96
      %v3092 = vpop.permute.xlu0 %3091
      %3093 = vrot.lane.b32.xlu0 %v3022, 96
      %v3094 = vpop.permute.xlu0 %3093
      %3095 = vrot.lane.b32.xlu0 %v3023, 96
      %v3096 = vpop.permute.xlu0 %3095
      %3097 = vrot.lane.b32.xlu0 %v3024, 96
      %v3098 = vpop.permute.xlu0 %3097
      %3099 = vrot.lane.b32.xlu0 %v3025, 96
      %v3100 = vpop.permute.xlu0 %3099
      %3101 = vrot.lane.b32.xlu0 %v3026, 96
      %v3102 = vpop.permute.xlu0 %3101
      %3103 = vrot.lane.b32.xlu0 %v3027, 96
      %v3104 = vpop.permute.xlu0 %3103
      %3105 = vrot.lane.b32.xlu0 %v3028, 96
      %v3106 = vpop.permute.xlu0 %3105
      %3107 = vrot.lane.b32.xlu0 %v3029, 96
      %v3108 = vpop.permute.xlu0 %3107
      %3109 = vrot.lane.b32.xlu0 %v3030, 96
      %v3110 = vpop.permute.xlu0 %3109
      %3111 = vrot.lane.b32.xlu0 %v3031, 96
      %v3112 = vpop.permute.xlu0 %3111
      %3113 = vrot.lane.b32.xlu0 %v3032, 96
      %v3114 = vpop.permute.xlu0 %3113
      %3115 = vrot.lane.b32.xlu0 %v3033, 96
      %v3116 = vpop.permute.xlu0 %3115
      %3117 = vrot.lane.b32.xlu0 %v3034, 96
      %v3118 = vpop.permute.xlu0 %3117
      %3119 = vrot.lane.b32.xlu0 %v3035, 96
      %v3120 = vpop.permute.xlu0 %3119
      %3121 = vrot.lane.b32.xlu0 %v3036, 96
      %v3122 = vpop.permute.xlu0 %3121
      %3123 = vrot.lane.b32.xlu0 %v3037, 96
      %v3124 = vpop.permute.xlu0 %3123
      %3125 = vrot.lane.b32.xlu0 %v3038, 96
      %v3126 = vpop.permute.xlu0 %3125
      %3127 = vrot.lane.b32.xlu0 %v3039, 96
      %v3128 = vpop.permute.xlu0 %3127
      %3129 = vrot.lane.b32.xlu0 %v3040, 96
      %v3130 = vpop.permute.xlu0 %3129
      %3131 = vrot.lane.b32.xlu0 %v3041, 96
      %v3132 = vpop.permute.xlu0 %3131
      %3133 = vrot.lane.b32.xlu0 %v3042, 96
      %v3134 = vpop.permute.xlu0 %3133
      %3135 = vrot.lane.b32.xlu0 %v3043, 96
      %v3136 = vpop.permute.xlu0 %3135
      %3137 = vrot.lane.b32.xlu0 %v3044, 96
      %v3138 = vpop.permute.xlu0 %3137
      %3139 = vrot.lane.b32.xlu0 %v3045, 96
      %v3140 = vpop.permute.xlu0 %3139
      %3141 = vrot.lane.b32.xlu0 %v3046, 96
      %v3142 = vpop.permute.xlu0 %3141
      %v3175 = vadd.f32 %v2726, %v3080
      %v3176 = vadd.f32 %v2727, %v3082
      %v3177 = vadd.f32 %v2728, %v3084
      %v3178 = vadd.f32 %v2729, %v3086
      %v3179 = vadd.f32 %v2730, %v3088
      %v3180 = vadd.f32 %v2731, %v3090
      %v3181 = vadd.f32 %v2732, %v3092
      %v3182 = vadd.f32 %v2733, %v3094
      %v3183 = vadd.f32 %v2734, %v3096
      %v3184 = vadd.f32 %v2735, %v3098
      %v3185 = vadd.f32 %v2736, %v3100
      %v3186 = vadd.f32 %v2737, %v3102
      %v3187 = vadd.f32 %v2738, %v3104
      %v3188 = vadd.f32 %v2739, %v3106
      %v3189 = vadd.f32 %v2740, %v3108
      %v3190 = vadd.f32 %v2741, %v3110
      %v3191 = vadd.f32 %v2742, %v3112
      %v3192 = vadd.f32 %v2743, %v3114
      %v3193 = vadd.f32 %v2744, %v3116
      %v3194 = vadd.f32 %v2745, %v3118
      %v3195 = vadd.f32 %v2746, %v3120
      %v3196 = vadd.f32 %v2747, %v3122
      %v3197 = vadd.f32 %v2748, %v3124
      %v3198 = vadd.f32 %v2749, %v3126
      %v3199 = vadd.f32 %v2750, %v3128
      %v3200 = vadd.f32 %v2751, %v3130
      %v3201 = vadd.f32 %v2752, %v3132
      %v3202 = vadd.f32 %v2753, %v3134
      %v3203 = vadd.f32 %v2754, %v3136
      %v3204 = vadd.f32 %v2755, %v3138
      %v3205 = vadd.f32 %v2756, %v3140
      %v3206 = vadd.f32 %v2757, %v3142
      %v3207 = vrot.slane %v1085, 5
      %v3208 = vrot.slane %v1089, 5
      %v3209 = vrot.slane %v1095, 5
      %v3210 = vrot.slane %v1099, 5
      %v3211 = vrot.slane %v1105, 5
      %v3212 = vrot.slane %v1109, 5
      %v3213 = vrot.slane %v1115, 5
      %v3214 = vrot.slane %v1119, 5
      %v3215 = vrot.slane %v1125, 5
      %v3216 = vrot.slane %v1129, 5
      %v3217 = vrot.slane %v1135, 5
      %v3218 = vrot.slane %v1139, 5
      %v3219 = vrot.slane %v1145, 5
      %v3220 = vrot.slane %v1149, 5
      %v3221 = vrot.slane %v1155, 5
      %v3222 = vrot.slane %v1159, 5
      %v3223 = vrot.slane %v1165, 5
      %v3224 = vrot.slane %v1169, 5
      %v3225 = vrot.slane %v1175, 5
      %v3226 = vrot.slane %v1179, 5
      %v3227 = vrot.slane %v1185, 5
      %v3228 = vrot.slane %v1189, 5
      %v3229 = vrot.slane %v1195, 5
      %v3230 = vrot.slane %v1199, 5
      %v3231 = vrot.slane %v1205, 5
      %v3232 = vrot.slane %v1209, 5
      %v3233 = vrot.slane %v1215, 5
      %v3234 = vrot.slane %v1219, 5
      %v3235 = vrot.slane %v1225, 5
      %v3236 = vrot.slane %v1229, 5
      %v3237 = vrot.slane %v1235, 5
      %v3238 = vrot.slane %v1239, 5
      %vm3239 = vcmp.lt.s32.totalorder %v333, 3
      %v3240 = vsel %vm3239, %v3237, %v3238
      %v3241 = vsel %vm3239, %v3236, %v3237
      %v3242 = vsel %vm3239, %v3235, %v3236
      %v3243 = vsel %vm3239, %v3234, %v3235
      %v3244 = vsel %vm3239, %v3233, %v3234
      %v3245 = vsel %vm3239, %v3232, %v3233
      %v3246 = vsel %vm3239, %v3231, %v3232
      %v3247 = vsel %vm3239, %v3230, %v3231
      %v3248 = vsel %vm3239, %v3229, %v3230
      %v3249 = vsel %vm3239, %v3228, %v3229
      %v3250 = vsel %vm3239, %v3227, %v3228
      %v3251 = vsel %vm3239, %v3226, %v3227
      %v3252 = vsel %vm3239, %v3225, %v3226
      %v3253 = vsel %vm3239, %v3224, %v3225
      %v3254 = vsel %vm3239, %v3223, %v3224
      %v3255 = vsel %vm3239, %v3222, %v3223
      %v3256 = vsel %vm3239, %v3221, %v3222
      %v3257 = vsel %vm3239, %v3220, %v3221
      %v3258 = vsel %vm3239, %v3219, %v3220
      %v3259 = vsel %vm3239, %v3218, %v3219
      %v3260 = vsel %vm3239, %v3217, %v3218
      %v3261 = vsel %vm3239, %v3216, %v3217
      %v3262 = vsel %vm3239, %v3215, %v3216
      %v3263 = vsel %vm3239, %v3214, %v3215
      %v3264 = vsel %vm3239, %v3213, %v3214
      %v3265 = vsel %vm3239, %v3212, %v3213
      %v3266 = vsel %vm3239, %v3211, %v3212
      %v3267 = vsel %vm3239, %v3210, %v3211
      %v3268 = vsel %vm3239, %v3209, %v3210
      %v3269 = vsel %vm3239, %v3208, %v3209
      %v3270 = vsel %vm3239, %v3207, %v3208
      %v3271 = vsel %vm3239, %v3238, %v3207
      %vm3272 = vcmp.ge.s32.totalorder %v717, 3
      %vm3273 = vcmp.ge.s32.totalorder %v718, 3
      %vm3274 = vcmp.ge.s32.totalorder %v719, 3
      %vm3275 = vcmp.ge.s32.totalorder %v720, 3
      %vm3276 = vcmp.ge.s32.totalorder %v721, 3
      %vm3277 = vcmp.ge.s32.totalorder %v722, 3
      %vm3278 = vcmp.ge.s32.totalorder %v723, 3
      %vm3279 = vcmp.ge.s32.totalorder %v724, 3
      %vm3280 = vcmp.ge.s32.totalorder %v725, 3
      %vm3281 = vcmp.ge.s32.totalorder %v726, 3
      %vm3282 = vcmp.ge.s32.totalorder %v727, 3
      %vm3283 = vcmp.ge.s32.totalorder %v728, 3
      %vm3284 = vcmp.ge.s32.totalorder %v729, 3
      %vm3285 = vcmp.ge.s32.totalorder %v730, 3
      %vm3286 = vcmp.ge.s32.totalorder %v731, 3
      %vm3287 = vcmp.ge.s32.totalorder %v732, 3
      %vm3288 = vcmp.ge.s32.totalorder %v733, 3
      %vm3289 = vcmp.ge.s32.totalorder %v734, 3
      %vm3290 = vcmp.ge.s32.totalorder %v735, 3
      %vm3291 = vcmp.ge.s32.totalorder %v736, 3
      %vm3292 = vcmp.ge.s32.totalorder %v737, 3
      %vm3293 = vcmp.ge.s32.totalorder %v738, 3
      %vm3294 = vcmp.ge.s32.totalorder %v739, 3
      %vm3295 = vcmp.ge.s32.totalorder %v740, 3
      %vm3296 = vcmp.ge.s32.totalorder %v741, 3
      %vm3297 = vcmp.ge.s32.totalorder %v742, 3
      %vm3298 = vcmp.ge.s32.totalorder %v743, 3
      %vm3299 = vcmp.ge.s32.totalorder %v744, 3
      %vm3300 = vcmp.ge.s32.totalorder %v745, 3
      %vm3301 = vcmp.ge.s32.totalorder %v746, 3
      %vm3302 = vcmp.ge.s32.totalorder %v747, 3
      %vm3303 = vcmp.ge.s32.totalorder %v748, 3
      %v3304 = vsel %vm3272, 1, 0
      %v3305 = vsel %vm3273, 1, 0
      %v3306 = vsel %vm3274, 1, 0
      %v3307 = vsel %vm3275, 1, 0
      %v3308 = vsel %vm3276, 1, 0
      %v3309 = vsel %vm3277, 1, 0
      %v3310 = vsel %vm3278, 1, 0
      %v3311 = vsel %vm3279, 1, 0
      %v3312 = vsel %vm3280, 1, 0
      %v3313 = vsel %vm3281, 1, 0
      %v3314 = vsel %vm3282, 1, 0
      %v3315 = vsel %vm3283, 1, 0
      %v3316 = vsel %vm3284, 1, 0
      %v3317 = vsel %vm3285, 1, 0
      %v3318 = vsel %vm3286, 1, 0
      %v3319 = vsel %vm3287, 1, 0
      %v3320 = vsel %vm3288, 1, 0
      %v3321 = vsel %vm3289, 1, 0
      %v3322 = vsel %vm3290, 1, 0
      %v3323 = vsel %vm3291, 1, 0
      %v3324 = vsel %vm3292, 1, 0
      %v3325 = vsel %vm3293, 1, 0
      %v3326 = vsel %vm3294, 1, 0
      %v3327 = vsel %vm3295, 1, 0
      %v3328 = vsel %vm3296, 1, 0
      %v3329 = vsel %vm3297, 1, 0
      %v3330 = vsel %vm3298, 1, 0
      %v3331 = vsel %vm3299, 1, 0
      %v3332 = vsel %vm3300, 1, 0
      %v3333 = vsel %vm3301, 1, 0
      %v3334 = vsel %vm3302, 1, 0
      %v3335 = vsel %vm3303, 1, 0
      %v3336 = vcvt.s32.f32 %v3304
      %v3337 = vcvt.s32.f32 %v3305
      %v3338 = vcvt.s32.f32 %v3306
      %v3339 = vcvt.s32.f32 %v3307
      %v3340 = vcvt.s32.f32 %v3308
      %v3341 = vcvt.s32.f32 %v3309
      %v3342 = vcvt.s32.f32 %v3310
      %v3343 = vcvt.s32.f32 %v3311
      %v3344 = vcvt.s32.f32 %v3312
      %v3345 = vcvt.s32.f32 %v3313
      %v3346 = vcvt.s32.f32 %v3314
      %v3347 = vcvt.s32.f32 %v3315
      %v3348 = vcvt.s32.f32 %v3316
      %v3349 = vcvt.s32.f32 %v3317
      %v3350 = vcvt.s32.f32 %v3318
      %v3351 = vcvt.s32.f32 %v3319
      %v3352 = vcvt.s32.f32 %v3320
      %v3353 = vcvt.s32.f32 %v3321
      %v3354 = vcvt.s32.f32 %v3322
      %v3355 = vcvt.s32.f32 %v3323
      %v3356 = vcvt.s32.f32 %v3324
      %v3357 = vcvt.s32.f32 %v3325
      %v3358 = vcvt.s32.f32 %v3326
      %v3359 = vcvt.s32.f32 %v3327
      %v3360 = vcvt.s32.f32 %v3328
      %v3361 = vcvt.s32.f32 %v3329
      %v3362 = vcvt.s32.f32 %v3330
      %v3363 = vcvt.s32.f32 %v3331
      %v3364 = vcvt.s32.f32 %v3332
      %v3365 = vcvt.s32.f32 %v3333
      %v3366 = vcvt.s32.f32 %v3334
      %v3367 = vcvt.s32.f32 %v3335
      %v3368 = vmul.f32 %v3271, %v3336
      %v3369 = vmul.f32 %v3270, %v3337
      %v3370 = vmul.f32 %v3269, %v3338
      %v3371 = vmul.f32 %v3268, %v3339
      %v3372 = vmul.f32 %v3267, %v3340
      %v3373 = vmul.f32 %v3266, %v3341
      %v3374 = vmul.f32 %v3265, %v3342
      %v3375 = vmul.f32 %v3264, %v3343
      %v3376 = vmul.f32 %v3263, %v3344
      %v3377 = vmul.f32 %v3262, %v3345
      %v3378 = vmul.f32 %v3261, %v3346
      %v3379 = vmul.f32 %v3260, %v3347
      %v3380 = vmul.f32 %v3259, %v3348
      %v3381 = vmul.f32 %v3258, %v3349
      %v3382 = vmul.f32 %v3257, %v3350
      %v3383 = vmul.f32 %v3256, %v3351
      %v3384 = vmul.f32 %v3255, %v3352
      %v3385 = vmul.f32 %v3254, %v3353
      %v3386 = vmul.f32 %v3253, %v3354
      %v3387 = vmul.f32 %v3252, %v3355
      %v3388 = vmul.f32 %v3251, %v3356
      %v3389 = vmul.f32 %v3250, %v3357
      %v3390 = vmul.f32 %v3249, %v3358
      %v3391 = vmul.f32 %v3248, %v3359
      %v3392 = vmul.f32 %v3247, %v3360
      %v3393 = vmul.f32 %v3246, %v3361
      %v3394 = vmul.f32 %v3245, %v3362
      %v3395 = vmul.f32 %v3244, %v3363
      %v3396 = vmul.f32 %v3243, %v3364
      %v3397 = vmul.f32 %v3242, %v3365
      %v3398 = vmul.f32 %v3241, %v3366
      %v3399 = vmul.f32 %v3240, %v3367
      %3432 = vrot.lane.b32.xlu0 %v3368, 96
      %v3433 = vpop.permute.xlu0 %3432
      %3434 = vrot.lane.b32.xlu0 %v3369, 96
      %v3435 = vpop.permute.xlu0 %3434
      %3436 = vrot.lane.b32.xlu0 %v3370, 96
      %v3437 = vpop.permute.xlu0 %3436
      %3438 = vrot.lane.b32.xlu0 %v3371, 96
      %v3439 = vpop.permute.xlu0 %3438
      %3440 = vrot.lane.b32.xlu0 %v3372, 96
      %v3441 = vpop.permute.xlu0 %3440
      %3442 = vrot.lane.b32.xlu0 %v3373, 96
      %v3443 = vpop.permute.xlu0 %3442
      %3444 = vrot.lane.b32.xlu0 %v3374, 96
      %v3445 = vpop.permute.xlu0 %3444
      %3446 = vrot.lane.b32.xlu0 %v3375, 96
      %v3447 = vpop.permute.xlu0 %3446
      %3448 = vrot.lane.b32.xlu0 %v3376, 96
      %v3449 = vpop.permute.xlu0 %3448
      %3450 = vrot.lane.b32.xlu0 %v3377, 96
      %v3451 = vpop.permute.xlu0 %3450
      %3452 = vrot.lane.b32.xlu0 %v3378, 96
      %v3453 = vpop.permute.xlu0 %3452
      %3454 = vrot.lane.b32.xlu0 %v3379, 96
      %v3455 = vpop.permute.xlu0 %3454
      %3456 = vrot.lane.b32.xlu0 %v3380, 96
      %v3457 = vpop.permute.xlu0 %3456
      %3458 = vrot.lane.b32.xlu0 %v3381, 96
      %v3459 = vpop.permute.xlu0 %3458
      %3460 = vrot.lane.b32.xlu0 %v3382, 96
      %v3461 = vpop.permute.xlu0 %3460
      %3462 = vrot.lane.b32.xlu0 %v3383, 96
      %v3463 = vpop.permute.xlu0 %3462
      %3464 = vrot.lane.b32.xlu0 %v3384, 96
      %v3465 = vpop.permute.xlu0 %3464
      %3466 = vrot.lane.b32.xlu0 %v3385, 96
      %v3467 = vpop.permute.xlu0 %3466
      %3468 = vrot.lane.b32.xlu0 %v3386, 96
      %v3469 = vpop.permute.xlu0 %3468
      %3470 = vrot.lane.b32.xlu0 %v3387, 96
      %v3471 = vpop.permute.xlu0 %3470
      %3472 = vrot.lane.b32.xlu0 %v3388, 96
      %v3473 = vpop.permute.xlu0 %3472
      %3474 = vrot.lane.b32.xlu0 %v3389, 96
      %v3475 = vpop.permute.xlu0 %3474
      %3476 = vrot.lane.b32.xlu0 %v3390, 96
      %v3477 = vpop.permute.xlu0 %3476
      %3478 = vrot.lane.b32.xlu0 %v3391, 96
      %v3479 = vpop.permute.xlu0 %3478
      %3480 = vrot.lane.b32.xlu0 %v3392, 96
      %v3481 = vpop.permute.xlu0 %3480
      %3482 = vrot.lane.b32.xlu0 %v3393, 96
      %v3483 = vpop.permute.xlu0 %3482
      %3484 = vrot.lane.b32.xlu0 %v3394, 96
      %v3485 = vpop.permute.xlu0 %3484
      %3486 = vrot.lane.b32.xlu0 %v3395, 96
      %v3487 = vpop.permute.xlu0 %3486
      %3488 = vrot.lane.b32.xlu0 %v3396, 96
      %v3489 = vpop.permute.xlu0 %3488
      %3490 = vrot.lane.b32.xlu0 %v3397, 96
      %v3491 = vpop.permute.xlu0 %3490
      %3492 = vrot.lane.b32.xlu0 %v3398, 96
      %v3493 = vpop.permute.xlu0 %3492
      %3494 = vrot.lane.b32.xlu0 %v3399, 96
      %v3495 = vpop.permute.xlu0 %3494
      %v3528 = vadd.f32 %v3175, %v3433
      %v3529 = vadd.f32 %v3176, %v3435
      %v3530 = vadd.f32 %v3177, %v3437
      %v3531 = vadd.f32 %v3178, %v3439
      %v3532 = vadd.f32 %v3179, %v3441
      %v3533 = vadd.f32 %v3180, %v3443
      %v3534 = vadd.f32 %v3181, %v3445
      %v3535 = vadd.f32 %v3182, %v3447
      %v3536 = vadd.f32 %v3183, %v3449
      %v3537 = vadd.f32 %v3184, %v3451
      %v3538 = vadd.f32 %v3185, %v3453
      %v3539 = vadd.f32 %v3186, %v3455
      %v3540 = vadd.f32 %v3187, %v3457
      %v3541 = vadd.f32 %v3188, %v3459
      %v3542 = vadd.f32 %v3189, %v3461
      %v3543 = vadd.f32 %v3190, %v3463
      %v3544 = vadd.f32 %v3191, %v3465
      %v3545 = vadd.f32 %v3192, %v3467
      %v3546 = vadd.f32 %v3193, %v3469
      %v3547 = vadd.f32 %v3194, %v3471
      %v3548 = vadd.f32 %v3195, %v3473
      %v3549 = vadd.f32 %v3196, %v3475
      %v3550 = vadd.f32 %v3197, %v3477
      %v3551 = vadd.f32 %v3198, %v3479
      %v3552 = vadd.f32 %v3199, %v3481
      %v3553 = vadd.f32 %v3200, %v3483
      %v3554 = vadd.f32 %v3201, %v3485
      %v3555 = vadd.f32 %v3202, %v3487
      %v3556 = vadd.f32 %v3203, %v3489
      %v3557 = vadd.f32 %v3204, %v3491
      %v3558 = vadd.f32 %v3205, %v3493
      %v3559 = vadd.f32 %v3206, %v3495
      %3592 = vrot.lane.b32.xlu0 %v1085, 96
      %v3593 = vpop.permute.xlu0 %3592
      %3594 = vrot.lane.b32.xlu0 %v1089, 96
      %v3595 = vpop.permute.xlu0 %3594
      %3596 = vrot.lane.b32.xlu0 %v1095, 96
      %v3597 = vpop.permute.xlu0 %3596
      %3598 = vrot.lane.b32.xlu0 %v1099, 96
      %v3599 = vpop.permute.xlu0 %3598
      %3600 = vrot.lane.b32.xlu0 %v1105, 96
      %v3601 = vpop.permute.xlu0 %3600
      %3602 = vrot.lane.b32.xlu0 %v1109, 96
      %v3603 = vpop.permute.xlu0 %3602
      %3604 = vrot.lane.b32.xlu0 %v1115, 96
      %v3605 = vpop.permute.xlu0 %3604
      %3606 = vrot.lane.b32.xlu0 %v1119, 96
      %v3607 = vpop.permute.xlu0 %3606
      %3608 = vrot.lane.b32.xlu0 %v1125, 96
      %v3609 = vpop.permute.xlu0 %3608
      %3610 = vrot.lane.b32.xlu0 %v1129, 96
      %v3611 = vpop.permute.xlu0 %3610
      %3612 = vrot.lane.b32.xlu0 %v1135, 96
      %v3613 = vpop.permute.xlu0 %3612
      %3614 = vrot.lane.b32.xlu0 %v1139, 96
      %v3615 = vpop.permute.xlu0 %3614
      %3616 = vrot.lane.b32.xlu0 %v1145, 96
      %v3617 = vpop.permute.xlu0 %3616
      %3618 = vrot.lane.b32.xlu0 %v1149, 96
      %v3619 = vpop.permute.xlu0 %3618
      %3620 = vrot.lane.b32.xlu0 %v1155, 96
      %v3621 = vpop.permute.xlu0 %3620
      %3622 = vrot.lane.b32.xlu0 %v1159, 96
      %v3623 = vpop.permute.xlu0 %3622
      %3624 = vrot.lane.b32.xlu0 %v1165, 96
      %v3625 = vpop.permute.xlu0 %3624
      %3626 = vrot.lane.b32.xlu0 %v1169, 96
      %v3627 = vpop.permute.xlu0 %3626
      %3628 = vrot.lane.b32.xlu0 %v1175, 96
      %v3629 = vpop.permute.xlu0 %3628
      %3630 = vrot.lane.b32.xlu0 %v1179, 96
      %v3631 = vpop.permute.xlu0 %3630
      %3632 = vrot.lane.b32.xlu0 %v1185, 96
      %v3633 = vpop.permute.xlu0 %3632
      %3634 = vrot.lane.b32.xlu0 %v1189, 96
      %v3635 = vpop.permute.xlu0 %3634
      %3636 = vrot.lane.b32.xlu0 %v1195, 96
      %v3637 = vpop.permute.xlu0 %3636
      %3638 = vrot.lane.b32.xlu0 %v1199, 96
      %v3639 = vpop.permute.xlu0 %3638
      %3640 = vrot.lane.b32.xlu0 %v1205, 96
      %v3641 = vpop.permute.xlu0 %3640
      %3642 = vrot.lane.b32.xlu0 %v1209, 96
      %v3643 = vpop.permute.xlu0 %3642
      %3644 = vrot.lane.b32.xlu0 %v1215, 96
      %v3645 = vpop.permute.xlu0 %3644
      %3646 = vrot.lane.b32.xlu0 %v1219, 96
      %v3647 = vpop.permute.xlu0 %3646
      %3648 = vrot.lane.b32.xlu0 %v1225, 96
      %v3649 = vpop.permute.xlu0 %3648
      %3650 = vrot.lane.b32.xlu0 %v1229, 96
      %v3651 = vpop.permute.xlu0 %3650
      %3652 = vrot.lane.b32.xlu0 %v1235, 96
      %v3653 = vpop.permute.xlu0 %3652
      %3654 = vrot.lane.b32.xlu0 %v1239, 96
      %v3655 = vpop.permute.xlu0 %3654
      %v3688 = vrot.slane %v3593, 6
      %v3689 = vrot.slane %v3595, 6
      %v3690 = vrot.slane %v3597, 6
      %v3691 = vrot.slane %v3599, 6
      %v3692 = vrot.slane %v3601, 6
      %v3693 = vrot.slane %v3603, 6
      %v3694 = vrot.slane %v3605, 6
      %v3695 = vrot.slane %v3607, 6
      %v3696 = vrot.slane %v3609, 6
      %v3697 = vrot.slane %v3611, 6
      %v3698 = vrot.slane %v3613, 6
      %v3699 = vrot.slane %v3615, 6
      %v3700 = vrot.slane %v3617, 6
      %v3701 = vrot.slane %v3619, 6
      %v3702 = vrot.slane %v3621, 6
      %v3703 = vrot.slane %v3623, 6
      %v3704 = vrot.slane %v3625, 6
      %v3705 = vrot.slane %v3627, 6
      %v3706 = vrot.slane %v3629, 6
      %v3707 = vrot.slane %v3631, 6
      %v3708 = vrot.slane %v3633, 6
      %v3709 = vrot.slane %v3635, 6
      %v3710 = vrot.slane %v3637, 6
      %v3711 = vrot.slane %v3639, 6
      %v3712 = vrot.slane %v3641, 6
      %v3713 = vrot.slane %v3643, 6
      %v3714 = vrot.slane %v3645, 6
      %v3715 = vrot.slane %v3647, 6
      %v3716 = vrot.slane %v3649, 6
      %v3717 = vrot.slane %v3651, 6
      %v3718 = vrot.slane %v3653, 6
      %v3719 = vrot.slane %v3655, 6
      %vm3720 = vcmp.lt.s32.totalorder %v333, 2
      %v3721 = vsel %vm3720, %v3718, %v3719
      %v3722 = vsel %vm3720, %v3717, %v3718
      %v3723 = vsel %vm3720, %v3716, %v3717
      %v3724 = vsel %vm3720, %v3715, %v3716
      %v3725 = vsel %vm3720, %v3714, %v3715
      %v3726 = vsel %vm3720, %v3713, %v3714
      %v3727 = vsel %vm3720, %v3712, %v3713
      %v3728 = vsel %vm3720, %v3711, %v3712
      %v3729 = vsel %vm3720, %v3710, %v3711
      %v3730 = vsel %vm3720, %v3709, %v3710
      %v3731 = vsel %vm3720, %v3708, %v3709
      %v3732 = vsel %vm3720, %v3707, %v3708
      %v3733 = vsel %vm3720, %v3706, %v3707
      %v3734 = vsel %vm3720, %v3705, %v3706
      %v3735 = vsel %vm3720, %v3704, %v3705
      %v3736 = vsel %vm3720, %v3703, %v3704
      %v3737 = vsel %vm3720, %v3702, %v3703
      %v3738 = vsel %vm3720, %v3701, %v3702
      %v3739 = vsel %vm3720, %v3700, %v3701
      %v3740 = vsel %vm3720, %v3699, %v3700
      %v3741 = vsel %vm3720, %v3698, %v3699
      %v3742 = vsel %vm3720, %v3697, %v3698
      %v3743 = vsel %vm3720, %v3696, %v3697
      %v3744 = vsel %vm3720, %v3695, %v3696
      %v3745 = vsel %vm3720, %v3694, %v3695
      %v3746 = vsel %vm3720, %v3693, %v3694
      %v3747 = vsel %vm3720, %v3692, %v3693
      %v3748 = vsel %vm3720, %v3691, %v3692
      %v3749 = vsel %vm3720, %v3690, %v3691
      %v3750 = vsel %vm3720, %v3689, %v3690
      %v3751 = vsel %vm3720, %v3688, %v3689
      %v3752 = vsel %vm3720, %v3719, %v3688
      %vm3753 = vcmp.ge.s32.totalorder %v717, 2
      %vm3754 = vcmp.ge.s32.totalorder %v718, 2
      %vm3755 = vcmp.ge.s32.totalorder %v719, 2
      %vm3756 = vcmp.ge.s32.totalorder %v720, 2
      %vm3757 = vcmp.ge.s32.totalorder %v721, 2
      %vm3758 = vcmp.ge.s32.totalorder %v722, 2
      %vm3759 = vcmp.ge.s32.totalorder %v723, 2
      %vm3760 = vcmp.ge.s32.totalorder %v724, 2
      %vm3761 = vcmp.ge.s32.totalorder %v725, 2
      %vm3762 = vcmp.ge.s32.totalorder %v726, 2
      %vm3763 = vcmp.ge.s32.totalorder %v727, 2
      %vm3764 = vcmp.ge.s32.totalorder %v728, 2
      %vm3765 = vcmp.ge.s32.totalorder %v729, 2
      %vm3766 = vcmp.ge.s32.totalorder %v730, 2
      %vm3767 = vcmp.ge.s32.totalorder %v731, 2
      %vm3768 = vcmp.ge.s32.totalorder %v732, 2
      %vm3769 = vcmp.ge.s32.totalorder %v733, 2
      %vm3770 = vcmp.ge.s32.totalorder %v734, 2
      %vm3771 = vcmp.ge.s32.totalorder %v735, 2
      %vm3772 = vcmp.ge.s32.totalorder %v736, 2
      %vm3773 = vcmp.ge.s32.totalorder %v737, 2
      %vm3774 = vcmp.ge.s32.totalorder %v738, 2
      %vm3775 = vcmp.ge.s32.totalorder %v739, 2
      %vm3776 = vcmp.ge.s32.totalorder %v740, 2
      %vm3777 = vcmp.ge.s32.totalorder %v741, 2
      %vm3778 = vcmp.ge.s32.totalorder %v742, 2
      %vm3779 = vcmp.ge.s32.totalorder %v743, 2
      %vm3780 = vcmp.ge.s32.totalorder %v744, 2
      %vm3781 = vcmp.ge.s32.totalorder %v745, 2
      %vm3782 = vcmp.ge.s32.totalorder %v746, 2
      %vm3783 = vcmp.ge.s32.totalorder %v747, 2
      %vm3784 = vcmp.ge.s32.totalorder %v748, 2
      %v3785 = vsel %vm3753, 1, 0
      %v3786 = vsel %vm3754, 1, 0
      %v3787 = vsel %vm3755, 1, 0
      %v3788 = vsel %vm3756, 1, 0
      %v3789 = vsel %vm3757, 1, 0
      %v3790 = vsel %vm3758, 1, 0
      %v3791 = vsel %vm3759, 1, 0
      %v3792 = vsel %vm3760, 1, 0
      %v3793 = vsel %vm3761, 1, 0
      %v3794 = vsel %vm3762, 1, 0
      %v3795 = vsel %vm3763, 1, 0
      %v3796 = vsel %vm3764, 1, 0
      %v3797 = vsel %vm3765, 1, 0
      %v3798 = vsel %vm3766, 1, 0
      %v3799 = vsel %vm3767, 1, 0
      %v3800 = vsel %vm3768, 1, 0
      %v3801 = vsel %vm3769, 1, 0
      %v3802 = vsel %vm3770, 1, 0
      %v3803 = vsel %vm3771, 1, 0
      %v3804 = vsel %vm3772, 1, 0
      %v3805 = vsel %vm3773, 1, 0
      %v3806 = vsel %vm3774, 1, 0
      %v3807 = vsel %vm3775, 1, 0
      %v3808 = vsel %vm3776, 1, 0
      %v3809 = vsel %vm3777, 1, 0
      %v3810 = vsel %vm3778, 1, 0
      %v3811 = vsel %vm3779, 1, 0
      %v3812 = vsel %vm3780, 1, 0
      %v3813 = vsel %vm3781, 1, 0
      %v3814 = vsel %vm3782, 1, 0
      %v3815 = vsel %vm3783, 1, 0
      %v3816 = vsel %vm3784, 1, 0
      %v3817 = vcvt.s32.f32 %v3785
      %v3818 = vcvt.s32.f32 %v3786
      %v3819 = vcvt.s32.f32 %v3787
      %v3820 = vcvt.s32.f32 %v3788
      %v3821 = vcvt.s32.f32 %v3789
      %v3822 = vcvt.s32.f32 %v3790
      %v3823 = vcvt.s32.f32 %v3791
      %v3824 = vcvt.s32.f32 %v3792
      %v3825 = vcvt.s32.f32 %v3793
      %v3826 = vcvt.s32.f32 %v3794
      %v3827 = vcvt.s32.f32 %v3795
      %v3828 = vcvt.s32.f32 %v3796
      %v3829 = vcvt.s32.f32 %v3797
      %v3830 = vcvt.s32.f32 %v3798
      %v3831 = vcvt.s32.f32 %v3799
      %v3832 = vcvt.s32.f32 %v3800
      %v3833 = vcvt.s32.f32 %v3801
      %v3834 = vcvt.s32.f32 %v3802
      %v3835 = vcvt.s32.f32 %v3803
      %v3836 = vcvt.s32.f32 %v3804
      %v3837 = vcvt.s32.f32 %v3805
      %v3838 = vcvt.s32.f32 %v3806
      %v3839 = vcvt.s32.f32 %v3807
      %v3840 = vcvt.s32.f32 %v3808
      %v3841 = vcvt.s32.f32 %v3809
      %v3842 = vcvt.s32.f32 %v3810
      %v3843 = vcvt.s32.f32 %v3811
      %v3844 = vcvt.s32.f32 %v3812
      %v3845 = vcvt.s32.f32 %v3813
      %v3846 = vcvt.s32.f32 %v3814
      %v3847 = vcvt.s32.f32 %v3815
      %v3848 = vcvt.s32.f32 %v3816
      %v3849 = vmul.f32 %v3752, %v3817
      %v3850 = vmul.f32 %v3751, %v3818
      %v3851 = vmul.f32 %v3750, %v3819
      %v3852 = vmul.f32 %v3749, %v3820
      %v3853 = vmul.f32 %v3748, %v3821
      %v3854 = vmul.f32 %v3747, %v3822
      %v3855 = vmul.f32 %v3746, %v3823
      %v3856 = vmul.f32 %v3745, %v3824
      %v3857 = vmul.f32 %v3744, %v3825
      %v3858 = vmul.f32 %v3743, %v3826
      %v3859 = vmul.f32 %v3742, %v3827
      %v3860 = vmul.f32 %v3741, %v3828
      %v3861 = vmul.f32 %v3740, %v3829
      %v3862 = vmul.f32 %v3739, %v3830
      %v3863 = vmul.f32 %v3738, %v3831
      %v3864 = vmul.f32 %v3737, %v3832
      %v3865 = vmul.f32 %v3736, %v3833
      %v3866 = vmul.f32 %v3735, %v3834
      %v3867 = vmul.f32 %v3734, %v3835
      %v3868 = vmul.f32 %v3733, %v3836
      %v3869 = vmul.f32 %v3732, %v3837
      %v3870 = vmul.f32 %v3731, %v3838
      %v3871 = vmul.f32 %v3730, %v3839
      %v3872 = vmul.f32 %v3729, %v3840
      %v3873 = vmul.f32 %v3728, %v3841
      %v3874 = vmul.f32 %v3727, %v3842
      %v3875 = vmul.f32 %v3726, %v3843
      %v3876 = vmul.f32 %v3725, %v3844
      %v3877 = vmul.f32 %v3724, %v3845
      %v3878 = vmul.f32 %v3723, %v3846
      %v3879 = vmul.f32 %v3722, %v3847
      %v3880 = vmul.f32 %v3721, %v3848
      %3913 = vrot.lane.b32.xlu0 %v3849, 96
      %v3914 = vpop.permute.xlu0 %3913
      %3915 = vrot.lane.b32.xlu0 %v3850, 96
      %v3916 = vpop.permute.xlu0 %3915
      %3917 = vrot.lane.b32.xlu0 %v3851, 96
      %v3918 = vpop.permute.xlu0 %3917
      %3919 = vrot.lane.b32.xlu0 %v3852, 96
      %v3920 = vpop.permute.xlu0 %3919
      %3921 = vrot.lane.b32.xlu0 %v3853, 96
      %v3922 = vpop.permute.xlu0 %3921
      %3923 = vrot.lane.b32.xlu0 %v3854, 96
      %v3924 = vpop.permute.xlu0 %3923
      %3925 = vrot.lane.b32.xlu0 %v3855, 96
      %v3926 = vpop.permute.xlu0 %3925
      %3927 = vrot.lane.b32.xlu0 %v3856, 96
      %v3928 = vpop.permute.xlu0 %3927
      %3929 = vrot.lane.b32.xlu0 %v3857, 96
      %v3930 = vpop.permute.xlu0 %3929
      %3931 = vrot.lane.b32.xlu0 %v3858, 96
      %v3932 = vpop.permute.xlu0 %3931
      %3933 = vrot.lane.b32.xlu0 %v3859, 96
      %v3934 = vpop.permute.xlu0 %3933
      %3935 = vrot.lane.b32.xlu0 %v3860, 96
      %v3936 = vpop.permute.xlu0 %3935
      %3937 = vrot.lane.b32.xlu0 %v3861, 96
      %v3938 = vpop.permute.xlu0 %3937
      %3939 = vrot.lane.b32.xlu0 %v3862, 96
      %v3940 = vpop.permute.xlu0 %3939
      %3941 = vrot.lane.b32.xlu0 %v3863, 96
      %v3942 = vpop.permute.xlu0 %3941
      %3943 = vrot.lane.b32.xlu0 %v3864, 96
      %v3944 = vpop.permute.xlu0 %3943
      %3945 = vrot.lane.b32.xlu0 %v3865, 96
      %v3946 = vpop.permute.xlu0 %3945
      %3947 = vrot.lane.b32.xlu0 %v3866, 96
      %v3948 = vpop.permute.xlu0 %3947
      %3949 = vrot.lane.b32.xlu0 %v3867, 96
      %v3950 = vpop.permute.xlu0 %3949
      %3951 = vrot.lane.b32.xlu0 %v3868, 96
      %v3952 = vpop.permute.xlu0 %3951
      %3953 = vrot.lane.b32.xlu0 %v3869, 96
      %v3954 = vpop.permute.xlu0 %3953
      %3955 = vrot.lane.b32.xlu0 %v3870, 96
      %v3956 = vpop.permute.xlu0 %3955
      %3957 = vrot.lane.b32.xlu0 %v3871, 96
      %v3958 = vpop.permute.xlu0 %3957
      %3959 = vrot.lane.b32.xlu0 %v3872, 96
      %v3960 = vpop.permute.xlu0 %3959
      %3961 = vrot.lane.b32.xlu0 %v3873, 96
      %v3962 = vpop.permute.xlu0 %3961
      %3963 = vrot.lane.b32.xlu0 %v3874, 96
      %v3964 = vpop.permute.xlu0 %3963
      %3965 = vrot.lane.b32.xlu0 %v3875, 96
      %v3966 = vpop.permute.xlu0 %3965
      %3967 = vrot.lane.b32.xlu0 %v3876, 96
      %v3968 = vpop.permute.xlu0 %3967
      %3969 = vrot.lane.b32.xlu0 %v3877, 96
      %v3970 = vpop.permute.xlu0 %3969
      %3971 = vrot.lane.b32.xlu0 %v3878, 96
      %v3972 = vpop.permute.xlu0 %3971
      %3973 = vrot.lane.b32.xlu0 %v3879, 96
      %v3974 = vpop.permute.xlu0 %3973
      %3975 = vrot.lane.b32.xlu0 %v3880, 96
      %v3976 = vpop.permute.xlu0 %3975
      %v4009 = vadd.f32 %v3528, %v3914
      %v4010 = vadd.f32 %v3529, %v3916
      %v4011 = vadd.f32 %v3530, %v3918
      %v4012 = vadd.f32 %v3531, %v3920
      %v4013 = vadd.f32 %v3532, %v3922
      %v4014 = vadd.f32 %v3533, %v3924
      %v4015 = vadd.f32 %v3534, %v3926
      %v4016 = vadd.f32 %v3535, %v3928
      %v4017 = vadd.f32 %v3536, %v3930
      %v4018 = vadd.f32 %v3537, %v3932
      %v4019 = vadd.f32 %v3538, %v3934
      %v4020 = vadd.f32 %v3539, %v3936
      %v4021 = vadd.f32 %v3540, %v3938
      %v4022 = vadd.f32 %v3541, %v3940
      %v4023 = vadd.f32 %v3542, %v3942
      %v4024 = vadd.f32 %v3543, %v3944
      %v4025 = vadd.f32 %v3544, %v3946
      %v4026 = vadd.f32 %v3545, %v3948
      %v4027 = vadd.f32 %v3546, %v3950
      %v4028 = vadd.f32 %v3547, %v3952
      %v4029 = vadd.f32 %v3548, %v3954
      %v4030 = vadd.f32 %v3549, %v3956
      %v4031 = vadd.f32 %v3550, %v3958
      %v4032 = vadd.f32 %v3551, %v3960
      %v4033 = vadd.f32 %v3552, %v3962
      %v4034 = vadd.f32 %v3553, %v3964
      %v4035 = vadd.f32 %v3554, %v3966
      %v4036 = vadd.f32 %v3555, %v3968
      %v4037 = vadd.f32 %v3556, %v3970
      %v4038 = vadd.f32 %v3557, %v3972
      %v4039 = vadd.f32 %v3558, %v3974
      %v4040 = vadd.f32 %v3559, %v3976
      %4041 = vrot.lane.b32.xlu0 %v1085, 64
      %v4042 = vpop.permute.xlu0 %4041
      %4043 = vrot.lane.b32.xlu0 %v1089, 64
      %v4044 = vpop.permute.xlu0 %4043
      %4045 = vrot.lane.b32.xlu0 %v1095, 64
      %v4046 = vpop.permute.xlu0 %4045
      %4047 = vrot.lane.b32.xlu0 %v1099, 64
      %v4048 = vpop.permute.xlu0 %4047
      %4049 = vrot.lane.b32.xlu0 %v1105, 64
      %v4050 = vpop.permute.xlu0 %4049
      %4051 = vrot.lane.b32.xlu0 %v1109, 64
      %v4052 = vpop.permute.xlu0 %4051
      %4053 = vrot.lane.b32.xlu0 %v1115, 64
      %v4054 = vpop.permute.xlu0 %4053
      %4055 = vrot.lane.b32.xlu0 %v1119, 64
      %v4056 = vpop.permute.xlu0 %4055
      %4057 = vrot.lane.b32.xlu0 %v1125, 64
      %v4058 = vpop.permute.xlu0 %4057
      %4059 = vrot.lane.b32.xlu0 %v1129, 64
      %v4060 = vpop.permute.xlu0 %4059
      %4061 = vrot.lane.b32.xlu0 %v1135, 64
      %v4062 = vpop.permute.xlu0 %4061
      %4063 = vrot.lane.b32.xlu0 %v1139, 64
      %v4064 = vpop.permute.xlu0 %4063
      %4065 = vrot.lane.b32.xlu0 %v1145, 64
      %v4066 = vpop.permute.xlu0 %4065
      %4067 = vrot.lane.b32.xlu0 %v1149, 64
      %v4068 = vpop.permute.xlu0 %4067
      %4069 = vrot.lane.b32.xlu0 %v1155, 64
      %v4070 = vpop.permute.xlu0 %4069
      %4071 = vrot.lane.b32.xlu0 %v1159, 64
      %v4072 = vpop.permute.xlu0 %4071
      %4073 = vrot.lane.b32.xlu0 %v1165, 64
      %v4074 = vpop.permute.xlu0 %4073
      %4075 = vrot.lane.b32.xlu0 %v1169, 64
      %v4076 = vpop.permute.xlu0 %4075
      %4077 = vrot.lane.b32.xlu0 %v1175, 64
      %v4078 = vpop.permute.xlu0 %4077
      %4079 = vrot.lane.b32.xlu0 %v1179, 64
      %v4080 = vpop.permute.xlu0 %4079
      %4081 = vrot.lane.b32.xlu0 %v1185, 64
      %v4082 = vpop.permute.xlu0 %4081
      %4083 = vrot.lane.b32.xlu0 %v1189, 64
      %v4084 = vpop.permute.xlu0 %4083
      %4085 = vrot.lane.b32.xlu0 %v1195, 64
      %v4086 = vpop.permute.xlu0 %4085
      %4087 = vrot.lane.b32.xlu0 %v1199, 64
      %v4088 = vpop.permute.xlu0 %4087
      %4089 = vrot.lane.b32.xlu0 %v1205, 64
      %v4090 = vpop.permute.xlu0 %4089
      %4091 = vrot.lane.b32.xlu0 %v1209, 64
      %v4092 = vpop.permute.xlu0 %4091
      %4093 = vrot.lane.b32.xlu0 %v1215, 64
      %v4094 = vpop.permute.xlu0 %4093
      %4095 = vrot.lane.b32.xlu0 %v1219, 64
      %v4096 = vpop.permute.xlu0 %4095
      %4097 = vrot.lane.b32.xlu0 %v1225, 64
      %v4098 = vpop.permute.xlu0 %4097
      %4099 = vrot.lane.b32.xlu0 %v1229, 64
      %v4100 = vpop.permute.xlu0 %4099
      %4101 = vrot.lane.b32.xlu0 %v1235, 64
      %v4102 = vpop.permute.xlu0 %4101
      %4103 = vrot.lane.b32.xlu0 %v1239, 64
      %v4104 = vpop.permute.xlu0 %4103
      %v4137 = vrot.slane %v4042, 7
      %v4138 = vrot.slane %v4044, 7
      %v4139 = vrot.slane %v4046, 7
      %v4140 = vrot.slane %v4048, 7
      %v4141 = vrot.slane %v4050, 7
      %v4142 = vrot.slane %v4052, 7
      %v4143 = vrot.slane %v4054, 7
      %v4144 = vrot.slane %v4056, 7
      %v4145 = vrot.slane %v4058, 7
      %v4146 = vrot.slane %v4060, 7
      %v4147 = vrot.slane %v4062, 7
      %v4148 = vrot.slane %v4064, 7
      %v4149 = vrot.slane %v4066, 7
      %v4150 = vrot.slane %v4068, 7
      %v4151 = vrot.slane %v4070, 7
      %v4152 = vrot.slane %v4072, 7
      %v4153 = vrot.slane %v4074, 7
      %v4154 = vrot.slane %v4076, 7
      %v4155 = vrot.slane %v4078, 7
      %v4156 = vrot.slane %v4080, 7
      %v4157 = vrot.slane %v4082, 7
      %v4158 = vrot.slane %v4084, 7
      %v4159 = vrot.slane %v4086, 7
      %v4160 = vrot.slane %v4088, 7
      %v4161 = vrot.slane %v4090, 7
      %v4162 = vrot.slane %v4092, 7
      %v4163 = vrot.slane %v4094, 7
      %v4164 = vrot.slane %v4096, 7
      %v4165 = vrot.slane %v4098, 7
      %v4166 = vrot.slane %v4100, 7
      %v4167 = vrot.slane %v4102, 7
      %v4168 = vrot.slane %v4104, 7
      %vm4169 = vcmp.lt.s32.totalorder %v333, 1
      %v4170 = vsel %vm4169, %v4167, %v4168
      %v4171 = vsel %vm4169, %v4166, %v4167
      %v4172 = vsel %vm4169, %v4165, %v4166
      %v4173 = vsel %vm4169, %v4164, %v4165
      %v4174 = vsel %vm4169, %v4163, %v4164
      %v4175 = vsel %vm4169, %v4162, %v4163
      %v4176 = vsel %vm4169, %v4161, %v4162
      %v4177 = vsel %vm4169, %v4160, %v4161
      %v4178 = vsel %vm4169, %v4159, %v4160
      %v4179 = vsel %vm4169, %v4158, %v4159
      %v4180 = vsel %vm4169, %v4157, %v4158
      %v4181 = vsel %vm4169, %v4156, %v4157
      %v4182 = vsel %vm4169, %v4155, %v4156
      %v4183 = vsel %vm4169, %v4154, %v4155
      %v4184 = vsel %vm4169, %v4153, %v4154
      %v4185 = vsel %vm4169, %v4152, %v4153
      %v4186 = vsel %vm4169, %v4151, %v4152
      %v4187 = vsel %vm4169, %v4150, %v4151
      %v4188 = vsel %vm4169, %v4149, %v4150
      %v4189 = vsel %vm4169, %v4148, %v4149
      %v4190 = vsel %vm4169, %v4147, %v4148
      %v4191 = vsel %vm4169, %v4146, %v4147
      %v4192 = vsel %vm4169, %v4145, %v4146
      %v4193 = vsel %vm4169, %v4144, %v4145
      %v4194 = vsel %vm4169, %v4143, %v4144
      %v4195 = vsel %vm4169, %v4142, %v4143
      %v4196 = vsel %vm4169, %v4141, %v4142
      %v4197 = vsel %vm4169, %v4140, %v4141
      %v4198 = vsel %vm4169, %v4139, %v4140
      %v4199 = vsel %vm4169, %v4138, %v4139
      %v4200 = vsel %vm4169, %v4137, %v4138
      %v4201 = vsel %vm4169, %v4168, %v4137
      %vm4202 = vcmp.ge.s32.totalorder %v717, 1
      %vm4203 = vcmp.ge.s32.totalorder %v718, 1
      %vm4204 = vcmp.ge.s32.totalorder %v719, 1
      %vm4205 = vcmp.ge.s32.totalorder %v720, 1
      %vm4206 = vcmp.ge.s32.totalorder %v721, 1
      %vm4207 = vcmp.ge.s32.totalorder %v722, 1
      %vm4208 = vcmp.ge.s32.totalorder %v723, 1
      %vm4209 = vcmp.ge.s32.totalorder %v724, 1
      %vm4210 = vcmp.ge.s32.totalorder %v725, 1
      %vm4211 = vcmp.ge.s32.totalorder %v726, 1
      %vm4212 = vcmp.ge.s32.totalorder %v727, 1
      %vm4213 = vcmp.ge.s32.totalorder %v728, 1
      %vm4214 = vcmp.ge.s32.totalorder %v729, 1
      %vm4215 = vcmp.ge.s32.totalorder %v730, 1
      %vm4216 = vcmp.ge.s32.totalorder %v731, 1
      %vm4217 = vcmp.ge.s32.totalorder %v732, 1
      %vm4218 = vcmp.ge.s32.totalorder %v733, 1
      %vm4219 = vcmp.ge.s32.totalorder %v734, 1
      %vm4220 = vcmp.ge.s32.totalorder %v735, 1
      %vm4221 = vcmp.ge.s32.totalorder %v736, 1
      %vm4222 = vcmp.ge.s32.totalorder %v737, 1
      %vm4223 = vcmp.ge.s32.totalorder %v738, 1
      %vm4224 = vcmp.ge.s32.totalorder %v739, 1
      %vm4225 = vcmp.ge.s32.totalorder %v740, 1
      %vm4226 = vcmp.ge.s32.totalorder %v741, 1
      %vm4227 = vcmp.ge.s32.totalorder %v742, 1
      %vm4228 = vcmp.ge.s32.totalorder %v743, 1
      %vm4229 = vcmp.ge.s32.totalorder %v744, 1
      %vm4230 = vcmp.ge.s32.totalorder %v745, 1
      %vm4231 = vcmp.ge.s32.totalorder %v746, 1
      %vm4232 = vcmp.ge.s32.totalorder %v747, 1
      %vm4233 = vcmp.ge.s32.totalorder %v748, 1
      %v4234 = vsel %vm4202, 1, 0
      %v4235 = vsel %vm4203, 1, 0
      %v4236 = vsel %vm4204, 1, 0
      %v4237 = vsel %vm4205, 1, 0
      %v4238 = vsel %vm4206, 1, 0
      %v4239 = vsel %vm4207, 1, 0
      %v4240 = vsel %vm4208, 1, 0
      %v4241 = vsel %vm4209, 1, 0
      %v4242 = vsel %vm4210, 1, 0
      %v4243 = vsel %vm4211, 1, 0
      %v4244 = vsel %vm4212, 1, 0
      %v4245 = vsel %vm4213, 1, 0
      %v4246 = vsel %vm4214, 1, 0
      %v4247 = vsel %vm4215, 1, 0
      %v4248 = vsel %vm4216, 1, 0
      %v4249 = vsel %vm4217, 1, 0
      %v4250 = vsel %vm4218, 1, 0
      %v4251 = vsel %vm4219, 1, 0
      %v4252 = vsel %vm4220, 1, 0
      %v4253 = vsel %vm4221, 1, 0
      %v4254 = vsel %vm4222, 1, 0
      %v4255 = vsel %vm4223, 1, 0
      %v4256 = vsel %vm4224, 1, 0
      %v4257 = vsel %vm4225, 1, 0
      %v4258 = vsel %vm4226, 1, 0
      %v4259 = vsel %vm4227, 1, 0
      %v4260 = vsel %vm4228, 1, 0
      %v4261 = vsel %vm4229, 1, 0
      %v4262 = vsel %vm4230, 1, 0
      %v4263 = vsel %vm4231, 1, 0
      %v4264 = vsel %vm4232, 1, 0
      %v4265 = vsel %vm4233, 1, 0
      %v4266 = vcvt.s32.f32 %v4234
      %v4267 = vcvt.s32.f32 %v4235
      %v4268 = vcvt.s32.f32 %v4236
      %v4269 = vcvt.s32.f32 %v4237
      %v4270 = vcvt.s32.f32 %v4238
      %v4271 = vcvt.s32.f32 %v4239
      %v4272 = vcvt.s32.f32 %v4240
      %v4273 = vcvt.s32.f32 %v4241
      %v4274 = vcvt.s32.f32 %v4242
      %v4275 = vcvt.s32.f32 %v4243
      %v4276 = vcvt.s32.f32 %v4244
      %v4277 = vcvt.s32.f32 %v4245
      %v4278 = vcvt.s32.f32 %v4246
      %v4279 = vcvt.s32.f32 %v4247
      %v4280 = vcvt.s32.f32 %v4248
      %v4281 = vcvt.s32.f32 %v4249
      %v4282 = vcvt.s32.f32 %v4250
      %v4283 = vcvt.s32.f32 %v4251
      %v4284 = vcvt.s32.f32 %v4252
      %v4285 = vcvt.s32.f32 %v4253
      %v4286 = vcvt.s32.f32 %v4254
      %v4287 = vcvt.s32.f32 %v4255
      %v4288 = vcvt.s32.f32 %v4256
      %v4289 = vcvt.s32.f32 %v4257
      %v4290 = vcvt.s32.f32 %v4258
      %v4291 = vcvt.s32.f32 %v4259
      %v4292 = vcvt.s32.f32 %v4260
      %v4293 = vcvt.s32.f32 %v4261
      %v4294 = vcvt.s32.f32 %v4262
      %v4295 = vcvt.s32.f32 %v4263
      %v4296 = vcvt.s32.f32 %v4264
      %v4297 = vcvt.s32.f32 %v4265
      %v4298 = vmul.f32 %v4201, %v4266
      %v4299 = vmul.f32 %v4200, %v4267
      %v4300 = vmul.f32 %v4199, %v4268
      %v4301 = vmul.f32 %v4198, %v4269
      %v4302 = vmul.f32 %v4197, %v4270
      %v4303 = vmul.f32 %v4196, %v4271
      %v4304 = vmul.f32 %v4195, %v4272
      %v4305 = vmul.f32 %v4194, %v4273
      %v4306 = vmul.f32 %v4193, %v4274
      %v4307 = vmul.f32 %v4192, %v4275
      %v4308 = vmul.f32 %v4191, %v4276
      %v4309 = vmul.f32 %v4190, %v4277
      %v4310 = vmul.f32 %v4189, %v4278
      %v4311 = vmul.f32 %v4188, %v4279
      %v4312 = vmul.f32 %v4187, %v4280
      %v4313 = vmul.f32 %v4186, %v4281
      %v4314 = vmul.f32 %v4185, %v4282
      %v4315 = vmul.f32 %v4184, %v4283
      %v4316 = vmul.f32 %v4183, %v4284
      %v4317 = vmul.f32 %v4182, %v4285
      %v4318 = vmul.f32 %v4181, %v4286
      %v4319 = vmul.f32 %v4180, %v4287
      %v4320 = vmul.f32 %v4179, %v4288
      %v4321 = vmul.f32 %v4178, %v4289
      %v4322 = vmul.f32 %v4177, %v4290
      %v4323 = vmul.f32 %v4176, %v4291
      %v4324 = vmul.f32 %v4175, %v4292
      %v4325 = vmul.f32 %v4174, %v4293
      %v4326 = vmul.f32 %v4173, %v4294
      %v4327 = vmul.f32 %v4172, %v4295
      %v4328 = vmul.f32 %v4171, %v4296
      %v4329 = vmul.f32 %v4170, %v4297
      %4362 = vrot.lane.b32.xlu0 %v4298, 96
      %v4363 = vpop.permute.xlu0 %4362
      %4364 = vrot.lane.b32.xlu0 %v4299, 96
      %v4365 = vpop.permute.xlu0 %4364
      %4366 = vrot.lane.b32.xlu0 %v4300, 96
      %v4367 = vpop.permute.xlu0 %4366
      %4368 = vrot.lane.b32.xlu0 %v4301, 96
      %v4369 = vpop.permute.xlu0 %4368
      %4370 = vrot.lane.b32.xlu0 %v4302, 96
      %v4371 = vpop.permute.xlu0 %4370
      %4372 = vrot.lane.b32.xlu0 %v4303, 96
      %v4373 = vpop.permute.xlu0 %4372
      %4374 = vrot.lane.b32.xlu0 %v4304, 96
      %v4375 = vpop.permute.xlu0 %4374
      %4376 = vrot.lane.b32.xlu0 %v4305, 96
      %v4377 = vpop.permute.xlu0 %4376
      %4378 = vrot.lane.b32.xlu0 %v4306, 96
      %v4379 = vpop.permute.xlu0 %4378
      %4380 = vrot.lane.b32.xlu0 %v4307, 96
      %v4381 = vpop.permute.xlu0 %4380
      %4382 = vrot.lane.b32.xlu0 %v4308, 96
      %v4383 = vpop.permute.xlu0 %4382
      %4384 = vrot.lane.b32.xlu0 %v4309, 96
      %v4385 = vpop.permute.xlu0 %4384
      %4386 = vrot.lane.b32.xlu0 %v4310, 96
      %v4387 = vpop.permute.xlu0 %4386
      %4388 = vrot.lane.b32.xlu0 %v4311, 96
      %v4389 = vpop.permute.xlu0 %4388
      %4390 = vrot.lane.b32.xlu0 %v4312, 96
      %v4391 = vpop.permute.xlu0 %4390
      %4392 = vrot.lane.b32.xlu0 %v4313, 96
      %v4393 = vpop.permute.xlu0 %4392
      %4394 = vrot.lane.b32.xlu0 %v4314, 96
      %v4395 = vpop.permute.xlu0 %4394
      %4396 = vrot.lane.b32.xlu0 %v4315, 96
      %v4397 = vpop.permute.xlu0 %4396
      %4398 = vrot.lane.b32.xlu0 %v4316, 96
      %v4399 = vpop.permute.xlu0 %4398
      %4400 = vrot.lane.b32.xlu0 %v4317, 96
      %v4401 = vpop.permute.xlu0 %4400
      %4402 = vrot.lane.b32.xlu0 %v4318, 96
      %v4403 = vpop.permute.xlu0 %4402
      %4404 = vrot.lane.b32.xlu0 %v4319, 96
      %v4405 = vpop.permute.xlu0 %4404
      %4406 = vrot.lane.b32.xlu0 %v4320, 96
      %v4407 = vpop.permute.xlu0 %4406
      %4408 = vrot.lane.b32.xlu0 %v4321, 96
      %v4409 = vpop.permute.xlu0 %4408
      %4410 = vrot.lane.b32.xlu0 %v4322, 96
      %v4411 = vpop.permute.xlu0 %4410
      %4412 = vrot.lane.b32.xlu0 %v4323, 96
      %v4413 = vpop.permute.xlu0 %4412
      %4414 = vrot.lane.b32.xlu0 %v4324, 96
      %v4415 = vpop.permute.xlu0 %4414
      %4416 = vrot.lane.b32.xlu0 %v4325, 96
      %v4417 = vpop.permute.xlu0 %4416
      %4418 = vrot.lane.b32.xlu0 %v4326, 96
      %v4419 = vpop.permute.xlu0 %4418
      %4420 = vrot.lane.b32.xlu0 %v4327, 96
      %v4421 = vpop.permute.xlu0 %4420
      %4422 = vrot.lane.b32.xlu0 %v4328, 96
      %v4423 = vpop.permute.xlu0 %4422
      %4424 = vrot.lane.b32.xlu0 %v4329, 96
      %v4425 = vpop.permute.xlu0 %4424
      %v4458 = vadd.f32 %v4009, %v4363
      %v4459 = vadd.f32 %v4010, %v4365
      %v4460 = vadd.f32 %v4011, %v4367
      %v4461 = vadd.f32 %v4012, %v4369
      %v4462 = vadd.f32 %v4013, %v4371
      %v4463 = vadd.f32 %v4014, %v4373
      %v4464 = vadd.f32 %v4015, %v4375
      %v4465 = vadd.f32 %v4016, %v4377
      %v4466 = vadd.f32 %v4017, %v4379
      %v4467 = vadd.f32 %v4018, %v4381
      %v4468 = vadd.f32 %v4019, %v4383
      %v4469 = vadd.f32 %v4020, %v4385
      %v4470 = vadd.f32 %v4021, %v4387
      %v4471 = vadd.f32 %v4022, %v4389
      %v4472 = vadd.f32 %v4023, %v4391
      %v4473 = vadd.f32 %v4024, %v4393
      %v4474 = vadd.f32 %v4025, %v4395
      %v4475 = vadd.f32 %v4026, %v4397
      %v4476 = vadd.f32 %v4027, %v4399
      %v4477 = vadd.f32 %v4028, %v4401
      %v4478 = vadd.f32 %v4029, %v4403
      %v4479 = vadd.f32 %v4030, %v4405
      %v4480 = vadd.f32 %v4031, %v4407
      %v4481 = vadd.f32 %v4032, %v4409
      %v4482 = vadd.f32 %v4033, %v4411
      %v4483 = vadd.f32 %v4034, %v4413
      %v4484 = vadd.f32 %v4035, %v4415
      %v4485 = vadd.f32 %v4036, %v4417
      %v4486 = vadd.f32 %v4037, %v4419
      %v4487 = vadd.f32 %v4038, %v4421
      %v4488 = vadd.f32 %v4039, %v4423
      %v4489 = vadd.f32 %v4040, %v4425
      %v4490 = vrot.slane %v1276, 1
      %v4491 = vrot.slane %v1280, 1
      %v4492 = vrot.slane %v1286, 1
      %v4493 = vrot.slane %v1290, 1
      %v4494 = vrot.slane %v1296, 1
      %v4495 = vrot.slane %v1300, 1
      %v4496 = vrot.slane %v1306, 1
      %v4497 = vrot.slane %v1310, 1
      %v4498 = vrot.slane %v1316, 1
      %v4499 = vrot.slane %v1320, 1
      %v4500 = vrot.slane %v1326, 1
      %v4501 = vrot.slane %v1330, 1
      %v4502 = vrot.slane %v1336, 1
      %v4503 = vrot.slane %v1340, 1
      %v4504 = vrot.slane %v1346, 1
      %v4505 = vrot.slane %v1350, 1
      %v4506 = vrot.slane %v1356, 1
      %v4507 = vrot.slane %v1360, 1
      %v4508 = vrot.slane %v1366, 1
      %v4509 = vrot.slane %v1370, 1
      %v4510 = vrot.slane %v1376, 1
      %v4511 = vrot.slane %v1380, 1
      %v4512 = vrot.slane %v1386, 1
      %v4513 = vrot.slane %v1390, 1
      %v4514 = vrot.slane %v1396, 1
      %v4515 = vrot.slane %v1400, 1
      %v4516 = vrot.slane %v1406, 1
      %v4517 = vrot.slane %v1410, 1
      %v4518 = vrot.slane %v1416, 1
      %v4519 = vrot.slane %v1420, 1
      %v4520 = vrot.slane %v1426, 1
      %v4521 = vrot.slane %v1430, 1
      %v4522 = vsel %vm1507, %v4520, %v4521
      %v4523 = vsel %vm1507, %v4519, %v4520
      %v4524 = vsel %vm1507, %v4518, %v4519
      %v4525 = vsel %vm1507, %v4517, %v4518
      %v4526 = vsel %vm1507, %v4516, %v4517
      %v4527 = vsel %vm1507, %v4515, %v4516
      %v4528 = vsel %vm1507, %v4514, %v4515
      %v4529 = vsel %vm1507, %v4513, %v4514
      %v4530 = vsel %vm1507, %v4512, %v4513
      %v4531 = vsel %vm1507, %v4511, %v4512
      %v4532 = vsel %vm1507, %v4510, %v4511
      %v4533 = vsel %vm1507, %v4509, %v4510
      %v4534 = vsel %vm1507, %v4508, %v4509
      %v4535 = vsel %vm1507, %v4507, %v4508
      %v4536 = vsel %vm1507, %v4506, %v4507
      %v4537 = vsel %vm1507, %v4505, %v4506
      %v4538 = vsel %vm1507, %v4504, %v4505
      %v4539 = vsel %vm1507, %v4503, %v4504
      %v4540 = vsel %vm1507, %v4502, %v4503
      %v4541 = vsel %vm1507, %v4501, %v4502
      %v4542 = vsel %vm1507, %v4500, %v4501
      %v4543 = vsel %vm1507, %v4499, %v4500
      %v4544 = vsel %vm1507, %v4498, %v4499
      %v4545 = vsel %vm1507, %v4497, %v4498
      %v4546 = vsel %vm1507, %v4496, %v4497
      %v4547 = vsel %vm1507, %v4495, %v4496
      %v4548 = vsel %vm1507, %v4494, %v4495
      %v4549 = vsel %vm1507, %v4493, %v4494
      %v4550 = vsel %vm1507, %v4492, %v4493
      %v4551 = vsel %vm1507, %v4491, %v4492
      %v4552 = vsel %vm1507, %v4490, %v4491
      %v4553 = vsel %vm1507, %v4521, %v4490
      %vm4554 = vcmp.lt.s32.totalorder %v717, 7
      %vm4555 = vcmp.lt.s32.totalorder %v718, 7
      %vm4556 = vcmp.lt.s32.totalorder %v719, 7
      %vm4557 = vcmp.lt.s32.totalorder %v720, 7
      %vm4558 = vcmp.lt.s32.totalorder %v721, 7
      %vm4559 = vcmp.lt.s32.totalorder %v722, 7
      %vm4560 = vcmp.lt.s32.totalorder %v723, 7
      %vm4561 = vcmp.lt.s32.totalorder %v724, 7
      %vm4562 = vcmp.lt.s32.totalorder %v725, 7
      %vm4563 = vcmp.lt.s32.totalorder %v726, 7
      %vm4564 = vcmp.lt.s32.totalorder %v727, 7
      %vm4565 = vcmp.lt.s32.totalorder %v728, 7
      %vm4566 = vcmp.lt.s32.totalorder %v729, 7
      %vm4567 = vcmp.lt.s32.totalorder %v730, 7
      %vm4568 = vcmp.lt.s32.totalorder %v731, 7
      %vm4569 = vcmp.lt.s32.totalorder %v732, 7
      %vm4570 = vcmp.lt.s32.totalorder %v733, 7
      %vm4571 = vcmp.lt.s32.totalorder %v734, 7
      %vm4572 = vcmp.lt.s32.totalorder %v735, 7
      %vm4573 = vcmp.lt.s32.totalorder %v736, 7
      %vm4574 = vcmp.lt.s32.totalorder %v737, 7
      %vm4575 = vcmp.lt.s32.totalorder %v738, 7
      %vm4576 = vcmp.lt.s32.totalorder %v739, 7
      %vm4577 = vcmp.lt.s32.totalorder %v740, 7
      %vm4578 = vcmp.lt.s32.totalorder %v741, 7
      %vm4579 = vcmp.lt.s32.totalorder %v742, 7
      %vm4580 = vcmp.lt.s32.totalorder %v743, 7
      %vm4581 = vcmp.lt.s32.totalorder %v744, 7
      %vm4582 = vcmp.lt.s32.totalorder %v745, 7
      %vm4583 = vcmp.lt.s32.totalorder %v746, 7
      %vm4584 = vcmp.lt.s32.totalorder %v747, 7
      %vm4585 = vcmp.lt.s32.totalorder %v748, 7
      %v4586 = vsel %vm4554, 1, 0
      %v4587 = vsel %vm4555, 1, 0
      %v4588 = vsel %vm4556, 1, 0
      %v4589 = vsel %vm4557, 1, 0
      %v4590 = vsel %vm4558, 1, 0
      %v4591 = vsel %vm4559, 1, 0
      %v4592 = vsel %vm4560, 1, 0
      %v4593 = vsel %vm4561, 1, 0
      %v4594 = vsel %vm4562, 1, 0
      %v4595 = vsel %vm4563, 1, 0
      %v4596 = vsel %vm4564, 1, 0
      %v4597 = vsel %vm4565, 1, 0
      %v4598 = vsel %vm4566, 1, 0
      %v4599 = vsel %vm4567, 1, 0
      %v4600 = vsel %vm4568, 1, 0
      %v4601 = vsel %vm4569, 1, 0
      %v4602 = vsel %vm4570, 1, 0
      %v4603 = vsel %vm4571, 1, 0
      %v4604 = vsel %vm4572, 1, 0
      %v4605 = vsel %vm4573, 1, 0
      %v4606 = vsel %vm4574, 1, 0
      %v4607 = vsel %vm4575, 1, 0
      %v4608 = vsel %vm4576, 1, 0
      %v4609 = vsel %vm4577, 1, 0
      %v4610 = vsel %vm4578, 1, 0
      %v4611 = vsel %vm4579, 1, 0
      %v4612 = vsel %vm4580, 1, 0
      %v4613 = vsel %vm4581, 1, 0
      %v4614 = vsel %vm4582, 1, 0
      %v4615 = vsel %vm4583, 1, 0
      %v4616 = vsel %vm4584, 1, 0
      %v4617 = vsel %vm4585, 1, 0
      %v4618 = vcvt.s32.f32 %v4586
      %v4619 = vcvt.s32.f32 %v4587
      %v4620 = vcvt.s32.f32 %v4588
      %v4621 = vcvt.s32.f32 %v4589
      %v4622 = vcvt.s32.f32 %v4590
      %v4623 = vcvt.s32.f32 %v4591
      %v4624 = vcvt.s32.f32 %v4592
      %v4625 = vcvt.s32.f32 %v4593
      %v4626 = vcvt.s32.f32 %v4594
      %v4627 = vcvt.s32.f32 %v4595
      %v4628 = vcvt.s32.f32 %v4596
      %v4629 = vcvt.s32.f32 %v4597
      %v4630 = vcvt.s32.f32 %v4598
      %v4631 = vcvt.s32.f32 %v4599
      %v4632 = vcvt.s32.f32 %v4600
      %v4633 = vcvt.s32.f32 %v4601
      %v4634 = vcvt.s32.f32 %v4602
      %v4635 = vcvt.s32.f32 %v4603
      %v4636 = vcvt.s32.f32 %v4604
      %v4637 = vcvt.s32.f32 %v4605
      %v4638 = vcvt.s32.f32 %v4606
      %v4639 = vcvt.s32.f32 %v4607
      %v4640 = vcvt.s32.f32 %v4608
      %v4641 = vcvt.s32.f32 %v4609
      %v4642 = vcvt.s32.f32 %v4610
      %v4643 = vcvt.s32.f32 %v4611
      %v4644 = vcvt.s32.f32 %v4612
      %v4645 = vcvt.s32.f32 %v4613
      %v4646 = vcvt.s32.f32 %v4614
      %v4647 = vcvt.s32.f32 %v4615
      %v4648 = vcvt.s32.f32 %v4616
      %v4649 = vcvt.s32.f32 %v4617
      %v4650 = vmul.f32 %v4552, %v4618
      %v4651 = vmul.f32 %v4551, %v4619
      %v4652 = vmul.f32 %v4550, %v4620
      %v4653 = vmul.f32 %v4549, %v4621
      %v4654 = vmul.f32 %v4548, %v4622
      %v4655 = vmul.f32 %v4547, %v4623
      %v4656 = vmul.f32 %v4546, %v4624
      %v4657 = vmul.f32 %v4545, %v4625
      %v4658 = vmul.f32 %v4544, %v4626
      %v4659 = vmul.f32 %v4543, %v4627
      %v4660 = vmul.f32 %v4542, %v4628
      %v4661 = vmul.f32 %v4541, %v4629
      %v4662 = vmul.f32 %v4540, %v4630
      %v4663 = vmul.f32 %v4539, %v4631
      %v4664 = vmul.f32 %v4538, %v4632
      %v4665 = vmul.f32 %v4537, %v4633
      %v4666 = vmul.f32 %v4536, %v4634
      %v4667 = vmul.f32 %v4535, %v4635
      %v4668 = vmul.f32 %v4534, %v4636
      %v4669 = vmul.f32 %v4533, %v4637
      %v4670 = vmul.f32 %v4532, %v4638
      %v4671 = vmul.f32 %v4531, %v4639
      %v4672 = vmul.f32 %v4530, %v4640
      %v4673 = vmul.f32 %v4529, %v4641
      %v4674 = vmul.f32 %v4528, %v4642
      %v4675 = vmul.f32 %v4527, %v4643
      %v4676 = vmul.f32 %v4526, %v4644
      %v4677 = vmul.f32 %v4525, %v4645
      %v4678 = vmul.f32 %v4524, %v4646
      %v4679 = vmul.f32 %v4523, %v4647
      %v4680 = vmul.f32 %v4522, %v4648
      %v4681 = vmul.f32 %v4553, %v4649
      %4714 = vrot.lane.b32.xlu0 %v4650, 96
      %v4715 = vpop.permute.xlu0 %4714
      %4716 = vrot.lane.b32.xlu0 %v4651, 96
      %v4717 = vpop.permute.xlu0 %4716
      %4718 = vrot.lane.b32.xlu0 %v4652, 96
      %v4719 = vpop.permute.xlu0 %4718
      %4720 = vrot.lane.b32.xlu0 %v4653, 96
      %v4721 = vpop.permute.xlu0 %4720
      %4722 = vrot.lane.b32.xlu0 %v4654, 96
      %v4723 = vpop.permute.xlu0 %4722
      %4724 = vrot.lane.b32.xlu0 %v4655, 96
      %v4725 = vpop.permute.xlu0 %4724
      %4726 = vrot.lane.b32.xlu0 %v4656, 96
      %v4727 = vpop.permute.xlu0 %4726
      %4728 = vrot.lane.b32.xlu0 %v4657, 96
      %v4729 = vpop.permute.xlu0 %4728
      %4730 = vrot.lane.b32.xlu0 %v4658, 96
      %v4731 = vpop.permute.xlu0 %4730
      %4732 = vrot.lane.b32.xlu0 %v4659, 96
      %v4733 = vpop.permute.xlu0 %4732
      %4734 = vrot.lane.b32.xlu0 %v4660, 96
      %v4735 = vpop.permute.xlu0 %4734
      %4736 = vrot.lane.b32.xlu0 %v4661, 96
      %v4737 = vpop.permute.xlu0 %4736
      %4738 = vrot.lane.b32.xlu0 %v4662, 96
      %v4739 = vpop.permute.xlu0 %4738
      %4740 = vrot.lane.b32.xlu0 %v4663, 96
      %v4741 = vpop.permute.xlu0 %4740
      %4742 = vrot.lane.b32.xlu0 %v4664, 96
      %v4743 = vpop.permute.xlu0 %4742
      %4744 = vrot.lane.b32.xlu0 %v4665, 96
      %v4745 = vpop.permute.xlu0 %4744
      %4746 = vrot.lane.b32.xlu0 %v4666, 96
      %v4747 = vpop.permute.xlu0 %4746
      %4748 = vrot.lane.b32.xlu0 %v4667, 96
      %v4749 = vpop.permute.xlu0 %4748
      %4750 = vrot.lane.b32.xlu0 %v4668, 96
      %v4751 = vpop.permute.xlu0 %4750
      %4752 = vrot.lane.b32.xlu0 %v4669, 96
      %v4753 = vpop.permute.xlu0 %4752
      %4754 = vrot.lane.b32.xlu0 %v4670, 96
      %v4755 = vpop.permute.xlu0 %4754
      %4756 = vrot.lane.b32.xlu0 %v4671, 96
      %v4757 = vpop.permute.xlu0 %4756
      %4758 = vrot.lane.b32.xlu0 %v4672, 96
      %v4759 = vpop.permute.xlu0 %4758
      %4760 = vrot.lane.b32.xlu0 %v4673, 96
      %v4761 = vpop.permute.xlu0 %4760
      %4762 = vrot.lane.b32.xlu0 %v4674, 96
      %v4763 = vpop.permute.xlu0 %4762
      %4764 = vrot.lane.b32.xlu0 %v4675, 96
      %v4765 = vpop.permute.xlu0 %4764
      %4766 = vrot.lane.b32.xlu0 %v4676, 96
      %v4767 = vpop.permute.xlu0 %4766
      %4768 = vrot.lane.b32.xlu0 %v4677, 96
      %v4769 = vpop.permute.xlu0 %4768
      %4770 = vrot.lane.b32.xlu0 %v4678, 96
      %v4771 = vpop.permute.xlu0 %4770
      %4772 = vrot.lane.b32.xlu0 %v4679, 96
      %v4773 = vpop.permute.xlu0 %4772
      %4774 = vrot.lane.b32.xlu0 %v4680, 96
      %v4775 = vpop.permute.xlu0 %4774
      %4776 = vrot.lane.b32.xlu0 %v4681, 96
      %v4777 = vpop.permute.xlu0 %4776
      %v4810 = vadd.f32 %v4458, %v4715
      %v4811 = vadd.f32 %v4459, %v4717
      %v4812 = vadd.f32 %v4460, %v4719
      %v4813 = vadd.f32 %v4461, %v4721
      %v4814 = vadd.f32 %v4462, %v4723
      %v4815 = vadd.f32 %v4463, %v4725
      %v4816 = vadd.f32 %v4464, %v4727
      %v4817 = vadd.f32 %v4465, %v4729
      %v4818 = vadd.f32 %v4466, %v4731
      %v4819 = vadd.f32 %v4467, %v4733
      %v4820 = vadd.f32 %v4468, %v4735
      %v4821 = vadd.f32 %v4469, %v4737
      %v4822 = vadd.f32 %v4470, %v4739
      %v4823 = vadd.f32 %v4471, %v4741
      %v4824 = vadd.f32 %v4472, %v4743
      %v4825 = vadd.f32 %v4473, %v4745
      %v4826 = vadd.f32 %v4474, %v4747
      %v4827 = vadd.f32 %v4475, %v4749
      %v4828 = vadd.f32 %v4476, %v4751
      %v4829 = vadd.f32 %v4477, %v4753
      %v4830 = vadd.f32 %v4478, %v4755
      %v4831 = vadd.f32 %v4479, %v4757
      %v4832 = vadd.f32 %v4480, %v4759
      %v4833 = vadd.f32 %v4481, %v4761
      %v4834 = vadd.f32 %v4482, %v4763
      %v4835 = vadd.f32 %v4483, %v4765
      %v4836 = vadd.f32 %v4484, %v4767
      %v4837 = vadd.f32 %v4485, %v4769
      %v4838 = vadd.f32 %v4486, %v4771
      %v4839 = vadd.f32 %v4487, %v4773
      %v4840 = vadd.f32 %v4488, %v4775
      %v4841 = vadd.f32 %v4489, %v4777
      %4874 = vrot.lane.b32.xlu0 %v1276, 96
      %v4875 = vpop.permute.xlu0 %4874
      %4876 = vrot.lane.b32.xlu0 %v1280, 96
      %v4877 = vpop.permute.xlu0 %4876
      %4878 = vrot.lane.b32.xlu0 %v1286, 96
      %v4879 = vpop.permute.xlu0 %4878
      %4880 = vrot.lane.b32.xlu0 %v1290, 96
      %v4881 = vpop.permute.xlu0 %4880
      %4882 = vrot.lane.b32.xlu0 %v1296, 96
      %v4883 = vpop.permute.xlu0 %4882
      %4884 = vrot.lane.b32.xlu0 %v1300, 96
      %v4885 = vpop.permute.xlu0 %4884
      %4886 = vrot.lane.b32.xlu0 %v1306, 96
      %v4887 = vpop.permute.xlu0 %4886
      %4888 = vrot.lane.b32.xlu0 %v1310, 96
      %v4889 = vpop.permute.xlu0 %4888
      %4890 = vrot.lane.b32.xlu0 %v1316, 96
      %v4891 = vpop.permute.xlu0 %4890
      %4892 = vrot.lane.b32.xlu0 %v1320, 96
      %v4893 = vpop.permute.xlu0 %4892
      %4894 = vrot.lane.b32.xlu0 %v1326, 96
      %v4895 = vpop.permute.xlu0 %4894
      %4896 = vrot.lane.b32.xlu0 %v1330, 96
      %v4897 = vpop.permute.xlu0 %4896
      %4898 = vrot.lane.b32.xlu0 %v1336, 96
      %v4899 = vpop.permute.xlu0 %4898
      %4900 = vrot.lane.b32.xlu0 %v1340, 96
      %v4901 = vpop.permute.xlu0 %4900
      %4902 = vrot.lane.b32.xlu0 %v1346, 96
      %v4903 = vpop.permute.xlu0 %4902
      %4904 = vrot.lane.b32.xlu0 %v1350, 96
      %v4905 = vpop.permute.xlu0 %4904
      %4906 = vrot.lane.b32.xlu0 %v1356, 96
      %v4907 = vpop.permute.xlu0 %4906
      %4908 = vrot.lane.b32.xlu0 %v1360, 96
      %v4909 = vpop.permute.xlu0 %4908
      %4910 = vrot.lane.b32.xlu0 %v1366, 96
      %v4911 = vpop.permute.xlu0 %4910
      %4912 = vrot.lane.b32.xlu0 %v1370, 96
      %v4913 = vpop.permute.xlu0 %4912
      %4914 = vrot.lane.b32.xlu0 %v1376, 96
      %v4915 = vpop.permute.xlu0 %4914
      %4916 = vrot.lane.b32.xlu0 %v1380, 96
      %v4917 = vpop.permute.xlu0 %4916
      %4918 = vrot.lane.b32.xlu0 %v1386, 96
      %v4919 = vpop.permute.xlu0 %4918
      %4920 = vrot.lane.b32.xlu0 %v1390, 96
      %v4921 = vpop.permute.xlu0 %4920
      %4922 = vrot.lane.b32.xlu0 %v1396, 96
      %v4923 = vpop.permute.xlu0 %4922
      %4924 = vrot.lane.b32.xlu0 %v1400, 96
      %v4925 = vpop.permute.xlu0 %4924
      %4926 = vrot.lane.b32.xlu0 %v1406, 96
      %v4927 = vpop.permute.xlu0 %4926
      %4928 = vrot.lane.b32.xlu0 %v1410, 96
      %v4929 = vpop.permute.xlu0 %4928
      %4930 = vrot.lane.b32.xlu0 %v1416, 96
      %v4931 = vpop.permute.xlu0 %4930
      %4932 = vrot.lane.b32.xlu0 %v1420, 96
      %v4933 = vpop.permute.xlu0 %4932
      %4934 = vrot.lane.b32.xlu0 %v1426, 96
      %v4935 = vpop.permute.xlu0 %4934
      %4936 = vrot.lane.b32.xlu0 %v1430, 96
      %v4937 = vpop.permute.xlu0 %4936
      %v4970 = vrot.slane %v4875, 2
      %v4971 = vrot.slane %v4877, 2
      %v4972 = vrot.slane %v4879, 2
      %v4973 = vrot.slane %v4881, 2
      %v4974 = vrot.slane %v4883, 2
      %v4975 = vrot.slane %v4885, 2
      %v4976 = vrot.slane %v4887, 2
      %v4977 = vrot.slane %v4889, 2
      %v4978 = vrot.slane %v4891, 2
      %v4979 = vrot.slane %v4893, 2
      %v4980 = vrot.slane %v4895, 2
      %v4981 = vrot.slane %v4897, 2
      %v4982 = vrot.slane %v4899, 2
      %v4983 = vrot.slane %v4901, 2
      %v4984 = vrot.slane %v4903, 2
      %v4985 = vrot.slane %v4905, 2
      %v4986 = vrot.slane %v4907, 2
      %v4987 = vrot.slane %v4909, 2
      %v4988 = vrot.slane %v4911, 2
      %v4989 = vrot.slane %v4913, 2
      %v4990 = vrot.slane %v4915, 2
      %v4991 = vrot.slane %v4917, 2
      %v4992 = vrot.slane %v4919, 2
      %v4993 = vrot.slane %v4921, 2
      %v4994 = vrot.slane %v4923, 2
      %v4995 = vrot.slane %v4925, 2
      %v4996 = vrot.slane %v4927, 2
      %v4997 = vrot.slane %v4929, 2
      %v4998 = vrot.slane %v4931, 2
      %v4999 = vrot.slane %v4933, 2
      %v5000 = vrot.slane %v4935, 2
      %v5001 = vrot.slane %v4937, 2
      %v5002 = vsel %vm1988, %v5000, %v5001
      %v5003 = vsel %vm1988, %v4999, %v5000
      %v5004 = vsel %vm1988, %v4998, %v4999
      %v5005 = vsel %vm1988, %v4997, %v4998
      %v5006 = vsel %vm1988, %v4996, %v4997
      %v5007 = vsel %vm1988, %v4995, %v4996
      %v5008 = vsel %vm1988, %v4994, %v4995
      %v5009 = vsel %vm1988, %v4993, %v4994
      %v5010 = vsel %vm1988, %v4992, %v4993
      %v5011 = vsel %vm1988, %v4991, %v4992
      %v5012 = vsel %vm1988, %v4990, %v4991
      %v5013 = vsel %vm1988, %v4989, %v4990
      %v5014 = vsel %vm1988, %v4988, %v4989
      %v5015 = vsel %vm1988, %v4987, %v4988
      %v5016 = vsel %vm1988, %v4986, %v4987
      %v5017 = vsel %vm1988, %v4985, %v4986
      %v5018 = vsel %vm1988, %v4984, %v4985
      %v5019 = vsel %vm1988, %v4983, %v4984
      %v5020 = vsel %vm1988, %v4982, %v4983
      %v5021 = vsel %vm1988, %v4981, %v4982
      %v5022 = vsel %vm1988, %v4980, %v4981
      %v5023 = vsel %vm1988, %v4979, %v4980
      %v5024 = vsel %vm1988, %v4978, %v4979
      %v5025 = vsel %vm1988, %v4977, %v4978
      %v5026 = vsel %vm1988, %v4976, %v4977
      %v5027 = vsel %vm1988, %v4975, %v4976
      %v5028 = vsel %vm1988, %v4974, %v4975
      %v5029 = vsel %vm1988, %v4973, %v4974
      %v5030 = vsel %vm1988, %v4972, %v4973
      %v5031 = vsel %vm1988, %v4971, %v4972
      %v5032 = vsel %vm1988, %v4970, %v4971
      %v5033 = vsel %vm1988, %v5001, %v4970
      %vm5034 = vcmp.lt.s32.totalorder %v717, 6
      %vm5035 = vcmp.lt.s32.totalorder %v718, 6
      %vm5036 = vcmp.lt.s32.totalorder %v719, 6
      %vm5037 = vcmp.lt.s32.totalorder %v720, 6
      %vm5038 = vcmp.lt.s32.totalorder %v721, 6
      %vm5039 = vcmp.lt.s32.totalorder %v722, 6
      %vm5040 = vcmp.lt.s32.totalorder %v723, 6
      %vm5041 = vcmp.lt.s32.totalorder %v724, 6
      %vm5042 = vcmp.lt.s32.totalorder %v725, 6
      %vm5043 = vcmp.lt.s32.totalorder %v726, 6
      %vm5044 = vcmp.lt.s32.totalorder %v727, 6
      %vm5045 = vcmp.lt.s32.totalorder %v728, 6
      %vm5046 = vcmp.lt.s32.totalorder %v729, 6
      %vm5047 = vcmp.lt.s32.totalorder %v730, 6
      %vm5048 = vcmp.lt.s32.totalorder %v731, 6
      %vm5049 = vcmp.lt.s32.totalorder %v732, 6
      %vm5050 = vcmp.lt.s32.totalorder %v733, 6
      %vm5051 = vcmp.lt.s32.totalorder %v734, 6
      %vm5052 = vcmp.lt.s32.totalorder %v735, 6
      %vm5053 = vcmp.lt.s32.totalorder %v736, 6
      %vm5054 = vcmp.lt.s32.totalorder %v737, 6
      %vm5055 = vcmp.lt.s32.totalorder %v738, 6
      %vm5056 = vcmp.lt.s32.totalorder %v739, 6
      %vm5057 = vcmp.lt.s32.totalorder %v740, 6
      %vm5058 = vcmp.lt.s32.totalorder %v741, 6
      %vm5059 = vcmp.lt.s32.totalorder %v742, 6
      %vm5060 = vcmp.lt.s32.totalorder %v743, 6
      %vm5061 = vcmp.lt.s32.totalorder %v744, 6
      %vm5062 = vcmp.lt.s32.totalorder %v745, 6
      %vm5063 = vcmp.lt.s32.totalorder %v746, 6
      %vm5064 = vcmp.lt.s32.totalorder %v747, 6
      %vm5065 = vcmp.lt.s32.totalorder %v748, 6
      %v5066 = vsel %vm5034, 1, 0
      %v5067 = vsel %vm5035, 1, 0
      %v5068 = vsel %vm5036, 1, 0
      %v5069 = vsel %vm5037, 1, 0
      %v5070 = vsel %vm5038, 1, 0
      %v5071 = vsel %vm5039, 1, 0
      %v5072 = vsel %vm5040, 1, 0
      %v5073 = vsel %vm5041, 1, 0
      %v5074 = vsel %vm5042, 1, 0
      %v5075 = vsel %vm5043, 1, 0
      %v5076 = vsel %vm5044, 1, 0
      %v5077 = vsel %vm5045, 1, 0
      %v5078 = vsel %vm5046, 1, 0
      %v5079 = vsel %vm5047, 1, 0
      %v5080 = vsel %vm5048, 1, 0
      %v5081 = vsel %vm5049, 1, 0
      %v5082 = vsel %vm5050, 1, 0
      %v5083 = vsel %vm5051, 1, 0
      %v5084 = vsel %vm5052, 1, 0
      %v5085 = vsel %vm5053, 1, 0
      %v5086 = vsel %vm5054, 1, 0
      %v5087 = vsel %vm5055, 1, 0
      %v5088 = vsel %vm5056, 1, 0
      %v5089 = vsel %vm5057, 1, 0
      %v5090 = vsel %vm5058, 1, 0
      %v5091 = vsel %vm5059, 1, 0
      %v5092 = vsel %vm5060, 1, 0
      %v5093 = vsel %vm5061, 1, 0
      %v5094 = vsel %vm5062, 1, 0
      %v5095 = vsel %vm5063, 1, 0
      %v5096 = vsel %vm5064, 1, 0
      %v5097 = vsel %vm5065, 1, 0
      %v5098 = vcvt.s32.f32 %v5066
      %v5099 = vcvt.s32.f32 %v5067
      %v5100 = vcvt.s32.f32 %v5068
      %v5101 = vcvt.s32.f32 %v5069
      %v5102 = vcvt.s32.f32 %v5070
      %v5103 = vcvt.s32.f32 %v5071
      %v5104 = vcvt.s32.f32 %v5072
      %v5105 = vcvt.s32.f32 %v5073
      %v5106 = vcvt.s32.f32 %v5074
      %v5107 = vcvt.s32.f32 %v5075
      %v5108 = vcvt.s32.f32 %v5076
      %v5109 = vcvt.s32.f32 %v5077
      %v5110 = vcvt.s32.f32 %v5078
      %v5111 = vcvt.s32.f32 %v5079
      %v5112 = vcvt.s32.f32 %v5080
      %v5113 = vcvt.s32.f32 %v5081
      %v5114 = vcvt.s32.f32 %v5082
      %v5115 = vcvt.s32.f32 %v5083
      %v5116 = vcvt.s32.f32 %v5084
      %v5117 = vcvt.s32.f32 %v5085
      %v5118 = vcvt.s32.f32 %v5086
      %v5119 = vcvt.s32.f32 %v5087
      %v5120 = vcvt.s32.f32 %v5088
      %v5121 = vcvt.s32.f32 %v5089
      %v5122 = vcvt.s32.f32 %v5090
      %v5123 = vcvt.s32.f32 %v5091
      %v5124 = vcvt.s32.f32 %v5092
      %v5125 = vcvt.s32.f32 %v5093
      %v5126 = vcvt.s32.f32 %v5094
      %v5127 = vcvt.s32.f32 %v5095
      %v5128 = vcvt.s32.f32 %v5096
      %v5129 = vcvt.s32.f32 %v5097
      %v5130 = vmul.f32 %v5032, %v5098
      %v5131 = vmul.f32 %v5031, %v5099
      %v5132 = vmul.f32 %v5030, %v5100
      %v5133 = vmul.f32 %v5029, %v5101
      %v5134 = vmul.f32 %v5028, %v5102
      %v5135 = vmul.f32 %v5027, %v5103
      %v5136 = vmul.f32 %v5026, %v5104
      %v5137 = vmul.f32 %v5025, %v5105
      %v5138 = vmul.f32 %v5024, %v5106
      %v5139 = vmul.f32 %v5023, %v5107
      %v5140 = vmul.f32 %v5022, %v5108
      %v5141 = vmul.f32 %v5021, %v5109
      %v5142 = vmul.f32 %v5020, %v5110
      %v5143 = vmul.f32 %v5019, %v5111
      %v5144 = vmul.f32 %v5018, %v5112
      %v5145 = vmul.f32 %v5017, %v5113
      %v5146 = vmul.f32 %v5016, %v5114
      %v5147 = vmul.f32 %v5015, %v5115
      %v5148 = vmul.f32 %v5014, %v5116
      %v5149 = vmul.f32 %v5013, %v5117
      %v5150 = vmul.f32 %v5012, %v5118
      %v5151 = vmul.f32 %v5011, %v5119
      %v5152 = vmul.f32 %v5010, %v5120
      %v5153 = vmul.f32 %v5009, %v5121
      %v5154 = vmul.f32 %v5008, %v5122
      %v5155 = vmul.f32 %v5007, %v5123
      %v5156 = vmul.f32 %v5006, %v5124
      %v5157 = vmul.f32 %v5005, %v5125
      %v5158 = vmul.f32 %v5004, %v5126
      %v5159 = vmul.f32 %v5003, %v5127
      %v5160 = vmul.f32 %v5002, %v5128
      %v5161 = vmul.f32 %v5033, %v5129
      %5194 = vrot.lane.b32.xlu0 %v5130, 96
      %v5195 = vpop.permute.xlu0 %5194
      %5196 = vrot.lane.b32.xlu0 %v5131, 96
      %v5197 = vpop.permute.xlu0 %5196
      %5198 = vrot.lane.b32.xlu0 %v5132, 96
      %v5199 = vpop.permute.xlu0 %5198
      %5200 = vrot.lane.b32.xlu0 %v5133, 96
      %v5201 = vpop.permute.xlu0 %5200
      %5202 = vrot.lane.b32.xlu0 %v5134, 96
      %v5203 = vpop.permute.xlu0 %5202
      %5204 = vrot.lane.b32.xlu0 %v5135, 96
      %v5205 = vpop.permute.xlu0 %5204
      %5206 = vrot.lane.b32.xlu0 %v5136, 96
      %v5207 = vpop.permute.xlu0 %5206
      %5208 = vrot.lane.b32.xlu0 %v5137, 96
      %v5209 = vpop.permute.xlu0 %5208
      %5210 = vrot.lane.b32.xlu0 %v5138, 96
      %v5211 = vpop.permute.xlu0 %5210
      %5212 = vrot.lane.b32.xlu0 %v5139, 96
      %v5213 = vpop.permute.xlu0 %5212
      %5214 = vrot.lane.b32.xlu0 %v5140, 96
      %v5215 = vpop.permute.xlu0 %5214
      %5216 = vrot.lane.b32.xlu0 %v5141, 96
      %v5217 = vpop.permute.xlu0 %5216
      %5218 = vrot.lane.b32.xlu0 %v5142, 96
      %v5219 = vpop.permute.xlu0 %5218
      %5220 = vrot.lane.b32.xlu0 %v5143, 96
      %v5221 = vpop.permute.xlu0 %5220
      %5222 = vrot.lane.b32.xlu0 %v5144, 96
      %v5223 = vpop.permute.xlu0 %5222
      %5224 = vrot.lane.b32.xlu0 %v5145, 96
      %v5225 = vpop.permute.xlu0 %5224
      %5226 = vrot.lane.b32.xlu0 %v5146, 96
      %v5227 = vpop.permute.xlu0 %5226
      %5228 = vrot.lane.b32.xlu0 %v5147, 96
      %v5229 = vpop.permute.xlu0 %5228
      %5230 = vrot.lane.b32.xlu0 %v5148, 96
      %v5231 = vpop.permute.xlu0 %5230
      %5232 = vrot.lane.b32.xlu0 %v5149, 96
      %v5233 = vpop.permute.xlu0 %5232
      %5234 = vrot.lane.b32.xlu0 %v5150, 96
      %v5235 = vpop.permute.xlu0 %5234
      %5236 = vrot.lane.b32.xlu0 %v5151, 96
      %v5237 = vpop.permute.xlu0 %5236
      %5238 = vrot.lane.b32.xlu0 %v5152, 96
      %v5239 = vpop.permute.xlu0 %5238
      %5240 = vrot.lane.b32.xlu0 %v5153, 96
      %v5241 = vpop.permute.xlu0 %5240
      %5242 = vrot.lane.b32.xlu0 %v5154, 96
      %v5243 = vpop.permute.xlu0 %5242
      %5244 = vrot.lane.b32.xlu0 %v5155, 96
      %v5245 = vpop.permute.xlu0 %5244
      %5246 = vrot.lane.b32.xlu0 %v5156, 96
      %v5247 = vpop.permute.xlu0 %5246
      %5248 = vrot.lane.b32.xlu0 %v5157, 96
      %v5249 = vpop.permute.xlu0 %5248
      %5250 = vrot.lane.b32.xlu0 %v5158, 96
      %v5251 = vpop.permute.xlu0 %5250
      %5252 = vrot.lane.b32.xlu0 %v5159, 96
      %v5253 = vpop.permute.xlu0 %5252
      %5254 = vrot.lane.b32.xlu0 %v5160, 96
      %v5255 = vpop.permute.xlu0 %5254
      %5256 = vrot.lane.b32.xlu0 %v5161, 96
      %v5257 = vpop.permute.xlu0 %5256
      %v5290 = vadd.f32 %v4810, %v5195
      %v5291 = vadd.f32 %v4811, %v5197
      %v5292 = vadd.f32 %v4812, %v5199
      %v5293 = vadd.f32 %v4813, %v5201
      %v5294 = vadd.f32 %v4814, %v5203
      %v5295 = vadd.f32 %v4815, %v5205
      %v5296 = vadd.f32 %v4816, %v5207
      %v5297 = vadd.f32 %v4817, %v5209
      %v5298 = vadd.f32 %v4818, %v5211
      %v5299 = vadd.f32 %v4819, %v5213
      %v5300 = vadd.f32 %v4820, %v5215
      %v5301 = vadd.f32 %v4821, %v5217
      %v5302 = vadd.f32 %v4822, %v5219
      %v5303 = vadd.f32 %v4823, %v5221
      %v5304 = vadd.f32 %v4824, %v5223
      %v5305 = vadd.f32 %v4825, %v5225
      %v5306 = vadd.f32 %v4826, %v5227
      %v5307 = vadd.f32 %v4827, %v5229
      %v5308 = vadd.f32 %v4828, %v5231
      %v5309 = vadd.f32 %v4829, %v5233
      %v5310 = vadd.f32 %v4830, %v5235
      %v5311 = vadd.f32 %v4831, %v5237
      %v5312 = vadd.f32 %v4832, %v5239
      %v5313 = vadd.f32 %v4833, %v5241
      %v5314 = vadd.f32 %v4834, %v5243
      %v5315 = vadd.f32 %v4835, %v5245
      %v5316 = vadd.f32 %v4836, %v5247
      %v5317 = vadd.f32 %v4837, %v5249
      %v5318 = vadd.f32 %v4838, %v5251
      %v5319 = vadd.f32 %v4839, %v5253
      %v5320 = vadd.f32 %v4840, %v5255
      %v5321 = vadd.f32 %v4841, %v5257
      %5322 = vrot.lane.b32.xlu0 %v1276, 64
      %v5323 = vpop.permute.xlu0 %5322
      %5324 = vrot.lane.b32.xlu0 %v1280, 64
      %v5325 = vpop.permute.xlu0 %5324
      %5326 = vrot.lane.b32.xlu0 %v1286, 64
      %v5327 = vpop.permute.xlu0 %5326
      %5328 = vrot.lane.b32.xlu0 %v1290, 64
      %v5329 = vpop.permute.xlu0 %5328
      %5330 = vrot.lane.b32.xlu0 %v1296, 64
      %v5331 = vpop.permute.xlu0 %5330
      %5332 = vrot.lane.b32.xlu0 %v1300, 64
      %v5333 = vpop.permute.xlu0 %5332
      %5334 = vrot.lane.b32.xlu0 %v1306, 64
      %v5335 = vpop.permute.xlu0 %5334
      %5336 = vrot.lane.b32.xlu0 %v1310, 64
      %v5337 = vpop.permute.xlu0 %5336
      %5338 = vrot.lane.b32.xlu0 %v1316, 64
      %v5339 = vpop.permute.xlu0 %5338
      %5340 = vrot.lane.b32.xlu0 %v1320, 64
      %v5341 = vpop.permute.xlu0 %5340
      %5342 = vrot.lane.b32.xlu0 %v1326, 64
      %v5343 = vpop.permute.xlu0 %5342
      %5344 = vrot.lane.b32.xlu0 %v1330, 64
      %v5345 = vpop.permute.xlu0 %5344
      %5346 = vrot.lane.b32.xlu0 %v1336, 64
      %v5347 = vpop.permute.xlu0 %5346
      %5348 = vrot.lane.b32.xlu0 %v1340, 64
      %v5349 = vpop.permute.xlu0 %5348
      %5350 = vrot.lane.b32.xlu0 %v1346, 64
      %v5351 = vpop.permute.xlu0 %5350
      %5352 = vrot.lane.b32.xlu0 %v1350, 64
      %v5353 = vpop.permute.xlu0 %5352
      %5354 = vrot.lane.b32.xlu0 %v1356, 64
      %v5355 = vpop.permute.xlu0 %5354
      %5356 = vrot.lane.b32.xlu0 %v1360, 64
      %v5357 = vpop.permute.xlu0 %5356
      %5358 = vrot.lane.b32.xlu0 %v1366, 64
      %v5359 = vpop.permute.xlu0 %5358
      %5360 = vrot.lane.b32.xlu0 %v1370, 64
      %v5361 = vpop.permute.xlu0 %5360
      %5362 = vrot.lane.b32.xlu0 %v1376, 64
      %v5363 = vpop.permute.xlu0 %5362
      %5364 = vrot.lane.b32.xlu0 %v1380, 64
      %v5365 = vpop.permute.xlu0 %5364
      %5366 = vrot.lane.b32.xlu0 %v1386, 64
      %v5367 = vpop.permute.xlu0 %5366
      %5368 = vrot.lane.b32.xlu0 %v1390, 64
      %v5369 = vpop.permute.xlu0 %5368
      %5370 = vrot.lane.b32.xlu0 %v1396, 64
      %v5371 = vpop.permute.xlu0 %5370
      %5372 = vrot.lane.b32.xlu0 %v1400, 64
      %v5373 = vpop.permute.xlu0 %5372
      %5374 = vrot.lane.b32.xlu0 %v1406, 64
      %v5375 = vpop.permute.xlu0 %5374
      %5376 = vrot.lane.b32.xlu0 %v1410, 64
      %v5377 = vpop.permute.xlu0 %5376
      %5378 = vrot.lane.b32.xlu0 %v1416, 64
      %v5379 = vpop.permute.xlu0 %5378
      %5380 = vrot.lane.b32.xlu0 %v1420, 64
      %v5381 = vpop.permute.xlu0 %5380
      %5382 = vrot.lane.b32.xlu0 %v1426, 64
      %v5383 = vpop.permute.xlu0 %5382
      %5384 = vrot.lane.b32.xlu0 %v1430, 64
      %v5385 = vpop.permute.xlu0 %5384
      %v5418 = vrot.slane %v5323, 3
      %v5419 = vrot.slane %v5325, 3
      %v5420 = vrot.slane %v5327, 3
      %v5421 = vrot.slane %v5329, 3
      %v5422 = vrot.slane %v5331, 3
      %v5423 = vrot.slane %v5333, 3
      %v5424 = vrot.slane %v5335, 3
      %v5425 = vrot.slane %v5337, 3
      %v5426 = vrot.slane %v5339, 3
      %v5427 = vrot.slane %v5341, 3
      %v5428 = vrot.slane %v5343, 3
      %v5429 = vrot.slane %v5345, 3
      %v5430 = vrot.slane %v5347, 3
      %v5431 = vrot.slane %v5349, 3
      %v5432 = vrot.slane %v5351, 3
      %v5433 = vrot.slane %v5353, 3
      %v5434 = vrot.slane %v5355, 3
      %v5435 = vrot.slane %v5357, 3
      %v5436 = vrot.slane %v5359, 3
      %v5437 = vrot.slane %v5361, 3
      %v5438 = vrot.slane %v5363, 3
      %v5439 = vrot.slane %v5365, 3
      %v5440 = vrot.slane %v5367, 3
      %v5441 = vrot.slane %v5369, 3
      %v5442 = vrot.slane %v5371, 3
      %v5443 = vrot.slane %v5373, 3
      %v5444 = vrot.slane %v5375, 3
      %v5445 = vrot.slane %v5377, 3
      %v5446 = vrot.slane %v5379, 3
      %v5447 = vrot.slane %v5381, 3
      %v5448 = vrot.slane %v5383, 3
      %v5449 = vrot.slane %v5385, 3
      %v5450 = vsel %vm2437, %v5448, %v5449
      %v5451 = vsel %vm2437, %v5447, %v5448
      %v5452 = vsel %vm2437, %v5446, %v5447
      %v5453 = vsel %vm2437, %v5445, %v5446
      %v5454 = vsel %vm2437, %v5444, %v5445
      %v5455 = vsel %vm2437, %v5443, %v5444
      %v5456 = vsel %vm2437, %v5442, %v5443
      %v5457 = vsel %vm2437, %v5441, %v5442
      %v5458 = vsel %vm2437, %v5440, %v5441
      %v5459 = vsel %vm2437, %v5439, %v5440
      %v5460 = vsel %vm2437, %v5438, %v5439
      %v5461 = vsel %vm2437, %v5437, %v5438
      %v5462 = vsel %vm2437, %v5436, %v5437
      %v5463 = vsel %vm2437, %v5435, %v5436
      %v5464 = vsel %vm2437, %v5434, %v5435
      %v5465 = vsel %vm2437, %v5433, %v5434
      %v5466 = vsel %vm2437, %v5432, %v5433
      %v5467 = vsel %vm2437, %v5431, %v5432
      %v5468 = vsel %vm2437, %v5430, %v5431
      %v5469 = vsel %vm2437, %v5429, %v5430
      %v5470 = vsel %vm2437, %v5428, %v5429
      %v5471 = vsel %vm2437, %v5427, %v5428
      %v5472 = vsel %vm2437, %v5426, %v5427
      %v5473 = vsel %vm2437, %v5425, %v5426
      %v5474 = vsel %vm2437, %v5424, %v5425
      %v5475 = vsel %vm2437, %v5423, %v5424
      %v5476 = vsel %vm2437, %v5422, %v5423
      %v5477 = vsel %vm2437, %v5421, %v5422
      %v5478 = vsel %vm2437, %v5420, %v5421
      %v5479 = vsel %vm2437, %v5419, %v5420
      %v5480 = vsel %vm2437, %v5418, %v5419
      %v5481 = vsel %vm2437, %v5449, %v5418
      %vm5482 = vcmp.lt.s32.totalorder %v717, 5
      %vm5483 = vcmp.lt.s32.totalorder %v718, 5
      %vm5484 = vcmp.lt.s32.totalorder %v719, 5
      %vm5485 = vcmp.lt.s32.totalorder %v720, 5
      %vm5486 = vcmp.lt.s32.totalorder %v721, 5
      %vm5487 = vcmp.lt.s32.totalorder %v722, 5
      %vm5488 = vcmp.lt.s32.totalorder %v723, 5
      %vm5489 = vcmp.lt.s32.totalorder %v724, 5
      %vm5490 = vcmp.lt.s32.totalorder %v725, 5
      %vm5491 = vcmp.lt.s32.totalorder %v726, 5
      %vm5492 = vcmp.lt.s32.totalorder %v727, 5
      %vm5493 = vcmp.lt.s32.totalorder %v728, 5
      %vm5494 = vcmp.lt.s32.totalorder %v729, 5
      %vm5495 = vcmp.lt.s32.totalorder %v730, 5
      %vm5496 = vcmp.lt.s32.totalorder %v731, 5
      %vm5497 = vcmp.lt.s32.totalorder %v732, 5
      %vm5498 = vcmp.lt.s32.totalorder %v733, 5
      %vm5499 = vcmp.lt.s32.totalorder %v734, 5
      %vm5500 = vcmp.lt.s32.totalorder %v735, 5
      %vm5501 = vcmp.lt.s32.totalorder %v736, 5
      %vm5502 = vcmp.lt.s32.totalorder %v737, 5
      %vm5503 = vcmp.lt.s32.totalorder %v738, 5
      %vm5504 = vcmp.lt.s32.totalorder %v739, 5
      %vm5505 = vcmp.lt.s32.totalorder %v740, 5
      %vm5506 = vcmp.lt.s32.totalorder %v741, 5
      %vm5507 = vcmp.lt.s32.totalorder %v742, 5
      %vm5508 = vcmp.lt.s32.totalorder %v743, 5
      %vm5509 = vcmp.lt.s32.totalorder %v744, 5
      %vm5510 = vcmp.lt.s32.totalorder %v745, 5
      %vm5511 = vcmp.lt.s32.totalorder %v746, 5
      %vm5512 = vcmp.lt.s32.totalorder %v747, 5
      %vm5513 = vcmp.lt.s32.totalorder %v748, 5
      %v5514 = vsel %vm5482, 1, 0
      %v5515 = vsel %vm5483, 1, 0
      %v5516 = vsel %vm5484, 1, 0
      %v5517 = vsel %vm5485, 1, 0
      %v5518 = vsel %vm5486, 1, 0
      %v5519 = vsel %vm5487, 1, 0
      %v5520 = vsel %vm5488, 1, 0
      %v5521 = vsel %vm5489, 1, 0
      %v5522 = vsel %vm5490, 1, 0
      %v5523 = vsel %vm5491, 1, 0
      %v5524 = vsel %vm5492, 1, 0
      %v5525 = vsel %vm5493, 1, 0
      %v5526 = vsel %vm5494, 1, 0
      %v5527 = vsel %vm5495, 1, 0
      %v5528 = vsel %vm5496, 1, 0
      %v5529 = vsel %vm5497, 1, 0
      %v5530 = vsel %vm5498, 1, 0
      %v5531 = vsel %vm5499, 1, 0
      %v5532 = vsel %vm5500, 1, 0
      %v5533 = vsel %vm5501, 1, 0
      %v5534 = vsel %vm5502, 1, 0
      %v5535 = vsel %vm5503, 1, 0
      %v5536 = vsel %vm5504, 1, 0
      %v5537 = vsel %vm5505, 1, 0
      %v5538 = vsel %vm5506, 1, 0
      %v5539 = vsel %vm5507, 1, 0
      %v5540 = vsel %vm5508, 1, 0
      %v5541 = vsel %vm5509, 1, 0
      %v5542 = vsel %vm5510, 1, 0
      %v5543 = vsel %vm5511, 1, 0
      %v5544 = vsel %vm5512, 1, 0
      %v5545 = vsel %vm5513, 1, 0
      %v5546 = vcvt.s32.f32 %v5514
      %v5547 = vcvt.s32.f32 %v5515
      %v5548 = vcvt.s32.f32 %v5516
      %v5549 = vcvt.s32.f32 %v5517
      %v5550 = vcvt.s32.f32 %v5518
      %v5551 = vcvt.s32.f32 %v5519
      %v5552 = vcvt.s32.f32 %v5520
      %v5553 = vcvt.s32.f32 %v5521
      %v5554 = vcvt.s32.f32 %v5522
      %v5555 = vcvt.s32.f32 %v5523
      %v5556 = vcvt.s32.f32 %v5524
      %v5557 = vcvt.s32.f32 %v5525
      %v5558 = vcvt.s32.f32 %v5526
      %v5559 = vcvt.s32.f32 %v5527
      %v5560 = vcvt.s32.f32 %v5528
      %v5561 = vcvt.s32.f32 %v5529
      %v5562 = vcvt.s32.f32 %v5530
      %v5563 = vcvt.s32.f32 %v5531
      %v5564 = vcvt.s32.f32 %v5532
      %v5565 = vcvt.s32.f32 %v5533
      %v5566 = vcvt.s32.f32 %v5534
      %v5567 = vcvt.s32.f32 %v5535
      %v5568 = vcvt.s32.f32 %v5536
      %v5569 = vcvt.s32.f32 %v5537
      %v5570 = vcvt.s32.f32 %v5538
      %v5571 = vcvt.s32.f32 %v5539
      %v5572 = vcvt.s32.f32 %v5540
      %v5573 = vcvt.s32.f32 %v5541
      %v5574 = vcvt.s32.f32 %v5542
      %v5575 = vcvt.s32.f32 %v5543
      %v5576 = vcvt.s32.f32 %v5544
      %v5577 = vcvt.s32.f32 %v5545
      %v5578 = vmul.f32 %v5480, %v5546
      %v5579 = vmul.f32 %v5479, %v5547
      %v5580 = vmul.f32 %v5478, %v5548
      %v5581 = vmul.f32 %v5477, %v5549
      %v5582 = vmul.f32 %v5476, %v5550
      %v5583 = vmul.f32 %v5475, %v5551
      %v5584 = vmul.f32 %v5474, %v5552
      %v5585 = vmul.f32 %v5473, %v5553
      %v5586 = vmul.f32 %v5472, %v5554
      %v5587 = vmul.f32 %v5471, %v5555
      %v5588 = vmul.f32 %v5470, %v5556
      %v5589 = vmul.f32 %v5469, %v5557
      %v5590 = vmul.f32 %v5468, %v5558
      %v5591 = vmul.f32 %v5467, %v5559
      %v5592 = vmul.f32 %v5466, %v5560
      %v5593 = vmul.f32 %v5465, %v5561
      %v5594 = vmul.f32 %v5464, %v5562
      %v5595 = vmul.f32 %v5463, %v5563
      %v5596 = vmul.f32 %v5462, %v5564
      %v5597 = vmul.f32 %v5461, %v5565
      %v5598 = vmul.f32 %v5460, %v5566
      %v5599 = vmul.f32 %v5459, %v5567
      %v5600 = vmul.f32 %v5458, %v5568
      %v5601 = vmul.f32 %v5457, %v5569
      %v5602 = vmul.f32 %v5456, %v5570
      %v5603 = vmul.f32 %v5455, %v5571
      %v5604 = vmul.f32 %v5454, %v5572
      %v5605 = vmul.f32 %v5453, %v5573
      %v5606 = vmul.f32 %v5452, %v5574
      %v5607 = vmul.f32 %v5451, %v5575
      %v5608 = vmul.f32 %v5450, %v5576
      %v5609 = vmul.f32 %v5481, %v5577
      %5642 = vrot.lane.b32.xlu0 %v5578, 96
      %v5643 = vpop.permute.xlu0 %5642
      %5644 = vrot.lane.b32.xlu0 %v5579, 96
      %v5645 = vpop.permute.xlu0 %5644
      %5646 = vrot.lane.b32.xlu0 %v5580, 96
      %v5647 = vpop.permute.xlu0 %5646
      %5648 = vrot.lane.b32.xlu0 %v5581, 96
      %v5649 = vpop.permute.xlu0 %5648
      %5650 = vrot.lane.b32.xlu0 %v5582, 96
      %v5651 = vpop.permute.xlu0 %5650
      %5652 = vrot.lane.b32.xlu0 %v5583, 96
      %v5653 = vpop.permute.xlu0 %5652
      %5654 = vrot.lane.b32.xlu0 %v5584, 96
      %v5655 = vpop.permute.xlu0 %5654
      %5656 = vrot.lane.b32.xlu0 %v5585, 96
      %v5657 = vpop.permute.xlu0 %5656
      %5658 = vrot.lane.b32.xlu0 %v5586, 96
      %v5659 = vpop.permute.xlu0 %5658
      %5660 = vrot.lane.b32.xlu0 %v5587, 96
      %v5661 = vpop.permute.xlu0 %5660
      %5662 = vrot.lane.b32.xlu0 %v5588, 96
      %v5663 = vpop.permute.xlu0 %5662
      %5664 = vrot.lane.b32.xlu0 %v5589, 96
      %v5665 = vpop.permute.xlu0 %5664
      %5666 = vrot.lane.b32.xlu0 %v5590, 96
      %v5667 = vpop.permute.xlu0 %5666
      %5668 = vrot.lane.b32.xlu0 %v5591, 96
      %v5669 = vpop.permute.xlu0 %5668
      %5670 = vrot.lane.b32.xlu0 %v5592, 96
      %v5671 = vpop.permute.xlu0 %5670
      %5672 = vrot.lane.b32.xlu0 %v5593, 96
      %v5673 = vpop.permute.xlu0 %5672
      %5674 = vrot.lane.b32.xlu0 %v5594, 96
      %v5675 = vpop.permute.xlu0 %5674
      %5676 = vrot.lane.b32.xlu0 %v5595, 96
      %v5677 = vpop.permute.xlu0 %5676
      %5678 = vrot.lane.b32.xlu0 %v5596, 96
      %v5679 = vpop.permute.xlu0 %5678
      %5680 = vrot.lane.b32.xlu0 %v5597, 96
      %v5681 = vpop.permute.xlu0 %5680
      %5682 = vrot.lane.b32.xlu0 %v5598, 96
      %v5683 = vpop.permute.xlu0 %5682
      %5684 = vrot.lane.b32.xlu0 %v5599, 96
      %v5685 = vpop.permute.xlu0 %5684
      %5686 = vrot.lane.b32.xlu0 %v5600, 96
      %v5687 = vpop.permute.xlu0 %5686
      %5688 = vrot.lane.b32.xlu0 %v5601, 96
      %v5689 = vpop.permute.xlu0 %5688
      %5690 = vrot.lane.b32.xlu0 %v5602, 96
      %v5691 = vpop.permute.xlu0 %5690
      %5692 = vrot.lane.b32.xlu0 %v5603, 96
      %v5693 = vpop.permute.xlu0 %5692
      %5694 = vrot.lane.b32.xlu0 %v5604, 96
      %v5695 = vpop.permute.xlu0 %5694
      %5696 = vrot.lane.b32.xlu0 %v5605, 96
      %v5697 = vpop.permute.xlu0 %5696
      %5698 = vrot.lane.b32.xlu0 %v5606, 96
      %v5699 = vpop.permute.xlu0 %5698
      %5700 = vrot.lane.b32.xlu0 %v5607, 96
      %v5701 = vpop.permute.xlu0 %5700
      %5702 = vrot.lane.b32.xlu0 %v5608, 96
      %v5703 = vpop.permute.xlu0 %5702
      %5704 = vrot.lane.b32.xlu0 %v5609, 96
      %v5705 = vpop.permute.xlu0 %5704
      %v5738 = vadd.f32 %v5290, %v5643
      %v5739 = vadd.f32 %v5291, %v5645
      %v5740 = vadd.f32 %v5292, %v5647
      %v5741 = vadd.f32 %v5293, %v5649
      %v5742 = vadd.f32 %v5294, %v5651
      %v5743 = vadd.f32 %v5295, %v5653
      %v5744 = vadd.f32 %v5296, %v5655
      %v5745 = vadd.f32 %v5297, %v5657
      %v5746 = vadd.f32 %v5298, %v5659
      %v5747 = vadd.f32 %v5299, %v5661
      %v5748 = vadd.f32 %v5300, %v5663
      %v5749 = vadd.f32 %v5301, %v5665
      %v5750 = vadd.f32 %v5302, %v5667
      %v5751 = vadd.f32 %v5303, %v5669
      %v5752 = vadd.f32 %v5304, %v5671
      %v5753 = vadd.f32 %v5305, %v5673
      %v5754 = vadd.f32 %v5306, %v5675
      %v5755 = vadd.f32 %v5307, %v5677
      %v5756 = vadd.f32 %v5308, %v5679
      %v5757 = vadd.f32 %v5309, %v5681
      %v5758 = vadd.f32 %v5310, %v5683
      %v5759 = vadd.f32 %v5311, %v5685
      %v5760 = vadd.f32 %v5312, %v5687
      %v5761 = vadd.f32 %v5313, %v5689
      %v5762 = vadd.f32 %v5314, %v5691
      %v5763 = vadd.f32 %v5315, %v5693
      %v5764 = vadd.f32 %v5316, %v5695
      %v5765 = vadd.f32 %v5317, %v5697
      %v5766 = vadd.f32 %v5318, %v5699
      %v5767 = vadd.f32 %v5319, %v5701
      %v5768 = vadd.f32 %v5320, %v5703
      %v5769 = vadd.f32 %v5321, %v5705
      %5770 = vrot.lane.b32.xlu0 %v1276, 32
      %v5771 = vpop.permute.xlu0 %5770
      %5772 = vrot.lane.b32.xlu0 %v1280, 32
      %v5773 = vpop.permute.xlu0 %5772
      %5774 = vrot.lane.b32.xlu0 %v1286, 32
      %v5775 = vpop.permute.xlu0 %5774
      %5776 = vrot.lane.b32.xlu0 %v1290, 32
      %v5777 = vpop.permute.xlu0 %5776
      %5778 = vrot.lane.b32.xlu0 %v1296, 32
      %v5779 = vpop.permute.xlu0 %5778
      %5780 = vrot.lane.b32.xlu0 %v1300, 32
      %v5781 = vpop.permute.xlu0 %5780
      %5782 = vrot.lane.b32.xlu0 %v1306, 32
      %v5783 = vpop.permute.xlu0 %5782
      %5784 = vrot.lane.b32.xlu0 %v1310, 32
      %v5785 = vpop.permute.xlu0 %5784
      %5786 = vrot.lane.b32.xlu0 %v1316, 32
      %v5787 = vpop.permute.xlu0 %5786
      %5788 = vrot.lane.b32.xlu0 %v1320, 32
      %v5789 = vpop.permute.xlu0 %5788
      %5790 = vrot.lane.b32.xlu0 %v1326, 32
      %v5791 = vpop.permute.xlu0 %5790
      %5792 = vrot.lane.b32.xlu0 %v1330, 32
      %v5793 = vpop.permute.xlu0 %5792
      %5794 = vrot.lane.b32.xlu0 %v1336, 32
      %v5795 = vpop.permute.xlu0 %5794
      %5796 = vrot.lane.b32.xlu0 %v1340, 32
      %v5797 = vpop.permute.xlu0 %5796
      %5798 = vrot.lane.b32.xlu0 %v1346, 32
      %v5799 = vpop.permute.xlu0 %5798
      %5800 = vrot.lane.b32.xlu0 %v1350, 32
      %v5801 = vpop.permute.xlu0 %5800
      %5802 = vrot.lane.b32.xlu0 %v1356, 32
      %v5803 = vpop.permute.xlu0 %5802
      %5804 = vrot.lane.b32.xlu0 %v1360, 32
      %v5805 = vpop.permute.xlu0 %5804
      %5806 = vrot.lane.b32.xlu0 %v1366, 32
      %v5807 = vpop.permute.xlu0 %5806
      %5808 = vrot.lane.b32.xlu0 %v1370, 32
      %v5809 = vpop.permute.xlu0 %5808
      %5810 = vrot.lane.b32.xlu0 %v1376, 32
      %v5811 = vpop.permute.xlu0 %5810
      %5812 = vrot.lane.b32.xlu0 %v1380, 32
      %v5813 = vpop.permute.xlu0 %5812
      %5814 = vrot.lane.b32.xlu0 %v1386, 32
      %v5815 = vpop.permute.xlu0 %5814
      %5816 = vrot.lane.b32.xlu0 %v1390, 32
      %v5817 = vpop.permute.xlu0 %5816
      %5818 = vrot.lane.b32.xlu0 %v1396, 32
      %v5819 = vpop.permute.xlu0 %5818
      %5820 = vrot.lane.b32.xlu0 %v1400, 32
      %v5821 = vpop.permute.xlu0 %5820
      %5822 = vrot.lane.b32.xlu0 %v1406, 32
      %v5823 = vpop.permute.xlu0 %5822
      %5824 = vrot.lane.b32.xlu0 %v1410, 32
      %v5825 = vpop.permute.xlu0 %5824
      %5826 = vrot.lane.b32.xlu0 %v1416, 32
      %v5827 = vpop.permute.xlu0 %5826
      %5828 = vrot.lane.b32.xlu0 %v1420, 32
      %v5829 = vpop.permute.xlu0 %5828
      %5830 = vrot.lane.b32.xlu0 %v1426, 32
      %v5831 = vpop.permute.xlu0 %5830
      %5832 = vrot.lane.b32.xlu0 %v1430, 32
      %v5833 = vpop.permute.xlu0 %5832
      %v5866 = vrot.slane %v5771, 4
      %v5867 = vrot.slane %v5773, 4
      %v5868 = vrot.slane %v5775, 4
      %v5869 = vrot.slane %v5777, 4
      %v5870 = vrot.slane %v5779, 4
      %v5871 = vrot.slane %v5781, 4
      %v5872 = vrot.slane %v5783, 4
      %v5873 = vrot.slane %v5785, 4
      %v5874 = vrot.slane %v5787, 4
      %v5875 = vrot.slane %v5789, 4
      %v5876 = vrot.slane %v5791, 4
      %v5877 = vrot.slane %v5793, 4
      %v5878 = vrot.slane %v5795, 4
      %v5879 = vrot.slane %v5797, 4
      %v5880 = vrot.slane %v5799, 4
      %v5881 = vrot.slane %v5801, 4
      %v5882 = vrot.slane %v5803, 4
      %v5883 = vrot.slane %v5805, 4
      %v5884 = vrot.slane %v5807, 4
      %v5885 = vrot.slane %v5809, 4
      %v5886 = vrot.slane %v5811, 4
      %v5887 = vrot.slane %v5813, 4
      %v5888 = vrot.slane %v5815, 4
      %v5889 = vrot.slane %v5817, 4
      %v5890 = vrot.slane %v5819, 4
      %v5891 = vrot.slane %v5821, 4
      %v5892 = vrot.slane %v5823, 4
      %v5893 = vrot.slane %v5825, 4
      %v5894 = vrot.slane %v5827, 4
      %v5895 = vrot.slane %v5829, 4
      %v5896 = vrot.slane %v5831, 4
      %v5897 = vrot.slane %v5833, 4
      %v5898 = vsel %vm2886, %v5896, %v5897
      %v5899 = vsel %vm2886, %v5895, %v5896
      %v5900 = vsel %vm2886, %v5894, %v5895
      %v5901 = vsel %vm2886, %v5893, %v5894
      %v5902 = vsel %vm2886, %v5892, %v5893
      %v5903 = vsel %vm2886, %v5891, %v5892
      %v5904 = vsel %vm2886, %v5890, %v5891
      %v5905 = vsel %vm2886, %v5889, %v5890
      %v5906 = vsel %vm2886, %v5888, %v5889
      %v5907 = vsel %vm2886, %v5887, %v5888
      %v5908 = vsel %vm2886, %v5886, %v5887
      %v5909 = vsel %vm2886, %v5885, %v5886
      %v5910 = vsel %vm2886, %v5884, %v5885
      %v5911 = vsel %vm2886, %v5883, %v5884
      %v5912 = vsel %vm2886, %v5882, %v5883
      %v5913 = vsel %vm2886, %v5881, %v5882
      %v5914 = vsel %vm2886, %v5880, %v5881
      %v5915 = vsel %vm2886, %v5879, %v5880
      %v5916 = vsel %vm2886, %v5878, %v5879
      %v5917 = vsel %vm2886, %v5877, %v5878
      %v5918 = vsel %vm2886, %v5876, %v5877
      %v5919 = vsel %vm2886, %v5875, %v5876
      %v5920 = vsel %vm2886, %v5874, %v5875
      %v5921 = vsel %vm2886, %v5873, %v5874
      %v5922 = vsel %vm2886, %v5872, %v5873
      %v5923 = vsel %vm2886, %v5871, %v5872
      %v5924 = vsel %vm2886, %v5870, %v5871
      %v5925 = vsel %vm2886, %v5869, %v5870
      %v5926 = vsel %vm2886, %v5868, %v5869
      %v5927 = vsel %vm2886, %v5867, %v5868
      %v5928 = vsel %vm2886, %v5866, %v5867
      %v5929 = vsel %vm2886, %v5897, %v5866
      %vm5930 = vcmp.lt.s32.totalorder %v717, 4
      %vm5931 = vcmp.lt.s32.totalorder %v718, 4
      %vm5932 = vcmp.lt.s32.totalorder %v719, 4
      %vm5933 = vcmp.lt.s32.totalorder %v720, 4
      %vm5934 = vcmp.lt.s32.totalorder %v721, 4
      %vm5935 = vcmp.lt.s32.totalorder %v722, 4
      %vm5936 = vcmp.lt.s32.totalorder %v723, 4
      %vm5937 = vcmp.lt.s32.totalorder %v724, 4
      %vm5938 = vcmp.lt.s32.totalorder %v725, 4
      %vm5939 = vcmp.lt.s32.totalorder %v726, 4
      %vm5940 = vcmp.lt.s32.totalorder %v727, 4
      %vm5941 = vcmp.lt.s32.totalorder %v728, 4
      %vm5942 = vcmp.lt.s32.totalorder %v729, 4
      %vm5943 = vcmp.lt.s32.totalorder %v730, 4
      %vm5944 = vcmp.lt.s32.totalorder %v731, 4
      %vm5945 = vcmp.lt.s32.totalorder %v732, 4
      %vm5946 = vcmp.lt.s32.totalorder %v733, 4
      %vm5947 = vcmp.lt.s32.totalorder %v734, 4
      %vm5948 = vcmp.lt.s32.totalorder %v735, 4
      %vm5949 = vcmp.lt.s32.totalorder %v736, 4
      %vm5950 = vcmp.lt.s32.totalorder %v737, 4
      %vm5951 = vcmp.lt.s32.totalorder %v738, 4
      %vm5952 = vcmp.lt.s32.totalorder %v739, 4
      %vm5953 = vcmp.lt.s32.totalorder %v740, 4
      %vm5954 = vcmp.lt.s32.totalorder %v741, 4
      %vm5955 = vcmp.lt.s32.totalorder %v742, 4
      %vm5956 = vcmp.lt.s32.totalorder %v743, 4
      %vm5957 = vcmp.lt.s32.totalorder %v744, 4
      %vm5958 = vcmp.lt.s32.totalorder %v745, 4
      %vm5959 = vcmp.lt.s32.totalorder %v746, 4
      %vm5960 = vcmp.lt.s32.totalorder %v747, 4
      %vm5961 = vcmp.lt.s32.totalorder %v748, 4
      %v5962 = vsel %vm5930, 1, 0
      %v5963 = vsel %vm5931, 1, 0
      %v5964 = vsel %vm5932, 1, 0
      %v5965 = vsel %vm5933, 1, 0
      %v5966 = vsel %vm5934, 1, 0
      %v5967 = vsel %vm5935, 1, 0
      %v5968 = vsel %vm5936, 1, 0
      %v5969 = vsel %vm5937, 1, 0
      %v5970 = vsel %vm5938, 1, 0
      %v5971 = vsel %vm5939, 1, 0
      %v5972 = vsel %vm5940, 1, 0
      %v5973 = vsel %vm5941, 1, 0
      %v5974 = vsel %vm5942, 1, 0
      %v5975 = vsel %vm5943, 1, 0
      %v5976 = vsel %vm5944, 1, 0
      %v5977 = vsel %vm5945, 1, 0
      %v5978 = vsel %vm5946, 1, 0
      %v5979 = vsel %vm5947, 1, 0
      %v5980 = vsel %vm5948, 1, 0
      %v5981 = vsel %vm5949, 1, 0
      %v5982 = vsel %vm5950, 1, 0
      %v5983 = vsel %vm5951, 1, 0
      %v5984 = vsel %vm5952, 1, 0
      %v5985 = vsel %vm5953, 1, 0
      %v5986 = vsel %vm5954, 1, 0
      %v5987 = vsel %vm5955, 1, 0
      %v5988 = vsel %vm5956, 1, 0
      %v5989 = vsel %vm5957, 1, 0
      %v5990 = vsel %vm5958, 1, 0
      %v5991 = vsel %vm5959, 1, 0
      %v5992 = vsel %vm5960, 1, 0
      %v5993 = vsel %vm5961, 1, 0
      %v5994 = vcvt.s32.f32 %v5962
      %v5995 = vcvt.s32.f32 %v5963
      %v5996 = vcvt.s32.f32 %v5964
      %v5997 = vcvt.s32.f32 %v5965
      %v5998 = vcvt.s32.f32 %v5966
      %v5999 = vcvt.s32.f32 %v5967
      %v6000 = vcvt.s32.f32 %v5968
      %v6001 = vcvt.s32.f32 %v5969
      %v6002 = vcvt.s32.f32 %v5970
      %v6003 = vcvt.s32.f32 %v5971
      %v6004 = vcvt.s32.f32 %v5972
      %v6005 = vcvt.s32.f32 %v5973
      %v6006 = vcvt.s32.f32 %v5974
      %v6007 = vcvt.s32.f32 %v5975
      %v6008 = vcvt.s32.f32 %v5976
      %v6009 = vcvt.s32.f32 %v5977
      %v6010 = vcvt.s32.f32 %v5978
      %v6011 = vcvt.s32.f32 %v5979
      %v6012 = vcvt.s32.f32 %v5980
      %v6013 = vcvt.s32.f32 %v5981
      %v6014 = vcvt.s32.f32 %v5982
      %v6015 = vcvt.s32.f32 %v5983
      %v6016 = vcvt.s32.f32 %v5984
      %v6017 = vcvt.s32.f32 %v5985
      %v6018 = vcvt.s32.f32 %v5986
      %v6019 = vcvt.s32.f32 %v5987
      %v6020 = vcvt.s32.f32 %v5988
      %v6021 = vcvt.s32.f32 %v5989
      %v6022 = vcvt.s32.f32 %v5990
      %v6023 = vcvt.s32.f32 %v5991
      %v6024 = vcvt.s32.f32 %v5992
      %v6025 = vcvt.s32.f32 %v5993
      %v6026 = vmul.f32 %v5928, %v5994
      %v6027 = vmul.f32 %v5927, %v5995
      %v6028 = vmul.f32 %v5926, %v5996
      %v6029 = vmul.f32 %v5925, %v5997
      %v6030 = vmul.f32 %v5924, %v5998
      %v6031 = vmul.f32 %v5923, %v5999
      %v6032 = vmul.f32 %v5922, %v6000
      %v6033 = vmul.f32 %v5921, %v6001
      %v6034 = vmul.f32 %v5920, %v6002
      %v6035 = vmul.f32 %v5919, %v6003
      %v6036 = vmul.f32 %v5918, %v6004
      %v6037 = vmul.f32 %v5917, %v6005
      %v6038 = vmul.f32 %v5916, %v6006
      %v6039 = vmul.f32 %v5915, %v6007
      %v6040 = vmul.f32 %v5914, %v6008
      %v6041 = vmul.f32 %v5913, %v6009
      %v6042 = vmul.f32 %v5912, %v6010
      %v6043 = vmul.f32 %v5911, %v6011
      %v6044 = vmul.f32 %v5910, %v6012
      %v6045 = vmul.f32 %v5909, %v6013
      %v6046 = vmul.f32 %v5908, %v6014
      %v6047 = vmul.f32 %v5907, %v6015
      %v6048 = vmul.f32 %v5906, %v6016
      %v6049 = vmul.f32 %v5905, %v6017
      %v6050 = vmul.f32 %v5904, %v6018
      %v6051 = vmul.f32 %v5903, %v6019
      %v6052 = vmul.f32 %v5902, %v6020
      %v6053 = vmul.f32 %v5901, %v6021
      %v6054 = vmul.f32 %v5900, %v6022
      %v6055 = vmul.f32 %v5899, %v6023
      %v6056 = vmul.f32 %v5898, %v6024
      %v6057 = vmul.f32 %v5929, %v6025
      %6090 = vrot.lane.b32.xlu0 %v6026, 96
      %v6091 = vpop.permute.xlu0 %6090
      %6092 = vrot.lane.b32.xlu0 %v6027, 96
      %v6093 = vpop.permute.xlu0 %6092
      %6094 = vrot.lane.b32.xlu0 %v6028, 96
      %v6095 = vpop.permute.xlu0 %6094
      %6096 = vrot.lane.b32.xlu0 %v6029, 96
      %v6097 = vpop.permute.xlu0 %6096
      %6098 = vrot.lane.b32.xlu0 %v6030, 96
      %v6099 = vpop.permute.xlu0 %6098
      %6100 = vrot.lane.b32.xlu0 %v6031, 96
      %v6101 = vpop.permute.xlu0 %6100
      %6102 = vrot.lane.b32.xlu0 %v6032, 96
      %v6103 = vpop.permute.xlu0 %6102
      %6104 = vrot.lane.b32.xlu0 %v6033, 96
      %v6105 = vpop.permute.xlu0 %6104
      %6106 = vrot.lane.b32.xlu0 %v6034, 96
      %v6107 = vpop.permute.xlu0 %6106
      %6108 = vrot.lane.b32.xlu0 %v6035, 96
      %v6109 = vpop.permute.xlu0 %6108
      %6110 = vrot.lane.b32.xlu0 %v6036, 96
      %v6111 = vpop.permute.xlu0 %6110
      %6112 = vrot.lane.b32.xlu0 %v6037, 96
      %v6113 = vpop.permute.xlu0 %6112
      %6114 = vrot.lane.b32.xlu0 %v6038, 96
      %v6115 = vpop.permute.xlu0 %6114
      %6116 = vrot.lane.b32.xlu0 %v6039, 96
      %v6117 = vpop.permute.xlu0 %6116
      %6118 = vrot.lane.b32.xlu0 %v6040, 96
      %v6119 = vpop.permute.xlu0 %6118
      %6120 = vrot.lane.b32.xlu0 %v6041, 96
      %v6121 = vpop.permute.xlu0 %6120
      %6122 = vrot.lane.b32.xlu0 %v6042, 96
      %v6123 = vpop.permute.xlu0 %6122
      %6124 = vrot.lane.b32.xlu0 %v6043, 96
      %v6125 = vpop.permute.xlu0 %6124
      %6126 = vrot.lane.b32.xlu0 %v6044, 96
      %v6127 = vpop.permute.xlu0 %6126
      %6128 = vrot.lane.b32.xlu0 %v6045, 96
      %v6129 = vpop.permute.xlu0 %6128
      %6130 = vrot.lane.b32.xlu0 %v6046, 96
      %v6131 = vpop.permute.xlu0 %6130
      %6132 = vrot.lane.b32.xlu0 %v6047, 96
      %v6133 = vpop.permute.xlu0 %6132
      %6134 = vrot.lane.b32.xlu0 %v6048, 96
      %v6135 = vpop.permute.xlu0 %6134
      %6136 = vrot.lane.b32.xlu0 %v6049, 96
      %v6137 = vpop.permute.xlu0 %6136
      %6138 = vrot.lane.b32.xlu0 %v6050, 96
      %v6139 = vpop.permute.xlu0 %6138
      %6140 = vrot.lane.b32.xlu0 %v6051, 96
      %v6141 = vpop.permute.xlu0 %6140
      %6142 = vrot.lane.b32.xlu0 %v6052, 96
      %v6143 = vpop.permute.xlu0 %6142
      %6144 = vrot.lane.b32.xlu0 %v6053, 96
      %v6145 = vpop.permute.xlu0 %6144
      %6146 = vrot.lane.b32.xlu0 %v6054, 96
      %v6147 = vpop.permute.xlu0 %6146
      %6148 = vrot.lane.b32.xlu0 %v6055, 96
      %v6149 = vpop.permute.xlu0 %6148
      %6150 = vrot.lane.b32.xlu0 %v6056, 96
      %v6151 = vpop.permute.xlu0 %6150
      %6152 = vrot.lane.b32.xlu0 %v6057, 96
      %v6153 = vpop.permute.xlu0 %6152
      %v6186 = vadd.f32 %v5738, %v6091
      %v6187 = vadd.f32 %v5739, %v6093
      %v6188 = vadd.f32 %v5740, %v6095
      %v6189 = vadd.f32 %v5741, %v6097
      %v6190 = vadd.f32 %v5742, %v6099
      %v6191 = vadd.f32 %v5743, %v6101
      %v6192 = vadd.f32 %v5744, %v6103
      %v6193 = vadd.f32 %v5745, %v6105
      %v6194 = vadd.f32 %v5746, %v6107
      %v6195 = vadd.f32 %v5747, %v6109
      %v6196 = vadd.f32 %v5748, %v6111
      %v6197 = vadd.f32 %v5749, %v6113
      %v6198 = vadd.f32 %v5750, %v6115
      %v6199 = vadd.f32 %v5751, %v6117
      %v6200 = vadd.f32 %v5752, %v6119
      %v6201 = vadd.f32 %v5753, %v6121
      %v6202 = vadd.f32 %v5754, %v6123
      %v6203 = vadd.f32 %v5755, %v6125
      %v6204 = vadd.f32 %v5756, %v6127
      %v6205 = vadd.f32 %v5757, %v6129
      %v6206 = vadd.f32 %v5758, %v6131
      %v6207 = vadd.f32 %v5759, %v6133
      %v6208 = vadd.f32 %v5760, %v6135
      %v6209 = vadd.f32 %v5761, %v6137
      %v6210 = vadd.f32 %v5762, %v6139
      %v6211 = vadd.f32 %v5763, %v6141
      %v6212 = vadd.f32 %v5764, %v6143
      %v6213 = vadd.f32 %v5765, %v6145
      %v6214 = vadd.f32 %v5766, %v6147
      %v6215 = vadd.f32 %v5767, %v6149
      %v6216 = vadd.f32 %v5768, %v6151
      %v6217 = vadd.f32 %v5769, %v6153
      %v6218 = vrot.slane %v1278, 5
      %v6219 = vrot.slane %v1282, 5
      %v6220 = vrot.slane %v1288, 5
      %v6221 = vrot.slane %v1292, 5
      %v6222 = vrot.slane %v1298, 5
      %v6223 = vrot.slane %v1302, 5
      %v6224 = vrot.slane %v1308, 5
      %v6225 = vrot.slane %v1312, 5
      %v6226 = vrot.slane %v1318, 5
      %v6227 = vrot.slane %v1322, 5
      %v6228 = vrot.slane %v1328, 5
      %v6229 = vrot.slane %v1332, 5
      %v6230 = vrot.slane %v1338, 5
      %v6231 = vrot.slane %v1342, 5
      %v6232 = vrot.slane %v1348, 5
      %v6233 = vrot.slane %v1352, 5
      %v6234 = vrot.slane %v1358, 5
      %v6235 = vrot.slane %v1362, 5
      %v6236 = vrot.slane %v1368, 5
      %v6237 = vrot.slane %v1372, 5
      %v6238 = vrot.slane %v1378, 5
      %v6239 = vrot.slane %v1382, 5
      %v6240 = vrot.slane %v1388, 5
      %v6241 = vrot.slane %v1392, 5
      %v6242 = vrot.slane %v1398, 5
      %v6243 = vrot.slane %v1402, 5
      %v6244 = vrot.slane %v1408, 5
      %v6245 = vrot.slane %v1412, 5
      %v6246 = vrot.slane %v1418, 5
      %v6247 = vrot.slane %v1422, 5
      %v6248 = vrot.slane %v1428, 5
      %v6249 = vrot.slane %v1432, 5
      %v6250 = vsel %vm3239, %v6248, %v6249
      %v6251 = vsel %vm3239, %v6247, %v6248
      %v6252 = vsel %vm3239, %v6246, %v6247
      %v6253 = vsel %vm3239, %v6245, %v6246
      %v6254 = vsel %vm3239, %v6244, %v6245
      %v6255 = vsel %vm3239, %v6243, %v6244
      %v6256 = vsel %vm3239, %v6242, %v6243
      %v6257 = vsel %vm3239, %v6241, %v6242
      %v6258 = vsel %vm3239, %v6240, %v6241
      %v6259 = vsel %vm3239, %v6239, %v6240
      %v6260 = vsel %vm3239, %v6238, %v6239
      %v6261 = vsel %vm3239, %v6237, %v6238
      %v6262 = vsel %vm3239, %v6236, %v6237
      %v6263 = vsel %vm3239, %v6235, %v6236
      %v6264 = vsel %vm3239, %v6234, %v6235
      %v6265 = vsel %vm3239, %v6233, %v6234
      %v6266 = vsel %vm3239, %v6232, %v6233
      %v6267 = vsel %vm3239, %v6231, %v6232
      %v6268 = vsel %vm3239, %v6230, %v6231
      %v6269 = vsel %vm3239, %v6229, %v6230
      %v6270 = vsel %vm3239, %v6228, %v6229
      %v6271 = vsel %vm3239, %v6227, %v6228
      %v6272 = vsel %vm3239, %v6226, %v6227
      %v6273 = vsel %vm3239, %v6225, %v6226
      %v6274 = vsel %vm3239, %v6224, %v6225
      %v6275 = vsel %vm3239, %v6223, %v6224
      %v6276 = vsel %vm3239, %v6222, %v6223
      %v6277 = vsel %vm3239, %v6221, %v6222
      %v6278 = vsel %vm3239, %v6220, %v6221
      %v6279 = vsel %vm3239, %v6219, %v6220
      %v6280 = vsel %vm3239, %v6218, %v6219
      %v6281 = vsel %vm3239, %v6249, %v6218
      %vm6282 = vcmp.lt.s32.totalorder %v717, 3
      %vm6283 = vcmp.lt.s32.totalorder %v718, 3
      %vm6284 = vcmp.lt.s32.totalorder %v719, 3
      %vm6285 = vcmp.lt.s32.totalorder %v720, 3
      %vm6286 = vcmp.lt.s32.totalorder %v721, 3
      %vm6287 = vcmp.lt.s32.totalorder %v722, 3
      %vm6288 = vcmp.lt.s32.totalorder %v723, 3
      %vm6289 = vcmp.lt.s32.totalorder %v724, 3
      %vm6290 = vcmp.lt.s32.totalorder %v725, 3
      %vm6291 = vcmp.lt.s32.totalorder %v726, 3
      %vm6292 = vcmp.lt.s32.totalorder %v727, 3
      %vm6293 = vcmp.lt.s32.totalorder %v728, 3
      %vm6294 = vcmp.lt.s32.totalorder %v729, 3
      %vm6295 = vcmp.lt.s32.totalorder %v730, 3
      %vm6296 = vcmp.lt.s32.totalorder %v731, 3
      %vm6297 = vcmp.lt.s32.totalorder %v732, 3
      %vm6298 = vcmp.lt.s32.totalorder %v733, 3
      %vm6299 = vcmp.lt.s32.totalorder %v734, 3
      %vm6300 = vcmp.lt.s32.totalorder %v735, 3
      %vm6301 = vcmp.lt.s32.totalorder %v736, 3
      %vm6302 = vcmp.lt.s32.totalorder %v737, 3
      %vm6303 = vcmp.lt.s32.totalorder %v738, 3
      %vm6304 = vcmp.lt.s32.totalorder %v739, 3
      %vm6305 = vcmp.lt.s32.totalorder %v740, 3
      %vm6306 = vcmp.lt.s32.totalorder %v741, 3
      %vm6307 = vcmp.lt.s32.totalorder %v742, 3
      %vm6308 = vcmp.lt.s32.totalorder %v743, 3
      %vm6309 = vcmp.lt.s32.totalorder %v744, 3
      %vm6310 = vcmp.lt.s32.totalorder %v745, 3
      %vm6311 = vcmp.lt.s32.totalorder %v746, 3
      %vm6312 = vcmp.lt.s32.totalorder %v747, 3
      %vm6313 = vcmp.lt.s32.totalorder %v748, 3
      %v6314 = vsel %vm6282, 1, 0
      %v6315 = vsel %vm6283, 1, 0
      %v6316 = vsel %vm6284, 1, 0
      %v6317 = vsel %vm6285, 1, 0
      %v6318 = vsel %vm6286, 1, 0
      %v6319 = vsel %vm6287, 1, 0
      %v6320 = vsel %vm6288, 1, 0
      %v6321 = vsel %vm6289, 1, 0
      %v6322 = vsel %vm6290, 1, 0
      %v6323 = vsel %vm6291, 1, 0
      %v6324 = vsel %vm6292, 1, 0
      %v6325 = vsel %vm6293, 1, 0
      %v6326 = vsel %vm6294, 1, 0
      %v6327 = vsel %vm6295, 1, 0
      %v6328 = vsel %vm6296, 1, 0
      %v6329 = vsel %vm6297, 1, 0
      %v6330 = vsel %vm6298, 1, 0
      %v6331 = vsel %vm6299, 1, 0
      %v6332 = vsel %vm6300, 1, 0
      %v6333 = vsel %vm6301, 1, 0
      %v6334 = vsel %vm6302, 1, 0
      %v6335 = vsel %vm6303, 1, 0
      %v6336 = vsel %vm6304, 1, 0
      %v6337 = vsel %vm6305, 1, 0
      %v6338 = vsel %vm6306, 1, 0
      %v6339 = vsel %vm6307, 1, 0
      %v6340 = vsel %vm6308, 1, 0
      %v6341 = vsel %vm6309, 1, 0
      %v6342 = vsel %vm6310, 1, 0
      %v6343 = vsel %vm6311, 1, 0
      %v6344 = vsel %vm6312, 1, 0
      %v6345 = vsel %vm6313, 1, 0
      %v6346 = vcvt.s32.f32 %v6314
      %v6347 = vcvt.s32.f32 %v6315
      %v6348 = vcvt.s32.f32 %v6316
      %v6349 = vcvt.s32.f32 %v6317
      %v6350 = vcvt.s32.f32 %v6318
      %v6351 = vcvt.s32.f32 %v6319
      %v6352 = vcvt.s32.f32 %v6320
      %v6353 = vcvt.s32.f32 %v6321
      %v6354 = vcvt.s32.f32 %v6322
      %v6355 = vcvt.s32.f32 %v6323
      %v6356 = vcvt.s32.f32 %v6324
      %v6357 = vcvt.s32.f32 %v6325
      %v6358 = vcvt.s32.f32 %v6326
      %v6359 = vcvt.s32.f32 %v6327
      %v6360 = vcvt.s32.f32 %v6328
      %v6361 = vcvt.s32.f32 %v6329
      %v6362 = vcvt.s32.f32 %v6330
      %v6363 = vcvt.s32.f32 %v6331
      %v6364 = vcvt.s32.f32 %v6332
      %v6365 = vcvt.s32.f32 %v6333
      %v6366 = vcvt.s32.f32 %v6334
      %v6367 = vcvt.s32.f32 %v6335
      %v6368 = vcvt.s32.f32 %v6336
      %v6369 = vcvt.s32.f32 %v6337
      %v6370 = vcvt.s32.f32 %v6338
      %v6371 = vcvt.s32.f32 %v6339
      %v6372 = vcvt.s32.f32 %v6340
      %v6373 = vcvt.s32.f32 %v6341
      %v6374 = vcvt.s32.f32 %v6342
      %v6375 = vcvt.s32.f32 %v6343
      %v6376 = vcvt.s32.f32 %v6344
      %v6377 = vcvt.s32.f32 %v6345
      %v6378 = vmul.f32 %v6280, %v6346
      %v6379 = vmul.f32 %v6279, %v6347
      %v6380 = vmul.f32 %v6278, %v6348
      %v6381 = vmul.f32 %v6277, %v6349
      %v6382 = vmul.f32 %v6276, %v6350
      %v6383 = vmul.f32 %v6275, %v6351
      %v6384 = vmul.f32 %v6274, %v6352
      %v6385 = vmul.f32 %v6273, %v6353
      %v6386 = vmul.f32 %v6272, %v6354
      %v6387 = vmul.f32 %v6271, %v6355
      %v6388 = vmul.f32 %v6270, %v6356
      %v6389 = vmul.f32 %v6269, %v6357
      %v6390 = vmul.f32 %v6268, %v6358
      %v6391 = vmul.f32 %v6267, %v6359
      %v6392 = vmul.f32 %v6266, %v6360
      %v6393 = vmul.f32 %v6265, %v6361
      %v6394 = vmul.f32 %v6264, %v6362
      %v6395 = vmul.f32 %v6263, %v6363
      %v6396 = vmul.f32 %v6262, %v6364
      %v6397 = vmul.f32 %v6261, %v6365
      %v6398 = vmul.f32 %v6260, %v6366
      %v6399 = vmul.f32 %v6259, %v6367
      %v6400 = vmul.f32 %v6258, %v6368
      %v6401 = vmul.f32 %v6257, %v6369
      %v6402 = vmul.f32 %v6256, %v6370
      %v6403 = vmul.f32 %v6255, %v6371
      %v6404 = vmul.f32 %v6254, %v6372
      %v6405 = vmul.f32 %v6253, %v6373
      %v6406 = vmul.f32 %v6252, %v6374
      %v6407 = vmul.f32 %v6251, %v6375
      %v6408 = vmul.f32 %v6250, %v6376
      %v6409 = vmul.f32 %v6281, %v6377
      %6442 = vrot.lane.b32.xlu0 %v6378, 96
      %v6443 = vpop.permute.xlu0 %6442
      %6444 = vrot.lane.b32.xlu0 %v6379, 96
      %v6445 = vpop.permute.xlu0 %6444
      %6446 = vrot.lane.b32.xlu0 %v6380, 96
      %v6447 = vpop.permute.xlu0 %6446
      %6448 = vrot.lane.b32.xlu0 %v6381, 96
      %v6449 = vpop.permute.xlu0 %6448
      %6450 = vrot.lane.b32.xlu0 %v6382, 96
      %v6451 = vpop.permute.xlu0 %6450
      %6452 = vrot.lane.b32.xlu0 %v6383, 96
      %v6453 = vpop.permute.xlu0 %6452
      %6454 = vrot.lane.b32.xlu0 %v6384, 96
      %v6455 = vpop.permute.xlu0 %6454
      %6456 = vrot.lane.b32.xlu0 %v6385, 96
      %v6457 = vpop.permute.xlu0 %6456
      %6458 = vrot.lane.b32.xlu0 %v6386, 96
      %v6459 = vpop.permute.xlu0 %6458
      %6460 = vrot.lane.b32.xlu0 %v6387, 96
      %v6461 = vpop.permute.xlu0 %6460
      %6462 = vrot.lane.b32.xlu0 %v6388, 96
      %v6463 = vpop.permute.xlu0 %6462
      %6464 = vrot.lane.b32.xlu0 %v6389, 96
      %v6465 = vpop.permute.xlu0 %6464
      %6466 = vrot.lane.b32.xlu0 %v6390, 96
      %v6467 = vpop.permute.xlu0 %6466
      %6468 = vrot.lane.b32.xlu0 %v6391, 96
      %v6469 = vpop.permute.xlu0 %6468
      %6470 = vrot.lane.b32.xlu0 %v6392, 96
      %v6471 = vpop.permute.xlu0 %6470
      %6472 = vrot.lane.b32.xlu0 %v6393, 96
      %v6473 = vpop.permute.xlu0 %6472
      %6474 = vrot.lane.b32.xlu0 %v6394, 96
      %v6475 = vpop.permute.xlu0 %6474
      %6476 = vrot.lane.b32.xlu0 %v6395, 96
      %v6477 = vpop.permute.xlu0 %6476
      %6478 = vrot.lane.b32.xlu0 %v6396, 96
      %v6479 = vpop.permute.xlu0 %6478
      %6480 = vrot.lane.b32.xlu0 %v6397, 96
      %v6481 = vpop.permute.xlu0 %6480
      %6482 = vrot.lane.b32.xlu0 %v6398, 96
      %v6483 = vpop.permute.xlu0 %6482
      %6484 = vrot.lane.b32.xlu0 %v6399, 96
      %v6485 = vpop.permute.xlu0 %6484
      %6486 = vrot.lane.b32.xlu0 %v6400, 96
      %v6487 = vpop.permute.xlu0 %6486
      %6488 = vrot.lane.b32.xlu0 %v6401, 96
      %v6489 = vpop.permute.xlu0 %6488
      %6490 = vrot.lane.b32.xlu0 %v6402, 96
      %v6491 = vpop.permute.xlu0 %6490
      %6492 = vrot.lane.b32.xlu0 %v6403, 96
      %v6493 = vpop.permute.xlu0 %6492
      %6494 = vrot.lane.b32.xlu0 %v6404, 96
      %v6495 = vpop.permute.xlu0 %6494
      %6496 = vrot.lane.b32.xlu0 %v6405, 96
      %v6497 = vpop.permute.xlu0 %6496
      %6498 = vrot.lane.b32.xlu0 %v6406, 96
      %v6499 = vpop.permute.xlu0 %6498
      %6500 = vrot.lane.b32.xlu0 %v6407, 96
      %v6501 = vpop.permute.xlu0 %6500
      %6502 = vrot.lane.b32.xlu0 %v6408, 96
      %v6503 = vpop.permute.xlu0 %6502
      %6504 = vrot.lane.b32.xlu0 %v6409, 96
      %v6505 = vpop.permute.xlu0 %6504
      %v6538 = vadd.f32 %v6186, %v6443
      %v6539 = vadd.f32 %v6187, %v6445
      %v6540 = vadd.f32 %v6188, %v6447
      %v6541 = vadd.f32 %v6189, %v6449
      %v6542 = vadd.f32 %v6190, %v6451
      %v6543 = vadd.f32 %v6191, %v6453
      %v6544 = vadd.f32 %v6192, %v6455
      %v6545 = vadd.f32 %v6193, %v6457
      %v6546 = vadd.f32 %v6194, %v6459
      %v6547 = vadd.f32 %v6195, %v6461
      %v6548 = vadd.f32 %v6196, %v6463
      %v6549 = vadd.f32 %v6197, %v6465
      %v6550 = vadd.f32 %v6198, %v6467
      %v6551 = vadd.f32 %v6199, %v6469
      %v6552 = vadd.f32 %v6200, %v6471
      %v6553 = vadd.f32 %v6201, %v6473
      %v6554 = vadd.f32 %v6202, %v6475
      %v6555 = vadd.f32 %v6203, %v6477
      %v6556 = vadd.f32 %v6204, %v6479
      %v6557 = vadd.f32 %v6205, %v6481
      %v6558 = vadd.f32 %v6206, %v6483
      %v6559 = vadd.f32 %v6207, %v6485
      %v6560 = vadd.f32 %v6208, %v6487
      %v6561 = vadd.f32 %v6209, %v6489
      %v6562 = vadd.f32 %v6210, %v6491
      %v6563 = vadd.f32 %v6211, %v6493
      %v6564 = vadd.f32 %v6212, %v6495
      %v6565 = vadd.f32 %v6213, %v6497
      %v6566 = vadd.f32 %v6214, %v6499
      %v6567 = vadd.f32 %v6215, %v6501
      %v6568 = vadd.f32 %v6216, %v6503
      %v6569 = vadd.f32 %v6217, %v6505
      %6602 = vrot.lane.b32.xlu0 %v1278, 96
      %v6603 = vpop.permute.xlu0 %6602
      %6604 = vrot.lane.b32.xlu0 %v1282, 96
      %v6605 = vpop.permute.xlu0 %6604
      %6606 = vrot.lane.b32.xlu0 %v1288, 96
      %v6607 = vpop.permute.xlu0 %6606
      %6608 = vrot.lane.b32.xlu0 %v1292, 96
      %v6609 = vpop.permute.xlu0 %6608
      %6610 = vrot.lane.b32.xlu0 %v1298, 96
      %v6611 = vpop.permute.xlu0 %6610
      %6612 = vrot.lane.b32.xlu0 %v1302, 96
      %v6613 = vpop.permute.xlu0 %6612
      %6614 = vrot.lane.b32.xlu0 %v1308, 96
      %v6615 = vpop.permute.xlu0 %6614
      %6616 = vrot.lane.b32.xlu0 %v1312, 96
      %v6617 = vpop.permute.xlu0 %6616
      %6618 = vrot.lane.b32.xlu0 %v1318, 96
      %v6619 = vpop.permute.xlu0 %6618
      %6620 = vrot.lane.b32.xlu0 %v1322, 96
      %v6621 = vpop.permute.xlu0 %6620
      %6622 = vrot.lane.b32.xlu0 %v1328, 96
      %v6623 = vpop.permute.xlu0 %6622
      %6624 = vrot.lane.b32.xlu0 %v1332, 96
      %v6625 = vpop.permute.xlu0 %6624
      %6626 = vrot.lane.b32.xlu0 %v1338, 96
      %v6627 = vpop.permute.xlu0 %6626
      %6628 = vrot.lane.b32.xlu0 %v1342, 96
      %v6629 = vpop.permute.xlu0 %6628
      %6630 = vrot.lane.b32.xlu0 %v1348, 96
      %v6631 = vpop.permute.xlu0 %6630
      %6632 = vrot.lane.b32.xlu0 %v1352, 96
      %v6633 = vpop.permute.xlu0 %6632
      %6634 = vrot.lane.b32.xlu0 %v1358, 96
      %v6635 = vpop.permute.xlu0 %6634
      %6636 = vrot.lane.b32.xlu0 %v1362, 96
      %v6637 = vpop.permute.xlu0 %6636
      %6638 = vrot.lane.b32.xlu0 %v1368, 96
      %v6639 = vpop.permute.xlu0 %6638
      %6640 = vrot.lane.b32.xlu0 %v1372, 96
      %v6641 = vpop.permute.xlu0 %6640
      %6642 = vrot.lane.b32.xlu0 %v1378, 96
      %v6643 = vpop.permute.xlu0 %6642
      %6644 = vrot.lane.b32.xlu0 %v1382, 96
      %v6645 = vpop.permute.xlu0 %6644
      %6646 = vrot.lane.b32.xlu0 %v1388, 96
      %v6647 = vpop.permute.xlu0 %6646
      %6648 = vrot.lane.b32.xlu0 %v1392, 96
      %v6649 = vpop.permute.xlu0 %6648
      %6650 = vrot.lane.b32.xlu0 %v1398, 96
      %v6651 = vpop.permute.xlu0 %6650
      %6652 = vrot.lane.b32.xlu0 %v1402, 96
      %v6653 = vpop.permute.xlu0 %6652
      %6654 = vrot.lane.b32.xlu0 %v1408, 96
      %v6655 = vpop.permute.xlu0 %6654
      %6656 = vrot.lane.b32.xlu0 %v1412, 96
      %v6657 = vpop.permute.xlu0 %6656
      %6658 = vrot.lane.b32.xlu0 %v1418, 96
      %v6659 = vpop.permute.xlu0 %6658
      %6660 = vrot.lane.b32.xlu0 %v1422, 96
      %v6661 = vpop.permute.xlu0 %6660
      %6662 = vrot.lane.b32.xlu0 %v1428, 96
      %v6663 = vpop.permute.xlu0 %6662
      %6664 = vrot.lane.b32.xlu0 %v1432, 96
      %v6665 = vpop.permute.xlu0 %6664
      %v6698 = vrot.slane %v6603, 6
      %v6699 = vrot.slane %v6605, 6
      %v6700 = vrot.slane %v6607, 6
      %v6701 = vrot.slane %v6609, 6
      %v6702 = vrot.slane %v6611, 6
      %v6703 = vrot.slane %v6613, 6
      %v6704 = vrot.slane %v6615, 6
      %v6705 = vrot.slane %v6617, 6
      %v6706 = vrot.slane %v6619, 6
      %v6707 = vrot.slane %v6621, 6
      %v6708 = vrot.slane %v6623, 6
      %v6709 = vrot.slane %v6625, 6
      %v6710 = vrot.slane %v6627, 6
      %v6711 = vrot.slane %v6629, 6
      %v6712 = vrot.slane %v6631, 6
      %v6713 = vrot.slane %v6633, 6
      %v6714 = vrot.slane %v6635, 6
      %v6715 = vrot.slane %v6637, 6
      %v6716 = vrot.slane %v6639, 6
      %v6717 = vrot.slane %v6641, 6
      %v6718 = vrot.slane %v6643, 6
      %v6719 = vrot.slane %v6645, 6
      %v6720 = vrot.slane %v6647, 6
      %v6721 = vrot.slane %v6649, 6
      %v6722 = vrot.slane %v6651, 6
      %v6723 = vrot.slane %v6653, 6
      %v6724 = vrot.slane %v6655, 6
      %v6725 = vrot.slane %v6657, 6
      %v6726 = vrot.slane %v6659, 6
      %v6727 = vrot.slane %v6661, 6
      %v6728 = vrot.slane %v6663, 6
      %v6729 = vrot.slane %v6665, 6
      %v6730 = vsel %vm3720, %v6728, %v6729
      %v6731 = vsel %vm3720, %v6727, %v6728
      %v6732 = vsel %vm3720, %v6726, %v6727
      %v6733 = vsel %vm3720, %v6725, %v6726
      %v6734 = vsel %vm3720, %v6724, %v6725
      %v6735 = vsel %vm3720, %v6723, %v6724
      %v6736 = vsel %vm3720, %v6722, %v6723
      %v6737 = vsel %vm3720, %v6721, %v6722
      %v6738 = vsel %vm3720, %v6720, %v6721
      %v6739 = vsel %vm3720, %v6719, %v6720
      %v6740 = vsel %vm3720, %v6718, %v6719
      %v6741 = vsel %vm3720, %v6717, %v6718
      %v6742 = vsel %vm3720, %v6716, %v6717
      %v6743 = vsel %vm3720, %v6715, %v6716
      %v6744 = vsel %vm3720, %v6714, %v6715
      %v6745 = vsel %vm3720, %v6713, %v6714
      %v6746 = vsel %vm3720, %v6712, %v6713
      %v6747 = vsel %vm3720, %v6711, %v6712
      %v6748 = vsel %vm3720, %v6710, %v6711
      %v6749 = vsel %vm3720, %v6709, %v6710
      %v6750 = vsel %vm3720, %v6708, %v6709
      %v6751 = vsel %vm3720, %v6707, %v6708
      %v6752 = vsel %vm3720, %v6706, %v6707
      %v6753 = vsel %vm3720, %v6705, %v6706
      %v6754 = vsel %vm3720, %v6704, %v6705
      %v6755 = vsel %vm3720, %v6703, %v6704
      %v6756 = vsel %vm3720, %v6702, %v6703
      %v6757 = vsel %vm3720, %v6701, %v6702
      %v6758 = vsel %vm3720, %v6700, %v6701
      %v6759 = vsel %vm3720, %v6699, %v6700
      %v6760 = vsel %vm3720, %v6698, %v6699
      %v6761 = vsel %vm3720, %v6729, %v6698
      %vm6762 = vcmp.lt.s32.totalorder %v717, 2
      %vm6763 = vcmp.lt.s32.totalorder %v718, 2
      %vm6764 = vcmp.lt.s32.totalorder %v719, 2
      %vm6765 = vcmp.lt.s32.totalorder %v720, 2
      %vm6766 = vcmp.lt.s32.totalorder %v721, 2
      %vm6767 = vcmp.lt.s32.totalorder %v722, 2
      %vm6768 = vcmp.lt.s32.totalorder %v723, 2
      %vm6769 = vcmp.lt.s32.totalorder %v724, 2
      %vm6770 = vcmp.lt.s32.totalorder %v725, 2
      %vm6771 = vcmp.lt.s32.totalorder %v726, 2
      %vm6772 = vcmp.lt.s32.totalorder %v727, 2
      %vm6773 = vcmp.lt.s32.totalorder %v728, 2
      %vm6774 = vcmp.lt.s32.totalorder %v729, 2
      %vm6775 = vcmp.lt.s32.totalorder %v730, 2
      %vm6776 = vcmp.lt.s32.totalorder %v731, 2
      %vm6777 = vcmp.lt.s32.totalorder %v732, 2
      %vm6778 = vcmp.lt.s32.totalorder %v733, 2
      %vm6779 = vcmp.lt.s32.totalorder %v734, 2
      %vm6780 = vcmp.lt.s32.totalorder %v735, 2
      %vm6781 = vcmp.lt.s32.totalorder %v736, 2
      %vm6782 = vcmp.lt.s32.totalorder %v737, 2
      %vm6783 = vcmp.lt.s32.totalorder %v738, 2
      %vm6784 = vcmp.lt.s32.totalorder %v739, 2
      %vm6785 = vcmp.lt.s32.totalorder %v740, 2
      %vm6786 = vcmp.lt.s32.totalorder %v741, 2
      %vm6787 = vcmp.lt.s32.totalorder %v742, 2
      %vm6788 = vcmp.lt.s32.totalorder %v743, 2
      %vm6789 = vcmp.lt.s32.totalorder %v744, 2
      %vm6790 = vcmp.lt.s32.totalorder %v745, 2
      %vm6791 = vcmp.lt.s32.totalorder %v746, 2
      %vm6792 = vcmp.lt.s32.totalorder %v747, 2
      %vm6793 = vcmp.lt.s32.totalorder %v748, 2
      %v6794 = vsel %vm6762, 1, 0
      %v6795 = vsel %vm6763, 1, 0
      %v6796 = vsel %vm6764, 1, 0
      %v6797 = vsel %vm6765, 1, 0
      %v6798 = vsel %vm6766, 1, 0
      %v6799 = vsel %vm6767, 1, 0
      %v6800 = vsel %vm6768, 1, 0
      %v6801 = vsel %vm6769, 1, 0
      %v6802 = vsel %vm6770, 1, 0
      %v6803 = vsel %vm6771, 1, 0
      %v6804 = vsel %vm6772, 1, 0
      %v6805 = vsel %vm6773, 1, 0
      %v6806 = vsel %vm6774, 1, 0
      %v6807 = vsel %vm6775, 1, 0
      %v6808 = vsel %vm6776, 1, 0
      %v6809 = vsel %vm6777, 1, 0
      %v6810 = vsel %vm6778, 1, 0
      %v6811 = vsel %vm6779, 1, 0
      %v6812 = vsel %vm6780, 1, 0
      %v6813 = vsel %vm6781, 1, 0
      %v6814 = vsel %vm6782, 1, 0
      %v6815 = vsel %vm6783, 1, 0
      %v6816 = vsel %vm6784, 1, 0
      %v6817 = vsel %vm6785, 1, 0
      %v6818 = vsel %vm6786, 1, 0
      %v6819 = vsel %vm6787, 1, 0
      %v6820 = vsel %vm6788, 1, 0
      %v6821 = vsel %vm6789, 1, 0
      %v6822 = vsel %vm6790, 1, 0
      %v6823 = vsel %vm6791, 1, 0
      %v6824 = vsel %vm6792, 1, 0
      %v6825 = vsel %vm6793, 1, 0
      %v6826 = vcvt.s32.f32 %v6794
      %v6827 = vcvt.s32.f32 %v6795
      %v6828 = vcvt.s32.f32 %v6796
      %v6829 = vcvt.s32.f32 %v6797
      %v6830 = vcvt.s32.f32 %v6798
      %v6831 = vcvt.s32.f32 %v6799
      %v6832 = vcvt.s32.f32 %v6800
      %v6833 = vcvt.s32.f32 %v6801
      %v6834 = vcvt.s32.f32 %v6802
      %v6835 = vcvt.s32.f32 %v6803
      %v6836 = vcvt.s32.f32 %v6804
      %v6837 = vcvt.s32.f32 %v6805
      %v6838 = vcvt.s32.f32 %v6806
      %v6839 = vcvt.s32.f32 %v6807
      %v6840 = vcvt.s32.f32 %v6808
      %v6841 = vcvt.s32.f32 %v6809
      %v6842 = vcvt.s32.f32 %v6810
      %v6843 = vcvt.s32.f32 %v6811
      %v6844 = vcvt.s32.f32 %v6812
      %v6845 = vcvt.s32.f32 %v6813
      %v6846 = vcvt.s32.f32 %v6814
      %v6847 = vcvt.s32.f32 %v6815
      %v6848 = vcvt.s32.f32 %v6816
      %v6849 = vcvt.s32.f32 %v6817
      %v6850 = vcvt.s32.f32 %v6818
      %v6851 = vcvt.s32.f32 %v6819
      %v6852 = vcvt.s32.f32 %v6820
      %v6853 = vcvt.s32.f32 %v6821
      %v6854 = vcvt.s32.f32 %v6822
      %v6855 = vcvt.s32.f32 %v6823
      %v6856 = vcvt.s32.f32 %v6824
      %v6857 = vcvt.s32.f32 %v6825
      %v6858 = vmul.f32 %v6760, %v6826
      %v6859 = vmul.f32 %v6759, %v6827
      %v6860 = vmul.f32 %v6758, %v6828
      %v6861 = vmul.f32 %v6757, %v6829
      %v6862 = vmul.f32 %v6756, %v6830
      %v6863 = vmul.f32 %v6755, %v6831
      %v6864 = vmul.f32 %v6754, %v6832
      %v6865 = vmul.f32 %v6753, %v6833
      %v6866 = vmul.f32 %v6752, %v6834
      %v6867 = vmul.f32 %v6751, %v6835
      %v6868 = vmul.f32 %v6750, %v6836
      %v6869 = vmul.f32 %v6749, %v6837
      %v6870 = vmul.f32 %v6748, %v6838
      %v6871 = vmul.f32 %v6747, %v6839
      %v6872 = vmul.f32 %v6746, %v6840
      %v6873 = vmul.f32 %v6745, %v6841
      %v6874 = vmul.f32 %v6744, %v6842
      %v6875 = vmul.f32 %v6743, %v6843
      %v6876 = vmul.f32 %v6742, %v6844
      %v6877 = vmul.f32 %v6741, %v6845
      %v6878 = vmul.f32 %v6740, %v6846
      %v6879 = vmul.f32 %v6739, %v6847
      %v6880 = vmul.f32 %v6738, %v6848
      %v6881 = vmul.f32 %v6737, %v6849
      %v6882 = vmul.f32 %v6736, %v6850
      %v6883 = vmul.f32 %v6735, %v6851
      %v6884 = vmul.f32 %v6734, %v6852
      %v6885 = vmul.f32 %v6733, %v6853
      %v6886 = vmul.f32 %v6732, %v6854
      %v6887 = vmul.f32 %v6731, %v6855
      %v6888 = vmul.f32 %v6730, %v6856
      %v6889 = vmul.f32 %v6761, %v6857
      %6922 = vrot.lane.b32.xlu0 %v6858, 96
      %v6923 = vpop.permute.xlu0 %6922
      %6924 = vrot.lane.b32.xlu0 %v6859, 96
      %v6925 = vpop.permute.xlu0 %6924
      %6926 = vrot.lane.b32.xlu0 %v6860, 96
      %v6927 = vpop.permute.xlu0 %6926
      %6928 = vrot.lane.b32.xlu0 %v6861, 96
      %v6929 = vpop.permute.xlu0 %6928
      %6930 = vrot.lane.b32.xlu0 %v6862, 96
      %v6931 = vpop.permute.xlu0 %6930
      %6932 = vrot.lane.b32.xlu0 %v6863, 96
      %v6933 = vpop.permute.xlu0 %6932
      %6934 = vrot.lane.b32.xlu0 %v6864, 96
      %v6935 = vpop.permute.xlu0 %6934
      %6936 = vrot.lane.b32.xlu0 %v6865, 96
      %v6937 = vpop.permute.xlu0 %6936
      %6938 = vrot.lane.b32.xlu0 %v6866, 96
      %v6939 = vpop.permute.xlu0 %6938
      %6940 = vrot.lane.b32.xlu0 %v6867, 96
      %v6941 = vpop.permute.xlu0 %6940
      %6942 = vrot.lane.b32.xlu0 %v6868, 96
      %v6943 = vpop.permute.xlu0 %6942
      %6944 = vrot.lane.b32.xlu0 %v6869, 96
      %v6945 = vpop.permute.xlu0 %6944
      %6946 = vrot.lane.b32.xlu0 %v6870, 96
      %v6947 = vpop.permute.xlu0 %6946
      %6948 = vrot.lane.b32.xlu0 %v6871, 96
      %v6949 = vpop.permute.xlu0 %6948
      %6950 = vrot.lane.b32.xlu0 %v6872, 96
      %v6951 = vpop.permute.xlu0 %6950
      %6952 = vrot.lane.b32.xlu0 %v6873, 96
      %v6953 = vpop.permute.xlu0 %6952
      %6954 = vrot.lane.b32.xlu0 %v6874, 96
      %v6955 = vpop.permute.xlu0 %6954
      %6956 = vrot.lane.b32.xlu0 %v6875, 96
      %v6957 = vpop.permute.xlu0 %6956
      %6958 = vrot.lane.b32.xlu0 %v6876, 96
      %v6959 = vpop.permute.xlu0 %6958
      %6960 = vrot.lane.b32.xlu0 %v6877, 96
      %v6961 = vpop.permute.xlu0 %6960
      %6962 = vrot.lane.b32.xlu0 %v6878, 96
      %v6963 = vpop.permute.xlu0 %6962
      %6964 = vrot.lane.b32.xlu0 %v6879, 96
      %v6965 = vpop.permute.xlu0 %6964
      %6966 = vrot.lane.b32.xlu0 %v6880, 96
      %v6967 = vpop.permute.xlu0 %6966
      %6968 = vrot.lane.b32.xlu0 %v6881, 96
      %v6969 = vpop.permute.xlu0 %6968
      %6970 = vrot.lane.b32.xlu0 %v6882, 96
      %v6971 = vpop.permute.xlu0 %6970
      %6972 = vrot.lane.b32.xlu0 %v6883, 96
      %v6973 = vpop.permute.xlu0 %6972
      %6974 = vrot.lane.b32.xlu0 %v6884, 96
      %v6975 = vpop.permute.xlu0 %6974
      %6976 = vrot.lane.b32.xlu0 %v6885, 96
      %v6977 = vpop.permute.xlu0 %6976
      %6978 = vrot.lane.b32.xlu0 %v6886, 96
      %v6979 = vpop.permute.xlu0 %6978
      %6980 = vrot.lane.b32.xlu0 %v6887, 96
      %v6981 = vpop.permute.xlu0 %6980
      %6982 = vrot.lane.b32.xlu0 %v6888, 96
      %v6983 = vpop.permute.xlu0 %6982
      %6984 = vrot.lane.b32.xlu0 %v6889, 96
      %v6985 = vpop.permute.xlu0 %6984
      %v7018 = vadd.f32 %v6538, %v6923
      %v7019 = vadd.f32 %v6539, %v6925
      %v7020 = vadd.f32 %v6540, %v6927
      %v7021 = vadd.f32 %v6541, %v6929
      %v7022 = vadd.f32 %v6542, %v6931
      %v7023 = vadd.f32 %v6543, %v6933
      %v7024 = vadd.f32 %v6544, %v6935
      %v7025 = vadd.f32 %v6545, %v6937
      %v7026 = vadd.f32 %v6546, %v6939
      %v7027 = vadd.f32 %v6547, %v6941
      %v7028 = vadd.f32 %v6548, %v6943
      %v7029 = vadd.f32 %v6549, %v6945
      %v7030 = vadd.f32 %v6550, %v6947
      %v7031 = vadd.f32 %v6551, %v6949
      %v7032 = vadd.f32 %v6552, %v6951
      %v7033 = vadd.f32 %v6553, %v6953
      %v7034 = vadd.f32 %v6554, %v6955
      %v7035 = vadd.f32 %v6555, %v6957
      %v7036 = vadd.f32 %v6556, %v6959
      %v7037 = vadd.f32 %v6557, %v6961
      %v7038 = vadd.f32 %v6558, %v6963
      %v7039 = vadd.f32 %v6559, %v6965
      %v7040 = vadd.f32 %v6560, %v6967
      %v7041 = vadd.f32 %v6561, %v6969
      %v7042 = vadd.f32 %v6562, %v6971
      %v7043 = vadd.f32 %v6563, %v6973
      %v7044 = vadd.f32 %v6564, %v6975
      %v7045 = vadd.f32 %v6565, %v6977
      %v7046 = vadd.f32 %v6566, %v6979
      %v7047 = vadd.f32 %v6567, %v6981
      %v7048 = vadd.f32 %v6568, %v6983
      %v7049 = vadd.f32 %v6569, %v6985
      %7050 = vrot.lane.b32.xlu0 %v1278, 64
      %v7051 = vpop.permute.xlu0 %7050
      %7052 = vrot.lane.b32.xlu0 %v1282, 64
      %v7053 = vpop.permute.xlu0 %7052
      %7054 = vrot.lane.b32.xlu0 %v1288, 64
      %v7055 = vpop.permute.xlu0 %7054
      %7056 = vrot.lane.b32.xlu0 %v1292, 64
      %v7057 = vpop.permute.xlu0 %7056
      %7058 = vrot.lane.b32.xlu0 %v1298, 64
      %v7059 = vpop.permute.xlu0 %7058
      %7060 = vrot.lane.b32.xlu0 %v1302, 64
      %v7061 = vpop.permute.xlu0 %7060
      %7062 = vrot.lane.b32.xlu0 %v1308, 64
      %v7063 = vpop.permute.xlu0 %7062
      %7064 = vrot.lane.b32.xlu0 %v1312, 64
      %v7065 = vpop.permute.xlu0 %7064
      %7066 = vrot.lane.b32.xlu0 %v1318, 64
      %v7067 = vpop.permute.xlu0 %7066
      %7068 = vrot.lane.b32.xlu0 %v1322, 64
      %v7069 = vpop.permute.xlu0 %7068
      %7070 = vrot.lane.b32.xlu0 %v1328, 64
      %v7071 = vpop.permute.xlu0 %7070
      %7072 = vrot.lane.b32.xlu0 %v1332, 64
      %v7073 = vpop.permute.xlu0 %7072
      %7074 = vrot.lane.b32.xlu0 %v1338, 64
      %v7075 = vpop.permute.xlu0 %7074
      %7076 = vrot.lane.b32.xlu0 %v1342, 64
      %v7077 = vpop.permute.xlu0 %7076
      %7078 = vrot.lane.b32.xlu0 %v1348, 64
      %v7079 = vpop.permute.xlu0 %7078
      %7080 = vrot.lane.b32.xlu0 %v1352, 64
      %v7081 = vpop.permute.xlu0 %7080
      %7082 = vrot.lane.b32.xlu0 %v1358, 64
      %v7083 = vpop.permute.xlu0 %7082
      %7084 = vrot.lane.b32.xlu0 %v1362, 64
      %v7085 = vpop.permute.xlu0 %7084
      %7086 = vrot.lane.b32.xlu0 %v1368, 64
      %v7087 = vpop.permute.xlu0 %7086
      %7088 = vrot.lane.b32.xlu0 %v1372, 64
      %v7089 = vpop.permute.xlu0 %7088
      %7090 = vrot.lane.b32.xlu0 %v1378, 64
      %v7091 = vpop.permute.xlu0 %7090
      %7092 = vrot.lane.b32.xlu0 %v1382, 64
      %v7093 = vpop.permute.xlu0 %7092
      %7094 = vrot.lane.b32.xlu0 %v1388, 64
      %v7095 = vpop.permute.xlu0 %7094
      %7096 = vrot.lane.b32.xlu0 %v1392, 64
      %v7097 = vpop.permute.xlu0 %7096
      %7098 = vrot.lane.b32.xlu0 %v1398, 64
      %v7099 = vpop.permute.xlu0 %7098
      %7100 = vrot.lane.b32.xlu0 %v1402, 64
      %v7101 = vpop.permute.xlu0 %7100
      %7102 = vrot.lane.b32.xlu0 %v1408, 64
      %v7103 = vpop.permute.xlu0 %7102
      %7104 = vrot.lane.b32.xlu0 %v1412, 64
      %v7105 = vpop.permute.xlu0 %7104
      %7106 = vrot.lane.b32.xlu0 %v1418, 64
      %v7107 = vpop.permute.xlu0 %7106
      %7108 = vrot.lane.b32.xlu0 %v1422, 64
      %v7109 = vpop.permute.xlu0 %7108
      %7110 = vrot.lane.b32.xlu0 %v1428, 64
      %v7111 = vpop.permute.xlu0 %7110
      %7112 = vrot.lane.b32.xlu0 %v1432, 64
      %v7113 = vpop.permute.xlu0 %7112
      %v7146 = vrot.slane %v7051, 7
      %v7147 = vrot.slane %v7053, 7
      %v7148 = vrot.slane %v7055, 7
      %v7149 = vrot.slane %v7057, 7
      %v7150 = vrot.slane %v7059, 7
      %v7151 = vrot.slane %v7061, 7
      %v7152 = vrot.slane %v7063, 7
      %v7153 = vrot.slane %v7065, 7
      %v7154 = vrot.slane %v7067, 7
      %v7155 = vrot.slane %v7069, 7
      %v7156 = vrot.slane %v7071, 7
      %v7157 = vrot.slane %v7073, 7
      %v7158 = vrot.slane %v7075, 7
      %v7159 = vrot.slane %v7077, 7
      %v7160 = vrot.slane %v7079, 7
      %v7161 = vrot.slane %v7081, 7
      %v7162 = vrot.slane %v7083, 7
      %v7163 = vrot.slane %v7085, 7
      %v7164 = vrot.slane %v7087, 7
      %v7165 = vrot.slane %v7089, 7
      %v7166 = vrot.slane %v7091, 7
      %v7167 = vrot.slane %v7093, 7
      %v7168 = vrot.slane %v7095, 7
      %v7169 = vrot.slane %v7097, 7
      %v7170 = vrot.slane %v7099, 7
      %v7171 = vrot.slane %v7101, 7
      %v7172 = vrot.slane %v7103, 7
      %v7173 = vrot.slane %v7105, 7
      %v7174 = vrot.slane %v7107, 7
      %v7175 = vrot.slane %v7109, 7
      %v7176 = vrot.slane %v7111, 7
      %v7177 = vrot.slane %v7113, 7
      %v7178 = vsel %vm4169, %v7176, %v7177
      %v7179 = vsel %vm4169, %v7175, %v7176
      %v7180 = vsel %vm4169, %v7174, %v7175
      %v7181 = vsel %vm4169, %v7173, %v7174
      %v7182 = vsel %vm4169, %v7172, %v7173
      %v7183 = vsel %vm4169, %v7171, %v7172
      %v7184 = vsel %vm4169, %v7170, %v7171
      %v7185 = vsel %vm4169, %v7169, %v7170
      %v7186 = vsel %vm4169, %v7168, %v7169
      %v7187 = vsel %vm4169, %v7167, %v7168
      %v7188 = vsel %vm4169, %v7166, %v7167
      %v7189 = vsel %vm4169, %v7165, %v7166
      %v7190 = vsel %vm4169, %v7164, %v7165
      %v7191 = vsel %vm4169, %v7163, %v7164
      %v7192 = vsel %vm4169, %v7162, %v7163
      %v7193 = vsel %vm4169, %v7161, %v7162
      %v7194 = vsel %vm4169, %v7160, %v7161
      %v7195 = vsel %vm4169, %v7159, %v7160
      %v7196 = vsel %vm4169, %v7158, %v7159
      %v7197 = vsel %vm4169, %v7157, %v7158
      %v7198 = vsel %vm4169, %v7156, %v7157
      %v7199 = vsel %vm4169, %v7155, %v7156
      %v7200 = vsel %vm4169, %v7154, %v7155
      %v7201 = vsel %vm4169, %v7153, %v7154
      %v7202 = vsel %vm4169, %v7152, %v7153
      %v7203 = vsel %vm4169, %v7151, %v7152
      %v7204 = vsel %vm4169, %v7150, %v7151
      %v7205 = vsel %vm4169, %v7149, %v7150
      %v7206 = vsel %vm4169, %v7148, %v7149
      %v7207 = vsel %vm4169, %v7147, %v7148
      %v7208 = vsel %vm4169, %v7146, %v7147
      %v7209 = vsel %vm4169, %v7177, %v7146
      %vm7210 = vcmp.lt.s32.totalorder %v717, 1
      %vm7211 = vcmp.lt.s32.totalorder %v718, 1
      %vm7212 = vcmp.lt.s32.totalorder %v719, 1
      %vm7213 = vcmp.lt.s32.totalorder %v720, 1
      %vm7214 = vcmp.lt.s32.totalorder %v721, 1
      %vm7215 = vcmp.lt.s32.totalorder %v722, 1
      %vm7216 = vcmp.lt.s32.totalorder %v723, 1
      %vm7217 = vcmp.lt.s32.totalorder %v724, 1
      %vm7218 = vcmp.lt.s32.totalorder %v725, 1
      %vm7219 = vcmp.lt.s32.totalorder %v726, 1
      %vm7220 = vcmp.lt.s32.totalorder %v727, 1
      %vm7221 = vcmp.lt.s32.totalorder %v728, 1
      %vm7222 = vcmp.lt.s32.totalorder %v729, 1
      %vm7223 = vcmp.lt.s32.totalorder %v730, 1
      %vm7224 = vcmp.lt.s32.totalorder %v731, 1
      %vm7225 = vcmp.lt.s32.totalorder %v732, 1
      %vm7226 = vcmp.lt.s32.totalorder %v733, 1
      %vm7227 = vcmp.lt.s32.totalorder %v734, 1
      %vm7228 = vcmp.lt.s32.totalorder %v735, 1
      %vm7229 = vcmp.lt.s32.totalorder %v736, 1
      %vm7230 = vcmp.lt.s32.totalorder %v737, 1
      %vm7231 = vcmp.lt.s32.totalorder %v738, 1
      %vm7232 = vcmp.lt.s32.totalorder %v739, 1
      %vm7233 = vcmp.lt.s32.totalorder %v740, 1
      %vm7234 = vcmp.lt.s32.totalorder %v741, 1
      %vm7235 = vcmp.lt.s32.totalorder %v742, 1
      %vm7236 = vcmp.lt.s32.totalorder %v743, 1
      %vm7237 = vcmp.lt.s32.totalorder %v744, 1
      %vm7238 = vcmp.lt.s32.totalorder %v745, 1
      %vm7239 = vcmp.lt.s32.totalorder %v746, 1
      %vm7240 = vcmp.lt.s32.totalorder %v747, 1
      %vm7241 = vcmp.lt.s32.totalorder %v748, 1
      %v7242 = vsel %vm7210, 1, 0
      %v7243 = vsel %vm7211, 1, 0
      %v7244 = vsel %vm7212, 1, 0
      %v7245 = vsel %vm7213, 1, 0
      %v7246 = vsel %vm7214, 1, 0
      %v7247 = vsel %vm7215, 1, 0
      %v7248 = vsel %vm7216, 1, 0
      %v7249 = vsel %vm7217, 1, 0
      %v7250 = vsel %vm7218, 1, 0
      %v7251 = vsel %vm7219, 1, 0
      %v7252 = vsel %vm7220, 1, 0
      %v7253 = vsel %vm7221, 1, 0
      %v7254 = vsel %vm7222, 1, 0
      %v7255 = vsel %vm7223, 1, 0
      %v7256 = vsel %vm7224, 1, 0
      %v7257 = vsel %vm7225, 1, 0
      %v7258 = vsel %vm7226, 1, 0
      %v7259 = vsel %vm7227, 1, 0
      %v7260 = vsel %vm7228, 1, 0
      %v7261 = vsel %vm7229, 1, 0
      %v7262 = vsel %vm7230, 1, 0
      %v7263 = vsel %vm7231, 1, 0
      %v7264 = vsel %vm7232, 1, 0
      %v7265 = vsel %vm7233, 1, 0
      %v7266 = vsel %vm7234, 1, 0
      %v7267 = vsel %vm7235, 1, 0
      %v7268 = vsel %vm7236, 1, 0
      %v7269 = vsel %vm7237, 1, 0
      %v7270 = vsel %vm7238, 1, 0
      %v7271 = vsel %vm7239, 1, 0
      %v7272 = vsel %vm7240, 1, 0
      %v7273 = vsel %vm7241, 1, 0
      %v7274 = vcvt.s32.f32 %v7242
      %v7275 = vcvt.s32.f32 %v7243
      %v7276 = vcvt.s32.f32 %v7244
      %v7277 = vcvt.s32.f32 %v7245
      %v7278 = vcvt.s32.f32 %v7246
      %v7279 = vcvt.s32.f32 %v7247
      %v7280 = vcvt.s32.f32 %v7248
      %v7281 = vcvt.s32.f32 %v7249
      %v7282 = vcvt.s32.f32 %v7250
      %v7283 = vcvt.s32.f32 %v7251
      %v7284 = vcvt.s32.f32 %v7252
      %v7285 = vcvt.s32.f32 %v7253
      %v7286 = vcvt.s32.f32 %v7254
      %v7287 = vcvt.s32.f32 %v7255
      %v7288 = vcvt.s32.f32 %v7256
      %v7289 = vcvt.s32.f32 %v7257
      %v7290 = vcvt.s32.f32 %v7258
      %v7291 = vcvt.s32.f32 %v7259
      %v7292 = vcvt.s32.f32 %v7260
      %v7293 = vcvt.s32.f32 %v7261
      %v7294 = vcvt.s32.f32 %v7262
      %v7295 = vcvt.s32.f32 %v7263
      %v7296 = vcvt.s32.f32 %v7264
      %v7297 = vcvt.s32.f32 %v7265
      %v7298 = vcvt.s32.f32 %v7266
      %v7299 = vcvt.s32.f32 %v7267
      %v7300 = vcvt.s32.f32 %v7268
      %v7301 = vcvt.s32.f32 %v7269
      %v7302 = vcvt.s32.f32 %v7270
      %v7303 = vcvt.s32.f32 %v7271
      %v7304 = vcvt.s32.f32 %v7272
      %v7305 = vcvt.s32.f32 %v7273
      %v7306 = vmul.f32 %v7208, %v7274
      %v7307 = vmul.f32 %v7207, %v7275
      %v7308 = vmul.f32 %v7206, %v7276
      %v7309 = vmul.f32 %v7205, %v7277
      %v7310 = vmul.f32 %v7204, %v7278
      %v7311 = vmul.f32 %v7203, %v7279
      %v7312 = vmul.f32 %v7202, %v7280
      %v7313 = vmul.f32 %v7201, %v7281
      %v7314 = vmul.f32 %v7200, %v7282
      %v7315 = vmul.f32 %v7199, %v7283
      %v7316 = vmul.f32 %v7198, %v7284
      %v7317 = vmul.f32 %v7197, %v7285
      %v7318 = vmul.f32 %v7196, %v7286
      %v7319 = vmul.f32 %v7195, %v7287
      %v7320 = vmul.f32 %v7194, %v7288
      %v7321 = vmul.f32 %v7193, %v7289
      %v7322 = vmul.f32 %v7192, %v7290
      %v7323 = vmul.f32 %v7191, %v7291
      %v7324 = vmul.f32 %v7190, %v7292
      %v7325 = vmul.f32 %v7189, %v7293
      %v7326 = vmul.f32 %v7188, %v7294
      %v7327 = vmul.f32 %v7187, %v7295
      %v7328 = vmul.f32 %v7186, %v7296
      %v7329 = vmul.f32 %v7185, %v7297
      %v7330 = vmul.f32 %v7184, %v7298
      %v7331 = vmul.f32 %v7183, %v7299
      %v7332 = vmul.f32 %v7182, %v7300
      %v7333 = vmul.f32 %v7181, %v7301
      %v7334 = vmul.f32 %v7180, %v7302
      %v7335 = vmul.f32 %v7179, %v7303
      %v7336 = vmul.f32 %v7178, %v7304
      %v7337 = vmul.f32 %v7209, %v7305
      %7370 = vrot.lane.b32.xlu0 %v7306, 96
      %v7371 = vpop.permute.xlu0 %7370
      %7372 = vrot.lane.b32.xlu0 %v7307, 96
      %v7373 = vpop.permute.xlu0 %7372
      %7374 = vrot.lane.b32.xlu0 %v7308, 96
      %v7375 = vpop.permute.xlu0 %7374
      %7376 = vrot.lane.b32.xlu0 %v7309, 96
      %v7377 = vpop.permute.xlu0 %7376
      %7378 = vrot.lane.b32.xlu0 %v7310, 96
      %v7379 = vpop.permute.xlu0 %7378
      %7380 = vrot.lane.b32.xlu0 %v7311, 96
      %v7381 = vpop.permute.xlu0 %7380
      %7382 = vrot.lane.b32.xlu0 %v7312, 96
      %v7383 = vpop.permute.xlu0 %7382
      %7384 = vrot.lane.b32.xlu0 %v7313, 96
      %v7385 = vpop.permute.xlu0 %7384
      %7386 = vrot.lane.b32.xlu0 %v7314, 96
      %v7387 = vpop.permute.xlu0 %7386
      %7388 = vrot.lane.b32.xlu0 %v7315, 96
      %v7389 = vpop.permute.xlu0 %7388
      %7390 = vrot.lane.b32.xlu0 %v7316, 96
      %v7391 = vpop.permute.xlu0 %7390
      %7392 = vrot.lane.b32.xlu0 %v7317, 96
      %v7393 = vpop.permute.xlu0 %7392
      %7394 = vrot.lane.b32.xlu0 %v7318, 96
      %v7395 = vpop.permute.xlu0 %7394
      %7396 = vrot.lane.b32.xlu0 %v7319, 96
      %v7397 = vpop.permute.xlu0 %7396
      %7398 = vrot.lane.b32.xlu0 %v7320, 96
      %v7399 = vpop.permute.xlu0 %7398
      %7400 = vrot.lane.b32.xlu0 %v7321, 96
      %v7401 = vpop.permute.xlu0 %7400
      %7402 = vrot.lane.b32.xlu0 %v7322, 96
      %v7403 = vpop.permute.xlu0 %7402
      %7404 = vrot.lane.b32.xlu0 %v7323, 96
      %v7405 = vpop.permute.xlu0 %7404
      %7406 = vrot.lane.b32.xlu0 %v7324, 96
      %v7407 = vpop.permute.xlu0 %7406
      %7408 = vrot.lane.b32.xlu0 %v7325, 96
      %v7409 = vpop.permute.xlu0 %7408
      %7410 = vrot.lane.b32.xlu0 %v7326, 96
      %v7411 = vpop.permute.xlu0 %7410
      %7412 = vrot.lane.b32.xlu0 %v7327, 96
      %v7413 = vpop.permute.xlu0 %7412
      %7414 = vrot.lane.b32.xlu0 %v7328, 96
      %v7415 = vpop.permute.xlu0 %7414
      %7416 = vrot.lane.b32.xlu0 %v7329, 96
      %v7417 = vpop.permute.xlu0 %7416
      %7418 = vrot.lane.b32.xlu0 %v7330, 96
      %v7419 = vpop.permute.xlu0 %7418
      %7420 = vrot.lane.b32.xlu0 %v7331, 96
      %v7421 = vpop.permute.xlu0 %7420
      %7422 = vrot.lane.b32.xlu0 %v7332, 96
      %v7423 = vpop.permute.xlu0 %7422
      %7424 = vrot.lane.b32.xlu0 %v7333, 96
      %v7425 = vpop.permute.xlu0 %7424
      %7426 = vrot.lane.b32.xlu0 %v7334, 96
      %v7427 = vpop.permute.xlu0 %7426
      %7428 = vrot.lane.b32.xlu0 %v7335, 96
      %v7429 = vpop.permute.xlu0 %7428
      %7430 = vrot.lane.b32.xlu0 %v7336, 96
      %v7431 = vpop.permute.xlu0 %7430
      %7432 = vrot.lane.b32.xlu0 %v7337, 96
      %v7433 = vpop.permute.xlu0 %7432
      %v7466 = vadd.f32 %v7018, %v7371
      %v7467 = vadd.f32 %v7019, %v7373
      %v7468 = vadd.f32 %v7020, %v7375
      %v7469 = vadd.f32 %v7021, %v7377
      %v7470 = vadd.f32 %v7022, %v7379
      %v7471 = vadd.f32 %v7023, %v7381
      %v7472 = vadd.f32 %v7024, %v7383
      %v7473 = vadd.f32 %v7025, %v7385
      %v7474 = vadd.f32 %v7026, %v7387
      %v7475 = vadd.f32 %v7027, %v7389
      %v7476 = vadd.f32 %v7028, %v7391
      %v7477 = vadd.f32 %v7029, %v7393
      %v7478 = vadd.f32 %v7030, %v7395
      %v7479 = vadd.f32 %v7031, %v7397
      %v7480 = vadd.f32 %v7032, %v7399
      %v7481 = vadd.f32 %v7033, %v7401
      %v7482 = vadd.f32 %v7034, %v7403
      %v7483 = vadd.f32 %v7035, %v7405
      %v7484 = vadd.f32 %v7036, %v7407
      %v7485 = vadd.f32 %v7037, %v7409
      %v7486 = vadd.f32 %v7038, %v7411
      %v7487 = vadd.f32 %v7039, %v7413
      %v7488 = vadd.f32 %v7040, %v7415
      %v7489 = vadd.f32 %v7041, %v7417
      %v7490 = vadd.f32 %v7042, %v7419
      %v7491 = vadd.f32 %v7043, %v7421
      %v7492 = vadd.f32 %v7044, %v7423
      %v7493 = vadd.f32 %v7045, %v7425
      %v7494 = vadd.f32 %v7046, %v7427
      %v7495 = vadd.f32 %v7047, %v7429
      %v7496 = vadd.f32 %v7048, %v7431
      %v7497 = vadd.f32 %v7049, %v7433
      %v7498 = vmul.f32 %v7466, 0.5
      %v7499 = vmul.f32 %v7467, 0.5
      %v7500 = vmul.f32 %v7468, 0.5
      %v7501 = vmul.f32 %v7469, 0.5
      %v7502 = vmul.f32 %v7470, 0.5
      %v7503 = vmul.f32 %v7471, 0.5
      %v7504 = vmul.f32 %v7472, 0.5
      %v7505 = vmul.f32 %v7473, 0.5
      %v7506 = vmul.f32 %v7474, 0.5
      %v7507 = vmul.f32 %v7475, 0.5
      %v7508 = vmul.f32 %v7476, 0.5
      %v7509 = vmul.f32 %v7477, 0.5
      %v7510 = vmul.f32 %v7478, 0.5
      %v7511 = vmul.f32 %v7479, 0.5
      %v7512 = vmul.f32 %v7480, 0.5
      %v7513 = vmul.f32 %v7481, 0.5
      %v7514 = vmul.f32 %v7482, 0.5
      %v7515 = vmul.f32 %v7483, 0.5
      %v7516 = vmul.f32 %v7484, 0.5
      %v7517 = vmul.f32 %v7485, 0.5
      %v7518 = vmul.f32 %v7486, 0.5
      %v7519 = vmul.f32 %v7487, 0.5
      %v7520 = vmul.f32 %v7488, 0.5
      %v7521 = vmul.f32 %v7489, 0.5
      %v7522 = vmul.f32 %v7490, 0.5
      %v7523 = vmul.f32 %v7491, 0.5
      %v7524 = vmul.f32 %v7492, 0.5
      %v7525 = vmul.f32 %v7493, 0.5
      %v7526 = vmul.f32 %v7494, 0.5
      %v7527 = vmul.f32 %v7495, 0.5
      %v7528 = vmul.f32 %v7496, 0.5
      %v7529 = vmul.f32 %v7497, 0.5
      %v7530 = vmul.f32 %v7466, 0.70710677
      %v7531 = vmul.f32 %v7467, 0.70710677
      %v7532 = vmul.f32 %v7468, 0.70710677
      %v7533 = vmul.f32 %v7469, 0.70710677
      %v7534 = vmul.f32 %v7470, 0.70710677
      %v7535 = vmul.f32 %v7471, 0.70710677
      %v7536 = vmul.f32 %v7472, 0.70710677
      %v7537 = vmul.f32 %v7473, 0.70710677
      %v7538 = vmul.f32 %v7474, 0.70710677
      %v7539 = vmul.f32 %v7475, 0.70710677
      %v7540 = vmul.f32 %v7476, 0.70710677
      %v7541 = vmul.f32 %v7477, 0.70710677
      %v7542 = vmul.f32 %v7478, 0.70710677
      %v7543 = vmul.f32 %v7479, 0.70710677
      %v7544 = vmul.f32 %v7480, 0.70710677
      %v7545 = vmul.f32 %v7481, 0.70710677
      %v7546 = vmul.f32 %v7482, 0.70710677
      %v7547 = vmul.f32 %v7483, 0.70710677
      %v7548 = vmul.f32 %v7484, 0.70710677
      %v7549 = vmul.f32 %v7485, 0.70710677
      %v7550 = vmul.f32 %v7486, 0.70710677
      %v7551 = vmul.f32 %v7487, 0.70710677
      %v7552 = vmul.f32 %v7488, 0.70710677
      %v7553 = vmul.f32 %v7489, 0.70710677
      %v7554 = vmul.f32 %v7490, 0.70710677
      %v7555 = vmul.f32 %v7491, 0.70710677
      %v7556 = vmul.f32 %v7492, 0.70710677
      %v7557 = vmul.f32 %v7493, 0.70710677
      %v7558 = vmul.f32 %v7494, 0.70710677
      %v7559 = vmul.f32 %v7495, 0.70710677
      %v7560 = vmul.f32 %v7496, 0.70710677
      %v7561 = vmul.f32 %v7497, 0.70710677
      %v7562 = vand.u32 2147483647, %v7530
      %v7563 = vand.u32 2147483647, %v7531
      %v7564 = vand.u32 2147483647, %v7532
      %v7565 = vand.u32 2147483647, %v7533
      %v7566 = vand.u32 2147483647, %v7534
      %v7567 = vand.u32 2147483647, %v7535
      %v7568 = vand.u32 2147483647, %v7536
      %v7569 = vand.u32 2147483647, %v7537
      %v7570 = vand.u32 2147483647, %v7538
      %v7571 = vand.u32 2147483647, %v7539
      %v7572 = vand.u32 2147483647, %v7540
      %v7573 = vand.u32 2147483647, %v7541
      %v7574 = vand.u32 2147483647, %v7542
      %v7575 = vand.u32 2147483647, %v7543
      %v7576 = vand.u32 2147483647, %v7544
      %v7577 = vand.u32 2147483647, %v7545
      %v7578 = vand.u32 2147483647, %v7546
      %v7579 = vand.u32 2147483647, %v7547
      %v7580 = vand.u32 2147483647, %v7548
      %v7581 = vand.u32 2147483647, %v7549
      %v7582 = vand.u32 2147483647, %v7550
      %v7583 = vand.u32 2147483647, %v7551
      %v7584 = vand.u32 2147483647, %v7552
      %v7585 = vand.u32 2147483647, %v7553
      %v7586 = vand.u32 2147483647, %v7554
      %v7587 = vand.u32 2147483647, %v7555
      %v7588 = vand.u32 2147483647, %v7556
      %v7589 = vand.u32 2147483647, %v7557
      %v7590 = vand.u32 2147483647, %v7558
      %v7591 = vand.u32 2147483647, %v7559
      %v7592 = vand.u32 2147483647, %v7560
      %v7593 = vand.u32 2147483647, %v7561
      %v7594 = vmul.f32 %v7562, 0.3275911
      %v7595 = vmul.f32 %v7563, 0.3275911
      %v7596 = vmul.f32 %v7564, 0.3275911
      %v7597 = vmul.f32 %v7565, 0.3275911
      %v7598 = vmul.f32 %v7566, 0.3275911
      %v7599 = vmul.f32 %v7567, 0.3275911
      %v7600 = vmul.f32 %v7568, 0.3275911
      %v7601 = vmul.f32 %v7569, 0.3275911
      %v7602 = vmul.f32 %v7570, 0.3275911
      %v7603 = vmul.f32 %v7571, 0.3275911
      %v7604 = vmul.f32 %v7572, 0.3275911
      %v7605 = vmul.f32 %v7573, 0.3275911
      %v7606 = vmul.f32 %v7574, 0.3275911
      %v7607 = vmul.f32 %v7575, 0.3275911
      %v7608 = vmul.f32 %v7576, 0.3275911
      %v7609 = vmul.f32 %v7577, 0.3275911
      %v7610 = vmul.f32 %v7578, 0.3275911
      %v7611 = vmul.f32 %v7579, 0.3275911
      %v7612 = vmul.f32 %v7580, 0.3275911
      %v7613 = vmul.f32 %v7581, 0.3275911
      %v7614 = vmul.f32 %v7582, 0.3275911
      %v7615 = vmul.f32 %v7583, 0.3275911
      %v7616 = vmul.f32 %v7584, 0.3275911
      %v7617 = vmul.f32 %v7585, 0.3275911
      %v7618 = vmul.f32 %v7586, 0.3275911
      %v7619 = vmul.f32 %v7587, 0.3275911
      %v7620 = vmul.f32 %v7588, 0.3275911
      %v7621 = vmul.f32 %v7589, 0.3275911
      %v7622 = vmul.f32 %v7590, 0.3275911
      %v7623 = vmul.f32 %v7591, 0.3275911
      %v7624 = vmul.f32 %v7592, 0.3275911
      %v7625 = vmul.f32 %v7593, 0.3275911
      %v7626 = vadd.f32 %v7594, 1.0
      %v7627 = vadd.f32 %v7595, 1.0
      %v7628 = vadd.f32 %v7596, 1.0
      %v7629 = vadd.f32 %v7597, 1.0
      %v7630 = vadd.f32 %v7598, 1.0
      %v7631 = vadd.f32 %v7599, 1.0
      %v7632 = vadd.f32 %v7600, 1.0
      %v7633 = vadd.f32 %v7601, 1.0
      %v7634 = vadd.f32 %v7602, 1.0
      %v7635 = vadd.f32 %v7603, 1.0
      %v7636 = vadd.f32 %v7604, 1.0
      %v7637 = vadd.f32 %v7605, 1.0
      %v7638 = vadd.f32 %v7606, 1.0
      %v7639 = vadd.f32 %v7607, 1.0
      %v7640 = vadd.f32 %v7608, 1.0
      %v7641 = vadd.f32 %v7609, 1.0
      %v7642 = vadd.f32 %v7610, 1.0
      %v7643 = vadd.f32 %v7611, 1.0
      %v7644 = vadd.f32 %v7612, 1.0
      %v7645 = vadd.f32 %v7613, 1.0
      %v7646 = vadd.f32 %v7614, 1.0
      %v7647 = vadd.f32 %v7615, 1.0
      %v7648 = vadd.f32 %v7616, 1.0
      %v7649 = vadd.f32 %v7617, 1.0
      %v7650 = vadd.f32 %v7618, 1.0
      %v7651 = vadd.f32 %v7619, 1.0
      %v7652 = vadd.f32 %v7620, 1.0
      %v7653 = vadd.f32 %v7621, 1.0
      %v7654 = vadd.f32 %v7622, 1.0
      %v7655 = vadd.f32 %v7623, 1.0
      %v7656 = vadd.f32 %v7624, 1.0
      %v7657 = vadd.f32 %v7625, 1.0
      %v7658 = vrcp.pop %v7626
      %v7659 = vrcp.pop %v7627
      %v7660 = vrcp.pop %v7628
      %v7661 = vrcp.pop %v7629
      %v7662 = vrcp.pop %v7630
      %v7663 = vrcp.pop %v7631
      %v7664 = vrcp.pop %v7632
      %v7665 = vrcp.pop %v7633
      %v7666 = vrcp.pop %v7634
      %v7667 = vrcp.pop %v7635
      %v7668 = vrcp.pop %v7636
      %v7669 = vrcp.pop %v7637
      %v7670 = vrcp.pop %v7638
      %v7671 = vrcp.pop %v7639
      %v7672 = vrcp.pop %v7640
      %v7673 = vrcp.pop %v7641
      %v7674 = vrcp.pop %v7642
      %v7675 = vrcp.pop %v7643
      %v7676 = vrcp.pop %v7644
      %v7677 = vrcp.pop %v7645
      %v7678 = vrcp.pop %v7646
      %v7679 = vrcp.pop %v7647
      %v7680 = vrcp.pop %v7648
      %v7681 = vrcp.pop %v7649
      %v7682 = vrcp.pop %v7650
      %v7683 = vrcp.pop %v7651
      %v7684 = vrcp.pop %v7652
      %v7685 = vrcp.pop %v7653
      %v7686 = vrcp.pop %v7654
      %v7687 = vrcp.pop %v7655
      %v7688 = vrcp.pop %v7656
      %v7689 = vrcp.pop %v7657
      %v7690 = vmul.f32 %v7658, 1.0614054
      %v7691 = vmul.f32 %v7659, 1.0614054
      %v7692 = vmul.f32 %v7660, 1.0614054
      %v7693 = vmul.f32 %v7661, 1.0614054
      %v7694 = vmul.f32 %v7662, 1.0614054
      %v7695 = vmul.f32 %v7663, 1.0614054
      %v7696 = vmul.f32 %v7664, 1.0614054
      %v7697 = vmul.f32 %v7665, 1.0614054
      %v7698 = vmul.f32 %v7666, 1.0614054
      %v7699 = vmul.f32 %v7667, 1.0614054
      %v7700 = vmul.f32 %v7668, 1.0614054
      %v7701 = vmul.f32 %v7669, 1.0614054
      %v7702 = vmul.f32 %v7670, 1.0614054
      %v7703 = vmul.f32 %v7671, 1.0614054
      %v7704 = vmul.f32 %v7672, 1.0614054
      %v7705 = vmul.f32 %v7673, 1.0614054
      %v7706 = vmul.f32 %v7674, 1.0614054
      %v7707 = vmul.f32 %v7675, 1.0614054
      %v7708 = vmul.f32 %v7676, 1.0614054
      %v7709 = vmul.f32 %v7677, 1.0614054
      %v7710 = vmul.f32 %v7678, 1.0614054
      %v7711 = vmul.f32 %v7679, 1.0614054
      %v7712 = vmul.f32 %v7680, 1.0614054
      %v7713 = vmul.f32 %v7681, 1.0614054
      %v7714 = vmul.f32 %v7682, 1.0614054
      %v7715 = vmul.f32 %v7683, 1.0614054
      %v7716 = vmul.f32 %v7684, 1.0614054
      %v7717 = vmul.f32 %v7685, 1.0614054
      %v7718 = vmul.f32 %v7686, 1.0614054
      %v7719 = vmul.f32 %v7687, 1.0614054
      %v7720 = vmul.f32 %v7688, 1.0614054
      %v7721 = vmul.f32 %v7689, 1.0614054
      %v7722 = vadd.f32 %v7690, -1.4531521
      %v7723 = vadd.f32 %v7691, -1.4531521
      %v7724 = vadd.f32 %v7692, -1.4531521
      %v7725 = vadd.f32 %v7693, -1.4531521
      %v7726 = vadd.f32 %v7694, -1.4531521
      %v7727 = vadd.f32 %v7695, -1.4531521
      %v7728 = vadd.f32 %v7696, -1.4531521
      %v7729 = vadd.f32 %v7697, -1.4531521
      %v7730 = vadd.f32 %v7698, -1.4531521
      %v7731 = vadd.f32 %v7699, -1.4531521
      %v7732 = vadd.f32 %v7700, -1.4531521
      %v7733 = vadd.f32 %v7701, -1.4531521
      %v7734 = vadd.f32 %v7702, -1.4531521
      %v7735 = vadd.f32 %v7703, -1.4531521
      %v7736 = vadd.f32 %v7704, -1.4531521
      %v7737 = vadd.f32 %v7705, -1.4531521
      %v7738 = vadd.f32 %v7706, -1.4531521
      %v7739 = vadd.f32 %v7707, -1.4531521
      %v7740 = vadd.f32 %v7708, -1.4531521
      %v7741 = vadd.f32 %v7709, -1.4531521
      %v7742 = vadd.f32 %v7710, -1.4531521
      %v7743 = vadd.f32 %v7711, -1.4531521
      %v7744 = vadd.f32 %v7712, -1.4531521
      %v7745 = vadd.f32 %v7713, -1.4531521
      %v7746 = vadd.f32 %v7714, -1.4531521
      %v7747 = vadd.f32 %v7715, -1.4531521
      %v7748 = vadd.f32 %v7716, -1.4531521
      %v7749 = vadd.f32 %v7717, -1.4531521
      %v7750 = vadd.f32 %v7718, -1.4531521
      %v7751 = vadd.f32 %v7719, -1.4531521
      %v7752 = vadd.f32 %v7720, -1.4531521
      %v7753 = vadd.f32 %v7721, -1.4531521
      %v7754 = vmul.f32 %v7722, %v7658
      %v7755 = vmul.f32 %v7723, %v7659
      %v7756 = vmul.f32 %v7724, %v7660
      %v7757 = vmul.f32 %v7725, %v7661
      %v7758 = vmul.f32 %v7726, %v7662
      %v7759 = vmul.f32 %v7727, %v7663
      %v7760 = vmul.f32 %v7728, %v7664
      %v7761 = vmul.f32 %v7729, %v7665
      %v7762 = vmul.f32 %v7730, %v7666
      %v7763 = vmul.f32 %v7731, %v7667
      %v7764 = vmul.f32 %v7732, %v7668
      %v7765 = vmul.f32 %v7733, %v7669
      %v7766 = vmul.f32 %v7734, %v7670
      %v7767 = vmul.f32 %v7735, %v7671
      %v7768 = vmul.f32 %v7736, %v7672
      %v7769 = vmul.f32 %v7737, %v7673
      %v7770 = vmul.f32 %v7738, %v7674
      %v7771 = vmul.f32 %v7739, %v7675
      %v7772 = vmul.f32 %v7740, %v7676
      %v7773 = vmul.f32 %v7741, %v7677
      %v7774 = vmul.f32 %v7742, %v7678
      %v7775 = vmul.f32 %v7743, %v7679
      %v7776 = vmul.f32 %v7744, %v7680
      %v7777 = vmul.f32 %v7745, %v7681
      %v7778 = vmul.f32 %v7746, %v7682
      %v7779 = vmul.f32 %v7747, %v7683
      %v7780 = vmul.f32 %v7748, %v7684
      %v7781 = vmul.f32 %v7749, %v7685
      %v7782 = vmul.f32 %v7750, %v7686
      %v7783 = vmul.f32 %v7751, %v7687
      %v7784 = vmul.f32 %v7752, %v7688
      %v7785 = vmul.f32 %v7753, %v7689
      %v7786 = vadd.f32 %v7754, 1.4214138
      %v7787 = vadd.f32 %v7755, 1.4214138
      %v7788 = vadd.f32 %v7756, 1.4214138
      %v7789 = vadd.f32 %v7757, 1.4214138
      %v7790 = vadd.f32 %v7758, 1.4214138
      %v7791 = vadd.f32 %v7759, 1.4214138
      %v7792 = vadd.f32 %v7760, 1.4214138
      %v7793 = vadd.f32 %v7761, 1.4214138
      %v7794 = vadd.f32 %v7762, 1.4214138
      %v7795 = vadd.f32 %v7763, 1.4214138
      %v7796 = vadd.f32 %v7764, 1.4214138
      %v7797 = vadd.f32 %v7765, 1.4214138
      %v7798 = vadd.f32 %v7766, 1.4214138
      %v7799 = vadd.f32 %v7767, 1.4214138
      %v7800 = vadd.f32 %v7768, 1.4214138
      %v7801 = vadd.f32 %v7769, 1.4214138
      %v7802 = vadd.f32 %v7770, 1.4214138
      %v7803 = vadd.f32 %v7771, 1.4214138
      %v7804 = vadd.f32 %v7772, 1.4214138
      %v7805 = vadd.f32 %v7773, 1.4214138
      %v7806 = vadd.f32 %v7774, 1.4214138
      %v7807 = vadd.f32 %v7775, 1.4214138
      %v7808 = vadd.f32 %v7776, 1.4214138
      %v7809 = vadd.f32 %v7777, 1.4214138
      %v7810 = vadd.f32 %v7778, 1.4214138
      %v7811 = vadd.f32 %v7779, 1.4214138
      %v7812 = vadd.f32 %v7780, 1.4214138
      %v7813 = vadd.f32 %v7781, 1.4214138
      %v7814 = vadd.f32 %v7782, 1.4214138
      %v7815 = vadd.f32 %v7783, 1.4214138
      %v7816 = vadd.f32 %v7784, 1.4214138
      %v7817 = vadd.f32 %v7785, 1.4214138
      %v7818 = vmul.f32 %v7786, %v7658
      %v7819 = vmul.f32 %v7787, %v7659
      %v7820 = vmul.f32 %v7788, %v7660
      %v7821 = vmul.f32 %v7789, %v7661
      %v7822 = vmul.f32 %v7790, %v7662
      %v7823 = vmul.f32 %v7791, %v7663
      %v7824 = vmul.f32 %v7792, %v7664
      %v7825 = vmul.f32 %v7793, %v7665
      %v7826 = vmul.f32 %v7794, %v7666
      %v7827 = vmul.f32 %v7795, %v7667
      %v7828 = vmul.f32 %v7796, %v7668
      %v7829 = vmul.f32 %v7797, %v7669
      %v7830 = vmul.f32 %v7798, %v7670
      %v7831 = vmul.f32 %v7799, %v7671
      %v7832 = vmul.f32 %v7800, %v7672
      %v7833 = vmul.f32 %v7801, %v7673
      %v7834 = vmul.f32 %v7802, %v7674
      %v7835 = vmul.f32 %v7803, %v7675
      %v7836 = vmul.f32 %v7804, %v7676
      %v7837 = vmul.f32 %v7805, %v7677
      %v7838 = vmul.f32 %v7806, %v7678
      %v7839 = vmul.f32 %v7807, %v7679
      %v7840 = vmul.f32 %v7808, %v7680
      %v7841 = vmul.f32 %v7809, %v7681
      %v7842 = vmul.f32 %v7810, %v7682
      %v7843 = vmul.f32 %v7811, %v7683
      %v7844 = vmul.f32 %v7812, %v7684
      %v7845 = vmul.f32 %v7813, %v7685
      %v7846 = vmul.f32 %v7814, %v7686
      %v7847 = vmul.f32 %v7815, %v7687
      %v7848 = vmul.f32 %v7816, %v7688
      %v7849 = vmul.f32 %v7817, %v7689
      %v7850 = vadd.f32 %v7818, -0.28449672
      %v7851 = vadd.f32 %v7819, -0.28449672
      %v7852 = vadd.f32 %v7820, -0.28449672
      %v7853 = vadd.f32 %v7821, -0.28449672
      %v7854 = vadd.f32 %v7822, -0.28449672
      %v7855 = vadd.f32 %v7823, -0.28449672
      %v7856 = vadd.f32 %v7824, -0.28449672
      %v7857 = vadd.f32 %v7825, -0.28449672
      %v7858 = vadd.f32 %v7826, -0.28449672
      %v7859 = vadd.f32 %v7827, -0.28449672
      %v7860 = vadd.f32 %v7828, -0.28449672
      %v7861 = vadd.f32 %v7829, -0.28449672
      %v7862 = vadd.f32 %v7830, -0.28449672
      %v7863 = vadd.f32 %v7831, -0.28449672
      %v7864 = vadd.f32 %v7832, -0.28449672
      %v7865 = vadd.f32 %v7833, -0.28449672
      %v7866 = vadd.f32 %v7834, -0.28449672
      %v7867 = vadd.f32 %v7835, -0.28449672
      %v7868 = vadd.f32 %v7836, -0.28449672
      %v7869 = vadd.f32 %v7837, -0.28449672
      %v7870 = vadd.f32 %v7838, -0.28449672
      %v7871 = vadd.f32 %v7839, -0.28449672
      %v7872 = vadd.f32 %v7840, -0.28449672
      %v7873 = vadd.f32 %v7841, -0.28449672
      %v7874 = vadd.f32 %v7842, -0.28449672
      %v7875 = vadd.f32 %v7843, -0.28449672
      %v7876 = vadd.f32 %v7844, -0.28449672
      %v7877 = vadd.f32 %v7845, -0.28449672
      %v7878 = vadd.f32 %v7846, -0.28449672
      %v7879 = vadd.f32 %v7847, -0.28449672
      %v7880 = vadd.f32 %v7848, -0.28449672
      %v7881 = vadd.f32 %v7849, -0.28449672
      %v7882 = vmul.f32 %v7850, %v7658
      %v7883 = vmul.f32 %v7851, %v7659
      %v7884 = vmul.f32 %v7852, %v7660
      %v7885 = vmul.f32 %v7853, %v7661
      %v7886 = vmul.f32 %v7854, %v7662
      %v7887 = vmul.f32 %v7855, %v7663
      %v7888 = vmul.f32 %v7856, %v7664
      %v7889 = vmul.f32 %v7857, %v7665
      %v7890 = vmul.f32 %v7858, %v7666
      %v7891 = vmul.f32 %v7859, %v7667
      %v7892 = vmul.f32 %v7860, %v7668
      %v7893 = vmul.f32 %v7861, %v7669
      %v7894 = vmul.f32 %v7862, %v7670
      %v7895 = vmul.f32 %v7863, %v7671
      %v7896 = vmul.f32 %v7864, %v7672
      %v7897 = vmul.f32 %v7865, %v7673
      %v7898 = vmul.f32 %v7866, %v7674
      %v7899 = vmul.f32 %v7867, %v7675
      %v7900 = vmul.f32 %v7868, %v7676
      %v7901 = vmul.f32 %v7869, %v7677
      %v7902 = vmul.f32 %v7870, %v7678
      %v7903 = vmul.f32 %v7871, %v7679
      %v7904 = vmul.f32 %v7872, %v7680
      %v7905 = vmul.f32 %v7873, %v7681
      %v7906 = vmul.f32 %v7874, %v7682
      %v7907 = vmul.f32 %v7875, %v7683
      %v7908 = vmul.f32 %v7876, %v7684
      %v7909 = vmul.f32 %v7877, %v7685
      %v7910 = vmul.f32 %v7878, %v7686
      %v7911 = vmul.f32 %v7879, %v7687
      %v7912 = vmul.f32 %v7880, %v7688
      %v7913 = vmul.f32 %v7881, %v7689
      %v7914 = vadd.f32 %v7882, 0.2548296
      %v7915 = vadd.f32 %v7883, 0.2548296
      %v7916 = vadd.f32 %v7884, 0.2548296
      %v7917 = vadd.f32 %v7885, 0.2548296
      %v7918 = vadd.f32 %v7886, 0.2548296
      %v7919 = vadd.f32 %v7887, 0.2548296
      %v7920 = vadd.f32 %v7888, 0.2548296
      %v7921 = vadd.f32 %v7889, 0.2548296
      %v7922 = vadd.f32 %v7890, 0.2548296
      %v7923 = vadd.f32 %v7891, 0.2548296
      %v7924 = vadd.f32 %v7892, 0.2548296
      %v7925 = vadd.f32 %v7893, 0.2548296
      %v7926 = vadd.f32 %v7894, 0.2548296
      %v7927 = vadd.f32 %v7895, 0.2548296
      %v7928 = vadd.f32 %v7896, 0.2548296
      %v7929 = vadd.f32 %v7897, 0.2548296
      %v7930 = vadd.f32 %v7898, 0.2548296
      %v7931 = vadd.f32 %v7899, 0.2548296
      %v7932 = vadd.f32 %v7900, 0.2548296
      %v7933 = vadd.f32 %v7901, 0.2548296
      %v7934 = vadd.f32 %v7902, 0.2548296
      %v7935 = vadd.f32 %v7903, 0.2548296
      %v7936 = vadd.f32 %v7904, 0.2548296
      %v7937 = vadd.f32 %v7905, 0.2548296
      %v7938 = vadd.f32 %v7906, 0.2548296
      %v7939 = vadd.f32 %v7907, 0.2548296
      %v7940 = vadd.f32 %v7908, 0.2548296
      %v7941 = vadd.f32 %v7909, 0.2548296
      %v7942 = vadd.f32 %v7910, 0.2548296
      %v7943 = vadd.f32 %v7911, 0.2548296
      %v7944 = vadd.f32 %v7912, 0.2548296
      %v7945 = vadd.f32 %v7913, 0.2548296
      %v7946 = vmul.f32 %v7914, %v7658
      %v7947 = vmul.f32 %v7915, %v7659
      %v7948 = vmul.f32 %v7916, %v7660
      %v7949 = vmul.f32 %v7917, %v7661
      %v7950 = vmul.f32 %v7918, %v7662
      %v7951 = vmul.f32 %v7919, %v7663
      %v7952 = vmul.f32 %v7920, %v7664
      %v7953 = vmul.f32 %v7921, %v7665
      %v7954 = vmul.f32 %v7922, %v7666
      %v7955 = vmul.f32 %v7923, %v7667
      %v7956 = vmul.f32 %v7924, %v7668
      %v7957 = vmul.f32 %v7925, %v7669
      %v7958 = vmul.f32 %v7926, %v7670
      %v7959 = vmul.f32 %v7927, %v7671
      %v7960 = vmul.f32 %v7928, %v7672
      %v7961 = vmul.f32 %v7929, %v7673
      %v7962 = vmul.f32 %v7930, %v7674
      %v7963 = vmul.f32 %v7931, %v7675
      %v7964 = vmul.f32 %v7932, %v7676
      %v7965 = vmul.f32 %v7933, %v7677
      %v7966 = vmul.f32 %v7934, %v7678
      %v7967 = vmul.f32 %v7935, %v7679
      %v7968 = vmul.f32 %v7936, %v7680
      %v7969 = vmul.f32 %v7937, %v7681
      %v7970 = vmul.f32 %v7938, %v7682
      %v7971 = vmul.f32 %v7939, %v7683
      %v7972 = vmul.f32 %v7940, %v7684
      %v7973 = vmul.f32 %v7941, %v7685
      %v7974 = vmul.f32 %v7942, %v7686
      %v7975 = vmul.f32 %v7943, %v7687
      %v7976 = vmul.f32 %v7944, %v7688
      %v7977 = vmul.f32 %v7945, %v7689
      %v7978 = vsub.f32 0.0, %v7562
      %v7979 = vsub.f32 0.0, %v7563
      %v7980 = vsub.f32 0.0, %v7564
      %v7981 = vsub.f32 0.0, %v7565
      %v7982 = vsub.f32 0.0, %v7566
      %v7983 = vsub.f32 0.0, %v7567
      %v7984 = vsub.f32 0.0, %v7568
      %v7985 = vsub.f32 0.0, %v7569
      %v7986 = vsub.f32 0.0, %v7570
      %v7987 = vsub.f32 0.0, %v7571
      %v7988 = vsub.f32 0.0, %v7572
      %v7989 = vsub.f32 0.0, %v7573
      %v7990 = vsub.f32 0.0, %v7574
      %v7991 = vsub.f32 0.0, %v7575
      %v7992 = vsub.f32 0.0, %v7576
      %v7993 = vsub.f32 0.0, %v7577
      %v7994 = vsub.f32 0.0, %v7578
      %v7995 = vsub.f32 0.0, %v7579
      %v7996 = vsub.f32 0.0, %v7580
      %v7997 = vsub.f32 0.0, %v7581
      %v7998 = vsub.f32 0.0, %v7582
      %v7999 = vsub.f32 0.0, %v7583
      %v8000 = vsub.f32 0.0, %v7584
      %v8001 = vsub.f32 0.0, %v7585
      %v8002 = vsub.f32 0.0, %v7586
      %v8003 = vsub.f32 0.0, %v7587
      %v8004 = vsub.f32 0.0, %v7588
      %v8005 = vsub.f32 0.0, %v7589
      %v8006 = vsub.f32 0.0, %v7590
      %v8007 = vsub.f32 0.0, %v7591
      %v8008 = vsub.f32 0.0, %v7592
      %v8009 = vsub.f32 0.0, %v7593
      %v8010 = vmul.f32 %v7978, %v7562
      %v8011 = vmul.f32 %v7979, %v7563
      %v8012 = vmul.f32 %v7980, %v7564
      %v8013 = vmul.f32 %v7981, %v7565
      %v8014 = vmul.f32 %v7982, %v7566
      %v8015 = vmul.f32 %v7983, %v7567
      %v8016 = vmul.f32 %v7984, %v7568
      %v8017 = vmul.f32 %v7985, %v7569
      %v8018 = vmul.f32 %v7986, %v7570
      %v8019 = vmul.f32 %v7987, %v7571
      %v8020 = vmul.f32 %v7988, %v7572
      %v8021 = vmul.f32 %v7989, %v7573
      %v8022 = vmul.f32 %v7990, %v7574
      %v8023 = vmul.f32 %v7991, %v7575
      %v8024 = vmul.f32 %v7992, %v7576
      %v8025 = vmul.f32 %v7993, %v7577
      %v8026 = vmul.f32 %v7994, %v7578
      %v8027 = vmul.f32 %v7995, %v7579
      %v8028 = vmul.f32 %v7996, %v7580
      %v8029 = vmul.f32 %v7997, %v7581
      %v8030 = vmul.f32 %v7998, %v7582
      %v8031 = vmul.f32 %v7999, %v7583
      %v8032 = vmul.f32 %v8000, %v7584
      %v8033 = vmul.f32 %v8001, %v7585
      %v8034 = vmul.f32 %v8002, %v7586
      %v8035 = vmul.f32 %v8003, %v7587
      %v8036 = vmul.f32 %v8004, %v7588
      %v8037 = vmul.f32 %v8005, %v7589
      %v8038 = vmul.f32 %v8006, %v7590
      %v8039 = vmul.f32 %v8007, %v7591
      %v8040 = vmul.f32 %v8008, %v7592
      %v8041 = vmul.f32 %v8009, %v7593
      %v8042 = vmul.f32 %v8010, 1.442695
      %v8043 = vpow.pop %v8042
      %v8044 = vmul.f32 %v8011, 1.442695
      %v8045 = vpow.pop %v8044
      %v8046 = vmul.f32 %v8012, 1.442695
      %v8047 = vpow.pop %v8046
      %v8048 = vmul.f32 %v8013, 1.442695
      %v8049 = vpow.pop %v8048
      %v8050 = vmul.f32 %v8014, 1.442695
      %v8051 = vpow.pop %v8050
      %v8052 = vmul.f32 %v8015, 1.442695
      %v8053 = vpow.pop %v8052
      %v8054 = vmul.f32 %v8016, 1.442695
      %v8055 = vpow.pop %v8054
      %v8056 = vmul.f32 %v8017, 1.442695
      %v8057 = vpow.pop %v8056
      %v8058 = vmul.f32 %v8018, 1.442695
      %v8059 = vpow.pop %v8058
      %v8060 = vmul.f32 %v8019, 1.442695
      %v8061 = vpow.pop %v8060
      %v8062 = vmul.f32 %v8020, 1.442695
      %v8063 = vpow.pop %v8062
      %v8064 = vmul.f32 %v8021, 1.442695
      %v8065 = vpow.pop %v8064
      %v8066 = vmul.f32 %v8022, 1.442695
      %v8067 = vpow.pop %v8066
      %v8068 = vmul.f32 %v8023, 1.442695
      %v8069 = vpow.pop %v8068
      %v8070 = vmul.f32 %v8024, 1.442695
      %v8071 = vpow.pop %v8070
      %v8072 = vmul.f32 %v8025, 1.442695
      %v8073 = vpow.pop %v8072
      %v8074 = vmul.f32 %v8026, 1.442695
      %v8075 = vpow.pop %v8074
      %v8076 = vmul.f32 %v8027, 1.442695
      %v8077 = vpow.pop %v8076
      %v8078 = vmul.f32 %v8028, 1.442695
      %v8079 = vpow.pop %v8078
      %v8080 = vmul.f32 %v8029, 1.442695
      %v8081 = vpow.pop %v8080
      %v8082 = vmul.f32 %v8030, 1.442695
      %v8083 = vpow.pop %v8082
      %v8084 = vmul.f32 %v8031, 1.442695
      %v8085 = vpow.pop %v8084
      %v8086 = vmul.f32 %v8032, 1.442695
      %v8087 = vpow.pop %v8086
      %v8088 = vmul.f32 %v8033, 1.442695
      %v8089 = vpow.pop %v8088
      %v8090 = vmul.f32 %v8034, 1.442695
      %v8091 = vpow.pop %v8090
      %v8092 = vmul.f32 %v8035, 1.442695
      %v8093 = vpow.pop %v8092
      %v8094 = vmul.f32 %v8036, 1.442695
      %v8095 = vpow.pop %v8094
      %v8096 = vmul.f32 %v8037, 1.442695
      %v8097 = vpow.pop %v8096
      %v8098 = vmul.f32 %v8038, 1.442695
      %v8099 = vpow.pop %v8098
      %v8100 = vmul.f32 %v8039, 1.442695
      %v8101 = vpow.pop %v8100
      %v8102 = vmul.f32 %v8040, 1.442695
      %v8103 = vpow.pop %v8102
      %v8104 = vmul.f32 %v8041, 1.442695
      %v8105 = vpow.pop %v8104
      %v8106 = vmul.f32 %v7946, %v8043
      %v8107 = vmul.f32 %v7947, %v8045
      %v8108 = vmul.f32 %v7948, %v8047
      %v8109 = vmul.f32 %v7949, %v8049
      %v8110 = vmul.f32 %v7950, %v8051
      %v8111 = vmul.f32 %v7951, %v8053
      %v8112 = vmul.f32 %v7952, %v8055
      %v8113 = vmul.f32 %v7953, %v8057
      %v8114 = vmul.f32 %v7954, %v8059
      %v8115 = vmul.f32 %v7955, %v8061
      %v8116 = vmul.f32 %v7956, %v8063
      %v8117 = vmul.f32 %v7957, %v8065
      %v8118 = vmul.f32 %v7958, %v8067
      %v8119 = vmul.f32 %v7959, %v8069
      %v8120 = vmul.f32 %v7960, %v8071
      %v8121 = vmul.f32 %v7961, %v8073
      %v8122 = vmul.f32 %v7962, %v8075
      %v8123 = vmul.f32 %v7963, %v8077
      %v8124 = vmul.f32 %v7964, %v8079
      %v8125 = vmul.f32 %v7965, %v8081
      %v8126 = vmul.f32 %v7966, %v8083
      %v8127 = vmul.f32 %v7967, %v8085
      %v8128 = vmul.f32 %v7968, %v8087
      %v8129 = vmul.f32 %v7969, %v8089
      %v8130 = vmul.f32 %v7970, %v8091
      %v8131 = vmul.f32 %v7971, %v8093
      %v8132 = vmul.f32 %v7972, %v8095
      %v8133 = vmul.f32 %v7973, %v8097
      %v8134 = vmul.f32 %v7974, %v8099
      %v8135 = vmul.f32 %v7975, %v8101
      %v8136 = vmul.f32 %v7976, %v8103
      %v8137 = vmul.f32 %v7977, %v8105
      %v8138 = vsub.f32 1.0, %v8106
      %v8139 = vsub.f32 1.0, %v8107
      %v8140 = vsub.f32 1.0, %v8108
      %v8141 = vsub.f32 1.0, %v8109
      %v8142 = vsub.f32 1.0, %v8110
      %v8143 = vsub.f32 1.0, %v8111
      %v8144 = vsub.f32 1.0, %v8112
      %v8145 = vsub.f32 1.0, %v8113
      %v8146 = vsub.f32 1.0, %v8114
      %v8147 = vsub.f32 1.0, %v8115
      %v8148 = vsub.f32 1.0, %v8116
      %v8149 = vsub.f32 1.0, %v8117
      %v8150 = vsub.f32 1.0, %v8118
      %v8151 = vsub.f32 1.0, %v8119
      %v8152 = vsub.f32 1.0, %v8120
      %v8153 = vsub.f32 1.0, %v8121
      %v8154 = vsub.f32 1.0, %v8122
      %v8155 = vsub.f32 1.0, %v8123
      %v8156 = vsub.f32 1.0, %v8124
      %v8157 = vsub.f32 1.0, %v8125
      %v8158 = vsub.f32 1.0, %v8126
      %v8159 = vsub.f32 1.0, %v8127
      %v8160 = vsub.f32 1.0, %v8128
      %v8161 = vsub.f32 1.0, %v8129
      %v8162 = vsub.f32 1.0, %v8130
      %v8163 = vsub.f32 1.0, %v8131
      %v8164 = vsub.f32 1.0, %v8132
      %v8165 = vsub.f32 1.0, %v8133
      %v8166 = vsub.f32 1.0, %v8134
      %v8167 = vsub.f32 1.0, %v8135
      %v8168 = vsub.f32 1.0, %v8136
      %v8169 = vsub.f32 1.0, %v8137
      %vm8170 = vcmp.ge.f32.partialorder %v7530, 0.0
      %vm8171 = vcmp.ge.f32.partialorder %v7531, 0.0
      %vm8172 = vcmp.ge.f32.partialorder %v7532, 0.0
      %vm8173 = vcmp.ge.f32.partialorder %v7533, 0.0
      %vm8174 = vcmp.ge.f32.partialorder %v7534, 0.0
      %vm8175 = vcmp.ge.f32.partialorder %v7535, 0.0
      %vm8176 = vcmp.ge.f32.partialorder %v7536, 0.0
      %vm8177 = vcmp.ge.f32.partialorder %v7537, 0.0
      %vm8178 = vcmp.ge.f32.partialorder %v7538, 0.0
      %vm8179 = vcmp.ge.f32.partialorder %v7539, 0.0
      %vm8180 = vcmp.ge.f32.partialorder %v7540, 0.0
      %vm8181 = vcmp.ge.f32.partialorder %v7541, 0.0
      %vm8182 = vcmp.ge.f32.partialorder %v7542, 0.0
      %vm8183 = vcmp.ge.f32.partialorder %v7543, 0.0
      %vm8184 = vcmp.ge.f32.partialorder %v7544, 0.0
      %vm8185 = vcmp.ge.f32.partialorder %v7545, 0.0
      %vm8186 = vcmp.ge.f32.partialorder %v7546, 0.0
      %vm8187 = vcmp.ge.f32.partialorder %v7547, 0.0
      %vm8188 = vcmp.ge.f32.partialorder %v7548, 0.0
      %vm8189 = vcmp.ge.f32.partialorder %v7549, 0.0
      %vm8190 = vcmp.ge.f32.partialorder %v7550, 0.0
      %vm8191 = vcmp.ge.f32.partialorder %v7551, 0.0
      %vm8192 = vcmp.ge.f32.partialorder %v7552, 0.0
      %vm8193 = vcmp.ge.f32.partialorder %v7553, 0.0
      %vm8194 = vcmp.ge.f32.partialorder %v7554, 0.0
      %vm8195 = vcmp.ge.f32.partialorder %v7555, 0.0
      %vm8196 = vcmp.ge.f32.partialorder %v7556, 0.0
      %vm8197 = vcmp.ge.f32.partialorder %v7557, 0.0
      %vm8198 = vcmp.ge.f32.partialorder %v7558, 0.0
      %vm8199 = vcmp.ge.f32.partialorder %v7559, 0.0
      %vm8200 = vcmp.ge.f32.partialorder %v7560, 0.0
      %vm8201 = vcmp.ge.f32.partialorder %v7561, 0.0
      %v8202 = vsub.f32 0.0, %v8138
      %v8203 = vsub.f32 0.0, %v8139
      %v8204 = vsub.f32 0.0, %v8140
      %v8205 = vsub.f32 0.0, %v8141
      %v8206 = vsub.f32 0.0, %v8142
      %v8207 = vsub.f32 0.0, %v8143
      %v8208 = vsub.f32 0.0, %v8144
      %v8209 = vsub.f32 0.0, %v8145
      %v8210 = vsub.f32 0.0, %v8146
      %v8211 = vsub.f32 0.0, %v8147
      %v8212 = vsub.f32 0.0, %v8148
      %v8213 = vsub.f32 0.0, %v8149
      %v8214 = vsub.f32 0.0, %v8150
      %v8215 = vsub.f32 0.0, %v8151
      %v8216 = vsub.f32 0.0, %v8152
      %v8217 = vsub.f32 0.0, %v8153
      %v8218 = vsub.f32 0.0, %v8154
      %v8219 = vsub.f32 0.0, %v8155
      %v8220 = vsub.f32 0.0, %v8156
      %v8221 = vsub.f32 0.0, %v8157
      %v8222 = vsub.f32 0.0, %v8158
      %v8223 = vsub.f32 0.0, %v8159
      %v8224 = vsub.f32 0.0, %v8160
      %v8225 = vsub.f32 0.0, %v8161
      %v8226 = vsub.f32 0.0, %v8162
      %v8227 = vsub.f32 0.0, %v8163
      %v8228 = vsub.f32 0.0, %v8164
      %v8229 = vsub.f32 0.0, %v8165
      %v8230 = vsub.f32 0.0, %v8166
      %v8231 = vsub.f32 0.0, %v8167
      %v8232 = vsub.f32 0.0, %v8168
      %v8233 = vsub.f32 0.0, %v8169
      %v8234 = vsel %vm8170, %v8138, %v8202
      %v8235 = vsel %vm8171, %v8139, %v8203
      %v8236 = vsel %vm8172, %v8140, %v8204
      %v8237 = vsel %vm8173, %v8141, %v8205
      %v8238 = vsel %vm8174, %v8142, %v8206
      %v8239 = vsel %vm8175, %v8143, %v8207
      %v8240 = vsel %vm8176, %v8144, %v8208
      %v8241 = vsel %vm8177, %v8145, %v8209
      %v8242 = vsel %vm8178, %v8146, %v8210
      %v8243 = vsel %vm8179, %v8147, %v8211
      %v8244 = vsel %vm8180, %v8148, %v8212
      %v8245 = vsel %vm8181, %v8149, %v8213
      %v8246 = vsel %vm8182, %v8150, %v8214
      %v8247 = vsel %vm8183, %v8151, %v8215
      %v8248 = vsel %vm8184, %v8152, %v8216
      %v8249 = vsel %vm8185, %v8153, %v8217
      %v8250 = vsel %vm8186, %v8154, %v8218
      %v8251 = vsel %vm8187, %v8155, %v8219
      %v8252 = vsel %vm8188, %v8156, %v8220
      %v8253 = vsel %vm8189, %v8157, %v8221
      %v8254 = vsel %vm8190, %v8158, %v8222
      %v8255 = vsel %vm8191, %v8159, %v8223
      %v8256 = vsel %vm8192, %v8160, %v8224
      %v8257 = vsel %vm8193, %v8161, %v8225
      %v8258 = vsel %vm8194, %v8162, %v8226
      %v8259 = vsel %vm8195, %v8163, %v8227
      %v8260 = vsel %vm8196, %v8164, %v8228
      %v8261 = vsel %vm8197, %v8165, %v8229
      %v8262 = vsel %vm8198, %v8166, %v8230
      %v8263 = vsel %vm8199, %v8167, %v8231
      %v8264 = vsel %vm8200, %v8168, %v8232
      %v8265 = vsel %vm8201, %v8169, %v8233
      %v8266 = vadd.f32 %v8234, 1.0
      %v8267 = vadd.f32 %v8235, 1.0
      %v8268 = vadd.f32 %v8236, 1.0
      %v8269 = vadd.f32 %v8237, 1.0
      %v8270 = vadd.f32 %v8238, 1.0
      %v8271 = vadd.f32 %v8239, 1.0
      %v8272 = vadd.f32 %v8240, 1.0
      %v8273 = vadd.f32 %v8241, 1.0
      %v8274 = vadd.f32 %v8242, 1.0
      %v8275 = vadd.f32 %v8243, 1.0
      %v8276 = vadd.f32 %v8244, 1.0
      %v8277 = vadd.f32 %v8245, 1.0
      %v8278 = vadd.f32 %v8246, 1.0
      %v8279 = vadd.f32 %v8247, 1.0
      %v8280 = vadd.f32 %v8248, 1.0
      %v8281 = vadd.f32 %v8249, 1.0
      %v8282 = vadd.f32 %v8250, 1.0
      %v8283 = vadd.f32 %v8251, 1.0
      %v8284 = vadd.f32 %v8252, 1.0
      %v8285 = vadd.f32 %v8253, 1.0
      %v8286 = vadd.f32 %v8254, 1.0
      %v8287 = vadd.f32 %v8255, 1.0
      %v8288 = vadd.f32 %v8256, 1.0
      %v8289 = vadd.f32 %v8257, 1.0
      %v8290 = vadd.f32 %v8258, 1.0
      %v8291 = vadd.f32 %v8259, 1.0
      %v8292 = vadd.f32 %v8260, 1.0
      %v8293 = vadd.f32 %v8261, 1.0
      %v8294 = vadd.f32 %v8262, 1.0
      %v8295 = vadd.f32 %v8263, 1.0
      %v8296 = vadd.f32 %v8264, 1.0
      %v8297 = vadd.f32 %v8265, 1.0
      %v8298 = vmul.f32 %v7498, %v8266
      %v8299 = vmul.f32 %v7499, %v8267
      %v8300 = vmul.f32 %v7500, %v8268
      %v8301 = vmul.f32 %v7501, %v8269
      %v8302 = vmul.f32 %v7502, %v8270
      %v8303 = vmul.f32 %v7503, %v8271
      %v8304 = vmul.f32 %v7504, %v8272
      %v8305 = vmul.f32 %v7505, %v8273
      %v8306 = vmul.f32 %v7506, %v8274
      %v8307 = vmul.f32 %v7507, %v8275
      %v8308 = vmul.f32 %v7508, %v8276
      %v8309 = vmul.f32 %v7509, %v8277
      %v8310 = vmul.f32 %v7510, %v8278
      %v8311 = vmul.f32 %v7511, %v8279
      %v8312 = vmul.f32 %v7512, %v8280
      %v8313 = vmul.f32 %v7513, %v8281
      %v8314 = vmul.f32 %v7514, %v8282
      %v8315 = vmul.f32 %v7515, %v8283
      %v8316 = vmul.f32 %v7516, %v8284
      %v8317 = vmul.f32 %v7517, %v8285
      %v8318 = vmul.f32 %v7518, %v8286
      %v8319 = vmul.f32 %v7519, %v8287
      %v8320 = vmul.f32 %v7520, %v8288
      %v8321 = vmul.f32 %v7521, %v8289
      %v8322 = vmul.f32 %v7522, %v8290
      %v8323 = vmul.f32 %v7523, %v8291
      %v8324 = vmul.f32 %v7524, %v8292
      %v8325 = vmul.f32 %v7525, %v8293
      %v8326 = vmul.f32 %v7526, %v8294
      %v8327 = vmul.f32 %v7527, %v8295
      %v8328 = vmul.f32 %v7528, %v8296
      %v8329 = vmul.f32 %v7529, %v8297
      %v8330 = vpack.c.bf16 %v8299, %v8298
      %v8331 = vpack.c.bf16 %v8301, %v8300
      %v8332 = vpack.c.bf16 %v8303, %v8302
      %v8333 = vpack.c.bf16 %v8305, %v8304
      %v8334 = vpack.c.bf16 %v8307, %v8306
      %v8335 = vpack.c.bf16 %v8309, %v8308
      %v8336 = vpack.c.bf16 %v8311, %v8310
      %v8337 = vpack.c.bf16 %v8313, %v8312
      %v8338 = vpack.c.bf16 %v8315, %v8314
      %v8339 = vpack.c.bf16 %v8317, %v8316
      %v8340 = vpack.c.bf16 %v8319, %v8318
      %v8341 = vpack.c.bf16 %v8321, %v8320
      %v8342 = vpack.c.bf16 %v8323, %v8322
      %v8343 = vpack.c.bf16 %v8325, %v8324
      %v8344 = vpack.c.bf16 %v8327, %v8326
      %v8345 = vpack.c.bf16 %v8329, %v8328
      %v8346 = vld [vmem:[%s4] sm:$0xff]
      %v8347 = vld [vmem:[%s4 + $0x8] sm:$0xff]
      %v8348 = vld [vmem:[%s4 + $0x10] sm:$0xff]
      %v8349 = vld [vmem:[%s4 + $0x18] sm:$0xff]
      %8366 = vrot.lane.b32.xlu0 %v8330, 32
      %v8367 = vpop.permute.xlu0 %8366
      %8368 = vrot.lane.b32.xlu0 %v8331, 32
      %v8369 = vpop.permute.xlu0 %8368
      %8370 = vrot.lane.b32.xlu0 %v8332, 32
      %v8371 = vpop.permute.xlu0 %8370
      %8372 = vrot.lane.b32.xlu0 %v8333, 32
      %v8373 = vpop.permute.xlu0 %8372
      %8374 = vrot.lane.b32.xlu0 %v8334, 32
      %v8375 = vpop.permute.xlu0 %8374
      %8376 = vrot.lane.b32.xlu0 %v8335, 32
      %v8377 = vpop.permute.xlu0 %8376
      %8378 = vrot.lane.b32.xlu0 %v8336, 32
      %v8379 = vpop.permute.xlu0 %8378
      %8380 = vrot.lane.b32.xlu0 %v8337, 32
      %v8381 = vpop.permute.xlu0 %8380
      %8382 = vrot.lane.b32.xlu0 %v8338, 32
      %v8383 = vpop.permute.xlu0 %8382
      %8384 = vrot.lane.b32.xlu0 %v8339, 32
      %v8385 = vpop.permute.xlu0 %8384
      %8386 = vrot.lane.b32.xlu0 %v8340, 32
      %v8387 = vpop.permute.xlu0 %8386
      %8388 = vrot.lane.b32.xlu0 %v8341, 32
      %v8389 = vpop.permute.xlu0 %8388
      %8390 = vrot.lane.b32.xlu0 %v8342, 32
      %v8391 = vpop.permute.xlu0 %8390
      %8392 = vrot.lane.b32.xlu0 %v8343, 32
      %v8393 = vpop.permute.xlu0 %8392
      %8394 = vrot.lane.b32.xlu0 %v8344, 32
      %v8395 = vpop.permute.xlu0 %8394
      %8396 = vrot.lane.b32.xlu0 %v8345, 32
      %v8397 = vpop.permute.xlu0 %8396
      %v8402 = vunpack.c.l.b16 %v8346
      %v8403 = vunpack.c.h.b16 %v8346
      %v8404 = vunpack.c.l.b16 %v8347
      %v8405 = vunpack.c.h.b16 %v8347
      %v8406 = vunpack.c.l.b16 %v8348
      %v8407 = vunpack.c.h.b16 %v8348
      %v8408 = vunpack.c.l.b16 %v8349
      %v8409 = vunpack.c.h.b16 %v8349
      %v8410 = vpack.c.b16 %v8404, %v8402
      %v8411 = vpack.c.b16 %v8405, %v8403
      %v8412 = vpack.c.b16 %v8408, %v8406
      %v8413 = vpack.c.b16 %v8409, %v8407
      %vm8418 = vcmask 261120
      %v8420 = vsel %vm8418, %v8367, 0
      %v8423 = vsel %vm8418, %v8369, 0
      %v8426 = vsel %vm8418, %v8371, 0
      %v8429 = vsel %vm8418, %v8373, 0
      %v8432 = vsel %vm8418, %v8375, 0
      %v8435 = vsel %vm8418, %v8377, 0
      %v8438 = vsel %vm8418, %v8379, 0
      %v8441 = vsel %vm8418, %v8381, 0
      %v8444 = vsel %vm8418, %v8383, 0
      %v8447 = vsel %vm8418, %v8385, 0
      %v8450 = vsel %vm8418, %v8387, 0
      %v8453 = vsel %vm8418, %v8389, 0
      %v8456 = vsel %vm8418, %v8391, 0
      %v8459 = vsel %vm8418, %v8393, 0
      %v8462 = vsel %vm8418, %v8395, 0
      %v8465 = vsel %vm8418, %v8397, 0
      %8467 = vmatprep.subr.bf16.mxu0 0
      %8468 = vmatpush1.bf16.msra.mxu0 0
      %8469 = vmatprep.subr.bf16.mxu0 0
      %8470 = vmatpush1.bf16.msra.mxu0 0
      %8471 = vmatprep.subr.bf16.mxu0 0
      %8472 = vmatpush1.bf16.msra.mxu0 0
      %8473 = vmatprep.subr.bf16.mxu0 0
      %8474 = vmatpush1.bf16.msra.mxu0 0
      %8475 = vmatprep.subr.bf16.mxu0 0
      %8476 = vmatpush1.bf16.msra.mxu0 0
      %8477 = vmatprep.subr.bf16.mxu0 0
      %8478 = vmatpush1.bf16.msra.mxu0 0
      %8479 = vmatprep.subr.bf16.mxu0 %v8413
      %8480 = vmatpush1.bf16.msra.mxu0 %v8412
      %8481 = vmatprep.subr.bf16.mxu0 %v8411
      %8482 = vmatpush1.bf16.msra.mxu0 %v8410
      %8483 = vmatprep.subr.bf16.mxu0 0
      %8484 = vmatpush2.bf16.msra.mxu0 0
      %8485 = vmatprep.subr.bf16.mxu0 0
      %8486 = vmatpush2.bf16.msra.mxu0 0
      %8487 = vmatprep.subr.bf16.mxu0 0
      %8488 = vmatpush2.bf16.msra.mxu0 0
      %8489 = vmatprep.subr.bf16.mxu0 0
      %8490 = vmatpush2.bf16.msra.mxu0 0
      %8491 = vmatprep.subr.bf16.mxu0 0
      %8492 = vmatpush2.bf16.msra.mxu0 0
      %8493 = vmatprep.subr.bf16.mxu0 0
      %8494 = vmatpush2.bf16.msra.mxu0 0
      %8495 = vmatprep.subr.bf16.mxu0 0
      %8496 = vmatpush2.bf16.msra.mxu0 0
      %8497 = vmatprep.subr.bf16.mxu0 0
      %8498 = vmatpush2.bf16.msra.mxu0 0
      %8499 = vmatprep.mubr.bf16.mxu0 0
      %8500 = vmatmul.mubr.bf16.gmra.mxu0 %v8420
      %v8501 = vpop.f32.mrf.mxu0
      %v8502 = vadd.f32 0.0, %v8501
      %v8503 = vpop.f32.mrf.mxu0
      %v8504 = vadd.f32 0.0, %v8503
      %v8505 = vpop.f32.mrf.mxu0
      %v8506 = vadd.f32 0.0, %v8505
      %v8507 = vpop.f32.mrf.mxu0
      %v8508 = vadd.f32 0.0, %v8507
      %8509 = vmatprep.mubr.bf16.mxu0 0
      %8510 = vmatmul.mubr.bf16.gmra.mxu0 %v8423
      %v8511 = vpop.f32.mrf.mxu0
      %v8512 = vadd.f32 0.0, %v8511
      %v8513 = vpop.f32.mrf.mxu0
      %v8514 = vadd.f32 0.0, %v8513
      %v8515 = vpop.f32.mrf.mxu0
      %v8516 = vadd.f32 0.0, %v8515
      %v8517 = vpop.f32.mrf.mxu0
      %v8518 = vadd.f32 0.0, %v8517
      %8519 = vmatprep.mubr.bf16.mxu0 0
      %8520 = vmatmul.mubr.bf16.gmra.mxu0 %v8426
      %v8521 = vpop.f32.mrf.mxu0
      %v8522 = vadd.f32 0.0, %v8521
      %v8523 = vpop.f32.mrf.mxu0
      %v8524 = vadd.f32 0.0, %v8523
      %v8525 = vpop.f32.mrf.mxu0
      %v8526 = vadd.f32 0.0, %v8525
      %v8527 = vpop.f32.mrf.mxu0
      %v8528 = vadd.f32 0.0, %v8527
      %8529 = vmatprep.mubr.bf16.mxu0 0
      %8530 = vmatmul.mubr.bf16.gmra.mxu0 %v8429
      %v8531 = vpop.f32.mrf.mxu0
      %v8532 = vadd.f32 0.0, %v8531
      %v8533 = vpop.f32.mrf.mxu0
      %v8534 = vadd.f32 0.0, %v8533
      %v8535 = vpop.f32.mrf.mxu0
      %v8536 = vadd.f32 0.0, %v8535
      %v8537 = vpop.f32.mrf.mxu0
      %v8538 = vadd.f32 0.0, %v8537
      %8539 = vmatprep.mubr.bf16.mxu0 0
      %8540 = vmatmul.mubr.bf16.gmra.mxu0 %v8432
      %v8541 = vpop.f32.mrf.mxu0
      %v8542 = vadd.f32 0.0, %v8541
      %v8543 = vpop.f32.mrf.mxu0
      %v8544 = vadd.f32 0.0, %v8543
      %v8545 = vpop.f32.mrf.mxu0
      %v8546 = vadd.f32 0.0, %v8545
      %v8547 = vpop.f32.mrf.mxu0
      %v8548 = vadd.f32 0.0, %v8547
      %8549 = vmatprep.mubr.bf16.mxu0 0
      %8550 = vmatmul.mubr.bf16.gmra.mxu0 %v8435
      %v8551 = vpop.f32.mrf.mxu0
      %v8552 = vadd.f32 0.0, %v8551
      %v8553 = vpop.f32.mrf.mxu0
      %v8554 = vadd.f32 0.0, %v8553
      %v8555 = vpop.f32.mrf.mxu0
      %v8556 = vadd.f32 0.0, %v8555
      %v8557 = vpop.f32.mrf.mxu0
      %v8558 = vadd.f32 0.0, %v8557
      %8559 = vmatprep.mubr.bf16.mxu0 0
      %8560 = vmatmul.mubr.bf16.gmra.mxu0 %v8438
      %v8561 = vpop.f32.mrf.mxu0
      %v8562 = vadd.f32 0.0, %v8561
      %v8563 = vpop.f32.mrf.mxu0
      %v8564 = vadd.f32 0.0, %v8563
      %v8565 = vpop.f32.mrf.mxu0
      %v8566 = vadd.f32 0.0, %v8565
      %v8567 = vpop.f32.mrf.mxu0
      %v8568 = vadd.f32 0.0, %v8567
      %8569 = vmatprep.mubr.bf16.mxu0 0
      %8570 = vmatmul.mubr.bf16.gmra.mxu0 %v8441
      %v8571 = vpop.f32.mrf.mxu0
      %v8572 = vadd.f32 0.0, %v8571
      %v8573 = vpop.f32.mrf.mxu0
      %v8574 = vadd.f32 0.0, %v8573
      %v8575 = vpop.f32.mrf.mxu0
      %v8576 = vadd.f32 0.0, %v8575
      %v8577 = vpop.f32.mrf.mxu0
      %v8578 = vadd.f32 0.0, %v8577
      %8579 = vmatprep.mubr.bf16.mxu0 0
      %8580 = vmatmul.mubr.bf16.gmra.mxu0 %v8444
      %v8581 = vpop.f32.mrf.mxu0
      %v8582 = vadd.f32 0.0, %v8581
      %v8583 = vpop.f32.mrf.mxu0
      %v8584 = vadd.f32 0.0, %v8583
      %v8585 = vpop.f32.mrf.mxu0
      %v8586 = vadd.f32 0.0, %v8585
      %v8587 = vpop.f32.mrf.mxu0
      %v8588 = vadd.f32 0.0, %v8587
      %8589 = vmatprep.mubr.bf16.mxu0 0
      %8590 = vmatmul.mubr.bf16.gmra.mxu0 %v8447
      %v8591 = vpop.f32.mrf.mxu0
      %v8592 = vadd.f32 0.0, %v8591
      %v8593 = vpop.f32.mrf.mxu0
      %v8594 = vadd.f32 0.0, %v8593
      %v8595 = vpop.f32.mrf.mxu0
      %v8596 = vadd.f32 0.0, %v8595
      %v8597 = vpop.f32.mrf.mxu0
      %v8598 = vadd.f32 0.0, %v8597
      %8599 = vmatprep.mubr.bf16.mxu0 0
      %8600 = vmatmul.mubr.bf16.gmra.mxu0 %v8450
      %v8601 = vpop.f32.mrf.mxu0
      %v8602 = vadd.f32 0.0, %v8601
      %v8603 = vpop.f32.mrf.mxu0
      %v8604 = vadd.f32 0.0, %v8603
      %v8605 = vpop.f32.mrf.mxu0
      %v8606 = vadd.f32 0.0, %v8605
      %v8607 = vpop.f32.mrf.mxu0
      %v8608 = vadd.f32 0.0, %v8607
      %8609 = vmatprep.mubr.bf16.mxu0 0
      %8610 = vmatmul.mubr.bf16.gmra.mxu0 %v8453
      %v8611 = vpop.f32.mrf.mxu0
      %v8612 = vadd.f32 0.0, %v8611
      %v8613 = vpop.f32.mrf.mxu0
      %v8614 = vadd.f32 0.0, %v8613
      %v8615 = vpop.f32.mrf.mxu0
      %v8616 = vadd.f32 0.0, %v8615
      %v8617 = vpop.f32.mrf.mxu0
      %v8618 = vadd.f32 0.0, %v8617
      %8619 = vmatprep.mubr.bf16.mxu0 0
      %8620 = vmatmul.mubr.bf16.gmra.mxu0 %v8456
      %v8621 = vpop.f32.mrf.mxu0
      %v8622 = vadd.f32 0.0, %v8621
      %v8623 = vpop.f32.mrf.mxu0
      %v8624 = vadd.f32 0.0, %v8623
      %v8625 = vpop.f32.mrf.mxu0
      %v8626 = vadd.f32 0.0, %v8625
      %v8627 = vpop.f32.mrf.mxu0
      %v8628 = vadd.f32 0.0, %v8627
      %8629 = vmatprep.mubr.bf16.mxu0 0
      %8630 = vmatmul.mubr.bf16.gmra.mxu0 %v8459
      %v8631 = vpop.f32.mrf.mxu0
      %v8632 = vadd.f32 0.0, %v8631
      %v8633 = vpop.f32.mrf.mxu0
      %v8634 = vadd.f32 0.0, %v8633
      %v8635 = vpop.f32.mrf.mxu0
      %v8636 = vadd.f32 0.0, %v8635
      %v8637 = vpop.f32.mrf.mxu0
      %v8638 = vadd.f32 0.0, %v8637
      %8639 = vmatprep.mubr.bf16.mxu0 0
      %8640 = vmatmul.mubr.bf16.gmra.mxu0 %v8462
      %v8641 = vpop.f32.mrf.mxu0
      %v8642 = vadd.f32 0.0, %v8641
      %v8643 = vpop.f32.mrf.mxu0
      %v8644 = vadd.f32 0.0, %v8643
      %v8645 = vpop.f32.mrf.mxu0
      %v8646 = vadd.f32 0.0, %v8645
      %v8647 = vpop.f32.mrf.mxu0
      %v8648 = vadd.f32 0.0, %v8647
      %8649 = vmatprep.mubr.bf16.mxu0 0
      %8650 = vmatmul.mubr.bf16.gmra.mxu0 %v8465
      %v8651 = vpop.f32.mrf.mxu0
      %v8652 = vadd.f32 0.0, %v8651
      %v8653 = vpop.f32.mrf.mxu0
      %v8654 = vadd.f32 0.0, %v8653
      %v8655 = vpop.f32.mrf.mxu0
      %v8656 = vadd.f32 0.0, %v8655
      %v8657 = vpop.f32.mrf.mxu0
      %v8658 = vadd.f32 0.0, %v8657
      %8659 = vdwg.mxu0
      %v8660 = vld [vmem:[%s5] sm:$0x1]
      %v8662 = vlaneseq
      %v8663 = vshrl.u32 %v8662, 7
      %v8664 = vsub.s32 0, %v8663
      %v8665 = vrot.slane %v8660, %v8664
      %8666 = vrot.lane.b32.xlu0 %v8665, 64
      %v8667 = vpop.permute.xlu0 %8666
      %v8669 = vadd.f32 %v8502, %v8667
      %v8670 = vadd.f32 %v8506, %v8667
      %v8671 = vadd.f32 %v8512, %v8667
      %v8672 = vadd.f32 %v8516, %v8667
      %v8673 = vadd.f32 %v8522, %v8667
      %v8674 = vadd.f32 %v8526, %v8667
      %v8675 = vadd.f32 %v8532, %v8667
      %v8676 = vadd.f32 %v8536, %v8667
      %v8677 = vadd.f32 %v8542, %v8667
      %v8678 = vadd.f32 %v8546, %v8667
      %v8679 = vadd.f32 %v8552, %v8667
      %v8680 = vadd.f32 %v8556, %v8667
      %v8681 = vadd.f32 %v8562, %v8667
      %v8682 = vadd.f32 %v8566, %v8667
      %v8683 = vadd.f32 %v8572, %v8667
      %v8684 = vadd.f32 %v8576, %v8667
      %v8685 = vadd.f32 %v8582, %v8667
      %v8686 = vadd.f32 %v8586, %v8667
      %v8687 = vadd.f32 %v8592, %v8667
      %v8688 = vadd.f32 %v8596, %v8667
      %v8689 = vadd.f32 %v8602, %v8667
      %v8690 = vadd.f32 %v8606, %v8667
      %v8691 = vadd.f32 %v8612, %v8667
      %v8692 = vadd.f32 %v8616, %v8667
      %v8693 = vadd.f32 %v8622, %v8667
      %v8694 = vadd.f32 %v8626, %v8667
      %v8695 = vadd.f32 %v8632, %v8667
      %v8696 = vadd.f32 %v8636, %v8667
      %v8697 = vadd.f32 %v8642, %v8667
      %v8698 = vadd.f32 %v8646, %v8667
      %v8699 = vadd.f32 %v8652, %v8667
      %v8700 = vadd.f32 %v8656, %v8667
      %v8701 = vrot.slane %v8502, 6
      %v8702 = vrot.slane %v8506, 6
      %v8703 = vrot.slane %v8512, 6
      %v8704 = vrot.slane %v8516, 6
      %v8705 = vrot.slane %v8522, 6
      %v8706 = vrot.slane %v8526, 6
      %v8707 = vrot.slane %v8532, 6
      %v8708 = vrot.slane %v8536, 6
      %v8709 = vrot.slane %v8542, 6
      %v8710 = vrot.slane %v8546, 6
      %v8711 = vrot.slane %v8552, 6
      %v8712 = vrot.slane %v8556, 6
      %v8713 = vrot.slane %v8562, 6
      %v8714 = vrot.slane %v8566, 6
      %v8715 = vrot.slane %v8572, 6
      %v8716 = vrot.slane %v8576, 6
      %v8717 = vrot.slane %v8582, 6
      %v8718 = vrot.slane %v8586, 6
      %v8719 = vrot.slane %v8592, 6
      %v8720 = vrot.slane %v8596, 6
      %v8721 = vrot.slane %v8602, 6
      %v8722 = vrot.slane %v8606, 6
      %v8723 = vrot.slane %v8612, 6
      %v8724 = vrot.slane %v8616, 6
      %v8725 = vrot.slane %v8622, 6
      %v8726 = vrot.slane %v8626, 6
      %v8727 = vrot.slane %v8632, 6
      %v8728 = vrot.slane %v8636, 6
      %v8729 = vrot.slane %v8642, 6
      %v8730 = vrot.slane %v8646, 6
      %v8731 = vrot.slane %v8652, 6
      %v8732 = vrot.slane %v8656, 6
      %v8733 = vsel %vm3720, %v8731, %v8732
      %v8734 = vsel %vm3720, %v8730, %v8731
      %v8735 = vsel %vm3720, %v8729, %v8730
      %v8736 = vsel %vm3720, %v8728, %v8729
      %v8737 = vsel %vm3720, %v8727, %v8728
      %v8738 = vsel %vm3720, %v8726, %v8727
      %v8739 = vsel %vm3720, %v8725, %v8726
      %v8740 = vsel %vm3720, %v8724, %v8725
      %v8741 = vsel %vm3720, %v8723, %v8724
      %v8742 = vsel %vm3720, %v8722, %v8723
      %v8743 = vsel %vm3720, %v8721, %v8722
      %v8744 = vsel %vm3720, %v8720, %v8721
      %v8745 = vsel %vm3720, %v8719, %v8720
      %v8746 = vsel %vm3720, %v8718, %v8719
      %v8747 = vsel %vm3720, %v8717, %v8718
      %v8748 = vsel %vm3720, %v8716, %v8717
      %v8749 = vsel %vm3720, %v8715, %v8716
      %v8750 = vsel %vm3720, %v8714, %v8715
      %v8751 = vsel %vm3720, %v8713, %v8714
      %v8752 = vsel %vm3720, %v8712, %v8713
      %v8753 = vsel %vm3720, %v8711, %v8712
      %v8754 = vsel %vm3720, %v8710, %v8711
      %v8755 = vsel %vm3720, %v8709, %v8710
      %v8756 = vsel %vm3720, %v8708, %v8709
      %v8757 = vsel %vm3720, %v8707, %v8708
      %v8758 = vsel %vm3720, %v8706, %v8707
      %v8759 = vsel %vm3720, %v8705, %v8706
      %v8760 = vsel %vm3720, %v8704, %v8705
      %v8761 = vsel %vm3720, %v8703, %v8704
      %v8762 = vsel %vm3720, %v8702, %v8703
      %v8763 = vsel %vm3720, %v8701, %v8702
      %v8764 = vsel %vm3720, %v8732, %v8701
      %v8765 = vmul.f32 %v8764, %v3817
      %v8766 = vmul.f32 %v8763, %v3818
      %v8767 = vmul.f32 %v8762, %v3819
      %v8768 = vmul.f32 %v8761, %v3820
      %v8769 = vmul.f32 %v8760, %v3821
      %v8770 = vmul.f32 %v8759, %v3822
      %v8771 = vmul.f32 %v8758, %v3823
      %v8772 = vmul.f32 %v8757, %v3824
      %v8773 = vmul.f32 %v8756, %v3825
      %v8774 = vmul.f32 %v8755, %v3826
      %v8775 = vmul.f32 %v8754, %v3827
      %v8776 = vmul.f32 %v8753, %v3828
      %v8777 = vmul.f32 %v8752, %v3829
      %v8778 = vmul.f32 %v8751, %v3830
      %v8779 = vmul.f32 %v8750, %v3831
      %v8780 = vmul.f32 %v8749, %v3832
      %v8781 = vmul.f32 %v8748, %v3833
      %v8782 = vmul.f32 %v8747, %v3834
      %v8783 = vmul.f32 %v8746, %v3835
      %v8784 = vmul.f32 %v8745, %v3836
      %v8785 = vmul.f32 %v8744, %v3837
      %v8786 = vmul.f32 %v8743, %v3838
      %v8787 = vmul.f32 %v8742, %v3839
      %v8788 = vmul.f32 %v8741, %v3840
      %v8789 = vmul.f32 %v8740, %v3841
      %v8790 = vmul.f32 %v8739, %v3842
      %v8791 = vmul.f32 %v8738, %v3843
      %v8792 = vmul.f32 %v8737, %v3844
      %v8793 = vmul.f32 %v8736, %v3845
      %v8794 = vmul.f32 %v8735, %v3846
      %v8795 = vmul.f32 %v8734, %v3847
      %v8796 = vmul.f32 %v8733, %v3848
      %8829 = vrot.lane.b32.xlu0 %v8765, 64
      %v8830 = vpop.permute.xlu0 %8829
      %8831 = vrot.lane.b32.xlu0 %v8766, 64
      %v8832 = vpop.permute.xlu0 %8831
      %8833 = vrot.lane.b32.xlu0 %v8767, 64
      %v8834 = vpop.permute.xlu0 %8833
      %8835 = vrot.lane.b32.xlu0 %v8768, 64
      %v8836 = vpop.permute.xlu0 %8835
      %8837 = vrot.lane.b32.xlu0 %v8769, 64
      %v8838 = vpop.permute.xlu0 %8837
      %8839 = vrot.lane.b32.xlu0 %v8770, 64
      %v8840 = vpop.permute.xlu0 %8839
      %8841 = vrot.lane.b32.xlu0 %v8771, 64
      %v8842 = vpop.permute.xlu0 %8841
      %8843 = vrot.lane.b32.xlu0 %v8772, 64
      %v8844 = vpop.permute.xlu0 %8843
      %8845 = vrot.lane.b32.xlu0 %v8773, 64
      %v8846 = vpop.permute.xlu0 %8845
      %8847 = vrot.lane.b32.xlu0 %v8774, 64
      %v8848 = vpop.permute.xlu0 %8847
      %8849 = vrot.lane.b32.xlu0 %v8775, 64
      %v8850 = vpop.permute.xlu0 %8849
      %8851 = vrot.lane.b32.xlu0 %v8776, 64
      %v8852 = vpop.permute.xlu0 %8851
      %8853 = vrot.lane.b32.xlu0 %v8777, 64
      %v8854 = vpop.permute.xlu0 %8853
      %8855 = vrot.lane.b32.xlu0 %v8778, 64
      %v8856 = vpop.permute.xlu0 %8855
      %8857 = vrot.lane.b32.xlu0 %v8779, 64
      %v8858 = vpop.permute.xlu0 %8857
      %8859 = vrot.lane.b32.xlu0 %v8780, 64
      %v8860 = vpop.permute.xlu0 %8859
      %8861 = vrot.lane.b32.xlu0 %v8781, 64
      %v8862 = vpop.permute.xlu0 %8861
      %8863 = vrot.lane.b32.xlu0 %v8782, 64
      %v8864 = vpop.permute.xlu0 %8863
      %8865 = vrot.lane.b32.xlu0 %v8783, 64
      %v8866 = vpop.permute.xlu0 %8865
      %8867 = vrot.lane.b32.xlu0 %v8784, 64
      %v8868 = vpop.permute.xlu0 %8867
      %8869 = vrot.lane.b32.xlu0 %v8785, 64
      %v8870 = vpop.permute.xlu0 %8869
      %8871 = vrot.lane.b32.xlu0 %v8786, 64
      %v8872 = vpop.permute.xlu0 %8871
      %8873 = vrot.lane.b32.xlu0 %v8787, 64
      %v8874 = vpop.permute.xlu0 %8873
      %8875 = vrot.lane.b32.xlu0 %v8788, 64
      %v8876 = vpop.permute.xlu0 %8875
      %8877 = vrot.lane.b32.xlu0 %v8789, 64
      %v8878 = vpop.permute.xlu0 %8877
      %8879 = vrot.lane.b32.xlu0 %v8790, 64
      %v8880 = vpop.permute.xlu0 %8879
      %8881 = vrot.lane.b32.xlu0 %v8791, 64
      %v8882 = vpop.permute.xlu0 %8881
      %8883 = vrot.lane.b32.xlu0 %v8792, 64
      %v8884 = vpop.permute.xlu0 %8883
      %8885 = vrot.lane.b32.xlu0 %v8793, 64
      %v8886 = vpop.permute.xlu0 %8885
      %8887 = vrot.lane.b32.xlu0 %v8794, 64
      %v8888 = vpop.permute.xlu0 %8887
      %8889 = vrot.lane.b32.xlu0 %v8795, 64
      %v8890 = vpop.permute.xlu0 %8889
      %8891 = vrot.lane.b32.xlu0 %v8796, 64
      %v8892 = vpop.permute.xlu0 %8891
      %v8925 = vadd.f32 %v8669, %v8830
      %v8926 = vadd.f32 %v8670, %v8832
      %v8927 = vadd.f32 %v8671, %v8834
      %v8928 = vadd.f32 %v8672, %v8836
      %v8929 = vadd.f32 %v8673, %v8838
      %v8930 = vadd.f32 %v8674, %v8840
      %v8931 = vadd.f32 %v8675, %v8842
      %v8932 = vadd.f32 %v8676, %v8844
      %v8933 = vadd.f32 %v8677, %v8846
      %v8934 = vadd.f32 %v8678, %v8848
      %v8935 = vadd.f32 %v8679, %v8850
      %v8936 = vadd.f32 %v8680, %v8852
      %v8937 = vadd.f32 %v8681, %v8854
      %v8938 = vadd.f32 %v8682, %v8856
      %v8939 = vadd.f32 %v8683, %v8858
      %v8940 = vadd.f32 %v8684, %v8860
      %v8941 = vadd.f32 %v8685, %v8862
      %v8942 = vadd.f32 %v8686, %v8864
      %v8943 = vadd.f32 %v8687, %v8866
      %v8944 = vadd.f32 %v8688, %v8868
      %v8945 = vadd.f32 %v8689, %v8870
      %v8946 = vadd.f32 %v8690, %v8872
      %v8947 = vadd.f32 %v8691, %v8874
      %v8948 = vadd.f32 %v8692, %v8876
      %v8949 = vadd.f32 %v8693, %v8878
      %v8950 = vadd.f32 %v8694, %v8880
      %v8951 = vadd.f32 %v8695, %v8882
      %v8952 = vadd.f32 %v8696, %v8884
      %v8953 = vadd.f32 %v8697, %v8886
      %v8954 = vadd.f32 %v8698, %v8888
      %v8955 = vadd.f32 %v8699, %v8890
      %v8956 = vadd.f32 %v8700, %v8892
      %8989 = vrot.lane.b32.xlu0 %v8502, 96
      %v8990 = vpop.permute.xlu0 %8989
      %8991 = vrot.lane.b32.xlu0 %v8506, 96
      %v8992 = vpop.permute.xlu0 %8991
      %8993 = vrot.lane.b32.xlu0 %v8512, 96
      %v8994 = vpop.permute.xlu0 %8993
      %8995 = vrot.lane.b32.xlu0 %v8516, 96
      %v8996 = vpop.permute.xlu0 %8995
      %8997 = vrot.lane.b32.xlu0 %v8522, 96
      %v8998 = vpop.permute.xlu0 %8997
      %8999 = vrot.lane.b32.xlu0 %v8526, 96
      %v9000 = vpop.permute.xlu0 %8999
      %9001 = vrot.lane.b32.xlu0 %v8532, 96
      %v9002 = vpop.permute.xlu0 %9001
      %9003 = vrot.lane.b32.xlu0 %v8536, 96
      %v9004 = vpop.permute.xlu0 %9003
      %9005 = vrot.lane.b32.xlu0 %v8542, 96
      %v9006 = vpop.permute.xlu0 %9005
      %9007 = vrot.lane.b32.xlu0 %v8546, 96
      %v9008 = vpop.permute.xlu0 %9007
      %9009 = vrot.lane.b32.xlu0 %v8552, 96
      %v9010 = vpop.permute.xlu0 %9009
      %9011 = vrot.lane.b32.xlu0 %v8556, 96
      %v9012 = vpop.permute.xlu0 %9011
      %9013 = vrot.lane.b32.xlu0 %v8562, 96
      %v9014 = vpop.permute.xlu0 %9013
      %9015 = vrot.lane.b32.xlu0 %v8566, 96
      %v9016 = vpop.permute.xlu0 %9015
      %9017 = vrot.lane.b32.xlu0 %v8572, 96
      %v9018 = vpop.permute.xlu0 %9017
      %9019 = vrot.lane.b32.xlu0 %v8576, 96
      %v9020 = vpop.permute.xlu0 %9019
      %9021 = vrot.lane.b32.xlu0 %v8582, 96
      %v9022 = vpop.permute.xlu0 %9021
      %9023 = vrot.lane.b32.xlu0 %v8586, 96
      %v9024 = vpop.permute.xlu0 %9023
      %9025 = vrot.lane.b32.xlu0 %v8592, 96
      %v9026 = vpop.permute.xlu0 %9025
      %9027 = vrot.lane.b32.xlu0 %v8596, 96
      %v9028 = vpop.permute.xlu0 %9027
      %9029 = vrot.lane.b32.xlu0 %v8602, 96
      %v9030 = vpop.permute.xlu0 %9029
      %9031 = vrot.lane.b32.xlu0 %v8606, 96
      %v9032 = vpop.permute.xlu0 %9031
      %9033 = vrot.lane.b32.xlu0 %v8612, 96
      %v9034 = vpop.permute.xlu0 %9033
      %9035 = vrot.lane.b32.xlu0 %v8616, 96
      %v9036 = vpop.permute.xlu0 %9035
      %9037 = vrot.lane.b32.xlu0 %v8622, 96
      %v9038 = vpop.permute.xlu0 %9037
      %9039 = vrot.lane.b32.xlu0 %v8626, 96
      %v9040 = vpop.permute.xlu0 %9039
      %9041 = vrot.lane.b32.xlu0 %v8632, 96
      %v9042 = vpop.permute.xlu0 %9041
      %9043 = vrot.lane.b32.xlu0 %v8636, 96
      %v9044 = vpop.permute.xlu0 %9043
      %9045 = vrot.lane.b32.xlu0 %v8642, 96
      %v9046 = vpop.permute.xlu0 %9045
      %9047 = vrot.lane.b32.xlu0 %v8646, 96
      %v9048 = vpop.permute.xlu0 %9047
      %9049 = vrot.lane.b32.xlu0 %v8652, 96
      %v9050 = vpop.permute.xlu0 %9049
      %9051 = vrot.lane.b32.xlu0 %v8656, 96
      %v9052 = vpop.permute.xlu0 %9051
      %v9085 = vrot.slane %v8990, 7
      %v9086 = vrot.slane %v8992, 7
      %v9087 = vrot.slane %v8994, 7
      %v9088 = vrot.slane %v8996, 7
      %v9089 = vrot.slane %v8998, 7
      %v9090 = vrot.slane %v9000, 7
      %v9091 = vrot.slane %v9002, 7
      %v9092 = vrot.slane %v9004, 7
      %v9093 = vrot.slane %v9006, 7
      %v9094 = vrot.slane %v9008, 7
      %v9095 = vrot.slane %v9010, 7
      %v9096 = vrot.slane %v9012, 7
      %v9097 = vrot.slane %v9014, 7
      %v9098 = vrot.slane %v9016, 7
      %v9099 = vrot.slane %v9018, 7
      %v9100 = vrot.slane %v9020, 7
      %v9101 = vrot.slane %v9022, 7
      %v9102 = vrot.slane %v9024, 7
      %v9103 = vrot.slane %v9026, 7
      %v9104 = vrot.slane %v9028, 7
      %v9105 = vrot.slane %v9030, 7
      %v9106 = vrot.slane %v9032, 7
      %v9107 = vrot.slane %v9034, 7
      %v9108 = vrot.slane %v9036, 7
      %v9109 = vrot.slane %v9038, 7
      %v9110 = vrot.slane %v9040, 7
      %v9111 = vrot.slane %v9042, 7
      %v9112 = vrot.slane %v9044, 7
      %v9113 = vrot.slane %v9046, 7
      %v9114 = vrot.slane %v9048, 7
      %v9115 = vrot.slane %v9050, 7
      %v9116 = vrot.slane %v9052, 7
      %v9117 = vsel %vm4169, %v9115, %v9116
      %v9118 = vsel %vm4169, %v9114, %v9115
      %v9119 = vsel %vm4169, %v9113, %v9114
      %v9120 = vsel %vm4169, %v9112, %v9113
      %v9121 = vsel %vm4169, %v9111, %v9112
      %v9122 = vsel %vm4169, %v9110, %v9111
      %v9123 = vsel %vm4169, %v9109, %v9110
      %v9124 = vsel %vm4169, %v9108, %v9109
      %v9125 = vsel %vm4169, %v9107, %v9108
      %v9126 = vsel %vm4169, %v9106, %v9107
      %v9127 = vsel %vm4169, %v9105, %v9106
      %v9128 = vsel %vm4169, %v9104, %v9105
      %v9129 = vsel %vm4169, %v9103, %v9104
      %v9130 = vsel %vm4169, %v9102, %v9103
      %v9131 = vsel %vm4169, %v9101, %v9102
      %v9132 = vsel %vm4169, %v9100, %v9101
      %v9133 = vsel %vm4169, %v9099, %v9100
      %v9134 = vsel %vm4169, %v9098, %v9099
      %v9135 = vsel %vm4169, %v9097, %v9098
      %v9136 = vsel %vm4169, %v9096, %v9097
      %v9137 = vsel %vm4169, %v9095, %v9096
      %v9138 = vsel %vm4169, %v9094, %v9095
      %v9139 = vsel %vm4169, %v9093, %v9094
      %v9140 = vsel %vm4169, %v9092, %v9093
      %v9141 = vsel %vm4169, %v9091, %v9092
      %v9142 = vsel %vm4169, %v9090, %v9091
      %v9143 = vsel %vm4169, %v9089, %v9090
      %v9144 = vsel %vm4169, %v9088, %v9089
      %v9145 = vsel %vm4169, %v9087, %v9088
      %v9146 = vsel %vm4169, %v9086, %v9087
      %v9147 = vsel %vm4169, %v9085, %v9086
      %v9148 = vsel %vm4169, %v9116, %v9085
      %v9149 = vmul.f32 %v9148, %v4266
      %v9150 = vmul.f32 %v9147, %v4267
      %v9151 = vmul.f32 %v9146, %v4268
      %v9152 = vmul.f32 %v9145, %v4269
      %v9153 = vmul.f32 %v9144, %v4270
      %v9154 = vmul.f32 %v9143, %v4271
      %v9155 = vmul.f32 %v9142, %v4272
      %v9156 = vmul.f32 %v9141, %v4273
      %v9157 = vmul.f32 %v9140, %v4274
      %v9158 = vmul.f32 %v9139, %v4275
      %v9159 = vmul.f32 %v9138, %v4276
      %v9160 = vmul.f32 %v9137, %v4277
      %v9161 = vmul.f32 %v9136, %v4278
      %v9162 = vmul.f32 %v9135, %v4279
      %v9163 = vmul.f32 %v9134, %v4280
      %v9164 = vmul.f32 %v9133, %v4281
      %v9165 = vmul.f32 %v9132, %v4282
      %v9166 = vmul.f32 %v9131, %v4283
      %v9167 = vmul.f32 %v9130, %v4284
      %v9168 = vmul.f32 %v9129, %v4285
      %v9169 = vmul.f32 %v9128, %v4286
      %v9170 = vmul.f32 %v9127, %v4287
      %v9171 = vmul.f32 %v9126, %v4288
      %v9172 = vmul.f32 %v9125, %v4289
      %v9173 = vmul.f32 %v9124, %v4290
      %v9174 = vmul.f32 %v9123, %v4291
      %v9175 = vmul.f32 %v9122, %v4292
      %v9176 = vmul.f32 %v9121, %v4293
      %v9177 = vmul.f32 %v9120, %v4294
      %v9178 = vmul.f32 %v9119, %v4295
      %v9179 = vmul.f32 %v9118, %v4296
      %v9180 = vmul.f32 %v9117, %v4297
      %9213 = vrot.lane.b32.xlu0 %v9149, 64
      %v9214 = vpop.permute.xlu0 %9213
      %9215 = vrot.lane.b32.xlu0 %v9150, 64
      %v9216 = vpop.permute.xlu0 %9215
      %9217 = vrot.lane.b32.xlu0 %v9151, 64
      %v9218 = vpop.permute.xlu0 %9217
      %9219 = vrot.lane.b32.xlu0 %v9152, 64
      %v9220 = vpop.permute.xlu0 %9219
      %9221 = vrot.lane.b32.xlu0 %v9153, 64
      %v9222 = vpop.permute.xlu0 %9221
      %9223 = vrot.lane.b32.xlu0 %v9154, 64
      %v9224 = vpop.permute.xlu0 %9223
      %9225 = vrot.lane.b32.xlu0 %v9155, 64
      %v9226 = vpop.permute.xlu0 %9225
      %9227 = vrot.lane.b32.xlu0 %v9156, 64
      %v9228 = vpop.permute.xlu0 %9227
      %9229 = vrot.lane.b32.xlu0 %v9157, 64
      %v9230 = vpop.permute.xlu0 %9229
      %9231 = vrot.lane.b32.xlu0 %v9158, 64
      %v9232 = vpop.permute.xlu0 %9231
      %9233 = vrot.lane.b32.xlu0 %v9159, 64
      %v9234 = vpop.permute.xlu0 %9233
      %9235 = vrot.lane.b32.xlu0 %v9160, 64
      %v9236 = vpop.permute.xlu0 %9235
      %9237 = vrot.lane.b32.xlu0 %v9161, 64
      %v9238 = vpop.permute.xlu0 %9237
      %9239 = vrot.lane.b32.xlu0 %v9162, 64
      %v9240 = vpop.permute.xlu0 %9239
      %9241 = vrot.lane.b32.xlu0 %v9163, 64
      %v9242 = vpop.permute.xlu0 %9241
      %9243 = vrot.lane.b32.xlu0 %v9164, 64
      %v9244 = vpop.permute.xlu0 %9243
      %9245 = vrot.lane.b32.xlu0 %v9165, 64
      %v9246 = vpop.permute.xlu0 %9245
      %9247 = vrot.lane.b32.xlu0 %v9166, 64
      %v9248 = vpop.permute.xlu0 %9247
      %9249 = vrot.lane.b32.xlu0 %v9167, 64
      %v9250 = vpop.permute.xlu0 %9249
      %9251 = vrot.lane.b32.xlu0 %v9168, 64
      %v9252 = vpop.permute.xlu0 %9251
      %9253 = vrot.lane.b32.xlu0 %v9169, 64
      %v9254 = vpop.permute.xlu0 %9253
      %9255 = vrot.lane.b32.xlu0 %v9170, 64
      %v9256 = vpop.permute.xlu0 %9255
      %9257 = vrot.lane.b32.xlu0 %v9171, 64
      %v9258 = vpop.permute.xlu0 %9257
      %9259 = vrot.lane.b32.xlu0 %v9172, 64
      %v9260 = vpop.permute.xlu0 %9259
      %9261 = vrot.lane.b32.xlu0 %v9173, 64
      %v9262 = vpop.permute.xlu0 %9261
      %9263 = vrot.lane.b32.xlu0 %v9174, 64
      %v9264 = vpop.permute.xlu0 %9263
      %9265 = vrot.lane.b32.xlu0 %v9175, 64
      %v9266 = vpop.permute.xlu0 %9265
      %9267 = vrot.lane.b32.xlu0 %v9176, 64
      %v9268 = vpop.permute.xlu0 %9267
      %9269 = vrot.lane.b32.xlu0 %v9177, 64
      %v9270 = vpop.permute.xlu0 %9269
      %9271 = vrot.lane.b32.xlu0 %v9178, 64
      %v9272 = vpop.permute.xlu0 %9271
      %9273 = vrot.lane.b32.xlu0 %v9179, 64
      %v9274 = vpop.permute.xlu0 %9273
      %9275 = vrot.lane.b32.xlu0 %v9180, 64
      %v9276 = vpop.permute.xlu0 %9275
      %v9309 = vadd.f32 %v8925, %v9214
      %v9310 = vadd.f32 %v8926, %v9216
      %v9311 = vadd.f32 %v8927, %v9218
      %v9312 = vadd.f32 %v8928, %v9220
      %v9313 = vadd.f32 %v8929, %v9222
      %v9314 = vadd.f32 %v8930, %v9224
      %v9315 = vadd.f32 %v8931, %v9226
      %v9316 = vadd.f32 %v8932, %v9228
      %v9317 = vadd.f32 %v8933, %v9230
      %v9318 = vadd.f32 %v8934, %v9232
      %v9319 = vadd.f32 %v8935, %v9234
      %v9320 = vadd.f32 %v8936, %v9236
      %v9321 = vadd.f32 %v8937, %v9238
      %v9322 = vadd.f32 %v8938, %v9240
      %v9323 = vadd.f32 %v8939, %v9242
      %v9324 = vadd.f32 %v8940, %v9244
      %v9325 = vadd.f32 %v8941, %v9246
      %v9326 = vadd.f32 %v8942, %v9248
      %v9327 = vadd.f32 %v8943, %v9250
      %v9328 = vadd.f32 %v8944, %v9252
      %v9329 = vadd.f32 %v8945, %v9254
      %v9330 = vadd.f32 %v8946, %v9256
      %v9331 = vadd.f32 %v8947, %v9258
      %v9332 = vadd.f32 %v8948, %v9260
      %v9333 = vadd.f32 %v8949, %v9262
      %v9334 = vadd.f32 %v8950, %v9264
      %v9335 = vadd.f32 %v8951, %v9266
      %v9336 = vadd.f32 %v8952, %v9268
      %v9337 = vadd.f32 %v8953, %v9270
      %v9338 = vadd.f32 %v8954, %v9272
      %v9339 = vadd.f32 %v8955, %v9274
      %v9340 = vadd.f32 %v8956, %v9276
      %9341 = vrot.lane.b32.xlu0 %v8502, 32
      %v9342 = vpop.permute.xlu0 %9341
      %9343 = vrot.lane.b32.xlu0 %v8506, 32
      %v9344 = vpop.permute.xlu0 %9343
      %9345 = vrot.lane.b32.xlu0 %v8512, 32
      %v9346 = vpop.permute.xlu0 %9345
      %9347 = vrot.lane.b32.xlu0 %v8516, 32
      %v9348 = vpop.permute.xlu0 %9347
      %9349 = vrot.lane.b32.xlu0 %v8522, 32
      %v9350 = vpop.permute.xlu0 %9349
      %9351 = vrot.lane.b32.xlu0 %v8526, 32
      %v9352 = vpop.permute.xlu0 %9351
      %9353 = vrot.lane.b32.xlu0 %v8532, 32
      %v9354 = vpop.permute.xlu0 %9353
      %9355 = vrot.lane.b32.xlu0 %v8536, 32
      %v9356 = vpop.permute.xlu0 %9355
      %9357 = vrot.lane.b32.xlu0 %v8542, 32
      %v9358 = vpop.permute.xlu0 %9357
      %9359 = vrot.lane.b32.xlu0 %v8546, 32
      %v9360 = vpop.permute.xlu0 %9359
      %9361 = vrot.lane.b32.xlu0 %v8552, 32
      %v9362 = vpop.permute.xlu0 %9361
      %9363 = vrot.lane.b32.xlu0 %v8556, 32
      %v9364 = vpop.permute.xlu0 %9363
      %9365 = vrot.lane.b32.xlu0 %v8562, 32
      %v9366 = vpop.permute.xlu0 %9365
      %9367 = vrot.lane.b32.xlu0 %v8566, 32
      %v9368 = vpop.permute.xlu0 %9367
      %9369 = vrot.lane.b32.xlu0 %v8572, 32
      %v9370 = vpop.permute.xlu0 %9369
      %9371 = vrot.lane.b32.xlu0 %v8576, 32
      %v9372 = vpop.permute.xlu0 %9371
      %9373 = vrot.lane.b32.xlu0 %v8582, 32
      %v9374 = vpop.permute.xlu0 %9373
      %9375 = vrot.lane.b32.xlu0 %v8586, 32
      %v9376 = vpop.permute.xlu0 %9375
      %9377 = vrot.lane.b32.xlu0 %v8592, 32
      %v9378 = vpop.permute.xlu0 %9377
      %9379 = vrot.lane.b32.xlu0 %v8596, 32
      %v9380 = vpop.permute.xlu0 %9379
      %9381 = vrot.lane.b32.xlu0 %v8602, 32
      %v9382 = vpop.permute.xlu0 %9381
      %9383 = vrot.lane.b32.xlu0 %v8606, 32
      %v9384 = vpop.permute.xlu0 %9383
      %9385 = vrot.lane.b32.xlu0 %v8612, 32
      %v9386 = vpop.permute.xlu0 %9385
      %9387 = vrot.lane.b32.xlu0 %v8616, 32
      %v9388 = vpop.permute.xlu0 %9387
      %9389 = vrot.lane.b32.xlu0 %v8622, 32
      %v9390 = vpop.permute.xlu0 %9389
      %9391 = vrot.lane.b32.xlu0 %v8626, 32
      %v9392 = vpop.permute.xlu0 %9391
      %9393 = vrot.lane.b32.xlu0 %v8632, 32
      %v9394 = vpop.permute.xlu0 %9393
      %9395 = vrot.lane.b32.xlu0 %v8636, 32
      %v9396 = vpop.permute.xlu0 %9395
      %9397 = vrot.lane.b32.xlu0 %v8642, 32
      %v9398 = vpop.permute.xlu0 %9397
      %9399 = vrot.lane.b32.xlu0 %v8646, 32
      %v9400 = vpop.permute.xlu0 %9399
      %9401 = vrot.lane.b32.xlu0 %v8652, 32
      %v9402 = vpop.permute.xlu0 %9401
      %9403 = vrot.lane.b32.xlu0 %v8656, 32
      %v9404 = vpop.permute.xlu0 %9403
      %v9437 = vrot.slane %v9342, 1
      %v9438 = vrot.slane %v9344, 1
      %v9439 = vrot.slane %v9346, 1
      %v9440 = vrot.slane %v9348, 1
      %v9441 = vrot.slane %v9350, 1
      %v9442 = vrot.slane %v9352, 1
      %v9443 = vrot.slane %v9354, 1
      %v9444 = vrot.slane %v9356, 1
      %v9445 = vrot.slane %v9358, 1
      %v9446 = vrot.slane %v9360, 1
      %v9447 = vrot.slane %v9362, 1
      %v9448 = vrot.slane %v9364, 1
      %v9449 = vrot.slane %v9366, 1
      %v9450 = vrot.slane %v9368, 1
      %v9451 = vrot.slane %v9370, 1
      %v9452 = vrot.slane %v9372, 1
      %v9453 = vrot.slane %v9374, 1
      %v9454 = vrot.slane %v9376, 1
      %v9455 = vrot.slane %v9378, 1
      %v9456 = vrot.slane %v9380, 1
      %v9457 = vrot.slane %v9382, 1
      %v9458 = vrot.slane %v9384, 1
      %v9459 = vrot.slane %v9386, 1
      %v9460 = vrot.slane %v9388, 1
      %v9461 = vrot.slane %v9390, 1
      %v9462 = vrot.slane %v9392, 1
      %v9463 = vrot.slane %v9394, 1
      %v9464 = vrot.slane %v9396, 1
      %v9465 = vrot.slane %v9398, 1
      %v9466 = vrot.slane %v9400, 1
      %v9467 = vrot.slane %v9402, 1
      %v9468 = vrot.slane %v9404, 1
      %v9469 = vsel %vm1507, %v9467, %v9468
      %v9470 = vsel %vm1507, %v9466, %v9467
      %v9471 = vsel %vm1507, %v9465, %v9466
      %v9472 = vsel %vm1507, %v9464, %v9465
      %v9473 = vsel %vm1507, %v9463, %v9464
      %v9474 = vsel %vm1507, %v9462, %v9463
      %v9475 = vsel %vm1507, %v9461, %v9462
      %v9476 = vsel %vm1507, %v9460, %v9461
      %v9477 = vsel %vm1507, %v9459, %v9460
      %v9478 = vsel %vm1507, %v9458, %v9459
      %v9479 = vsel %vm1507, %v9457, %v9458
      %v9480 = vsel %vm1507, %v9456, %v9457
      %v9481 = vsel %vm1507, %v9455, %v9456
      %v9482 = vsel %vm1507, %v9454, %v9455
      %v9483 = vsel %vm1507, %v9453, %v9454
      %v9484 = vsel %vm1507, %v9452, %v9453
      %v9485 = vsel %vm1507, %v9451, %v9452
      %v9486 = vsel %vm1507, %v9450, %v9451
      %v9487 = vsel %vm1507, %v9449, %v9450
      %v9488 = vsel %vm1507, %v9448, %v9449
      %v9489 = vsel %vm1507, %v9447, %v9448
      %v9490 = vsel %vm1507, %v9446, %v9447
      %v9491 = vsel %vm1507, %v9445, %v9446
      %v9492 = vsel %vm1507, %v9444, %v9445
      %v9493 = vsel %vm1507, %v9443, %v9444
      %v9494 = vsel %vm1507, %v9442, %v9443
      %v9495 = vsel %vm1507, %v9441, %v9442
      %v9496 = vsel %vm1507, %v9440, %v9441
      %v9497 = vsel %vm1507, %v9439, %v9440
      %v9498 = vsel %vm1507, %v9438, %v9439
      %v9499 = vsel %vm1507, %v9437, %v9438
      %v9500 = vsel %vm1507, %v9468, %v9437
      %v9501 = vmul.f32 %v9499, %v4618
      %v9502 = vmul.f32 %v9498, %v4619
      %v9503 = vmul.f32 %v9497, %v4620
      %v9504 = vmul.f32 %v9496, %v4621
      %v9505 = vmul.f32 %v9495, %v4622
      %v9506 = vmul.f32 %v9494, %v4623
      %v9507 = vmul.f32 %v9493, %v4624
      %v9508 = vmul.f32 %v9492, %v4625
      %v9509 = vmul.f32 %v9491, %v4626
      %v9510 = vmul.f32 %v9490, %v4627
      %v9511 = vmul.f32 %v9489, %v4628
      %v9512 = vmul.f32 %v9488, %v4629
      %v9513 = vmul.f32 %v9487, %v4630
      %v9514 = vmul.f32 %v9486, %v4631
      %v9515 = vmul.f32 %v9485, %v4632
      %v9516 = vmul.f32 %v9484, %v4633
      %v9517 = vmul.f32 %v9483, %v4634
      %v9518 = vmul.f32 %v9482, %v4635
      %v9519 = vmul.f32 %v9481, %v4636
      %v9520 = vmul.f32 %v9480, %v4637
      %v9521 = vmul.f32 %v9479, %v4638
      %v9522 = vmul.f32 %v9478, %v4639
      %v9523 = vmul.f32 %v9477, %v4640
      %v9524 = vmul.f32 %v9476, %v4641
      %v9525 = vmul.f32 %v9475, %v4642
      %v9526 = vmul.f32 %v9474, %v4643
      %v9527 = vmul.f32 %v9473, %v4644
      %v9528 = vmul.f32 %v9472, %v4645
      %v9529 = vmul.f32 %v9471, %v4646
      %v9530 = vmul.f32 %v9470, %v4647
      %v9531 = vmul.f32 %v9469, %v4648
      %v9532 = vmul.f32 %v9500, %v4649
      %9565 = vrot.lane.b32.xlu0 %v9501, 64
      %v9566 = vpop.permute.xlu0 %9565
      %9567 = vrot.lane.b32.xlu0 %v9502, 64
      %v9568 = vpop.permute.xlu0 %9567
      %9569 = vrot.lane.b32.xlu0 %v9503, 64
      %v9570 = vpop.permute.xlu0 %9569
      %9571 = vrot.lane.b32.xlu0 %v9504, 64
      %v9572 = vpop.permute.xlu0 %9571
      %9573 = vrot.lane.b32.xlu0 %v9505, 64
      %v9574 = vpop.permute.xlu0 %9573
      %9575 = vrot.lane.b32.xlu0 %v9506, 64
      %v9576 = vpop.permute.xlu0 %9575
      %9577 = vrot.lane.b32.xlu0 %v9507, 64
      %v9578 = vpop.permute.xlu0 %9577
      %9579 = vrot.lane.b32.xlu0 %v9508, 64
      %v9580 = vpop.permute.xlu0 %9579
      %9581 = vrot.lane.b32.xlu0 %v9509, 64
      %v9582 = vpop.permute.xlu0 %9581
      %9583 = vrot.lane.b32.xlu0 %v9510, 64
      %v9584 = vpop.permute.xlu0 %9583
      %9585 = vrot.lane.b32.xlu0 %v9511, 64
      %v9586 = vpop.permute.xlu0 %9585
      %9587 = vrot.lane.b32.xlu0 %v9512, 64
      %v9588 = vpop.permute.xlu0 %9587
      %9589 = vrot.lane.b32.xlu0 %v9513, 64
      %v9590 = vpop.permute.xlu0 %9589
      %9591 = vrot.lane.b32.xlu0 %v9514, 64
      %v9592 = vpop.permute.xlu0 %9591
      %9593 = vrot.lane.b32.xlu0 %v9515, 64
      %v9594 = vpop.permute.xlu0 %9593
      %9595 = vrot.lane.b32.xlu0 %v9516, 64
      %v9596 = vpop.permute.xlu0 %9595
      %9597 = vrot.lane.b32.xlu0 %v9517, 64
      %v9598 = vpop.permute.xlu0 %9597
      %9599 = vrot.lane.b32.xlu0 %v9518, 64
      %v9600 = vpop.permute.xlu0 %9599
      %9601 = vrot.lane.b32.xlu0 %v9519, 64
      %v9602 = vpop.permute.xlu0 %9601
      %9603 = vrot.lane.b32.xlu0 %v9520, 64
      %v9604 = vpop.permute.xlu0 %9603
      %9605 = vrot.lane.b32.xlu0 %v9521, 64
      %v9606 = vpop.permute.xlu0 %9605
      %9607 = vrot.lane.b32.xlu0 %v9522, 64
      %v9608 = vpop.permute.xlu0 %9607
      %9609 = vrot.lane.b32.xlu0 %v9523, 64
      %v9610 = vpop.permute.xlu0 %9609
      %9611 = vrot.lane.b32.xlu0 %v9524, 64
      %v9612 = vpop.permute.xlu0 %9611
      %9613 = vrot.lane.b32.xlu0 %v9525, 64
      %v9614 = vpop.permute.xlu0 %9613
      %9615 = vrot.lane.b32.xlu0 %v9526, 64
      %v9616 = vpop.permute.xlu0 %9615
      %9617 = vrot.lane.b32.xlu0 %v9527, 64
      %v9618 = vpop.permute.xlu0 %9617
      %9619 = vrot.lane.b32.xlu0 %v9528, 64
      %v9620 = vpop.permute.xlu0 %9619
      %9621 = vrot.lane.b32.xlu0 %v9529, 64
      %v9622 = vpop.permute.xlu0 %9621
      %9623 = vrot.lane.b32.xlu0 %v9530, 64
      %v9624 = vpop.permute.xlu0 %9623
      %9625 = vrot.lane.b32.xlu0 %v9531, 64
      %v9626 = vpop.permute.xlu0 %9625
      %9627 = vrot.lane.b32.xlu0 %v9532, 64
      %v9628 = vpop.permute.xlu0 %9627
      %v9661 = vadd.f32 %v9309, %v9566
      %v9662 = vadd.f32 %v9310, %v9568
      %v9663 = vadd.f32 %v9311, %v9570
      %v9664 = vadd.f32 %v9312, %v9572
      %v9665 = vadd.f32 %v9313, %v9574
      %v9666 = vadd.f32 %v9314, %v9576
      %v9667 = vadd.f32 %v9315, %v9578
      %v9668 = vadd.f32 %v9316, %v9580
      %v9669 = vadd.f32 %v9317, %v9582
      %v9670 = vadd.f32 %v9318, %v9584
      %v9671 = vadd.f32 %v9319, %v9586
      %v9672 = vadd.f32 %v9320, %v9588
      %v9673 = vadd.f32 %v9321, %v9590
      %v9674 = vadd.f32 %v9322, %v9592
      %v9675 = vadd.f32 %v9323, %v9594
      %v9676 = vadd.f32 %v9324, %v9596
      %v9677 = vadd.f32 %v9325, %v9598
      %v9678 = vadd.f32 %v9326, %v9600
      %v9679 = vadd.f32 %v9327, %v9602
      %v9680 = vadd.f32 %v9328, %v9604
      %v9681 = vadd.f32 %v9329, %v9606
      %v9682 = vadd.f32 %v9330, %v9608
      %v9683 = vadd.f32 %v9331, %v9610
      %v9684 = vadd.f32 %v9332, %v9612
      %v9685 = vadd.f32 %v9333, %v9614
      %v9686 = vadd.f32 %v9334, %v9616
      %v9687 = vadd.f32 %v9335, %v9618
      %v9688 = vadd.f32 %v9336, %v9620
      %v9689 = vadd.f32 %v9337, %v9622
      %v9690 = vadd.f32 %v9338, %v9624
      %v9691 = vadd.f32 %v9339, %v9626
      %v9692 = vadd.f32 %v9340, %v9628
      %v9693 = vrot.slane %v8504, 2
      %v9694 = vrot.slane %v8508, 2
      %v9695 = vrot.slane %v8514, 2
      %v9696 = vrot.slane %v8518, 2
      %v9697 = vrot.slane %v8524, 2
      %v9698 = vrot.slane %v8528, 2
      %v9699 = vrot.slane %v8534, 2
      %v9700 = vrot.slane %v8538, 2
      %v9701 = vrot.slane %v8544, 2
      %v9702 = vrot.slane %v8548, 2
      %v9703 = vrot.slane %v8554, 2
      %v9704 = vrot.slane %v8558, 2
      %v9705 = vrot.slane %v8564, 2
      %v9706 = vrot.slane %v8568, 2
      %v9707 = vrot.slane %v8574, 2
      %v9708 = vrot.slane %v8578, 2
      %v9709 = vrot.slane %v8584, 2
      %v9710 = vrot.slane %v8588, 2
      %v9711 = vrot.slane %v8594, 2
      %v9712 = vrot.slane %v8598, 2
      %v9713 = vrot.slane %v8604, 2
      %v9714 = vrot.slane %v8608, 2
      %v9715 = vrot.slane %v8614, 2
      %v9716 = vrot.slane %v8618, 2
      %v9717 = vrot.slane %v8624, 2
      %v9718 = vrot.slane %v8628, 2
      %v9719 = vrot.slane %v8634, 2
      %v9720 = vrot.slane %v8638, 2
      %v9721 = vrot.slane %v8644, 2
      %v9722 = vrot.slane %v8648, 2
      %v9723 = vrot.slane %v8654, 2
      %v9724 = vrot.slane %v8658, 2
      %v9725 = vsel %vm1988, %v9723, %v9724
      %v9726 = vsel %vm1988, %v9722, %v9723
      %v9727 = vsel %vm1988, %v9721, %v9722
      %v9728 = vsel %vm1988, %v9720, %v9721
      %v9729 = vsel %vm1988, %v9719, %v9720
      %v9730 = vsel %vm1988, %v9718, %v9719
      %v9731 = vsel %vm1988, %v9717, %v9718
      %v9732 = vsel %vm1988, %v9716, %v9717
      %v9733 = vsel %vm1988, %v9715, %v9716
      %v9734 = vsel %vm1988, %v9714, %v9715
      %v9735 = vsel %vm1988, %v9713, %v9714
      %v9736 = vsel %vm1988, %v9712, %v9713
      %v9737 = vsel %vm1988, %v9711, %v9712
      %v9738 = vsel %vm1988, %v9710, %v9711
      %v9739 = vsel %vm1988, %v9709, %v9710
      %v9740 = vsel %vm1988, %v9708, %v9709
      %v9741 = vsel %vm1988, %v9707, %v9708
      %v9742 = vsel %vm1988, %v9706, %v9707
      %v9743 = vsel %vm1988, %v9705, %v9706
      %v9744 = vsel %vm1988, %v9704, %v9705
      %v9745 = vsel %vm1988, %v9703, %v9704
      %v9746 = vsel %vm1988, %v9702, %v9703
      %v9747 = vsel %vm1988, %v9701, %v9702
      %v9748 = vsel %vm1988, %v9700, %v9701
      %v9749 = vsel %vm1988, %v9699, %v9700
      %v9750 = vsel %vm1988, %v9698, %v9699
      %v9751 = vsel %vm1988, %v9697, %v9698
      %v9752 = vsel %vm1988, %v9696, %v9697
      %v9753 = vsel %vm1988, %v9695, %v9696
      %v9754 = vsel %vm1988, %v9694, %v9695
      %v9755 = vsel %vm1988, %v9693, %v9694
      %v9756 = vsel %vm1988, %v9724, %v9693
      %v9757 = vmul.f32 %v9755, %v5098
      %v9758 = vmul.f32 %v9754, %v5099
      %v9759 = vmul.f32 %v9753, %v5100
      %v9760 = vmul.f32 %v9752, %v5101
      %v9761 = vmul.f32 %v9751, %v5102
      %v9762 = vmul.f32 %v9750, %v5103
      %v9763 = vmul.f32 %v9749, %v5104
      %v9764 = vmul.f32 %v9748, %v5105
      %v9765 = vmul.f32 %v9747, %v5106
      %v9766 = vmul.f32 %v9746, %v5107
      %v9767 = vmul.f32 %v9745, %v5108
      %v9768 = vmul.f32 %v9744, %v5109
      %v9769 = vmul.f32 %v9743, %v5110
      %v9770 = vmul.f32 %v9742, %v5111
      %v9771 = vmul.f32 %v9741, %v5112
      %v9772 = vmul.f32 %v9740, %v5113
      %v9773 = vmul.f32 %v9739, %v5114
      %v9774 = vmul.f32 %v9738, %v5115
      %v9775 = vmul.f32 %v9737, %v5116
      %v9776 = vmul.f32 %v9736, %v5117
      %v9777 = vmul.f32 %v9735, %v5118
      %v9778 = vmul.f32 %v9734, %v5119
      %v9779 = vmul.f32 %v9733, %v5120
      %v9780 = vmul.f32 %v9732, %v5121
      %v9781 = vmul.f32 %v9731, %v5122
      %v9782 = vmul.f32 %v9730, %v5123
      %v9783 = vmul.f32 %v9729, %v5124
      %v9784 = vmul.f32 %v9728, %v5125
      %v9785 = vmul.f32 %v9727, %v5126
      %v9786 = vmul.f32 %v9726, %v5127
      %v9787 = vmul.f32 %v9725, %v5128
      %v9788 = vmul.f32 %v9756, %v5129
      %9821 = vrot.lane.b32.xlu0 %v9757, 64
      %v9822 = vpop.permute.xlu0 %9821
      %9823 = vrot.lane.b32.xlu0 %v9758, 64
      %v9824 = vpop.permute.xlu0 %9823
      %9825 = vrot.lane.b32.xlu0 %v9759, 64
      %v9826 = vpop.permute.xlu0 %9825
      %9827 = vrot.lane.b32.xlu0 %v9760, 64
      %v9828 = vpop.permute.xlu0 %9827
      %9829 = vrot.lane.b32.xlu0 %v9761, 64
      %v9830 = vpop.permute.xlu0 %9829
      %9831 = vrot.lane.b32.xlu0 %v9762, 64
      %v9832 = vpop.permute.xlu0 %9831
      %9833 = vrot.lane.b32.xlu0 %v9763, 64
      %v9834 = vpop.permute.xlu0 %9833
      %9835 = vrot.lane.b32.xlu0 %v9764, 64
      %v9836 = vpop.permute.xlu0 %9835
      %9837 = vrot.lane.b32.xlu0 %v9765, 64
      %v9838 = vpop.permute.xlu0 %9837
      %9839 = vrot.lane.b32.xlu0 %v9766, 64
      %v9840 = vpop.permute.xlu0 %9839
      %9841 = vrot.lane.b32.xlu0 %v9767, 64
      %v9842 = vpop.permute.xlu0 %9841
      %9843 = vrot.lane.b32.xlu0 %v9768, 64
      %v9844 = vpop.permute.xlu0 %9843
      %9845 = vrot.lane.b32.xlu0 %v9769, 64
      %v9846 = vpop.permute.xlu0 %9845
      %9847 = vrot.lane.b32.xlu0 %v9770, 64
      %v9848 = vpop.permute.xlu0 %9847
      %9849 = vrot.lane.b32.xlu0 %v9771, 64
      %v9850 = vpop.permute.xlu0 %9849
      %9851 = vrot.lane.b32.xlu0 %v9772, 64
      %v9852 = vpop.permute.xlu0 %9851
      %9853 = vrot.lane.b32.xlu0 %v9773, 64
      %v9854 = vpop.permute.xlu0 %9853
      %9855 = vrot.lane.b32.xlu0 %v9774, 64
      %v9856 = vpop.permute.xlu0 %9855
      %9857 = vrot.lane.b32.xlu0 %v9775, 64
      %v9858 = vpop.permute.xlu0 %9857
      %9859 = vrot.lane.b32.xlu0 %v9776, 64
      %v9860 = vpop.permute.xlu0 %9859
      %9861 = vrot.lane.b32.xlu0 %v9777, 64
      %v9862 = vpop.permute.xlu0 %9861
      %9863 = vrot.lane.b32.xlu0 %v9778, 64
      %v9864 = vpop.permute.xlu0 %9863
      %9865 = vrot.lane.b32.xlu0 %v9779, 64
      %v9866 = vpop.permute.xlu0 %9865
      %9867 = vrot.lane.b32.xlu0 %v9780, 64
      %v9868 = vpop.permute.xlu0 %9867
      %9869 = vrot.lane.b32.xlu0 %v9781, 64
      %v9870 = vpop.permute.xlu0 %9869
      %9871 = vrot.lane.b32.xlu0 %v9782, 64
      %v9872 = vpop.permute.xlu0 %9871
      %9873 = vrot.lane.b32.xlu0 %v9783, 64
      %v9874 = vpop.permute.xlu0 %9873
      %9875 = vrot.lane.b32.xlu0 %v9784, 64
      %v9876 = vpop.permute.xlu0 %9875
      %9877 = vrot.lane.b32.xlu0 %v9785, 64
      %v9878 = vpop.permute.xlu0 %9877
      %9879 = vrot.lane.b32.xlu0 %v9786, 64
      %v9880 = vpop.permute.xlu0 %9879
      %9881 = vrot.lane.b32.xlu0 %v9787, 64
      %v9882 = vpop.permute.xlu0 %9881
      %9883 = vrot.lane.b32.xlu0 %v9788, 64
      %v9884 = vpop.permute.xlu0 %9883
      %v9917 = vadd.f32 %v9661, %v9822
      %v9918 = vadd.f32 %v9662, %v9824
      %v9919 = vadd.f32 %v9663, %v9826
      %v9920 = vadd.f32 %v9664, %v9828
      %v9921 = vadd.f32 %v9665, %v9830
      %v9922 = vadd.f32 %v9666, %v9832
      %v9923 = vadd.f32 %v9667, %v9834
      %v9924 = vadd.f32 %v9668, %v9836
      %v9925 = vadd.f32 %v9669, %v9838
      %v9926 = vadd.f32 %v9670, %v9840
      %v9927 = vadd.f32 %v9671, %v9842
      %v9928 = vadd.f32 %v9672, %v9844
      %v9929 = vadd.f32 %v9673, %v9846
      %v9930 = vadd.f32 %v9674, %v9848
      %v9931 = vadd.f32 %v9675, %v9850
      %v9932 = vadd.f32 %v9676, %v9852
      %v9933 = vadd.f32 %v9677, %v9854
      %v9934 = vadd.f32 %v9678, %v9856
      %v9935 = vadd.f32 %v9679, %v9858
      %v9936 = vadd.f32 %v9680, %v9860
      %v9937 = vadd.f32 %v9681, %v9862
      %v9938 = vadd.f32 %v9682, %v9864
      %v9939 = vadd.f32 %v9683, %v9866
      %v9940 = vadd.f32 %v9684, %v9868
      %v9941 = vadd.f32 %v9685, %v9870
      %v9942 = vadd.f32 %v9686, %v9872
      %v9943 = vadd.f32 %v9687, %v9874
      %v9944 = vadd.f32 %v9688, %v9876
      %v9945 = vadd.f32 %v9689, %v9878
      %v9946 = vadd.f32 %v9690, %v9880
      %v9947 = vadd.f32 %v9691, %v9882
      %v9948 = vadd.f32 %v9692, %v9884
      %v9949 = vsub.f32 0.0, %v9917
      %v9950 = vsub.f32 0.0, %v9918
      %v9951 = vsub.f32 0.0, %v9919
      %v9952 = vsub.f32 0.0, %v9920
      %v9953 = vsub.f32 0.0, %v9921
      %v9954 = vsub.f32 0.0, %v9922
      %v9955 = vsub.f32 0.0, %v9923
      %v9956 = vsub.f32 0.0, %v9924
      %v9957 = vsub.f32 0.0, %v9925
      %v9958 = vsub.f32 0.0, %v9926
      %v9959 = vsub.f32 0.0, %v9927
      %v9960 = vsub.f32 0.0, %v9928
      %v9961 = vsub.f32 0.0, %v9929
      %v9962 = vsub.f32 0.0, %v9930
      %v9963 = vsub.f32 0.0, %v9931
      %v9964 = vsub.f32 0.0, %v9932
      %v9965 = vsub.f32 0.0, %v9933
      %v9966 = vsub.f32 0.0, %v9934
      %v9967 = vsub.f32 0.0, %v9935
      %v9968 = vsub.f32 0.0, %v9936
      %v9969 = vsub.f32 0.0, %v9937
      %v9970 = vsub.f32 0.0, %v9938
      %v9971 = vsub.f32 0.0, %v9939
      %v9972 = vsub.f32 0.0, %v9940
      %v9973 = vsub.f32 0.0, %v9941
      %v9974 = vsub.f32 0.0, %v9942
      %v9975 = vsub.f32 0.0, %v9943
      %v9976 = vsub.f32 0.0, %v9944
      %v9977 = vsub.f32 0.0, %v9945
      %v9978 = vsub.f32 0.0, %v9946
      %v9979 = vsub.f32 0.0, %v9947
      %v9980 = vsub.f32 0.0, %v9948
      %v9981 = vmul.f32 %v9949, 1.442695
      %v9982 = vpow.pop %v9981
      %v9983 = vmul.f32 %v9950, 1.442695
      %v9984 = vpow.pop %v9983
      %v9985 = vmul.f32 %v9951, 1.442695
      %v9986 = vpow.pop %v9985
      %v9987 = vmul.f32 %v9952, 1.442695
      %v9988 = vpow.pop %v9987
      %v9989 = vmul.f32 %v9953, 1.442695
      %v9990 = vpow.pop %v9989
      %v9991 = vmul.f32 %v9954, 1.442695
      %v9992 = vpow.pop %v9991
      %v9993 = vmul.f32 %v9955, 1.442695
      %v9994 = vpow.pop %v9993
      %v9995 = vmul.f32 %v9956, 1.442695
      %v9996 = vpow.pop %v9995
      %v9997 = vmul.f32 %v9957, 1.442695
      %v9998 = vpow.pop %v9997
      %v9999 = vmul.f32 %v9958, 1.442695
      %v10000 = vpow.pop %v9999
      %v10001 = vmul.f32 %v9959, 1.442695
      %v10002 = vpow.pop %v10001
      %v10003 = vmul.f32 %v9960, 1.442695
      %v10004 = vpow.pop %v10003
      %v10005 = vmul.f32 %v9961, 1.442695
      %v10006 = vpow.pop %v10005
      %v10007 = vmul.f32 %v9962, 1.442695
      %v10008 = vpow.pop %v10007
      %v10009 = vmul.f32 %v9963, 1.442695
      %v10010 = vpow.pop %v10009
      %v10011 = vmul.f32 %v9964, 1.442695
      %v10012 = vpow.pop %v10011
      %v10013 = vmul.f32 %v9965, 1.442695
      %v10014 = vpow.pop %v10013
      %v10015 = vmul.f32 %v9966, 1.442695
      %v10016 = vpow.pop %v10015
      %v10017 = vmul.f32 %v9967, 1.442695
      %v10018 = vpow.pop %v10017
      %v10019 = vmul.f32 %v9968, 1.442695
      %v10020 = vpow.pop %v10019
      %v10021 = vmul.f32 %v9969, 1.442695
      %v10022 = vpow.pop %v10021
      %v10023 = vmul.f32 %v9970, 1.442695
      %v10024 = vpow.pop %v10023
      %v10025 = vmul.f32 %v9971, 1.442695
      %v10026 = vpow.pop %v10025
      %v10027 = vmul.f32 %v9972, 1.442695
      %v10028 = vpow.pop %v10027
      %v10029 = vmul.f32 %v9973, 1.442695
      %v10030 = vpow.pop %v10029
      %v10031 = vmul.f32 %v9974, 1.442695
      %v10032 = vpow.pop %v10031
      %v10033 = vmul.f32 %v9975, 1.442695
      %v10034 = vpow.pop %v10033
      %v10035 = vmul.f32 %v9976, 1.442695
      %v10036 = vpow.pop %v10035
      %v10037 = vmul.f32 %v9977, 1.442695
      %v10038 = vpow.pop %v10037
      %v10039 = vmul.f32 %v9978, 1.442695
      %v10040 = vpow.pop %v10039
      %v10041 = vmul.f32 %v9979, 1.442695
      %v10042 = vpow.pop %v10041
      %v10043 = vmul.f32 %v9980, 1.442695
      %v10044 = vpow.pop %v10043
      %v10045 = vadd.f32 %v9982, 1.0
      %v10046 = vadd.f32 %v9984, 1.0
      %v10047 = vadd.f32 %v9986, 1.0
      %v10048 = vadd.f32 %v9988, 1.0
      %v10049 = vadd.f32 %v9990, 1.0
      %v10050 = vadd.f32 %v9992, 1.0
      %v10051 = vadd.f32 %v9994, 1.0
      %v10052 = vadd.f32 %v9996, 1.0
      %v10053 = vadd.f32 %v9998, 1.0
      %v10054 = vadd.f32 %v10000, 1.0
      %v10055 = vadd.f32 %v10002, 1.0
      %v10056 = vadd.f32 %v10004, 1.0
      %v10057 = vadd.f32 %v10006, 1.0
      %v10058 = vadd.f32 %v10008, 1.0
      %v10059 = vadd.f32 %v10010, 1.0
      %v10060 = vadd.f32 %v10012, 1.0
      %v10061 = vadd.f32 %v10014, 1.0
      %v10062 = vadd.f32 %v10016, 1.0
      %v10063 = vadd.f32 %v10018, 1.0
      %v10064 = vadd.f32 %v10020, 1.0
      %v10065 = vadd.f32 %v10022, 1.0
      %v10066 = vadd.f32 %v10024, 1.0
      %v10067 = vadd.f32 %v10026, 1.0
      %v10068 = vadd.f32 %v10028, 1.0
      %v10069 = vadd.f32 %v10030, 1.0
      %v10070 = vadd.f32 %v10032, 1.0
      %v10071 = vadd.f32 %v10034, 1.0
      %v10072 = vadd.f32 %v10036, 1.0
      %v10073 = vadd.f32 %v10038, 1.0
      %v10074 = vadd.f32 %v10040, 1.0
      %v10075 = vadd.f32 %v10042, 1.0
      %v10076 = vadd.f32 %v10044, 1.0
      %v10077 = vrcp.pop %v10045
      %v10078 = vrcp.pop %v10046
      %v10079 = vrcp.pop %v10047
      %v10080 = vrcp.pop %v10048
      %v10081 = vrcp.pop %v10049
      %v10082 = vrcp.pop %v10050
      %v10083 = vrcp.pop %v10051
      %v10084 = vrcp.pop %v10052
      %v10085 = vrcp.pop %v10053
      %v10086 = vrcp.pop %v10054
      %v10087 = vrcp.pop %v10055
      %v10088 = vrcp.pop %v10056
      %v10089 = vrcp.pop %v10057
      %v10090 = vrcp.pop %v10058
      %v10091 = vrcp.pop %v10059
      %v10092 = vrcp.pop %v10060
      %v10093 = vrcp.pop %v10061
      %v10094 = vrcp.pop %v10062
      %v10095 = vrcp.pop %v10063
      %v10096 = vrcp.pop %v10064
      %v10097 = vrcp.pop %v10065
      %v10098 = vrcp.pop %v10066
      %v10099 = vrcp.pop %v10067
      %v10100 = vrcp.pop %v10068
      %v10101 = vrcp.pop %v10069
      %v10102 = vrcp.pop %v10070
      %v10103 = vrcp.pop %v10071
      %v10104 = vrcp.pop %v10072
      %v10105 = vrcp.pop %v10073
      %v10106 = vrcp.pop %v10074
      %v10107 = vrcp.pop %v10075
      %v10108 = vrcp.pop %v10076
      %10141 = vrot.lane.b32.xlu0 %v749, 80
      %v10142 = vpop.permute.xlu0 %10141
      %10143 = vrot.lane.b32.xlu0 %v750, 80
      %v10144 = vpop.permute.xlu0 %10143
      %10145 = vrot.lane.b32.xlu0 %v751, 80
      %v10146 = vpop.permute.xlu0 %10145
      %10147 = vrot.lane.b32.xlu0 %v752, 80
      %v10148 = vpop.permute.xlu0 %10147
      %10149 = vrot.lane.b32.xlu0 %v753, 80
      %v10150 = vpop.permute.xlu0 %10149
      %10151 = vrot.lane.b32.xlu0 %v754, 80
      %v10152 = vpop.permute.xlu0 %10151
      %10153 = vrot.lane.b32.xlu0 %v755, 80
      %v10154 = vpop.permute.xlu0 %10153
      %10155 = vrot.lane.b32.xlu0 %v756, 80
      %v10156 = vpop.permute.xlu0 %10155
      %10157 = vrot.lane.b32.xlu0 %v757, 80
      %v10158 = vpop.permute.xlu0 %10157
      %10159 = vrot.lane.b32.xlu0 %v758, 80
      %v10160 = vpop.permute.xlu0 %10159
      %10161 = vrot.lane.b32.xlu0 %v759, 80
      %v10162 = vpop.permute.xlu0 %10161
      %10163 = vrot.lane.b32.xlu0 %v760, 80
      %v10164 = vpop.permute.xlu0 %10163
      %10165 = vrot.lane.b32.xlu0 %v761, 80
      %v10166 = vpop.permute.xlu0 %10165
      %10167 = vrot.lane.b32.xlu0 %v762, 80
      %v10168 = vpop.permute.xlu0 %10167
      %10169 = vrot.lane.b32.xlu0 %v763, 80
      %v10170 = vpop.permute.xlu0 %10169
      %10171 = vrot.lane.b32.xlu0 %v764, 80
      %v10172 = vpop.permute.xlu0 %10171
      %10173 = vrot.lane.b32.xlu0 %v765, 80
      %v10174 = vpop.permute.xlu0 %10173
      %10175 = vrot.lane.b32.xlu0 %v766, 80
      %v10176 = vpop.permute.xlu0 %10175
      %10177 = vrot.lane.b32.xlu0 %v767, 80
      %v10178 = vpop.permute.xlu0 %10177
      %10179 = vrot.lane.b32.xlu0 %v768, 80
      %v10180 = vpop.permute.xlu0 %10179
      %10181 = vrot.lane.b32.xlu0 %v769, 80
      %v10182 = vpop.permute.xlu0 %10181
      %10183 = vrot.lane.b32.xlu0 %v770, 80
      %v10184 = vpop.permute.xlu0 %10183
      %10185 = vrot.lane.b32.xlu0 %v771, 80
      %v10186 = vpop.permute.xlu0 %10185
      %10187 = vrot.lane.b32.xlu0 %v772, 80
      %v10188 = vpop.permute.xlu0 %10187
      %10189 = vrot.lane.b32.xlu0 %v773, 80
      %v10190 = vpop.permute.xlu0 %10189
      %10191 = vrot.lane.b32.xlu0 %v774, 80
      %v10192 = vpop.permute.xlu0 %10191
      %10193 = vrot.lane.b32.xlu0 %v775, 80
      %v10194 = vpop.permute.xlu0 %10193
      %10195 = vrot.lane.b32.xlu0 %v776, 80
      %v10196 = vpop.permute.xlu0 %10195
      %10197 = vrot.lane.b32.xlu0 %v777, 80
      %v10198 = vpop.permute.xlu0 %10197
      %10199 = vrot.lane.b32.xlu0 %v778, 80
      %v10200 = vpop.permute.xlu0 %10199
      %10201 = vrot.lane.b32.xlu0 %v779, 80
      %v10202 = vpop.permute.xlu0 %10201
      %10203 = vrot.lane.b32.xlu0 %v780, 80
      %v10204 = vpop.permute.xlu0 %10203
      %v10237 = vmul.f32 %v10077, %v10142
      %v10238 = vmul.f32 %v10078, %v10144
      %v10239 = vmul.f32 %v10079, %v10146
      %v10240 = vmul.f32 %v10080, %v10148
      %v10241 = vmul.f32 %v10081, %v10150
      %v10242 = vmul.f32 %v10082, %v10152
      %v10243 = vmul.f32 %v10083, %v10154
      %v10244 = vmul.f32 %v10084, %v10156
      %v10245 = vmul.f32 %v10085, %v10158
      %v10246 = vmul.f32 %v10086, %v10160
      %v10247 = vmul.f32 %v10087, %v10162
      %v10248 = vmul.f32 %v10088, %v10164
      %v10249 = vmul.f32 %v10089, %v10166
      %v10250 = vmul.f32 %v10090, %v10168
      %v10251 = vmul.f32 %v10091, %v10170
      %v10252 = vmul.f32 %v10092, %v10172
      %v10253 = vmul.f32 %v10093, %v10174
      %v10254 = vmul.f32 %v10094, %v10176
      %v10255 = vmul.f32 %v10095, %v10178
      %v10256 = vmul.f32 %v10096, %v10180
      %v10257 = vmul.f32 %v10097, %v10182
      %v10258 = vmul.f32 %v10098, %v10184
      %v10259 = vmul.f32 %v10099, %v10186
      %v10260 = vmul.f32 %v10100, %v10188
      %v10261 = vmul.f32 %v10101, %v10190
      %v10262 = vmul.f32 %v10102, %v10192
      %v10263 = vmul.f32 %v10103, %v10194
      %v10264 = vmul.f32 %v10104, %v10196
      %v10265 = vmul.f32 %v10105, %v10198
      %v10266 = vmul.f32 %v10106, %v10200
      %v10267 = vmul.f32 %v10107, %v10202
      %v10268 = vmul.f32 %v10108, %v10204
      %v10269 = vpack.c.bf16 %v10238, %v10237
      %v10270 = vpack.c.bf16 %v10240, %v10239
      %v10271 = vpack.c.bf16 %v10242, %v10241
      %v10272 = vpack.c.bf16 %v10244, %v10243
      %v10273 = vpack.c.bf16 %v10246, %v10245
      %v10274 = vpack.c.bf16 %v10248, %v10247
      %v10275 = vpack.c.bf16 %v10250, %v10249
      %v10276 = vpack.c.bf16 %v10252, %v10251
      %v10277 = vpack.c.bf16 %v10254, %v10253
      %v10278 = vpack.c.bf16 %v10256, %v10255
      %v10279 = vpack.c.bf16 %v10258, %v10257
      %v10280 = vpack.c.bf16 %v10260, %v10259
      %v10281 = vpack.c.bf16 %v10262, %v10261
      %v10282 = vpack.c.bf16 %v10264, %v10263
      %v10283 = vpack.c.bf16 %v10266, %v10265
      %v10284 = vpack.c.bf16 %v10268, %v10267
      %10301 = vrot.lane.b32.xlu0 %v10269, 48
      %v10302 = vpop.permute.xlu0 %10301
      %10303 = vrot.lane.b32.xlu0 %v10270, 48
      %v10304 = vpop.permute.xlu0 %10303
      %10305 = vrot.lane.b32.xlu0 %v10271, 48
      %v10306 = vpop.permute.xlu0 %10305
      %10307 = vrot.lane.b32.xlu0 %v10272, 48
      %v10308 = vpop.permute.xlu0 %10307
      %10309 = vrot.lane.b32.xlu0 %v10273, 48
      %v10310 = vpop.permute.xlu0 %10309
      %10311 = vrot.lane.b32.xlu0 %v10274, 48
      %v10312 = vpop.permute.xlu0 %10311
      %10313 = vrot.lane.b32.xlu0 %v10275, 48
      %v10314 = vpop.permute.xlu0 %10313
      %10315 = vrot.lane.b32.xlu0 %v10276, 48
      %v10316 = vpop.permute.xlu0 %10315
      %10317 = vrot.lane.b32.xlu0 %v10277, 48
      %v10318 = vpop.permute.xlu0 %10317
      %10319 = vrot.lane.b32.xlu0 %v10278, 48
      %v10320 = vpop.permute.xlu0 %10319
      %10321 = vrot.lane.b32.xlu0 %v10279, 48
      %v10322 = vpop.permute.xlu0 %10321
      %10323 = vrot.lane.b32.xlu0 %v10280, 48
      %v10324 = vpop.permute.xlu0 %10323
      %10325 = vrot.lane.b32.xlu0 %v10281, 48
      %v10326 = vpop.permute.xlu0 %10325
      %10327 = vrot.lane.b32.xlu0 %v10282, 48
      %v10328 = vpop.permute.xlu0 %10327
      %10329 = vrot.lane.b32.xlu0 %v10283, 48
      %v10330 = vpop.permute.xlu0 %10329
      %10331 = vrot.lane.b32.xlu0 %v10284, 48
      %v10332 = vpop.permute.xlu0 %10331
      %v10334 = vsel %vm893, %v10302, %v862
      %v10336 = vsel %vm893, %v10304, %v864
      %v10338 = vsel %vm893, %v10306, %v866
      %v10340 = vsel %vm893, %v10308, %v868
      %v10342 = vsel %vm893, %v10310, %v870
      %v10344 = vsel %vm893, %v10312, %v872
      %v10346 = vsel %vm893, %v10314, %v874
      %v10348 = vsel %vm893, %v10316, %v876
      %v10350 = vsel %vm893, %v10318, %v878
      %v10352 = vsel %vm893, %v10320, %v880
      %v10354 = vsel %vm893, %v10322, %v882
      %v10356 = vsel %vm893, %v10324, %v884
      %v10358 = vsel %vm893, %v10326, %v886
      %v10360 = vsel %vm893, %v10328, %v888
      %v10362 = vsel %vm893, %v10330, %v890
      %v10364 = vsel %vm893, %v10332, %v892
      %v10365 = vld [vmem:[%s6] sm:$0xf]
      %v10366 = vld [vmem:[%s6 + $0x4] sm:$0xf]
      %v10367 = vld [vmem:[%s6 + $0x8] sm:$0xf]
      %v10368 = vld [vmem:[%s6 + $0xc] sm:$0xf]
      %v10369 = vld [vmem:[%s6 + $0x10] sm:$0xf]
      %v10375 = vunpack.c.l.b16 %v10365
      %v10376 = vunpack.c.l.b16 %v10366
      %v10377 = vunpack.c.l.b16 %v10367
      %v10378 = vunpack.c.l.b16 %v10368
      %v10379 = vunpack.c.l.b16 %v10369
      %v10380 = vpack.c.b16 %v10376, %v10375
      %v10381 = vpack.c.b16 %v10378, %v10377
      %v10382 = vpack.c.b16 %v10379, %v10379
      %v10385 = vsel %vm1002, %v10334, 0
      %v10387 = vsel %vm1002, %v10336, 0
      %v10389 = vsel %vm1002, %v10338, 0
      %v10391 = vsel %vm1002, %v10340, 0
      %v10393 = vsel %vm1002, %v10342, 0
      %v10395 = vsel %vm1002, %v10344, 0
      %v10397 = vsel %vm1002, %v10346, 0
      %v10399 = vsel %vm1002, %v10348, 0
      %v10401 = vsel %vm1002, %v10350, 0
      %v10403 = vsel %vm1002, %v10352, 0
      %v10405 = vsel %vm1002, %v10354, 0
      %v10407 = vsel %vm1002, %v10356, 0
      %v10409 = vsel %vm1002, %v10358, 0
      %v10411 = vsel %vm1002, %v10360, 0
      %v10413 = vsel %vm1002, %v10362, 0
      %v10415 = vsel %vm1002, %v10364, 0
      %v10418 = vsel %vm1035, %v10382, 0
      %10420 = vmatprep.subr.bf16.mxu0 0
      %10421 = vmatpush1.bf16.msra.mxu0 0
      %10422 = vmatprep.subr.bf16.mxu0 0
      %10423 = vmatpush1.bf16.msra.mxu0 0
      %10424 = vmatprep.subr.bf16.mxu0 0
      %10425 = vmatpush1.bf16.msra.mxu0 0
      %10426 = vmatprep.subr.bf16.mxu0 0
      %10427 = vmatpush1.bf16.msra.mxu0 0
      %10428 = vmatprep.subr.bf16.mxu0 0
      %10429 = vmatpush1.bf16.msra.mxu0 0
      %10430 = vmatprep.subr.bf16.mxu0 0
      %10431 = vmatpush1.bf16.msra.mxu0 %v10418
      %10432 = vmatprep.subr.bf16.mxu0 0
      %10433 = vmatpush1.bf16.msra.mxu0 %v10381
      %10434 = vmatprep.subr.bf16.mxu0 0
      %10435 = vmatpush1.bf16.msra.mxu0 %v10380
      %10436 = vmatprep.subr.bf16.mxu0 0
      %10437 = vmatpush2.bf16.msra.mxu0 0
      %10438 = vmatprep.subr.bf16.mxu0 0
      %10439 = vmatpush2.bf16.msra.mxu0 0
      %10440 = vmatprep.subr.bf16.mxu0 0
      %10441 = vmatpush2.bf16.msra.mxu0 0
      %10442 = vmatprep.subr.bf16.mxu0 0
      %10443 = vmatpush2.bf16.msra.mxu0 0
      %10444 = vmatprep.subr.bf16.mxu0 0
      %10445 = vmatpush2.bf16.msra.mxu0 0
      %10446 = vmatprep.subr.bf16.mxu0 0
      %10447 = vmatpush2.bf16.msra.mxu0 0
      %10448 = vmatprep.subr.bf16.mxu0 0
      %10449 = vmatpush2.bf16.msra.mxu0 0
      %10450 = vmatprep.subr.bf16.mxu0 0
      %10451 = vmatpush2.bf16.msra.mxu0 0
      %10452 = vmatprep.mubr.bf16.mxu0 0
      %10453 = vmatmul.mubr.bf16.gmra.mxu0 %v10385
      %v10454 = vpop.f32.mrf.mxu0
      %v10455 = vadd.f32 0.0, %v10454
      %v10456 = vpop.f32.mrf.mxu0
      %v10457 = vpop.f32.mrf.mxu0
      %v10458 = vadd.f32 0.0, %v10457
      %v10459 = vpop.f32.mrf.mxu0
      %10460 = vmatprep.mubr.bf16.mxu0 0
      %10461 = vmatmul.mubr.bf16.gmra.mxu0 %v10387
      %v10462 = vpop.f32.mrf.mxu0
      %v10463 = vadd.f32 0.0, %v10462
      %v10464 = vpop.f32.mrf.mxu0
      %v10465 = vpop.f32.mrf.mxu0
      %v10466 = vadd.f32 0.0, %v10465
      %v10467 = vpop.f32.mrf.mxu0
      %10468 = vmatprep.mubr.bf16.mxu0 0
      %10469 = vmatmul.mubr.bf16.gmra.mxu0 %v10389
      %v10470 = vpop.f32.mrf.mxu0
      %v10471 = vadd.f32 0.0, %v10470
      %v10472 = vpop.f32.mrf.mxu0
      %v10473 = vpop.f32.mrf.mxu0
      %v10474 = vadd.f32 0.0, %v10473
      %v10475 = vpop.f32.mrf.mxu0
      %10476 = vmatprep.mubr.bf16.mxu0 0
      %10477 = vmatmul.mubr.bf16.gmra.mxu0 %v10391
      %v10478 = vpop.f32.mrf.mxu0
      %v10479 = vadd.f32 0.0, %v10478
      %v10480 = vpop.f32.mrf.mxu0
      %v10481 = vpop.f32.mrf.mxu0
      %v10482 = vadd.f32 0.0, %v10481
      %v10483 = vpop.f32.mrf.mxu0
      %10484 = vmatprep.mubr.bf16.mxu0 0
      %10485 = vmatmul.mubr.bf16.gmra.mxu0 %v10393
      %v10486 = vpop.f32.mrf.mxu0
      %v10487 = vadd.f32 0.0, %v10486
      %v10488 = vpop.f32.mrf.mxu0
      %v10489 = vpop.f32.mrf.mxu0
      %v10490 = vadd.f32 0.0, %v10489
      %v10491 = vpop.f32.mrf.mxu0
      %10492 = vmatprep.mubr.bf16.mxu0 0
      %10493 = vmatmul.mubr.bf16.gmra.mxu0 %v10395
      %v10494 = vpop.f32.mrf.mxu0
      %v10495 = vadd.f32 0.0, %v10494
      %v10496 = vpop.f32.mrf.mxu0
      %v10497 = vpop.f32.mrf.mxu0
      %v10498 = vadd.f32 0.0, %v10497
      %v10499 = vpop.f32.mrf.mxu0
      %10500 = vmatprep.mubr.bf16.mxu0 0
      %10501 = vmatmul.mubr.bf16.gmra.mxu0 %v10397
      %v10502 = vpop.f32.mrf.mxu0
      %v10503 = vadd.f32 0.0, %v10502
      %v10504 = vpop.f32.mrf.mxu0
      %v10505 = vpop.f32.mrf.mxu0
      %v10506 = vadd.f32 0.0, %v10505
      %v10507 = vpop.f32.mrf.mxu0
      %10508 = vmatprep.mubr.bf16.mxu0 0
      %10509 = vmatmul.mubr.bf16.gmra.mxu0 %v10399
      %v10510 = vpop.f32.mrf.mxu0
      %v10511 = vadd.f32 0.0, %v10510
      %v10512 = vpop.f32.mrf.mxu0
      %v10513 = vpop.f32.mrf.mxu0
      %v10514 = vadd.f32 0.0, %v10513
      %v10515 = vpop.f32.mrf.mxu0
      %10516 = vmatprep.mubr.bf16.mxu0 0
      %10517 = vmatmul.mubr.bf16.gmra.mxu0 %v10401
      %v10518 = vpop.f32.mrf.mxu0
      %v10519 = vadd.f32 0.0, %v10518
      %v10520 = vpop.f32.mrf.mxu0
      %v10521 = vpop.f32.mrf.mxu0
      %v10522 = vadd.f32 0.0, %v10521
      %v10523 = vpop.f32.mrf.mxu0
      %10524 = vmatprep.mubr.bf16.mxu0 0
      %10525 = vmatmul.mubr.bf16.gmra.mxu0 %v10403
      %v10526 = vpop.f32.mrf.mxu0
      %v10527 = vadd.f32 0.0, %v10526
      %v10528 = vpop.f32.mrf.mxu0
      %v10529 = vpop.f32.mrf.mxu0
      %v10530 = vadd.f32 0.0, %v10529
      %v10531 = vpop.f32.mrf.mxu0
      %10532 = vmatprep.mubr.bf16.mxu0 0
      %10533 = vmatmul.mubr.bf16.gmra.mxu0 %v10405
      %v10534 = vpop.f32.mrf.mxu0
      %v10535 = vadd.f32 0.0, %v10534
      %v10536 = vpop.f32.mrf.mxu0
      %v10537 = vpop.f32.mrf.mxu0
      %v10538 = vadd.f32 0.0, %v10537
      %v10539 = vpop.f32.mrf.mxu0
      %10540 = vmatprep.mubr.bf16.mxu0 0
      %10541 = vmatmul.mubr.bf16.gmra.mxu0 %v10407
      %v10542 = vpop.f32.mrf.mxu0
      %v10543 = vadd.f32 0.0, %v10542
      %v10544 = vpop.f32.mrf.mxu0
      %v10545 = vpop.f32.mrf.mxu0
      %v10546 = vadd.f32 0.0, %v10545
      %v10547 = vpop.f32.mrf.mxu0
      %10548 = vmatprep.mubr.bf16.mxu0 0
      %10549 = vmatmul.mubr.bf16.gmra.mxu0 %v10409
      %v10550 = vpop.f32.mrf.mxu0
      %v10551 = vadd.f32 0.0, %v10550
      %v10552 = vpop.f32.mrf.mxu0
      %v10553 = vpop.f32.mrf.mxu0
      %v10554 = vadd.f32 0.0, %v10553
      %v10555 = vpop.f32.mrf.mxu0
      %10556 = vmatprep.mubr.bf16.mxu0 0
      %10557 = vmatmul.mubr.bf16.gmra.mxu0 %v10411
      %v10558 = vpop.f32.mrf.mxu0
      %v10559 = vadd.f32 0.0, %v10558
      %v10560 = vpop.f32.mrf.mxu0
      %v10561 = vpop.f32.mrf.mxu0
      %v10562 = vadd.f32 0.0, %v10561
      %v10563 = vpop.f32.mrf.mxu0
      %10564 = vmatprep.mubr.bf16.mxu0 0
      %10565 = vmatmul.mubr.bf16.gmra.mxu0 %v10413
      %v10566 = vpop.f32.mrf.mxu0
      %v10567 = vadd.f32 0.0, %v10566
      %v10568 = vpop.f32.mrf.mxu0
      %v10569 = vpop.f32.mrf.mxu0
      %v10570 = vadd.f32 0.0, %v10569
      %v10571 = vpop.f32.mrf.mxu0
      %10572 = vmatprep.mubr.bf16.mxu0 0
      %10573 = vmatmul.mubr.bf16.gmra.mxu0 %v10415
      %v10574 = vpop.f32.mrf.mxu0
      %v10575 = vadd.f32 0.0, %v10574
      %v10576 = vpop.f32.mrf.mxu0
      %v10577 = vpop.f32.mrf.mxu0
      %v10578 = vadd.f32 0.0, %v10577
      %v10579 = vpop.f32.mrf.mxu0
      %10580 = vdwg.mxu0
      %v10581 = vld [vmem:[%s7] sm:$0x1]
      %v10583 = vlaneseq
      %v10584 = vshrl.u32 %v10583, 7
      %v10585 = vsub.s32 0, %v10584
      %v10586 = vrot.slane %v10581, %v10585
      %10587 = vrot.lane.b32.xlu0 %v10586, 32
      %v10588 = vpop.permute.xlu0 %10587
      %v10590 = vadd.f32 %v10455, %v10588
      %v10591 = vadd.f32 %v10458, %v10588
      %v10592 = vadd.f32 %v10463, %v10588
      %v10593 = vadd.f32 %v10466, %v10588
      %v10594 = vadd.f32 %v10471, %v10588
      %v10595 = vadd.f32 %v10474, %v10588
      %v10596 = vadd.f32 %v10479, %v10588
      %v10597 = vadd.f32 %v10482, %v10588
      %v10598 = vadd.f32 %v10487, %v10588
      %v10599 = vadd.f32 %v10490, %v10588
      %v10600 = vadd.f32 %v10495, %v10588
      %v10601 = vadd.f32 %v10498, %v10588
      %v10602 = vadd.f32 %v10503, %v10588
      %v10603 = vadd.f32 %v10506, %v10588
      %v10604 = vadd.f32 %v10511, %v10588
      %v10605 = vadd.f32 %v10514, %v10588
      %v10606 = vadd.f32 %v10519, %v10588
      %v10607 = vadd.f32 %v10522, %v10588
      %v10608 = vadd.f32 %v10527, %v10588
      %v10609 = vadd.f32 %v10530, %v10588
      %v10610 = vadd.f32 %v10535, %v10588
      %v10611 = vadd.f32 %v10538, %v10588
      %v10612 = vadd.f32 %v10543, %v10588
      %v10613 = vadd.f32 %v10546, %v10588
      %v10614 = vadd.f32 %v10551, %v10588
      %v10615 = vadd.f32 %v10554, %v10588
      %v10616 = vadd.f32 %v10559, %v10588
      %v10617 = vadd.f32 %v10562, %v10588
      %v10618 = vadd.f32 %v10567, %v10588
      %v10619 = vadd.f32 %v10570, %v10588
      %v10620 = vadd.f32 %v10575, %v10588
      %v10621 = vadd.f32 %v10578, %v10588
      %v10622 = vrot.slane %v10455, 6
      %v10623 = vrot.slane %v10458, 6
      %v10624 = vrot.slane %v10463, 6
      %v10625 = vrot.slane %v10466, 6
      %v10626 = vrot.slane %v10471, 6
      %v10627 = vrot.slane %v10474, 6
      %v10628 = vrot.slane %v10479, 6
      %v10629 = vrot.slane %v10482, 6
      %v10630 = vrot.slane %v10487, 6
      %v10631 = vrot.slane %v10490, 6
      %v10632 = vrot.slane %v10495, 6
      %v10633 = vrot.slane %v10498, 6
      %v10634 = vrot.slane %v10503, 6
      %v10635 = vrot.slane %v10506, 6
      %v10636 = vrot.slane %v10511, 6
      %v10637 = vrot.slane %v10514, 6
      %v10638 = vrot.slane %v10519, 6
      %v10639 = vrot.slane %v10522, 6
      %v10640 = vrot.slane %v10527, 6
      %v10641 = vrot.slane %v10530, 6
      %v10642 = vrot.slane %v10535, 6
      %v10643 = vrot.slane %v10538, 6
      %v10644 = vrot.slane %v10543, 6
      %v10645 = vrot.slane %v10546, 6
      %v10646 = vrot.slane %v10551, 6
      %v10647 = vrot.slane %v10554, 6
      %v10648 = vrot.slane %v10559, 6
      %v10649 = vrot.slane %v10562, 6
      %v10650 = vrot.slane %v10567, 6
      %v10651 = vrot.slane %v10570, 6
      %v10652 = vrot.slane %v10575, 6
      %v10653 = vrot.slane %v10578, 6
      %v10654 = vsel %vm3720, %v10652, %v10653
      %v10655 = vsel %vm3720, %v10651, %v10652
      %v10656 = vsel %vm3720, %v10650, %v10651
      %v10657 = vsel %vm3720, %v10649, %v10650
      %v10658 = vsel %vm3720, %v10648, %v10649
      %v10659 = vsel %vm3720, %v10647, %v10648
      %v10660 = vsel %vm3720, %v10646, %v10647
      %v10661 = vsel %vm3720, %v10645, %v10646
      %v10662 = vsel %vm3720, %v10644, %v10645
      %v10663 = vsel %vm3720, %v10643, %v10644
      %v10664 = vsel %vm3720, %v10642, %v10643
      %v10665 = vsel %vm3720, %v10641, %v10642
      %v10666 = vsel %vm3720, %v10640, %v10641
      %v10667 = vsel %vm3720, %v10639, %v10640
      %v10668 = vsel %vm3720, %v10638, %v10639
      %v10669 = vsel %vm3720, %v10637, %v10638
      %v10670 = vsel %vm3720, %v10636, %v10637
      %v10671 = vsel %vm3720, %v10635, %v10636
      %v10672 = vsel %vm3720, %v10634, %v10635
      %v10673 = vsel %vm3720, %v10633, %v10634
      %v10674 = vsel %vm3720, %v10632, %v10633
      %v10675 = vsel %vm3720, %v10631, %v10632
      %v10676 = vsel %vm3720, %v10630, %v10631
      %v10677 = vsel %vm3720, %v10629, %v10630
      %v10678 = vsel %vm3720, %v10628, %v10629
      %v10679 = vsel %vm3720, %v10627, %v10628
      %v10680 = vsel %vm3720, %v10626, %v10627
      %v10681 = vsel %vm3720, %v10625, %v10626
      %v10682 = vsel %vm3720, %v10624, %v10625
      %v10683 = vsel %vm3720, %v10623, %v10624
      %v10684 = vsel %vm3720, %v10622, %v10623
      %v10685 = vsel %vm3720, %v10653, %v10622
      %v10686 = vmul.f32 %v10685, %v3817
      %v10687 = vmul.f32 %v10684, %v3818
      %v10688 = vmul.f32 %v10683, %v3819
      %v10689 = vmul.f32 %v10682, %v3820
      %v10690 = vmul.f32 %v10681, %v3821
      %v10691 = vmul.f32 %v10680, %v3822
      %v10692 = vmul.f32 %v10679, %v3823
      %v10693 = vmul.f32 %v10678, %v3824
      %v10694 = vmul.f32 %v10677, %v3825
      %v10695 = vmul.f32 %v10676, %v3826
      %v10696 = vmul.f32 %v10675, %v3827
      %v10697 = vmul.f32 %v10674, %v3828
      %v10698 = vmul.f32 %v10673, %v3829
      %v10699 = vmul.f32 %v10672, %v3830
      %v10700 = vmul.f32 %v10671, %v3831
      %v10701 = vmul.f32 %v10670, %v3832
      %v10702 = vmul.f32 %v10669, %v3833
      %v10703 = vmul.f32 %v10668, %v3834
      %v10704 = vmul.f32 %v10667, %v3835
      %v10705 = vmul.f32 %v10666, %v3836
      %v10706 = vmul.f32 %v10665, %v3837
      %v10707 = vmul.f32 %v10664, %v3838
      %v10708 = vmul.f32 %v10663, %v3839
      %v10709 = vmul.f32 %v10662, %v3840
      %v10710 = vmul.f32 %v10661, %v3841
      %v10711 = vmul.f32 %v10660, %v3842
      %v10712 = vmul.f32 %v10659, %v3843
      %v10713 = vmul.f32 %v10658, %v3844
      %v10714 = vmul.f32 %v10657, %v3845
      %v10715 = vmul.f32 %v10656, %v3846
      %v10716 = vmul.f32 %v10655, %v3847
      %v10717 = vmul.f32 %v10654, %v3848
      %10750 = vrot.lane.b32.xlu0 %v10686, 32
      %v10751 = vpop.permute.xlu0 %10750
      %10752 = vrot.lane.b32.xlu0 %v10687, 32
      %v10753 = vpop.permute.xlu0 %10752
      %10754 = vrot.lane.b32.xlu0 %v10688, 32
      %v10755 = vpop.permute.xlu0 %10754
      %10756 = vrot.lane.b32.xlu0 %v10689, 32
      %v10757 = vpop.permute.xlu0 %10756
      %10758 = vrot.lane.b32.xlu0 %v10690, 32
      %v10759 = vpop.permute.xlu0 %10758
      %10760 = vrot.lane.b32.xlu0 %v10691, 32
      %v10761 = vpop.permute.xlu0 %10760
      %10762 = vrot.lane.b32.xlu0 %v10692, 32
      %v10763 = vpop.permute.xlu0 %10762
      %10764 = vrot.lane.b32.xlu0 %v10693, 32
      %v10765 = vpop.permute.xlu0 %10764
      %10766 = vrot.lane.b32.xlu0 %v10694, 32
      %v10767 = vpop.permute.xlu0 %10766
      %10768 = vrot.lane.b32.xlu0 %v10695, 32
      %v10769 = vpop.permute.xlu0 %10768
      %10770 = vrot.lane.b32.xlu0 %v10696, 32
      %v10771 = vpop.permute.xlu0 %10770
      %10772 = vrot.lane.b32.xlu0 %v10697, 32
      %v10773 = vpop.permute.xlu0 %10772
      %10774 = vrot.lane.b32.xlu0 %v10698, 32
      %v10775 = vpop.permute.xlu0 %10774
      %10776 = vrot.lane.b32.xlu0 %v10699, 32
      %v10777 = vpop.permute.xlu0 %10776
      %10778 = vrot.lane.b32.xlu0 %v10700, 32
      %v10779 = vpop.permute.xlu0 %10778
      %10780 = vrot.lane.b32.xlu0 %v10701, 32
      %v10781 = vpop.permute.xlu0 %10780
      %10782 = vrot.lane.b32.xlu0 %v10702, 32
      %v10783 = vpop.permute.xlu0 %10782
      %10784 = vrot.lane.b32.xlu0 %v10703, 32
      %v10785 = vpop.permute.xlu0 %10784
      %10786 = vrot.lane.b32.xlu0 %v10704, 32
      %v10787 = vpop.permute.xlu0 %10786
      %10788 = vrot.lane.b32.xlu0 %v10705, 32
      %v10789 = vpop.permute.xlu0 %10788
      %10790 = vrot.lane.b32.xlu0 %v10706, 32
      %v10791 = vpop.permute.xlu0 %10790
      %10792 = vrot.lane.b32.xlu0 %v10707, 32
      %v10793 = vpop.permute.xlu0 %10792
      %10794 = vrot.lane.b32.xlu0 %v10708, 32
      %v10795 = vpop.permute.xlu0 %10794
      %10796 = vrot.lane.b32.xlu0 %v10709, 32
      %v10797 = vpop.permute.xlu0 %10796
      %10798 = vrot.lane.b32.xlu0 %v10710, 32
      %v10799 = vpop.permute.xlu0 %10798
      %10800 = vrot.lane.b32.xlu0 %v10711, 32
      %v10801 = vpop.permute.xlu0 %10800
      %10802 = vrot.lane.b32.xlu0 %v10712, 32
      %v10803 = vpop.permute.xlu0 %10802
      %10804 = vrot.lane.b32.xlu0 %v10713, 32
      %v10805 = vpop.permute.xlu0 %10804
      %10806 = vrot.lane.b32.xlu0 %v10714, 32
      %v10807 = vpop.permute.xlu0 %10806
      %10808 = vrot.lane.b32.xlu0 %v10715, 32
      %v10809 = vpop.permute.xlu0 %10808
      %10810 = vrot.lane.b32.xlu0 %v10716, 32
      %v10811 = vpop.permute.xlu0 %10810
      %10812 = vrot.lane.b32.xlu0 %v10717, 32
      %v10813 = vpop.permute.xlu0 %10812
      %v10846 = vadd.f32 %v10590, %v10751
      %v10847 = vadd.f32 %v10591, %v10753
      %v10848 = vadd.f32 %v10592, %v10755
      %v10849 = vadd.f32 %v10593, %v10757
      %v10850 = vadd.f32 %v10594, %v10759
      %v10851 = vadd.f32 %v10595, %v10761
      %v10852 = vadd.f32 %v10596, %v10763
      %v10853 = vadd.f32 %v10597, %v10765
      %v10854 = vadd.f32 %v10598, %v10767
      %v10855 = vadd.f32 %v10599, %v10769
      %v10856 = vadd.f32 %v10600, %v10771
      %v10857 = vadd.f32 %v10601, %v10773
      %v10858 = vadd.f32 %v10602, %v10775
      %v10859 = vadd.f32 %v10603, %v10777
      %v10860 = vadd.f32 %v10604, %v10779
      %v10861 = vadd.f32 %v10605, %v10781
      %v10862 = vadd.f32 %v10606, %v10783
      %v10863 = vadd.f32 %v10607, %v10785
      %v10864 = vadd.f32 %v10608, %v10787
      %v10865 = vadd.f32 %v10609, %v10789
      %v10866 = vadd.f32 %v10610, %v10791
      %v10867 = vadd.f32 %v10611, %v10793
      %v10868 = vadd.f32 %v10612, %v10795
      %v10869 = vadd.f32 %v10613, %v10797
      %v10870 = vadd.f32 %v10614, %v10799
      %v10871 = vadd.f32 %v10615, %v10801
      %v10872 = vadd.f32 %v10616, %v10803
      %v10873 = vadd.f32 %v10617, %v10805
      %v10874 = vadd.f32 %v10618, %v10807
      %v10875 = vadd.f32 %v10619, %v10809
      %v10876 = vadd.f32 %v10620, %v10811
      %v10877 = vadd.f32 %v10621, %v10813
      %10910 = vrot.lane.b32.xlu0 %v10455, 112
      %v10911 = vpop.permute.xlu0 %10910
      %10912 = vrot.lane.b32.xlu0 %v10458, 112
      %v10913 = vpop.permute.xlu0 %10912
      %10914 = vrot.lane.b32.xlu0 %v10463, 112
      %v10915 = vpop.permute.xlu0 %10914
      %10916 = vrot.lane.b32.xlu0 %v10466, 112
      %v10917 = vpop.permute.xlu0 %10916
      %10918 = vrot.lane.b32.xlu0 %v10471, 112
      %v10919 = vpop.permute.xlu0 %10918
      %10920 = vrot.lane.b32.xlu0 %v10474, 112
      %v10921 = vpop.permute.xlu0 %10920
      %10922 = vrot.lane.b32.xlu0 %v10479, 112
      %v10923 = vpop.permute.xlu0 %10922
      %10924 = vrot.lane.b32.xlu0 %v10482, 112
      %v10925 = vpop.permute.xlu0 %10924
      %10926 = vrot.lane.b32.xlu0 %v10487, 112
      %v10927 = vpop.permute.xlu0 %10926
      %10928 = vrot.lane.b32.xlu0 %v10490, 112
      %v10929 = vpop.permute.xlu0 %10928
      %10930 = vrot.lane.b32.xlu0 %v10495, 112
      %v10931 = vpop.permute.xlu0 %10930
      %10932 = vrot.lane.b32.xlu0 %v10498, 112
      %v10933 = vpop.permute.xlu0 %10932
      %10934 = vrot.lane.b32.xlu0 %v10503, 112
      %v10935 = vpop.permute.xlu0 %10934
      %10936 = vrot.lane.b32.xlu0 %v10506, 112
      %v10937 = vpop.permute.xlu0 %10936
      %10938 = vrot.lane.b32.xlu0 %v10511, 112
      %v10939 = vpop.permute.xlu0 %10938
      %10940 = vrot.lane.b32.xlu0 %v10514, 112
      %v10941 = vpop.permute.xlu0 %10940
      %10942 = vrot.lane.b32.xlu0 %v10519, 112
      %v10943 = vpop.permute.xlu0 %10942
      %10944 = vrot.lane.b32.xlu0 %v10522, 112
      %v10945 = vpop.permute.xlu0 %10944
      %10946 = vrot.lane.b32.xlu0 %v10527, 112
      %v10947 = vpop.permute.xlu0 %10946
      %10948 = vrot.lane.b32.xlu0 %v10530, 112
      %v10949 = vpop.permute.xlu0 %10948
      %10950 = vrot.lane.b32.xlu0 %v10535, 112
      %v10951 = vpop.permute.xlu0 %10950
      %10952 = vrot.lane.b32.xlu0 %v10538, 112
      %v10953 = vpop.permute.xlu0 %10952
      %10954 = vrot.lane.b32.xlu0 %v10543, 112
      %v10955 = vpop.permute.xlu0 %10954
      %10956 = vrot.lane.b32.xlu0 %v10546, 112
      %v10957 = vpop.permute.xlu0 %10956
      %10958 = vrot.lane.b32.xlu0 %v10551, 112
      %v10959 = vpop.permute.xlu0 %10958
      %10960 = vrot.lane.b32.xlu0 %v10554, 112
      %v10961 = vpop.permute.xlu0 %10960
      %10962 = vrot.lane.b32.xlu0 %v10559, 112
      %v10963 = vpop.permute.xlu0 %10962
      %10964 = vrot.lane.b32.xlu0 %v10562, 112
      %v10965 = vpop.permute.xlu0 %10964
      %10966 = vrot.lane.b32.xlu0 %v10567, 112
      %v10967 = vpop.permute.xlu0 %10966
      %10968 = vrot.lane.b32.xlu0 %v10570, 112
      %v10969 = vpop.permute.xlu0 %10968
      %10970 = vrot.lane.b32.xlu0 %v10575, 112
      %v10971 = vpop.permute.xlu0 %10970
      %10972 = vrot.lane.b32.xlu0 %v10578, 112
      %v10973 = vpop.permute.xlu0 %10972
      %v11006 = vrot.slane %v10911, 7
      %v11007 = vrot.slane %v10913, 7
      %v11008 = vrot.slane %v10915, 7
      %v11009 = vrot.slane %v10917, 7
      %v11010 = vrot.slane %v10919, 7
      %v11011 = vrot.slane %v10921, 7
      %v11012 = vrot.slane %v10923, 7
      %v11013 = vrot.slane %v10925, 7
      %v11014 = vrot.slane %v10927, 7
      %v11015 = vrot.slane %v10929, 7
      %v11016 = vrot.slane %v10931, 7
      %v11017 = vrot.slane %v10933, 7
      %v11018 = vrot.slane %v10935, 7
      %v11019 = vrot.slane %v10937, 7
      %v11020 = vrot.slane %v10939, 7
      %v11021 = vrot.slane %v10941, 7
      %v11022 = vrot.slane %v10943, 7
      %v11023 = vrot.slane %v10945, 7
      %v11024 = vrot.slane %v10947, 7
      %v11025 = vrot.slane %v10949, 7
      %v11026 = vrot.slane %v10951, 7
      %v11027 = vrot.slane %v10953, 7
      %v11028 = vrot.slane %v10955, 7
      %v11029 = vrot.slane %v10957, 7
      %v11030 = vrot.slane %v10959, 7
      %v11031 = vrot.slane %v10961, 7
      %v11032 = vrot.slane %v10963, 7
      %v11033 = vrot.slane %v10965, 7
      %v11034 = vrot.slane %v10967, 7
      %v11035 = vrot.slane %v10969, 7
      %v11036 = vrot.slane %v10971, 7
      %v11037 = vrot.slane %v10973, 7
      %v11038 = vsel %vm4169, %v11036, %v11037
      %v11039 = vsel %vm4169, %v11035, %v11036
      %v11040 = vsel %vm4169, %v11034, %v11035
      %v11041 = vsel %vm4169, %v11033, %v11034
      %v11042 = vsel %vm4169, %v11032, %v11033
      %v11043 = vsel %vm4169, %v11031, %v11032
      %v11044 = vsel %vm4169, %v11030, %v11031
      %v11045 = vsel %vm4169, %v11029, %v11030
      %v11046 = vsel %vm4169, %v11028, %v11029
      %v11047 = vsel %vm4169, %v11027, %v11028
      %v11048 = vsel %vm4169, %v11026, %v11027
      %v11049 = vsel %vm4169, %v11025, %v11026
      %v11050 = vsel %vm4169, %v11024, %v11025
      %v11051 = vsel %vm4169, %v11023, %v11024
      %v11052 = vsel %vm4169, %v11022, %v11023
      %v11053 = vsel %vm4169, %v11021, %v11022
      %v11054 = vsel %vm4169, %v11020, %v11021
      %v11055 = vsel %vm4169, %v11019, %v11020
      %v11056 = vsel %vm4169, %v11018, %v11019
      %v11057 = vsel %vm4169, %v11017, %v11018
      %v11058 = vsel %vm4169, %v11016, %v11017
      %v11059 = vsel %vm4169, %v11015, %v11016
      %v11060 = vsel %vm4169, %v11014, %v11015
      %v11061 = vsel %vm4169, %v11013, %v11014
      %v11062 = vsel %vm4169, %v11012, %v11013
      %v11063 = vsel %vm4169, %v11011, %v11012
      %v11064 = vsel %vm4169, %v11010, %v11011
      %v11065 = vsel %vm4169, %v11009, %v11010
      %v11066 = vsel %vm4169, %v11008, %v11009
      %v11067 = vsel %vm4169, %v11007, %v11008
      %v11068 = vsel %vm4169, %v11006, %v11007
      %v11069 = vsel %vm4169, %v11037, %v11006
      %v11070 = vmul.f32 %v11069, %v4266
      %v11071 = vmul.f32 %v11068, %v4267
      %v11072 = vmul.f32 %v11067, %v4268
      %v11073 = vmul.f32 %v11066, %v4269
      %v11074 = vmul.f32 %v11065, %v4270
      %v11075 = vmul.f32 %v11064, %v4271
      %v11076 = vmul.f32 %v11063, %v4272
      %v11077 = vmul.f32 %v11062, %v4273
      %v11078 = vmul.f32 %v11061, %v4274
      %v11079 = vmul.f32 %v11060, %v4275
      %v11080 = vmul.f32 %v11059, %v4276
      %v11081 = vmul.f32 %v11058, %v4277
      %v11082 = vmul.f32 %v11057, %v4278
      %v11083 = vmul.f32 %v11056, %v4279
      %v11084 = vmul.f32 %v11055, %v4280
      %v11085 = vmul.f32 %v11054, %v4281
      %v11086 = vmul.f32 %v11053, %v4282
      %v11087 = vmul.f32 %v11052, %v4283
      %v11088 = vmul.f32 %v11051, %v4284
      %v11089 = vmul.f32 %v11050, %v4285
      %v11090 = vmul.f32 %v11049, %v4286
      %v11091 = vmul.f32 %v11048, %v4287
      %v11092 = vmul.f32 %v11047, %v4288
      %v11093 = vmul.f32 %v11046, %v4289
      %v11094 = vmul.f32 %v11045, %v4290
      %v11095 = vmul.f32 %v11044, %v4291
      %v11096 = vmul.f32 %v11043, %v4292
      %v11097 = vmul.f32 %v11042, %v4293
      %v11098 = vmul.f32 %v11041, %v4294
      %v11099 = vmul.f32 %v11040, %v4295
      %v11100 = vmul.f32 %v11039, %v4296
      %v11101 = vmul.f32 %v11038, %v4297
      %11134 = vrot.lane.b32.xlu0 %v11070, 32
      %v11135 = vpop.permute.xlu0 %11134
      %11136 = vrot.lane.b32.xlu0 %v11071, 32
      %v11137 = vpop.permute.xlu0 %11136
      %11138 = vrot.lane.b32.xlu0 %v11072, 32
      %v11139 = vpop.permute.xlu0 %11138
      %11140 = vrot.lane.b32.xlu0 %v11073, 32
      %v11141 = vpop.permute.xlu0 %11140
      %11142 = vrot.lane.b32.xlu0 %v11074, 32
      %v11143 = vpop.permute.xlu0 %11142
      %11144 = vrot.lane.b32.xlu0 %v11075, 32
      %v11145 = vpop.permute.xlu0 %11144
      %11146 = vrot.lane.b32.xlu0 %v11076, 32
      %v11147 = vpop.permute.xlu0 %11146
      %11148 = vrot.lane.b32.xlu0 %v11077, 32
      %v11149 = vpop.permute.xlu0 %11148
      %11150 = vrot.lane.b32.xlu0 %v11078, 32
      %v11151 = vpop.permute.xlu0 %11150
      %11152 = vrot.lane.b32.xlu0 %v11079, 32
      %v11153 = vpop.permute.xlu0 %11152
      %11154 = vrot.lane.b32.xlu0 %v11080, 32
      %v11155 = vpop.permute.xlu0 %11154
      %11156 = vrot.lane.b32.xlu0 %v11081, 32
      %v11157 = vpop.permute.xlu0 %11156
      %11158 = vrot.lane.b32.xlu0 %v11082, 32
      %v11159 = vpop.permute.xlu0 %11158
      %11160 = vrot.lane.b32.xlu0 %v11083, 32
      %v11161 = vpop.permute.xlu0 %11160
      %11162 = vrot.lane.b32.xlu0 %v11084, 32
      %v11163 = vpop.permute.xlu0 %11162
      %11164 = vrot.lane.b32.xlu0 %v11085, 32
      %v11165 = vpop.permute.xlu0 %11164
      %11166 = vrot.lane.b32.xlu0 %v11086, 32
      %v11167 = vpop.permute.xlu0 %11166
      %11168 = vrot.lane.b32.xlu0 %v11087, 32
      %v11169 = vpop.permute.xlu0 %11168
      %11170 = vrot.lane.b32.xlu0 %v11088, 32
      %v11171 = vpop.permute.xlu0 %11170
      %11172 = vrot.lane.b32.xlu0 %v11089, 32
      %v11173 = vpop.permute.xlu0 %11172
      %11174 = vrot.lane.b32.xlu0 %v11090, 32
      %v11175 = vpop.permute.xlu0 %11174
      %11176 = vrot.lane.b32.xlu0 %v11091, 32
      %v11177 = vpop.permute.xlu0 %11176
      %11178 = vrot.lane.b32.xlu0 %v11092, 32
      %v11179 = vpop.permute.xlu0 %11178
      %11180 = vrot.lane.b32.xlu0 %v11093, 32
      %v11181 = vpop.permute.xlu0 %11180
      %11182 = vrot.lane.b32.xlu0 %v11094, 32
      %v11183 = vpop.permute.xlu0 %11182
      %11184 = vrot.lane.b32.xlu0 %v11095, 32
      %v11185 = vpop.permute.xlu0 %11184
      %11186 = vrot.lane.b32.xlu0 %v11096, 32
      %v11187 = vpop.permute.xlu0 %11186
      %11188 = vrot.lane.b32.xlu0 %v11097, 32
      %v11189 = vpop.permute.xlu0 %11188
      %11190 = vrot.lane.b32.xlu0 %v11098, 32
      %v11191 = vpop.permute.xlu0 %11190
      %11192 = vrot.lane.b32.xlu0 %v11099, 32
      %v11193 = vpop.permute.xlu0 %11192
      %11194 = vrot.lane.b32.xlu0 %v11100, 32
      %v11195 = vpop.permute.xlu0 %11194
      %11196 = vrot.lane.b32.xlu0 %v11101, 32
      %v11197 = vpop.permute.xlu0 %11196
      %v11230 = vadd.f32 %v10846, %v11135
      %v11231 = vadd.f32 %v10847, %v11137
      %v11232 = vadd.f32 %v10848, %v11139
      %v11233 = vadd.f32 %v10849, %v11141
      %v11234 = vadd.f32 %v10850, %v11143
      %v11235 = vadd.f32 %v10851, %v11145
      %v11236 = vadd.f32 %v10852, %v11147
      %v11237 = vadd.f32 %v10853, %v11149
      %v11238 = vadd.f32 %v10854, %v11151
      %v11239 = vadd.f32 %v10855, %v11153
      %v11240 = vadd.f32 %v10856, %v11155
      %v11241 = vadd.f32 %v10857, %v11157
      %v11242 = vadd.f32 %v10858, %v11159
      %v11243 = vadd.f32 %v10859, %v11161
      %v11244 = vadd.f32 %v10860, %v11163
      %v11245 = vadd.f32 %v10861, %v11165
      %v11246 = vadd.f32 %v10862, %v11167
      %v11247 = vadd.f32 %v10863, %v11169
      %v11248 = vadd.f32 %v10864, %v11171
      %v11249 = vadd.f32 %v10865, %v11173
      %v11250 = vadd.f32 %v10866, %v11175
      %v11251 = vadd.f32 %v10867, %v11177
      %v11252 = vadd.f32 %v10868, %v11179
      %v11253 = vadd.f32 %v10869, %v11181
      %v11254 = vadd.f32 %v10870, %v11183
      %v11255 = vadd.f32 %v10871, %v11185
      %v11256 = vadd.f32 %v10872, %v11187
      %v11257 = vadd.f32 %v10873, %v11189
      %v11258 = vadd.f32 %v10874, %v11191
      %v11259 = vadd.f32 %v10875, %v11193
      %v11260 = vadd.f32 %v10876, %v11195
      %v11261 = vadd.f32 %v10877, %v11197
      %11262 = vrot.lane.b32.xlu0 %v10455, 80
      %v11263 = vpop.permute.xlu0 %11262
      %11264 = vrot.lane.b32.xlu0 %v10458, 80
      %v11265 = vpop.permute.xlu0 %11264
      %11266 = vrot.lane.b32.xlu0 %v10463, 80
      %v11267 = vpop.permute.xlu0 %11266
      %11268 = vrot.lane.b32.xlu0 %v10466, 80
      %v11269 = vpop.permute.xlu0 %11268
      %11270 = vrot.lane.b32.xlu0 %v10471, 80
      %v11271 = vpop.permute.xlu0 %11270
      %11272 = vrot.lane.b32.xlu0 %v10474, 80
      %v11273 = vpop.permute.xlu0 %11272
      %11274 = vrot.lane.b32.xlu0 %v10479, 80
      %v11275 = vpop.permute.xlu0 %11274
      %11276 = vrot.lane.b32.xlu0 %v10482, 80
      %v11277 = vpop.permute.xlu0 %11276
      %11278 = vrot.lane.b32.xlu0 %v10487, 80
      %v11279 = vpop.permute.xlu0 %11278
      %11280 = vrot.lane.b32.xlu0 %v10490, 80
      %v11281 = vpop.permute.xlu0 %11280
      %11282 = vrot.lane.b32.xlu0 %v10495, 80
      %v11283 = vpop.permute.xlu0 %11282
      %11284 = vrot.lane.b32.xlu0 %v10498, 80
      %v11285 = vpop.permute.xlu0 %11284
      %11286 = vrot.lane.b32.xlu0 %v10503, 80
      %v11287 = vpop.permute.xlu0 %11286
      %11288 = vrot.lane.b32.xlu0 %v10506, 80
      %v11289 = vpop.permute.xlu0 %11288
      %11290 = vrot.lane.b32.xlu0 %v10511, 80
      %v11291 = vpop.permute.xlu0 %11290
      %11292 = vrot.lane.b32.xlu0 %v10514, 80
      %v11293 = vpop.permute.xlu0 %11292
      %11294 = vrot.lane.b32.xlu0 %v10519, 80
      %v11295 = vpop.permute.xlu0 %11294
      %11296 = vrot.lane.b32.xlu0 %v10522, 80
      %v11297 = vpop.permute.xlu0 %11296
      %11298 = vrot.lane.b32.xlu0 %v10527, 80
      %v11299 = vpop.permute.xlu0 %11298
      %11300 = vrot.lane.b32.xlu0 %v10530, 80
      %v11301 = vpop.permute.xlu0 %11300
      %11302 = vrot.lane.b32.xlu0 %v10535, 80
      %v11303 = vpop.permute.xlu0 %11302
      %11304 = vrot.lane.b32.xlu0 %v10538, 80
      %v11305 = vpop.permute.xlu0 %11304
      %11306 = vrot.lane.b32.xlu0 %v10543, 80
      %v11307 = vpop.permute.xlu0 %11306
      %11308 = vrot.lane.b32.xlu0 %v10546, 80
      %v11309 = vpop.permute.xlu0 %11308
      %11310 = vrot.lane.b32.xlu0 %v10551, 80
      %v11311 = vpop.permute.xlu0 %11310
      %11312 = vrot.lane.b32.xlu0 %v10554, 80
      %v11313 = vpop.permute.xlu0 %11312
      %11314 = vrot.lane.b32.xlu0 %v10559, 80
      %v11315 = vpop.permute.xlu0 %11314
      %11316 = vrot.lane.b32.xlu0 %v10562, 80
      %v11317 = vpop.permute.xlu0 %11316
      %11318 = vrot.lane.b32.xlu0 %v10567, 80
      %v11319 = vpop.permute.xlu0 %11318
      %11320 = vrot.lane.b32.xlu0 %v10570, 80
      %v11321 = vpop.permute.xlu0 %11320
      %11322 = vrot.lane.b32.xlu0 %v10575, 80
      %v11323 = vpop.permute.xlu0 %11322
      %11324 = vrot.lane.b32.xlu0 %v10578, 80
      %v11325 = vpop.permute.xlu0 %11324
      %v11358 = vrot.slane %v11263, 1
      %v11359 = vrot.slane %v11265, 1
      %v11360 = vrot.slane %v11267, 1
      %v11361 = vrot.slane %v11269, 1
      %v11362 = vrot.slane %v11271, 1
      %v11363 = vrot.slane %v11273, 1
      %v11364 = vrot.slane %v11275, 1
      %v11365 = vrot.slane %v11277, 1
      %v11366 = vrot.slane %v11279, 1
      %v11367 = vrot.slane %v11281, 1
      %v11368 = vrot.slane %v11283, 1
      %v11369 = vrot.slane %v11285, 1
      %v11370 = vrot.slane %v11287, 1
      %v11371 = vrot.slane %v11289, 1
      %v11372 = vrot.slane %v11291, 1
      %v11373 = vrot.slane %v11293, 1
      %v11374 = vrot.slane %v11295, 1
      %v11375 = vrot.slane %v11297, 1
      %v11376 = vrot.slane %v11299, 1
      %v11377 = vrot.slane %v11301, 1
      %v11378 = vrot.slane %v11303, 1
      %v11379 = vrot.slane %v11305, 1
      %v11380 = vrot.slane %v11307, 1
      %v11381 = vrot.slane %v11309, 1
      %v11382 = vrot.slane %v11311, 1
      %v11383 = vrot.slane %v11313, 1
      %v11384 = vrot.slane %v11315, 1
      %v11385 = vrot.slane %v11317, 1
      %v11386 = vrot.slane %v11319, 1
      %v11387 = vrot.slane %v11321, 1
      %v11388 = vrot.slane %v11323, 1
      %v11389 = vrot.slane %v11325, 1
      %v11390 = vsel %vm1507, %v11388, %v11389
      %v11391 = vsel %vm1507, %v11387, %v11388
      %v11392 = vsel %vm1507, %v11386, %v11387
      %v11393 = vsel %vm1507, %v11385, %v11386
      %v11394 = vsel %vm1507, %v11384, %v11385
      %v11395 = vsel %vm1507, %v11383, %v11384
      %v11396 = vsel %vm1507, %v11382, %v11383
      %v11397 = vsel %vm1507, %v11381, %v11382
      %v11398 = vsel %vm1507, %v11380, %v11381
      %v11399 = vsel %vm1507, %v11379, %v11380
      %v11400 = vsel %vm1507, %v11378, %v11379
      %v11401 = vsel %vm1507, %v11377, %v11378
      %v11402 = vsel %vm1507, %v11376, %v11377
      %v11403 = vsel %vm1507, %v11375, %v11376
      %v11404 = vsel %vm1507, %v11374, %v11375
      %v11405 = vsel %vm1507, %v11373, %v11374
      %v11406 = vsel %vm1507, %v11372, %v11373
      %v11407 = vsel %vm1507, %v11371, %v11372
      %v11408 = vsel %vm1507, %v11370, %v11371
      %v11409 = vsel %vm1507, %v11369, %v11370
      %v11410 = vsel %vm1507, %v11368, %v11369
      %v11411 = vsel %vm1507, %v11367, %v11368
      %v11412 = vsel %vm1507, %v11366, %v11367
      %v11413 = vsel %vm1507, %v11365, %v11366
      %v11414 = vsel %vm1507, %v11364, %v11365
      %v11415 = vsel %vm1507, %v11363, %v11364
      %v11416 = vsel %vm1507, %v11362, %v11363
      %v11417 = vsel %vm1507, %v11361, %v11362
      %v11418 = vsel %vm1507, %v11360, %v11361
      %v11419 = vsel %vm1507, %v11359, %v11360
      %v11420 = vsel %vm1507, %v11358, %v11359
      %v11421 = vsel %vm1507, %v11389, %v11358
      %v11422 = vmul.f32 %v11420, %v4618
      %v11423 = vmul.f32 %v11419, %v4619
      %v11424 = vmul.f32 %v11418, %v4620
      %v11425 = vmul.f32 %v11417, %v4621
      %v11426 = vmul.f32 %v11416, %v4622
      %v11427 = vmul.f32 %v11415, %v4623
      %v11428 = vmul.f32 %v11414, %v4624
      %v11429 = vmul.f32 %v11413, %v4625
      %v11430 = vmul.f32 %v11412, %v4626
      %v11431 = vmul.f32 %v11411, %v4627
      %v11432 = vmul.f32 %v11410, %v4628
      %v11433 = vmul.f32 %v11409, %v4629
      %v11434 = vmul.f32 %v11408, %v4630
      %v11435 = vmul.f32 %v11407, %v4631
      %v11436 = vmul.f32 %v11406, %v4632
      %v11437 = vmul.f32 %v11405, %v4633
      %v11438 = vmul.f32 %v11404, %v4634
      %v11439 = vmul.f32 %v11403, %v4635
      %v11440 = vmul.f32 %v11402, %v4636
      %v11441 = vmul.f32 %v11401, %v4637
      %v11442 = vmul.f32 %v11400, %v4638
      %v11443 = vmul.f32 %v11399, %v4639
      %v11444 = vmul.f32 %v11398, %v4640
      %v11445 = vmul.f32 %v11397, %v4641
      %v11446 = vmul.f32 %v11396, %v4642
      %v11447 = vmul.f32 %v11395, %v4643
      %v11448 = vmul.f32 %v11394, %v4644
      %v11449 = vmul.f32 %v11393, %v4645
      %v11450 = vmul.f32 %v11392, %v4646
      %v11451 = vmul.f32 %v11391, %v4647
      %v11452 = vmul.f32 %v11390, %v4648
      %v11453 = vmul.f32 %v11421, %v4649
      %11486 = vrot.lane.b32.xlu0 %v11422, 32
      %v11487 = vpop.permute.xlu0 %11486
      %11488 = vrot.lane.b32.xlu0 %v11423, 32
      %v11489 = vpop.permute.xlu0 %11488
      %11490 = vrot.lane.b32.xlu0 %v11424, 32
      %v11491 = vpop.permute.xlu0 %11490
      %11492 = vrot.lane.b32.xlu0 %v11425, 32
      %v11493 = vpop.permute.xlu0 %11492
      %11494 = vrot.lane.b32.xlu0 %v11426, 32
      %v11495 = vpop.permute.xlu0 %11494
      %11496 = vrot.lane.b32.xlu0 %v11427, 32
      %v11497 = vpop.permute.xlu0 %11496
      %11498 = vrot.lane.b32.xlu0 %v11428, 32
      %v11499 = vpop.permute.xlu0 %11498
      %11500 = vrot.lane.b32.xlu0 %v11429, 32
      %v11501 = vpop.permute.xlu0 %11500
      %11502 = vrot.lane.b32.xlu0 %v11430, 32
      %v11503 = vpop.permute.xlu0 %11502
      %11504 = vrot.lane.b32.xlu0 %v11431, 32
      %v11505 = vpop.permute.xlu0 %11504
      %11506 = vrot.lane.b32.xlu0 %v11432, 32
      %v11507 = vpop.permute.xlu0 %11506
      %11508 = vrot.lane.b32.xlu0 %v11433, 32
      %v11509 = vpop.permute.xlu0 %11508
      %11510 = vrot.lane.b32.xlu0 %v11434, 32
      %v11511 = vpop.permute.xlu0 %11510
      %11512 = vrot.lane.b32.xlu0 %v11435, 32
      %v11513 = vpop.permute.xlu0 %11512
      %11514 = vrot.lane.b32.xlu0 %v11436, 32
      %v11515 = vpop.permute.xlu0 %11514
      %11516 = vrot.lane.b32.xlu0 %v11437, 32
      %v11517 = vpop.permute.xlu0 %11516
      %11518 = vrot.lane.b32.xlu0 %v11438, 32
      %v11519 = vpop.permute.xlu0 %11518
      %11520 = vrot.lane.b32.xlu0 %v11439, 32
      %v11521 = vpop.permute.xlu0 %11520
      %11522 = vrot.lane.b32.xlu0 %v11440, 32
      %v11523 = vpop.permute.xlu0 %11522
      %11524 = vrot.lane.b32.xlu0 %v11441, 32
      %v11525 = vpop.permute.xlu0 %11524
      %11526 = vrot.lane.b32.xlu0 %v11442, 32
      %v11527 = vpop.permute.xlu0 %11526
      %11528 = vrot.lane.b32.xlu0 %v11443, 32
      %v11529 = vpop.permute.xlu0 %11528
      %11530 = vrot.lane.b32.xlu0 %v11444, 32
      %v11531 = vpop.permute.xlu0 %11530
      %11532 = vrot.lane.b32.xlu0 %v11445, 32
      %v11533 = vpop.permute.xlu0 %11532
      %11534 = vrot.lane.b32.xlu0 %v11446, 32
      %v11535 = vpop.permute.xlu0 %11534
      %11536 = vrot.lane.b32.xlu0 %v11447, 32
      %v11537 = vpop.permute.xlu0 %11536
      %11538 = vrot.lane.b32.xlu0 %v11448, 32
      %v11539 = vpop.permute.xlu0 %11538
      %11540 = vrot.lane.b32.xlu0 %v11449, 32
      %v11541 = vpop.permute.xlu0 %11540
      %11542 = vrot.lane.b32.xlu0 %v11450, 32
      %v11543 = vpop.permute.xlu0 %11542
      %11544 = vrot.lane.b32.xlu0 %v11451, 32
      %v11545 = vpop.permute.xlu0 %11544
      %11546 = vrot.lane.b32.xlu0 %v11452, 32
      %v11547 = vpop.permute.xlu0 %11546
      %11548 = vrot.lane.b32.xlu0 %v11453, 32
      %v11549 = vpop.permute.xlu0 %11548
      %v11582 = vadd.f32 %v11230, %v11487
      %v11583 = vadd.f32 %v11231, %v11489
      %v11584 = vadd.f32 %v11232, %v11491
      %v11585 = vadd.f32 %v11233, %v11493
      %v11586 = vadd.f32 %v11234, %v11495
      %v11587 = vadd.f32 %v11235, %v11497
      %v11588 = vadd.f32 %v11236, %v11499
      %v11589 = vadd.f32 %v11237, %v11501
      %v11590 = vadd.f32 %v11238, %v11503
      %v11591 = vadd.f32 %v11239, %v11505
      %v11592 = vadd.f32 %v11240, %v11507
      %v11593 = vadd.f32 %v11241, %v11509
      %v11594 = vadd.f32 %v11242, %v11511
      %v11595 = vadd.f32 %v11243, %v11513
      %v11596 = vadd.f32 %v11244, %v11515
      %v11597 = vadd.f32 %v11245, %v11517
      %v11598 = vadd.f32 %v11246, %v11519
      %v11599 = vadd.f32 %v11247, %v11521
      %v11600 = vadd.f32 %v11248, %v11523
      %v11601 = vadd.f32 %v11249, %v11525
      %v11602 = vadd.f32 %v11250, %v11527
      %v11603 = vadd.f32 %v11251, %v11529
      %v11604 = vadd.f32 %v11252, %v11531
      %v11605 = vadd.f32 %v11253, %v11533
      %v11606 = vadd.f32 %v11254, %v11535
      %v11607 = vadd.f32 %v11255, %v11537
      %v11608 = vadd.f32 %v11256, %v11539
      %v11609 = vadd.f32 %v11257, %v11541
      %v11610 = vadd.f32 %v11258, %v11543
      %v11611 = vadd.f32 %v11259, %v11545
      %v11612 = vadd.f32 %v11260, %v11547
      %v11613 = vadd.f32 %v11261, %v11549
      %11614 = vrot.lane.b32.xlu0 %v10455, 64
      %v11615 = vpop.permute.xlu0 %11614
      %11616 = vrot.lane.b32.xlu0 %v10458, 64
      %v11617 = vpop.permute.xlu0 %11616
      %11618 = vrot.lane.b32.xlu0 %v10463, 64
      %v11619 = vpop.permute.xlu0 %11618
      %11620 = vrot.lane.b32.xlu0 %v10466, 64
      %v11621 = vpop.permute.xlu0 %11620
      %11622 = vrot.lane.b32.xlu0 %v10471, 64
      %v11623 = vpop.permute.xlu0 %11622
      %11624 = vrot.lane.b32.xlu0 %v10474, 64
      %v11625 = vpop.permute.xlu0 %11624
      %11626 = vrot.lane.b32.xlu0 %v10479, 64
      %v11627 = vpop.permute.xlu0 %11626
      %11628 = vrot.lane.b32.xlu0 %v10482, 64
      %v11629 = vpop.permute.xlu0 %11628
      %11630 = vrot.lane.b32.xlu0 %v10487, 64
      %v11631 = vpop.permute.xlu0 %11630
      %11632 = vrot.lane.b32.xlu0 %v10490, 64
      %v11633 = vpop.permute.xlu0 %11632
      %11634 = vrot.lane.b32.xlu0 %v10495, 64
      %v11635 = vpop.permute.xlu0 %11634
      %11636 = vrot.lane.b32.xlu0 %v10498, 64
      %v11637 = vpop.permute.xlu0 %11636
      %11638 = vrot.lane.b32.xlu0 %v10503, 64
      %v11639 = vpop.permute.xlu0 %11638
      %11640 = vrot.lane.b32.xlu0 %v10506, 64
      %v11641 = vpop.permute.xlu0 %11640
      %11642 = vrot.lane.b32.xlu0 %v10511, 64
      %v11643 = vpop.permute.xlu0 %11642
      %11644 = vrot.lane.b32.xlu0 %v10514, 64
      %v11645 = vpop.permute.xlu0 %11644
      %11646 = vrot.lane.b32.xlu0 %v10519, 64
      %v11647 = vpop.permute.xlu0 %11646
      %11648 = vrot.lane.b32.xlu0 %v10522, 64
      %v11649 = vpop.permute.xlu0 %11648
      %11650 = vrot.lane.b32.xlu0 %v10527, 64
      %v11651 = vpop.permute.xlu0 %11650
      %11652 = vrot.lane.b32.xlu0 %v10530, 64
      %v11653 = vpop.permute.xlu0 %11652
      %11654 = vrot.lane.b32.xlu0 %v10535, 64
      %v11655 = vpop.permute.xlu0 %11654
      %11656 = vrot.lane.b32.xlu0 %v10538, 64
      %v11657 = vpop.permute.xlu0 %11656
      %11658 = vrot.lane.b32.xlu0 %v10543, 64
      %v11659 = vpop.permute.xlu0 %11658
      %11660 = vrot.lane.b32.xlu0 %v10546, 64
      %v11661 = vpop.permute.xlu0 %11660
      %11662 = vrot.lane.b32.xlu0 %v10551, 64
      %v11663 = vpop.permute.xlu0 %11662
      %11664 = vrot.lane.b32.xlu0 %v10554, 64
      %v11665 = vpop.permute.xlu0 %11664
      %11666 = vrot.lane.b32.xlu0 %v10559, 64
      %v11667 = vpop.permute.xlu0 %11666
      %11668 = vrot.lane.b32.xlu0 %v10562, 64
      %v11669 = vpop.permute.xlu0 %11668
      %11670 = vrot.lane.b32.xlu0 %v10567, 64
      %v11671 = vpop.permute.xlu0 %11670
      %11672 = vrot.lane.b32.xlu0 %v10570, 64
      %v11673 = vpop.permute.xlu0 %11672
      %11674 = vrot.lane.b32.xlu0 %v10575, 64
      %v11675 = vpop.permute.xlu0 %11674
      %11676 = vrot.lane.b32.xlu0 %v10578, 64
      %v11677 = vpop.permute.xlu0 %11676
      %v11710 = vrot.slane %v11615, 2
      %v11711 = vrot.slane %v11617, 2
      %v11712 = vrot.slane %v11619, 2
      %v11713 = vrot.slane %v11621, 2
      %v11714 = vrot.slane %v11623, 2
      %v11715 = vrot.slane %v11625, 2
      %v11716 = vrot.slane %v11627, 2
      %v11717 = vrot.slane %v11629, 2
      %v11718 = vrot.slane %v11631, 2
      %v11719 = vrot.slane %v11633, 2
      %v11720 = vrot.slane %v11635, 2
      %v11721 = vrot.slane %v11637, 2
      %v11722 = vrot.slane %v11639, 2
      %v11723 = vrot.slane %v11641, 2
      %v11724 = vrot.slane %v11643, 2
      %v11725 = vrot.slane %v11645, 2
      %v11726 = vrot.slane %v11647, 2
      %v11727 = vrot.slane %v11649, 2
      %v11728 = vrot.slane %v11651, 2
      %v11729 = vrot.slane %v11653, 2
      %v11730 = vrot.slane %v11655, 2
      %v11731 = vrot.slane %v11657, 2
      %v11732 = vrot.slane %v11659, 2
      %v11733 = vrot.slane %v11661, 2
      %v11734 = vrot.slane %v11663, 2
      %v11735 = vrot.slane %v11665, 2
      %v11736 = vrot.slane %v11667, 2
      %v11737 = vrot.slane %v11669, 2
      %v11738 = vrot.slane %v11671, 2
      %v11739 = vrot.slane %v11673, 2
      %v11740 = vrot.slane %v11675, 2
      %v11741 = vrot.slane %v11677, 2
      %v11742 = vsel %vm1988, %v11740, %v11741
      %v11743 = vsel %vm1988, %v11739, %v11740
      %v11744 = vsel %vm1988, %v11738, %v11739
      %v11745 = vsel %vm1988, %v11737, %v11738
      %v11746 = vsel %vm1988, %v11736, %v11737
      %v11747 = vsel %vm1988, %v11735, %v11736
      %v11748 = vsel %vm1988, %v11734, %v11735
      %v11749 = vsel %vm1988, %v11733, %v11734
      %v11750 = vsel %vm1988, %v11732, %v11733
      %v11751 = vsel %vm1988, %v11731, %v11732
      %v11752 = vsel %vm1988, %v11730, %v11731
      %v11753 = vsel %vm1988, %v11729, %v11730
      %v11754 = vsel %vm1988, %v11728, %v11729
      %v11755 = vsel %vm1988, %v11727, %v11728
      %v11756 = vsel %vm1988, %v11726, %v11727
      %v11757 = vsel %vm1988, %v11725, %v11726
      %v11758 = vsel %vm1988, %v11724, %v11725
      %v11759 = vsel %vm1988, %v11723, %v11724
      %v11760 = vsel %vm1988, %v11722, %v11723
      %v11761 = vsel %vm1988, %v11721, %v11722
      %v11762 = vsel %vm1988, %v11720, %v11721
      %v11763 = vsel %vm1988, %v11719, %v11720
      %v11764 = vsel %vm1988, %v11718, %v11719
      %v11765 = vsel %vm1988, %v11717, %v11718
      %v11766 = vsel %vm1988, %v11716, %v11717
      %v11767 = vsel %vm1988, %v11715, %v11716
      %v11768 = vsel %vm1988, %v11714, %v11715
      %v11769 = vsel %vm1988, %v11713, %v11714
      %v11770 = vsel %vm1988, %v11712, %v11713
      %v11771 = vsel %vm1988, %v11711, %v11712
      %v11772 = vsel %vm1988, %v11710, %v11711
      %v11773 = vsel %vm1988, %v11741, %v11710
      %v11774 = vmul.f32 %v11772, %v5098
      %v11775 = vmul.f32 %v11771, %v5099
      %v11776 = vmul.f32 %v11770, %v5100
      %v11777 = vmul.f32 %v11769, %v5101
      %v11778 = vmul.f32 %v11768, %v5102
      %v11779 = vmul.f32 %v11767, %v5103
      %v11780 = vmul.f32 %v11766, %v5104
      %v11781 = vmul.f32 %v11765, %v5105
      %v11782 = vmul.f32 %v11764, %v5106
      %v11783 = vmul.f32 %v11763, %v5107
      %v11784 = vmul.f32 %v11762, %v5108
      %v11785 = vmul.f32 %v11761, %v5109
      %v11786 = vmul.f32 %v11760, %v5110
      %v11787 = vmul.f32 %v11759, %v5111
      %v11788 = vmul.f32 %v11758, %v5112
      %v11789 = vmul.f32 %v11757, %v5113
      %v11790 = vmul.f32 %v11756, %v5114
      %v11791 = vmul.f32 %v11755, %v5115
      %v11792 = vmul.f32 %v11754, %v5116
      %v11793 = vmul.f32 %v11753, %v5117
      %v11794 = vmul.f32 %v11752, %v5118
      %v11795 = vmul.f32 %v11751, %v5119
      %v11796 = vmul.f32 %v11750, %v5120
      %v11797 = vmul.f32 %v11749, %v5121
      %v11798 = vmul.f32 %v11748, %v5122
      %v11799 = vmul.f32 %v11747, %v5123
      %v11800 = vmul.f32 %v11746, %v5124
      %v11801 = vmul.f32 %v11745, %v5125
      %v11802 = vmul.f32 %v11744, %v5126
      %v11803 = vmul.f32 %v11743, %v5127
      %v11804 = vmul.f32 %v11742, %v5128
      %v11805 = vmul.f32 %v11773, %v5129
      %11838 = vrot.lane.b32.xlu0 %v11774, 32
      %v11839 = vpop.permute.xlu0 %11838
      %11840 = vrot.lane.b32.xlu0 %v11775, 32
      %v11841 = vpop.permute.xlu0 %11840
      %11842 = vrot.lane.b32.xlu0 %v11776, 32
      %v11843 = vpop.permute.xlu0 %11842
      %11844 = vrot.lane.b32.xlu0 %v11777, 32
      %v11845 = vpop.permute.xlu0 %11844
      %11846 = vrot.lane.b32.xlu0 %v11778, 32
      %v11847 = vpop.permute.xlu0 %11846
      %11848 = vrot.lane.b32.xlu0 %v11779, 32
      %v11849 = vpop.permute.xlu0 %11848
      %11850 = vrot.lane.b32.xlu0 %v11780, 32
      %v11851 = vpop.permute.xlu0 %11850
      %11852 = vrot.lane.b32.xlu0 %v11781, 32
      %v11853 = vpop.permute.xlu0 %11852
      %11854 = vrot.lane.b32.xlu0 %v11782, 32
      %v11855 = vpop.permute.xlu0 %11854
      %11856 = vrot.lane.b32.xlu0 %v11783, 32
      %v11857 = vpop.permute.xlu0 %11856
      %11858 = vrot.lane.b32.xlu0 %v11784, 32
      %v11859 = vpop.permute.xlu0 %11858
      %11860 = vrot.lane.b32.xlu0 %v11785, 32
      %v11861 = vpop.permute.xlu0 %11860
      %11862 = vrot.lane.b32.xlu0 %v11786, 32
      %v11863 = vpop.permute.xlu0 %11862
      %11864 = vrot.lane.b32.xlu0 %v11787, 32
      %v11865 = vpop.permute.xlu0 %11864
      %11866 = vrot.lane.b32.xlu0 %v11788, 32
      %v11867 = vpop.permute.xlu0 %11866
      %11868 = vrot.lane.b32.xlu0 %v11789, 32
      %v11869 = vpop.permute.xlu0 %11868
      %11870 = vrot.lane.b32.xlu0 %v11790, 32
      %v11871 = vpop.permute.xlu0 %11870
      %11872 = vrot.lane.b32.xlu0 %v11791, 32
      %v11873 = vpop.permute.xlu0 %11872
      %11874 = vrot.lane.b32.xlu0 %v11792, 32
      %v11875 = vpop.permute.xlu0 %11874
      %11876 = vrot.lane.b32.xlu0 %v11793, 32
      %v11877 = vpop.permute.xlu0 %11876
      %11878 = vrot.lane.b32.xlu0 %v11794, 32
      %v11879 = vpop.permute.xlu0 %11878
      %11880 = vrot.lane.b32.xlu0 %v11795, 32
      %v11881 = vpop.permute.xlu0 %11880
      %11882 = vrot.lane.b32.xlu0 %v11796, 32
      %v11883 = vpop.permute.xlu0 %11882
      %11884 = vrot.lane.b32.xlu0 %v11797, 32
      %v11885 = vpop.permute.xlu0 %11884
      %11886 = vrot.lane.b32.xlu0 %v11798, 32
      %v11887 = vpop.permute.xlu0 %11886
      %11888 = vrot.lane.b32.xlu0 %v11799, 32
      %v11889 = vpop.permute.xlu0 %11888
      %11890 = vrot.lane.b32.xlu0 %v11800, 32
      %v11891 = vpop.permute.xlu0 %11890
      %11892 = vrot.lane.b32.xlu0 %v11801, 32
      %v11893 = vpop.permute.xlu0 %11892
      %11894 = vrot.lane.b32.xlu0 %v11802, 32
      %v11895 = vpop.permute.xlu0 %11894
      %11896 = vrot.lane.b32.xlu0 %v11803, 32
      %v11897 = vpop.permute.xlu0 %11896
      %11898 = vrot.lane.b32.xlu0 %v11804, 32
      %v11899 = vpop.permute.xlu0 %11898
      %11900 = vrot.lane.b32.xlu0 %v11805, 32
      %v11901 = vpop.permute.xlu0 %11900
      %v11934 = vadd.f32 %v11582, %v11839
      %v11935 = vadd.f32 %v11583, %v11841
      %v11936 = vadd.f32 %v11584, %v11843
      %v11937 = vadd.f32 %v11585, %v11845
      %v11938 = vadd.f32 %v11586, %v11847
      %v11939 = vadd.f32 %v11587, %v11849
      %v11940 = vadd.f32 %v11588, %v11851
      %v11941 = vadd.f32 %v11589, %v11853
      %v11942 = vadd.f32 %v11590, %v11855
      %v11943 = vadd.f32 %v11591, %v11857
      %v11944 = vadd.f32 %v11592, %v11859
      %v11945 = vadd.f32 %v11593, %v11861
      %v11946 = vadd.f32 %v11594, %v11863
      %v11947 = vadd.f32 %v11595, %v11865
      %v11948 = vadd.f32 %v11596, %v11867
      %v11949 = vadd.f32 %v11597, %v11869
      %v11950 = vadd.f32 %v11598, %v11871
      %v11951 = vadd.f32 %v11599, %v11873
      %v11952 = vadd.f32 %v11600, %v11875
      %v11953 = vadd.f32 %v11601, %v11877
      %v11954 = vadd.f32 %v11602, %v11879
      %v11955 = vadd.f32 %v11603, %v11881
      %v11956 = vadd.f32 %v11604, %v11883
      %v11957 = vadd.f32 %v11605, %v11885
      %v11958 = vadd.f32 %v11606, %v11887
      %v11959 = vadd.f32 %v11607, %v11889
      %v11960 = vadd.f32 %v11608, %v11891
      %v11961 = vadd.f32 %v11609, %v11893
      %v11962 = vadd.f32 %v11610, %v11895
      %v11963 = vadd.f32 %v11611, %v11897
      %v11964 = vadd.f32 %v11612, %v11899
      %v11965 = vadd.f32 %v11613, %v11901
      %v11966 = vtanh.pop %v11934
      %v11967 = vtanh.pop %v11935
      %v11968 = vtanh.pop %v11936
      %v11969 = vtanh.pop %v11937
      %v11970 = vtanh.pop %v11938
      %v11971 = vtanh.pop %v11939
      %v11972 = vtanh.pop %v11940
      %v11973 = vtanh.pop %v11941
      %v11974 = vtanh.pop %v11942
      %v11975 = vtanh.pop %v11943
      %v11976 = vtanh.pop %v11944
      %v11977 = vtanh.pop %v11945
      %v11978 = vtanh.pop %v11946
      %v11979 = vtanh.pop %v11947
      %v11980 = vtanh.pop %v11948
      %v11981 = vtanh.pop %v11949
      %v11982 = vtanh.pop %v11950
      %v11983 = vtanh.pop %v11951
      %v11984 = vtanh.pop %v11952
      %v11985 = vtanh.pop %v11953
      %v11986 = vtanh.pop %v11954
      %v11987 = vtanh.pop %v11955
      %v11988 = vtanh.pop %v11956
      %v11989 = vtanh.pop %v11957
      %v11990 = vtanh.pop %v11958
      %v11991 = vtanh.pop %v11959
      %v11992 = vtanh.pop %v11960
      %v11993 = vtanh.pop %v11961
      %v11994 = vtanh.pop %v11962
      %v11995 = vtanh.pop %v11963
      %v11996 = vtanh.pop %v11964
      %v11997 = vtanh.pop %v11965
      %v11998 = vsub.f32 1.0, %v10077
      %v11999 = vsub.f32 1.0, %v10078
      %v12000 = vsub.f32 1.0, %v10079
      %v12001 = vsub.f32 1.0, %v10080
      %v12002 = vsub.f32 1.0, %v10081
      %v12003 = vsub.f32 1.0, %v10082
      %v12004 = vsub.f32 1.0, %v10083
      %v12005 = vsub.f32 1.0, %v10084
      %v12006 = vsub.f32 1.0, %v10085
      %v12007 = vsub.f32 1.0, %v10086
      %v12008 = vsub.f32 1.0, %v10087
      %v12009 = vsub.f32 1.0, %v10088
      %v12010 = vsub.f32 1.0, %v10089
      %v12011 = vsub.f32 1.0, %v10090
      %v12012 = vsub.f32 1.0, %v10091
      %v12013 = vsub.f32 1.0, %v10092
      %v12014 = vsub.f32 1.0, %v10093
      %v12015 = vsub.f32 1.0, %v10094
      %v12016 = vsub.f32 1.0, %v10095
      %v12017 = vsub.f32 1.0, %v10096
      %v12018 = vsub.f32 1.0, %v10097
      %v12019 = vsub.f32 1.0, %v10098
      %v12020 = vsub.f32 1.0, %v10099
      %v12021 = vsub.f32 1.0, %v10100
      %v12022 = vsub.f32 1.0, %v10101
      %v12023 = vsub.f32 1.0, %v10102
      %v12024 = vsub.f32 1.0, %v10103
      %v12025 = vsub.f32 1.0, %v10104
      %v12026 = vsub.f32 1.0, %v10105
      %v12027 = vsub.f32 1.0, %v10106
      %v12028 = vsub.f32 1.0, %v10107
      %v12029 = vsub.f32 1.0, %v10108
      %12030 = vrot.lane.b32.xlu0 %v749, 64
      %v12031 = vpop.permute.xlu0 %12030
      %12032 = vrot.lane.b32.xlu0 %v750, 64
      %v12033 = vpop.permute.xlu0 %12032
      %12034 = vrot.lane.b32.xlu0 %v751, 64
      %v12035 = vpop.permute.xlu0 %12034
      %12036 = vrot.lane.b32.xlu0 %v752, 64
      %v12037 = vpop.permute.xlu0 %12036
      %12038 = vrot.lane.b32.xlu0 %v753, 64
      %v12039 = vpop.permute.xlu0 %12038
      %12040 = vrot.lane.b32.xlu0 %v754, 64
      %v12041 = vpop.permute.xlu0 %12040
      %12042 = vrot.lane.b32.xlu0 %v755, 64
      %v12043 = vpop.permute.xlu0 %12042
      %12044 = vrot.lane.b32.xlu0 %v756, 64
      %v12045 = vpop.permute.xlu0 %12044
      %12046 = vrot.lane.b32.xlu0 %v757, 64
      %v12047 = vpop.permute.xlu0 %12046
      %12048 = vrot.lane.b32.xlu0 %v758, 64
      %v12049 = vpop.permute.xlu0 %12048
      %12050 = vrot.lane.b32.xlu0 %v759, 64
      %v12051 = vpop.permute.xlu0 %12050
      %12052 = vrot.lane.b32.xlu0 %v760, 64
      %v12053 = vpop.permute.xlu0 %12052
      %12054 = vrot.lane.b32.xlu0 %v761, 64
      %v12055 = vpop.permute.xlu0 %12054
      %12056 = vrot.lane.b32.xlu0 %v762, 64
      %v12057 = vpop.permute.xlu0 %12056
      %12058 = vrot.lane.b32.xlu0 %v763, 64
      %v12059 = vpop.permute.xlu0 %12058
      %12060 = vrot.lane.b32.xlu0 %v764, 64
      %v12061 = vpop.permute.xlu0 %12060
      %12062 = vrot.lane.b32.xlu0 %v765, 64
      %v12063 = vpop.permute.xlu0 %12062
      %12064 = vrot.lane.b32.xlu0 %v766, 64
      %v12065 = vpop.permute.xlu0 %12064
      %12066 = vrot.lane.b32.xlu0 %v767, 64
      %v12067 = vpop.permute.xlu0 %12066
      %12068 = vrot.lane.b32.xlu0 %v768, 64
      %v12069 = vpop.permute.xlu0 %12068
      %12070 = vrot.lane.b32.xlu0 %v769, 64
      %v12071 = vpop.permute.xlu0 %12070
      %12072 = vrot.lane.b32.xlu0 %v770, 64
      %v12073 = vpop.permute.xlu0 %12072
      %12074 = vrot.lane.b32.xlu0 %v771, 64
      %v12075 = vpop.permute.xlu0 %12074
      %12076 = vrot.lane.b32.xlu0 %v772, 64
      %v12077 = vpop.permute.xlu0 %12076
      %12078 = vrot.lane.b32.xlu0 %v773, 64
      %v12079 = vpop.permute.xlu0 %12078
      %12080 = vrot.lane.b32.xlu0 %v774, 64
      %v12081 = vpop.permute.xlu0 %12080
      %12082 = vrot.lane.b32.xlu0 %v775, 64
      %v12083 = vpop.permute.xlu0 %12082
      %12084 = vrot.lane.b32.xlu0 %v776, 64
      %v12085 = vpop.permute.xlu0 %12084
      %12086 = vrot.lane.b32.xlu0 %v777, 64
      %v12087 = vpop.permute.xlu0 %12086
      %12088 = vrot.lane.b32.xlu0 %v778, 64
      %v12089 = vpop.permute.xlu0 %12088
      %12090 = vrot.lane.b32.xlu0 %v779, 64
      %v12091 = vpop.permute.xlu0 %12090
      %12092 = vrot.lane.b32.xlu0 %v780, 64
      %v12093 = vpop.permute.xlu0 %12092
      %v12126 = vmul.f32 %v11998, %v12031
      %v12127 = vmul.f32 %v11999, %v12033
      %v12128 = vmul.f32 %v12000, %v12035
      %v12129 = vmul.f32 %v12001, %v12037
      %v12130 = vmul.f32 %v12002, %v12039
      %v12131 = vmul.f32 %v12003, %v12041
      %v12132 = vmul.f32 %v12004, %v12043
      %v12133 = vmul.f32 %v12005, %v12045
      %v12134 = vmul.f32 %v12006, %v12047
      %v12135 = vmul.f32 %v12007, %v12049
      %v12136 = vmul.f32 %v12008, %v12051
      %v12137 = vmul.f32 %v12009, %v12053
      %v12138 = vmul.f32 %v12010, %v12055
      %v12139 = vmul.f32 %v12011, %v12057
      %v12140 = vmul.f32 %v12012, %v12059
      %v12141 = vmul.f32 %v12013, %v12061
      %v12142 = vmul.f32 %v12014, %v12063
      %v12143 = vmul.f32 %v12015, %v12065
      %v12144 = vmul.f32 %v12016, %v12067
      %v12145 = vmul.f32 %v12017, %v12069
      %v12146 = vmul.f32 %v12018, %v12071
      %v12147 = vmul.f32 %v12019, %v12073
      %v12148 = vmul.f32 %v12020, %v12075
      %v12149 = vmul.f32 %v12021, %v12077
      %v12150 = vmul.f32 %v12022, %v12079
      %v12151 = vmul.f32 %v12023, %v12081
      %v12152 = vmul.f32 %v12024, %v12083
      %v12153 = vmul.f32 %v12025, %v12085
      %v12154 = vmul.f32 %v12026, %v12087
      %v12155 = vmul.f32 %v12027, %v12089
      %v12156 = vmul.f32 %v12028, %v12091
      %v12157 = vmul.f32 %v12029, %v12093
      %12190 = vrot.lane.b32.xlu0 %v11966, 32
      %v12191 = vpop.permute.xlu0 %12190
      %12192 = vrot.lane.b32.xlu0 %v11967, 32
      %v12193 = vpop.permute.xlu0 %12192
      %12194 = vrot.lane.b32.xlu0 %v11968, 32
      %v12195 = vpop.permute.xlu0 %12194
      %12196 = vrot.lane.b32.xlu0 %v11969, 32
      %v12197 = vpop.permute.xlu0 %12196
      %12198 = vrot.lane.b32.xlu0 %v11970, 32
      %v12199 = vpop.permute.xlu0 %12198
      %12200 = vrot.lane.b32.xlu0 %v11971, 32
      %v12201 = vpop.permute.xlu0 %12200
      %12202 = vrot.lane.b32.xlu0 %v11972, 32
      %v12203 = vpop.permute.xlu0 %12202
      %12204 = vrot.lane.b32.xlu0 %v11973, 32
      %v12205 = vpop.permute.xlu0 %12204
      %12206 = vrot.lane.b32.xlu0 %v11974, 32
      %v12207 = vpop.permute.xlu0 %12206
      %12208 = vrot.lane.b32.xlu0 %v11975, 32
      %v12209 = vpop.permute.xlu0 %12208
      %12210 = vrot.lane.b32.xlu0 %v11976, 32
      %v12211 = vpop.permute.xlu0 %12210
      %12212 = vrot.lane.b32.xlu0 %v11977, 32
      %v12213 = vpop.permute.xlu0 %12212
      %12214 = vrot.lane.b32.xlu0 %v11978, 32
      %v12215 = vpop.permute.xlu0 %12214
      %12216 = vrot.lane.b32.xlu0 %v11979, 32
      %v12217 = vpop.permute.xlu0 %12216
      %12218 = vrot.lane.b32.xlu0 %v11980, 32
      %v12219 = vpop.permute.xlu0 %12218
      %12220 = vrot.lane.b32.xlu0 %v11981, 32
      %v12221 = vpop.permute.xlu0 %12220
      %12222 = vrot.lane.b32.xlu0 %v11982, 32
      %v12223 = vpop.permute.xlu0 %12222
      %12224 = vrot.lane.b32.xlu0 %v11983, 32
      %v12225 = vpop.permute.xlu0 %12224
      %12226 = vrot.lane.b32.xlu0 %v11984, 32
      %v12227 = vpop.permute.xlu0 %12226
      %12228 = vrot.lane.b32.xlu0 %v11985, 32
      %v12229 = vpop.permute.xlu0 %12228
      %12230 = vrot.lane.b32.xlu0 %v11986, 32
      %v12231 = vpop.permute.xlu0 %12230
      %12232 = vrot.lane.b32.xlu0 %v11987, 32
      %v12233 = vpop.permute.xlu0 %12232
      %12234 = vrot.lane.b32.xlu0 %v11988, 32
      %v12235 = vpop.permute.xlu0 %12234
      %12236 = vrot.lane.b32.xlu0 %v11989, 32
      %v12237 = vpop.permute.xlu0 %12236
      %12238 = vrot.lane.b32.xlu0 %v11990, 32
      %v12239 = vpop.permute.xlu0 %12238
      %12240 = vrot.lane.b32.xlu0 %v11991, 32
      %v12241 = vpop.permute.xlu0 %12240
      %12242 = vrot.lane.b32.xlu0 %v11992, 32
      %v12243 = vpop.permute.xlu0 %12242
      %12244 = vrot.lane.b32.xlu0 %v11993, 32
      %v12245 = vpop.permute.xlu0 %12244
      %12246 = vrot.lane.b32.xlu0 %v11994, 32
      %v12247 = vpop.permute.xlu0 %12246
      %12248 = vrot.lane.b32.xlu0 %v11995, 32
      %v12249 = vpop.permute.xlu0 %12248
      %12250 = vrot.lane.b32.xlu0 %v11996, 32
      %v12251 = vpop.permute.xlu0 %12250
      %12252 = vrot.lane.b32.xlu0 %v11997, 32
      %v12253 = vpop.permute.xlu0 %12252
      %v12286 = vmul.f32 %v10077, %v12191
      %v12287 = vmul.f32 %v10078, %v12193
      %v12288 = vmul.f32 %v10079, %v12195
      %v12289 = vmul.f32 %v10080, %v12197
      %v12290 = vmul.f32 %v10081, %v12199
      %v12291 = vmul.f32 %v10082, %v12201
      %v12292 = vmul.f32 %v10083, %v12203
      %v12293 = vmul.f32 %v10084, %v12205
      %v12294 = vmul.f32 %v10085, %v12207
      %v12295 = vmul.f32 %v10086, %v12209
      %v12296 = vmul.f32 %v10087, %v12211
      %v12297 = vmul.f32 %v10088, %v12213
      %v12298 = vmul.f32 %v10089, %v12215
      %v12299 = vmul.f32 %v10090, %v12217
      %v12300 = vmul.f32 %v10091, %v12219
      %v12301 = vmul.f32 %v10092, %v12221
      %v12302 = vmul.f32 %v10093, %v12223
      %v12303 = vmul.f32 %v10094, %v12225
      %v12304 = vmul.f32 %v10095, %v12227
      %v12305 = vmul.f32 %v10096, %v12229
      %v12306 = vmul.f32 %v10097, %v12231
      %v12307 = vmul.f32 %v10098, %v12233
      %v12308 = vmul.f32 %v10099, %v12235
      %v12309 = vmul.f32 %v10100, %v12237
      %v12310 = vmul.f32 %v10101, %v12239
      %v12311 = vmul.f32 %v10102, %v12241
      %v12312 = vmul.f32 %v10103, %v12243
      %v12313 = vmul.f32 %v10104, %v12245
      %v12314 = vmul.f32 %v10105, %v12247
      %v12315 = vmul.f32 %v10106, %v12249
      %v12316 = vmul.f32 %v10107, %v12251
      %v12317 = vmul.f32 %v10108, %v12253
      %v12318 = vadd.f32 %v12126, %v12286
      %v12319 = vadd.f32 %v12127, %v12287
      %v12320 = vadd.f32 %v12128, %v12288
      %v12321 = vadd.f32 %v12129, %v12289
      %v12322 = vadd.f32 %v12130, %v12290
      %v12323 = vadd.f32 %v12131, %v12291
      %v12324 = vadd.f32 %v12132, %v12292
      %v12325 = vadd.f32 %v12133, %v12293
      %v12326 = vadd.f32 %v12134, %v12294
      %v12327 = vadd.f32 %v12135, %v12295
      %v12328 = vadd.f32 %v12136, %v12296
      %v12329 = vadd.f32 %v12137, %v12297
      %v12330 = vadd.f32 %v12138, %v12298
      %v12331 = vadd.f32 %v12139, %v12299
      %v12332 = vadd.f32 %v12140, %v12300
      %v12333 = vadd.f32 %v12141, %v12301
      %v12334 = vadd.f32 %v12142, %v12302
      %v12335 = vadd.f32 %v12143, %v12303
      %v12336 = vadd.f32 %v12144, %v12304
      %v12337 = vadd.f32 %v12145, %v12305
      %v12338 = vadd.f32 %v12146, %v12306
      %v12339 = vadd.f32 %v12147, %v12307
      %v12340 = vadd.f32 %v12148, %v12308
      %v12341 = vadd.f32 %v12149, %v12309
      %v12342 = vadd.f32 %v12150, %v12310
      %v12343 = vadd.f32 %v12151, %v12311
      %v12344 = vadd.f32 %v12152, %v12312
      %v12345 = vadd.f32 %v12153, %v12313
      %v12346 = vadd.f32 %v12154, %v12314
      %v12347 = vadd.f32 %v12155, %v12315
      %v12348 = vadd.f32 %v12156, %v12316
      %v12349 = vadd.f32 %v12157, %v12317
      %12382 = vrot.lane.b32.xlu0 %v12318, 64
      %v12383 = vpop.permute.xlu0 %12382
      %12384 = vrot.lane.b32.xlu0 %v12319, 64
      %v12385 = vpop.permute.xlu0 %12384
      %12386 = vrot.lane.b32.xlu0 %v12320, 64
      %v12387 = vpop.permute.xlu0 %12386
      %12388 = vrot.lane.b32.xlu0 %v12321, 64
      %v12389 = vpop.permute.xlu0 %12388
      %12390 = vrot.lane.b32.xlu0 %v12322, 64
      %v12391 = vpop.permute.xlu0 %12390
      %12392 = vrot.lane.b32.xlu0 %v12323, 64
      %v12393 = vpop.permute.xlu0 %12392
      %12394 = vrot.lane.b32.xlu0 %v12324, 64
      %v12395 = vpop.permute.xlu0 %12394
      %12396 = vrot.lane.b32.xlu0 %v12325, 64
      %v12397 = vpop.permute.xlu0 %12396
      %12398 = vrot.lane.b32.xlu0 %v12326, 64
      %v12399 = vpop.permute.xlu0 %12398
      %12400 = vrot.lane.b32.xlu0 %v12327, 64
      %v12401 = vpop.permute.xlu0 %12400
      %12402 = vrot.lane.b32.xlu0 %v12328, 64
      %v12403 = vpop.permute.xlu0 %12402
      %12404 = vrot.lane.b32.xlu0 %v12329, 64
      %v12405 = vpop.permute.xlu0 %12404
      %12406 = vrot.lane.b32.xlu0 %v12330, 64
      %v12407 = vpop.permute.xlu0 %12406
      %12408 = vrot.lane.b32.xlu0 %v12331, 64
      %v12409 = vpop.permute.xlu0 %12408
      %12410 = vrot.lane.b32.xlu0 %v12332, 64
      %v12411 = vpop.permute.xlu0 %12410
      %12412 = vrot.lane.b32.xlu0 %v12333, 64
      %v12413 = vpop.permute.xlu0 %12412
      %12414 = vrot.lane.b32.xlu0 %v12334, 64
      %v12415 = vpop.permute.xlu0 %12414
      %12416 = vrot.lane.b32.xlu0 %v12335, 64
      %v12417 = vpop.permute.xlu0 %12416
      %12418 = vrot.lane.b32.xlu0 %v12336, 64
      %v12419 = vpop.permute.xlu0 %12418
      %12420 = vrot.lane.b32.xlu0 %v12337, 64
      %v12421 = vpop.permute.xlu0 %12420
      %12422 = vrot.lane.b32.xlu0 %v12338, 64
      %v12423 = vpop.permute.xlu0 %12422
      %12424 = vrot.lane.b32.xlu0 %v12339, 64
      %v12425 = vpop.permute.xlu0 %12424
      %12426 = vrot.lane.b32.xlu0 %v12340, 64
      %v12427 = vpop.permute.xlu0 %12426
      %12428 = vrot.lane.b32.xlu0 %v12341, 64
      %v12429 = vpop.permute.xlu0 %12428
      %12430 = vrot.lane.b32.xlu0 %v12342, 64
      %v12431 = vpop.permute.xlu0 %12430
      %12432 = vrot.lane.b32.xlu0 %v12343, 64
      %v12433 = vpop.permute.xlu0 %12432
      %12434 = vrot.lane.b32.xlu0 %v12344, 64
      %v12435 = vpop.permute.xlu0 %12434
      %12436 = vrot.lane.b32.xlu0 %v12345, 64
      %v12437 = vpop.permute.xlu0 %12436
      %12438 = vrot.lane.b32.xlu0 %v12346, 64
      %v12439 = vpop.permute.xlu0 %12438
      %12440 = vrot.lane.b32.xlu0 %v12347, 64
      %v12441 = vpop.permute.xlu0 %12440
      %12442 = vrot.lane.b32.xlu0 %v12348, 64
      %v12443 = vpop.permute.xlu0 %12442
      %12444 = vrot.lane.b32.xlu0 %v12349, 64
      %v12445 = vpop.permute.xlu0 %12444
      %12478 = vst.msk [vmem:[%s329] sm:$0xff] %vm893, %v12383
      %12479 = vst.msk [vmem:[%s329 + $0x8] sm:$0xff] %vm893, %v12385
      %12480 = vst.msk [vmem:[%s329 + $0x10] sm:$0xff] %vm893, %v12387
      %12481 = vst.msk [vmem:[%s329 + $0x18] sm:$0xff] %vm893, %v12389
      %12482 = vst.msk [vmem:[%s329 + $0x20] sm:$0xff] %vm893, %v12391
      %12483 = vst.msk [vmem:[%s329 + $0x28] sm:$0xff] %vm893, %v12393
      %12484 = vst.msk [vmem:[%s329 + $0x30] sm:$0xff] %vm893, %v12395
      %12485 = vst.msk [vmem:[%s329 + $0x38] sm:$0xff] %vm893, %v12397
      %12486 = vst.msk [vmem:[%s329 + $0x40] sm:$0xff] %vm893, %v12399
      %12487 = vst.msk [vmem:[%s329 + $0x48] sm:$0xff] %vm893, %v12401
      %12488 = vst.msk [vmem:[%s329 + $0x50] sm:$0xff] %vm893, %v12403
      %12489 = vst.msk [vmem:[%s329 + $0x58] sm:$0xff] %vm893, %v12405
      %12490 = vst.msk [vmem:[%s329 + $0x60] sm:$0xff] %vm893, %v12407
      %12491 = vst.msk [vmem:[%s329 + $0x68] sm:$0xff] %vm893, %v12409
      %12492 = vst.msk [vmem:[%s329 + $0x70] sm:$0xff] %vm893, %v12411
      %12493 = vst.msk [vmem:[%s329 + $0x78] sm:$0xff] %vm893, %v12413
      %12494 = vst.msk [vmem:[%s329 + $0x80] sm:$0xff] %vm893, %v12415
      %12495 = vst.msk [vmem:[%s329 + $0x88] sm:$0xff] %vm893, %v12417
      %12496 = vst.msk [vmem:[%s329 + $0x90] sm:$0xff] %vm893, %v12419
      %12497 = vst.msk [vmem:[%s329 + $0x98] sm:$0xff] %vm893, %v12421
      %12498 = vst.msk [vmem:[%s329 + $0xa0] sm:$0xff] %vm893, %v12423
      %12499 = vst.msk [vmem:[%s329 + $0xa8] sm:$0xff] %vm893, %v12425
      %12500 = vst.msk [vmem:[%s329 + $0xb0] sm:$0xff] %vm893, %v12427
      %12501 = vst.msk [vmem:[%s329 + $0xb8] sm:$0xff] %vm893, %v12429
      %12502 = vst.msk [vmem:[%s329 + $0xc0] sm:$0xff] %vm893, %v12431
      %12503 = vst.msk [vmem:[%s329 + $0xc8] sm:$0xff] %vm893, %v12433
      %12504 = vst.msk [vmem:[%s329 + $0xd0] sm:$0xff] %vm893, %v12435
      %12505 = vst.msk [vmem:[%s329 + $0xd8] sm:$0xff] %vm893, %v12437
      %12506 = vst.msk [vmem:[%s329 + $0xe0] sm:$0xff] %vm893, %v12439
      %12507 = vst.msk [vmem:[%s329 + $0xe8] sm:$0xff] %vm893, %v12441
      %12508 = vst.msk [vmem:[%s329 + $0xf0] sm:$0xff] %vm893, %v12443
      %12509 = vst.msk [vmem:[%s329 + $0xf8] sm:$0xff] %vm893, %v12445
      %s12510 = smul.u32 32, %s19
      %p12511 = scmp.lt.s32.totalorder %s12510, 63
      %s12512 = scalar_select %p12511, %s12510, 63
      %s12513 = smul.addr %s12512, 8
      %s12514 = scalar_lea.vmem %s8, %s12513
      // Predicated region
      $region53: #{tpu_custom_call.1} parent=51 // pred_check
        %p12515 = pneg %p215
      $region54: #{tpu_custom_call.1} parent=51 // pred_check_branch
        %12517 = sbr.rel (%p12515) target = $region56
      $region55: #{tpu_custom_call.1} parent=51 // pred_region
        %s12518 = smul.u32 32, %s19
      $region56: #{tpu_custom_call.1} parent=51 // pred_fallthru
        _
    $region52: #{tpu_custom_call.1} parent=5 // pred_fallthru
      _
    %p12519 = scmp.le.s32.totalorder 2, %s14
    // Predicated region
    $region57: #{tpu_custom_call.1} parent=5 // pred_check
      %p12520 = pneg %p12519
    $region58: #{tpu_custom_call.1} parent=5 // pred_check_branch
      %12522 = sbr.rel (%p12520) target = $region60
    $region59: #{tpu_custom_call.1} parent=5 // pred_region
      %s12523 = ssub.s32 %s14, 2
      // Predicated region
      $region61: #{tpu_custom_call.1} parent=59 // pred_check
        %p12524 = pneg %p221
      $region62: #{tpu_custom_call.1} parent=59 // pred_check_branch
        %12526 = sbr.rel (%p12524) target = $region64
      $region63: #{tpu_custom_call.1} parent=59 // pred_region
        %s12527 = smul.u32 32, %s20
        %p12528 = scmp.lt.s32.totalorder %s12527, 63
        %s12529 = scalar_select %p12528, %s12527, 63
        %s12530 = smul.addr %s12529, 8
        %s12531 = scalar_lea.vmem %s8, %s12530
      $region64: #{tpu_custom_call.1} parent=59 // pred_fallthru
        _
    $region60: #{tpu_custom_call.1} parent=5 // pred_fallthru
      _
  $region6: #{tpu_custom_call.1} parent=0 // loop_footer
    %s18 = sadd.s32 1, %s14
  $region7: #{tpu_custom_call.1} parent=0 // loop_footer_branch
    %13 = sbr.rel target = $region3
  $region8: #{tpu_custom_call.1} parent=0 // loop_exit
    _

</llo_original>
